<compile_context>
chip_gen: v6e
topology: v6e:2x2x1
jax: 0.10.0
libtpu: 0.0.40
codegen_flags: <defaults>
</compile_context>

<pallas_src>
import functools

import numpy as np
import jax
import jax.numpy as jnp
from jax.experimental import pallas as pl
from jax.experimental.pallas import tpu as pltpu


def _ln_lastdim(x, g, b, eps=1e-5):
    mu = jnp.mean(x, axis=-1, keepdims=True)
    var = jnp.mean((x - mu) ** 2, axis=-1, keepdims=True)
    return (x - mu) * jax.lax.rsqrt(var + eps) * g + b


def _edsr_fused_kernel(
        # per-image inputs
        x_ref, noise_ref,
        # constants / parameters
        mu_ref, sigma_ref, cmask_ref, cw_ref, cb_ref, gmask_ref, coll_ref,
        lin_g, lin_b, lsl_g, lsl_b, lmlp_g, lmlp_b,
        wkv_ref, bkv_ref, wq_ref, bq_ref,
        wih_ref, bih_ref, whh_ref, bhh_ref,
        w1_ref, b1_ref, w2_ref, b2_ref,
        # outputs
        out_ref, attn_ref,
        # scratch
        patch_ref,
        *, n_resblocks, res_scale, num_heads, iters, scale, eps, H, W, c_in):
    C = cw_ref.shape[1]
    N = H * W
    K, S = noise_ref.shape[1], noise_ref.shape[2]
    HK = num_heads * K
    f32 = jnp.float32

    # ------------- conv stack, channel-first (C, N): lane-dense -------------
    def conv(feat, idx, relu=False):
        # patches(9C, N): tap t at sublane offset t*C (multiple of 8 ->
        # aligned unmasked stores).  Shifted taps come from an XLU lane
        # rotate of the flat (C, N) map; border masks implement zero padding.
        for t in range(9):
            dy, dx = t // 3 - 1, t % 3 - 1
            d = dy * W + dx
            if d == 0:
                g = feat
            else:
                g = pltpu.roll(feat, shift=(-d) % N, axis=1)
                g = g * cmask_ref[t:t + 1, :]
            patch_ref[t * C:(t + 1) * C, :] = g.astype(patch_ref.dtype)
        out = jnp.dot(cw_ref[idx], patch_ref[...],
                      preferred_element_type=f32) + cb_ref[idx]
        if relu:
            out = jnp.maximum(out, 0.0)
        return out

    # head conv: Cin zero-padded to C so every conv shares the same code path
    # (head weights were zero-padded over cin in the wrapper to match).
    x0 = jnp.concatenate(
        [x_ref[0].astype(f32), jnp.zeros((C - c_in, N), f32)], axis=0)
    feat = conv(x0, 0)

    r = feat
    ci = 1
    for _ in range(n_resblocks):
        y = conv(r, ci, relu=True)
        ci += 1
        y = conv(y, ci)
        ci += 1
        r = r + res_scale * y
    body = conv(r, ci) + feat                                   # (C, N)

    # ------------- slot attention (k/v/logits/attn lane-dense) --------------
    # LayerNorm over channels (per spatial position) in channel-first form.
    mu_c = jnp.mean(body, axis=0, keepdims=True)
    var_c = jnp.mean((body - mu_c) ** 2, axis=0, keepdims=True)
    inp = (body - mu_c) * jax.lax.rsqrt(var_c + 1e-5) * lin_g[...] + lin_b[...]

    kv = jnp.dot(wkv_ref[...], inp, preferred_element_type=f32) + bkv_ref[...]
    kT = kv[:S, :]                                              # (S, N)
    vT = kv[S:, :]                                              # (S, N)

    gmask = gmask_ref[...]          # (HK, S) block-diagonal head mask
    coll = coll_ref[...]            # (HK, K): coll[c, s] = (c % K == s)

    slots = mu_ref[...] + sigma_ref[...] * noise_ref[0]         # (K, S)
    attn_sm = jnp.zeros((num_heads, K, N), f32)

    for _ in range(iters):
        slots_prev = slots
        slots_n = _ln_lastdim(slots, lsl_g[...], lsl_b[...])
        q = jnp.dot(slots_n, wq_ref[...],
                    preferred_element_type=f32) + bq_ref[...]   # (K, S)

        # All heads in one matmul: qpack[h*K+s, d] = q[s, d] * [d in head h]
        qpack = jnp.dot(coll, q, preferred_element_type=f32) * gmask
        logits = jnp.dot(qpack, kT, preferred_element_type=f32) * scale
        lg = logits.reshape(num_heads, K, N)

        # per-head softmax over the K slots (per-head max)
        m = jnp.max(lg, axis=1, keepdims=True)
        e = jnp.exp(lg - m)
        denom = jnp.sum(e, axis=1, keepdims=True)
        attn_sm = e * pl.reciprocal(denom, approx=True) + eps   # (Hh, K, N)
        col_sum = jnp.sum(attn_sm, axis=2, keepdims=True)
        attn_n = (attn_sm * pl.reciprocal(col_sum, approx=True)).reshape(HK, N)

        # packed per-head updates: updates[s, d] = sum_n attn_n[h(d)K+s,n] v[d,n]
        t2 = jax.lax.dot_general(attn_n, vT, (((1,), (1,)), ((), ())),
                                 preferred_element_type=f32) * gmask   # (HK, S)
        updates = jax.lax.dot_general(coll, t2, (((0,), (0,)), ((), ())),
                                      preferred_element_type=f32)      # (K, S)

        # PyTorch GRUCell (chunk order r, z, n)
        gi = jnp.dot(updates, wih_ref[...],
                     preferred_element_type=f32) + bih_ref[...]
        gh = jnp.dot(slots_prev, whh_ref[...],
                     preferred_element_type=f32) + bhh_ref[...]
        r_g = jax.nn.sigmoid(gi[:, :S] + gh[:, :S])
        z_g = jax.nn.sigmoid(gi[:, S:2 * S] + gh[:, S:2 * S])
        n_g = jnp.tanh(gi[:, 2 * S:] + r_g * gh[:, 2 * S:])
        slots = (1.0 - z_g) * n_g + z_g * slots_prev

        # residual MLP
        sn = _ln_lastdim(slots, lmlp_g[...], lmlp_b[...])
        hid = jnp.maximum(
            jnp.dot(sn, w1_ref[...], preferred_element_type=f32) + b1_ref[...],
            0.0)
        slots = slots + jnp.dot(hid, w2_ref[...],
                                preferred_element_type=f32) + b2_ref[...]

    # head-averaged attention of the last iteration, lane-dense (K, N)
    attn_mean = jnp.mean(attn_sm, axis=0)
    attn_ref[0] = attn_mean

    # slot_feat channel-first: (S, N) = slots^T @ attn_mean
    slot_feat = jax.lax.dot_general(slots, attn_mean, (((0,), (0,)), ((), ())),
                                    preferred_element_type=f32)
    out_ref[0, 0:C, :] = body
    out_ref[0, C:C + S, :] = slot_feat


# ----------------------------------------------------------------------------
# Wrapper: parameter packing + a single pallas_call over grid=(B,)
# ----------------------------------------------------------------------------
class Cfg:
    n_resblocks = 2
    n_feats = 32
    n_colors = 3
    res_scale = 1.0
    no_upsampling = True
    slot_num = 8
    slot_iters = 3
    slot_attn_heads = 4
    slot_input_dim = 32
    slot_dim = 32
    slot_mlp_hid_dim = 64
    slot_eps = 1e-8


def init_params(key, cfg):
    ks = iter(jax.random.split(key, 64))
    nrm = lambda shape, s=0.05: s * jax.random.normal(next(ks), shape, jnp.float32)
    p = {}
    p["head_w"] = nrm((3, 3, cfg.n_colors, cfg.n_feats))
    p["head_b"] = nrm((1, cfg.n_feats))
    p["res"] = []
    for _ in range(cfg.n_resblocks):
        p["res"].append(dict(
            w1=nrm((3, 3, cfg.n_feats, cfg.n_feats)), b1=nrm((1, cfg.n_feats)),
            w2=nrm((3, 3, cfg.n_feats, cfg.n_feats)), b2=nrm((1, cfg.n_feats))))
    p["body_w"] = nrm((3, 3, cfg.n_feats, cfg.n_feats))
    p["body_b"] = nrm((1, cfg.n_feats))
    D, S, Hd = cfg.slot_input_dim, cfg.slot_dim, cfg.slot_mlp_hid_dim
    p["slots_mu"] = nrm((1, 1, S), 1.0)
    p["slots_sigma"] = jnp.abs(nrm((1, 1, S), 1.0))
    p["sa"] = dict(
        ln_in_g=jnp.ones((1, D), jnp.float32), ln_in_b=jnp.zeros((1, D), jnp.float32),
        ln_sl_g=jnp.ones((1, S), jnp.float32), ln_sl_b=jnp.zeros((1, S), jnp.float32),
        ln_mlp_g=jnp.ones((1, S), jnp.float32), ln_mlp_b=jnp.zeros((1, S), jnp.float32),
        wk=nrm((D, S)), bk=nrm((1, S)),
        wv=nrm((D, S)), bv=nrm((1, S)),
        wq=nrm((S, S)), bq=nrm((1, S)),
        gru_wih=nrm((S, 3 * S)), gru_bih=nrm((1, 3 * S)),
        gru_whh=nrm((S, 3 * S)), gru_bhh=nrm((1, 3 * S)),
        mlp_w1=nrm((S, Hd)), mlp_b1=nrm((1, Hd)),
        mlp_w2=nrm((Hd, S)), mlp_b2=nrm((1, S)),
    )
    return p


def _conv_border_masks(H, W):
    n = np.arange(H * W)
    hh, ww = n // W, n % W
    masks = []
    for t in range(9):
        dy, dx = t // 3 - 1, t % 3 - 1
        valid = (hh + dy >= 0) & (hh + dy < H) & (ww + dx >= 0) & (ww + dx < W)
        masks.append(valid.astype(np.float32))
    return np.stack(masks, 0)                       # (9, H*W)


def edsr_forward(params, x_nchw, cfg, slot_noise_key, use_bf16_mxu=False):
    B, Cin, H, W = x_nchw.shape
    C = cfg.n_feats
    D = cfg.slot_input_dim
    S = cfg.slot_dim
    K = cfg.slot_num
    Hid = cfg.slot_mlp_hid_dim
    Hh = cfg.slot_attn_heads
    dh = S // Hh
    HK = Hh * K
    N = H * W
    assert D == C, "slot_input_dim must equal n_feats in this configuration"

    # NCHW is already channel-first: a free reshape gives the kernel's per-image
    # (Cin, N) layout -- no transpose / channel-pad ops in the wrapper.
    x_flat = x_nchw.reshape(B, Cin, N).astype(jnp.float32)

    # slot init noise (slots0 = mu + sigma*noise is computed inside the kernel)
    noise = jax.random.normal(slot_noise_key, (B, K, S), jnp.float32)

    # bf16 MXU operands for the conv stack on v6e/v7x; f32 keeps parity with
    # the PyTorch reference numerics (default).
    mxdt = jnp.bfloat16 if use_bf16_mxu else jnp.float32

    # Conv weights as (C_out, 9*C_in): tap-major, input-channel-minor columns,
    # matching the patches(9C, N) scratch.  Head weight zero-padded over cin.
    def wmat_T(w):
        return jnp.transpose(w, (3, 0, 1, 2)).reshape(w.shape[3], 9 * w.shape[2])

    head_w = jnp.pad(params["head_w"], ((0, 0), (0, 0), (0, C - Cin), (0, 0)))
    conv_ws, conv_bs = [wmat_T(head_w)], [params["head_b"].reshape(C, 1)]
    for rb in params["res"]:
        conv_ws += [wmat_T(rb["w1"]), wmat_T(rb["w2"])]
        conv_bs += [rb["b1"].reshape(C, 1), rb["b2"].reshape(C, 1)]
    conv_ws.append(wmat_T(params["body_w"]))
    conv_bs.append(params["body_b"].reshape(C, 1))
    cw = jnp.stack(conv_ws, 0).astype(mxdt)          # (n_conv, C, 9C)
    cb = jnp.stack(conv_bs, 0)                       # (n_conv, C, 1)
    n_conv = 2 * cfg.n_resblocks + 2

    # Host-side (numpy) constants: baked as literals, no per-call device ops.
    cmask = jnp.asarray(_conv_border_masks(H, W))                       # (9, N)
    c_idx = np.arange(HK)
    gmask = jnp.asarray((np.arange(S)[None, :] // dh ==
                         (c_idx // K)[:, None]).astype(np.float32))     # (HK, S)
    coll = jnp.asarray((np.arange(K)[None, :] ==
                        (c_idx % K)[:, None]).astype(np.float32))       # (HK, K)

    sa = params["sa"]
    wkvT = jnp.concatenate([sa["wk"].T, sa["wv"].T], axis=0)            # (2S, D)
    bkvT = jnp.concatenate([sa["bk"], sa["bv"]], axis=1).reshape(2 * S, 1)

    scale = float((cfg.slot_dim // cfg.slot_attn_heads) ** (-0.5))

    kernel = functools.partial(
        _edsr_fused_kernel, n_resblocks=cfg.n_resblocks,
        res_scale=float(cfg.res_scale), num_heads=Hh, iters=cfg.slot_iters,
        scale=scale, eps=cfg.slot_eps, H=H, W=W, c_in=Cin)

    def full(shape):
        nd = len(shape)
        # Constant index maps.  (pipeline_mode=pl.Buffered(1) would drop the
        # pointless double buffer for these constants; negligible at this size.)
        return pl.BlockSpec(shape, lambda b: (0,) * nd)

    in_specs = [
        pl.BlockSpec((1, Cin, N), lambda b: (b, 0, 0)),   # x
        pl.BlockSpec((1, K, S), lambda b: (b, 0, 0)),     # noise
        full((1, S)), full((1, S)),                       # slots mu / sigma
        full((9, N)),                                     # conv border masks
        full((n_conv, C, 9 * C)), full((n_conv, C, 1)),   # conv W / b
        full((HK, S)), full((HK, K)),                     # gmask / collapse
        full((C, 1)), full((C, 1)),                       # ln_in g / b
        full((1, S)), full((1, S)),                       # ln_slots g / b
        full((1, S)), full((1, S)),                       # ln_mlp g / b
        full((2 * S, D)), full((2 * S, 1)),               # fused k/v proj
        full((S, S)), full((1, S)),                       # q proj
        full((S, 3 * S)), full((1, 3 * S)),               # gru ih
        full((S, 3 * S)), full((1, 3 * S)),               # gru hh
        full((S, Hid)), full((1, Hid)),                   # mlp w1/b1
        full((Hid, S)), full((1, S)),                     # mlp w2/b2
    ]
    out_specs = [
        pl.BlockSpec((1, C + S, N), lambda b: (b, 0, 0)),
        pl.BlockSpec((1, K, N), lambda b: (b, 0, 0)),
    ]
    out_shapes = (
        jax.ShapeDtypeStruct((B, C + S, N), jnp.float32),
        jax.ShapeDtypeStruct((B, K, N), jnp.float32),
    )

    out_flat, attn_t = pl.pallas_call(
        kernel,
        out_shape=out_shapes,
        grid=(B,),
        in_specs=in_specs,
        out_specs=out_specs,
        scratch_shapes=[pltpu.VMEM((9 * C, N), mxdt)],     # im2col patches
        compiler_params=pltpu.CompilerParams(
            dimension_semantics=("parallel",)),
    )(x_flat, noise,
      params["slots_mu"].reshape(1, S), params["slots_sigma"].reshape(1, S),
      cmask, cw, cb, gmask, coll,
      sa["ln_in_g"].reshape(C, 1), sa["ln_in_b"].reshape(C, 1),
      sa["ln_sl_g"], sa["ln_sl_b"], sa["ln_mlp_g"], sa["ln_mlp_b"],
      wkvT, bkvT, sa["wq"], sa["bq"],
      sa["gru_wih"], sa["gru_bih"], sa["gru_whh"], sa["gru_bhh"],
      sa["mlp_w1"], sa["mlp_b1"], sa["mlp_w2"], sa["mlp_b2"])

    out_nchw = out_flat.reshape(B, C + S, H, W)     # already channels-first
    attn = jnp.transpose(attn_t, (0, 2, 1))         # (B, N, K) as in PyTorch
    return out_nchw, attn


if __name__ == "__main__":
    cfg = Cfg()
    key = jax.random.PRNGKey(0)
    k_param, k_in, k_slots = jax.random.split(key, 3)

    params = init_params(k_param, cfg)
    x = jax.random.normal(k_in, (2, cfg.n_colors, 16, 16), jnp.float32)  # NCHW

    fwd = jax.jit(lambda p, xx, kk: edsr_forward(p, xx, cfg, kk))
    out, attn = fwd(params, x, k_slots)
    out = jax.block_until_ready(out)
    attn = jax.block_until_ready(attn)

    assert out.shape == (2, cfg.n_feats + cfg.slot_dim, 16, 16), out.shape
    assert attn.shape == (2, 16 * 16, cfg.slot_num), attn.shape
    assert bool(jnp.all(jnp.isfinite(out))) and bool(jnp.all(jnp.isfinite(attn)))
    print("KERNEL_OK")
</pallas_src>

<mosaic_0001>
module attributes {stable_mosaic.version = 11 : i64} {
  func.func @_edsr_fused_kernel(%arg0: i32, %arg1: memref<1x3x256xf32, #tpu.memory_space<vmem>>, %arg2: memref<1x8x32xf32, #tpu.memory_space<vmem>>, %arg3: memref<1x32xf32, #tpu.memory_space<vmem>>, %arg4: memref<1x32xf32, #tpu.memory_space<vmem>>, %arg5: memref<9x256xf32, #tpu.memory_space<vmem>>, %arg6: memref<6x32x288xf32, #tpu.memory_space<vmem>>, %arg7: memref<6x32x1xf32, #tpu.memory_space<vmem>>, %arg8: memref<32x32xf32, #tpu.memory_space<vmem>>, %arg9: memref<32x8xf32, #tpu.memory_space<vmem>>, %arg10: memref<32x1xf32, #tpu.memory_space<vmem>>, %arg11: memref<32x1xf32, #tpu.memory_space<vmem>>, %arg12: memref<1x32xf32, #tpu.memory_space<vmem>>, %arg13: memref<1x32xf32, #tpu.memory_space<vmem>>, %arg14: memref<1x32xf32, #tpu.memory_space<vmem>>, %arg15: memref<1x32xf32, #tpu.memory_space<vmem>>, %arg16: memref<64x32xf32, #tpu.memory_space<vmem>>, %arg17: memref<64x1xf32, #tpu.memory_space<vmem>>, %arg18: memref<32x32xf32, #tpu.memory_space<vmem>>, %arg19: memref<1x32xf32, #tpu.memory_space<vmem>>, %arg20: memref<32x96xf32, #tpu.memory_space<vmem>>, %arg21: memref<1x96xf32, #tpu.memory_space<vmem>>, %arg22: memref<32x96xf32, #tpu.memory_space<vmem>>, %arg23: memref<1x96xf32, #tpu.memory_space<vmem>>, %arg24: memref<32x64xf32, #tpu.memory_space<vmem>>, %arg25: memref<1x64xf32, #tpu.memory_space<vmem>>, %arg26: memref<64x32xf32, #tpu.memory_space<vmem>>, %arg27: memref<1x32xf32, #tpu.memory_space<vmem>>, %arg28: memref<1x64x256xf32, #tpu.memory_space<vmem>>, %arg29: memref<1x8x256xf32, #tpu.memory_space<vmem>>, %arg30: memref<288x256xf32, #tpu.memory_space<vmem>>) attributes {dimension_semantics = [#tpu.dimension_semantics<parallel>], iteration_bounds = array<i64: 2>, scalar_prefetch = 0 : i64, scratch_operands = 1 : i64, tpu.core_type = #tpu.core_type<tc>, window_params = [{transform_indices = @transform_0, window_bounds = array<i64: 1, 3, 256>}, {transform_indices = @transform_1, window_bounds = array<i64: 1, 8, 32>}, {pipeline_mode = #tpu.pipeline_mode<synchronous>, transform_indices = @transform_2, window_bounds = array<i64: 1, 32>}, {pipeline_mode = #tpu.pipeline_mode<synchronous>, transform_indices = @transform_3, window_bounds = array<i64: 1, 32>}, {pipeline_mode = #tpu.pipeline_mode<synchronous>, transform_indices = @transform_4, window_bounds = array<i64: 9, 256>}, {pipeline_mode = #tpu.pipeline_mode<synchronous>, transform_indices = @transform_5, window_bounds = array<i64: 6, 32, 288>}, {pipeline_mode = #tpu.pipeline_mode<synchronous>, transform_indices = @transform_6, window_bounds = array<i64: 6, 32, 1>}, {pipeline_mode = #tpu.pipeline_mode<synchronous>, transform_indices = @transform_7, window_bounds = array<i64: 32, 32>}, {pipeline_mode = #tpu.pipeline_mode<synchronous>, transform_indices = @transform_8, window_bounds = array<i64: 32, 8>}, {pipeline_mode = #tpu.pipeline_mode<synchronous>, transform_indices = @transform_9, window_bounds = array<i64: 32, 1>}, {pipeline_mode = #tpu.pipeline_mode<synchronous>, transform_indices = @transform_10, window_bounds = array<i64: 32, 1>}, {pipeline_mode = #tpu.pipeline_mode<synchronous>, transform_indices = @transform_11, window_bounds = array<i64: 1, 32>}, {pipeline_mode = #tpu.pipeline_mode<synchronous>, transform_indices = @transform_12, window_bounds = array<i64: 1, 32>}, {pipeline_mode = #tpu.pipeline_mode<synchronous>, transform_indices = @transform_13, window_bounds = array<i64: 1, 32>}, {pipeline_mode = #tpu.pipeline_mode<synchronous>, transform_indices = @transform_14, window_bounds = array<i64: 1, 32>}, {pipeline_mode = #tpu.pipeline_mode<synchronous>, transform_indices = @transform_15, window_bounds = array<i64: 64, 32>}, {pipeline_mode = #tpu.pipeline_mode<synchronous>, transform_indices = @transform_16, window_bounds = array<i64: 64, 1>}, {pipeline_mode = #tpu.pipeline_mode<synchronous>, transform_indices = @transform_17, window_bounds = array<i64: 32, 32>}, {pipeline_mode = #tpu.pipeline_mode<synchronous>, transform_indices = @transform_18, window_bounds = array<i64: 1, 32>}, {pipeline_mode = #tpu.pipeline_mode<synchronous>, transform_indices = @transform_19, window_bounds = array<i64: 32, 96>}, {pipeline_mode = #tpu.pipeline_mode<synchronous>, transform_indices = @transform_20, window_bounds = array<i64: 1, 96>}, {pipeline_mode = #tpu.pipeline_mode<synchronous>, transform_indices = @transform_21, window_bounds = array<i64: 32, 96>}, {pipeline_mode = #tpu.pipeline_mode<synchronous>, transform_indices = @transform_22, window_bounds = array<i64: 1, 96>}, {pipeline_mode = #tpu.pipeline_mode<synchronous>, transform_indices = @transform_23, window_bounds = array<i64: 32, 64>}, {pipeline_mode = #tpu.pipeline_mode<synchronous>, transform_indices = @transform_24, window_bounds = array<i64: 1, 64>}, {pipeline_mode = #tpu.pipeline_mode<synchronous>, transform_indices = @transform_25, window_bounds = array<i64: 64, 32>}, {pipeline_mode = #tpu.pipeline_mode<synchronous>, transform_indices = @transform_26, window_bounds = array<i64: 1, 32>}, {transform_indices = @transform_27, window_bounds = array<i64: 1, 64, 256>}, {transform_indices = @transform_28, window_bounds = array<i64: 1, 8, 256>}]} {
    %c0 = arith.constant 0 : index
    %c0_0 = arith.constant 0 : index
    %c0_1 = arith.constant 0 : index
    %0 = vector.load %arg1[%c0, %c0_0, %c0_1] : memref<1x3x256xf32, #tpu.memory_space<vmem>>, vector<1x3x256xf32>
    %1 = vector.shape_cast %0 : vector<1x3x256xf32> to vector<3x256xf32>
    %cst = arith.constant 0.000000e+00 : f32
    %2 = vector.broadcast %cst : f32 to vector<29x256xf32>
    %3 = tpu.concatenate %1, %2 in 0 : vector<3x256xf32>, vector<29x256xf32> -> vector<32x256xf32>
    %c17_i32 = arith.constant 17 : i32
    %4 = tpu.dynamic_rotate %3 by %c17_i32 dim 1 : vector<32x256xf32>, i32 -> vector<32x256xf32>
    %c0_2 = arith.constant 0 : index
    %c0_3 = arith.constant 0 : index
    %5 = vector.load %arg5[%c0_2, %c0_3] : memref<9x256xf32, #tpu.memory_space<vmem>>, vector<1x256xf32>
    %6 = vector.broadcast %5 : vector<1x256xf32> to vector<32x256xf32>
    %7 = arith.mulf %4, %6 : vector<32x256xf32>
    %c0_4 = arith.constant 0 : index
    %c0_5 = arith.constant 0 : index
    %8 = vector.load %arg30[%c0_4, %c0_5] : memref<288x256xf32, #tpu.memory_space<vmem>>, vector<32x256xf32>
    tpu.vector_store %arg30[%c0_4, %c0_5], %7 {strides = array<i32>} : memref<288x256xf32, #tpu.memory_space<vmem>>, vector<32x256xf32>,
    %c16_i32 = arith.constant 16 : i32
    %9 = tpu.dynamic_rotate %3 by %c16_i32 dim 1 : vector<32x256xf32>, i32 -> vector<32x256xf32>
    %c1 = arith.constant 1 : index
    %c0_6 = arith.constant 0 : index
    %10 = vector.load %arg5[%c1, %c0_6] : memref<9x256xf32, #tpu.memory_space<vmem>>, vector<1x256xf32>
    %11 = vector.broadcast %10 : vector<1x256xf32> to vector<32x256xf32>
    %12 = arith.mulf %9, %11 : vector<32x256xf32>
    %c32 = arith.constant 32 : index
    %c0_7 = arith.constant 0 : index
    %13 = vector.load %arg30[%c32, %c0_7] : memref<288x256xf32, #tpu.memory_space<vmem>>, vector<32x256xf32>
    tpu.vector_store %arg30[%c32, %c0_7], %12 {strides = array<i32>} : memref<288x256xf32, #tpu.memory_space<vmem>>, vector<32x256xf32>,
    %c15_i32 = arith.constant 15 : i32
    %14 = tpu.dynamic_rotate %3 by %c15_i32 dim 1 : vector<32x256xf32>, i32 -> vector<32x256xf32>
    %c2 = arith.constant 2 : index
    %c0_8 = arith.constant 0 : index
    %15 = vector.load %arg5[%c2, %c0_8] : memref<9x256xf32, #tpu.memory_space<vmem>>, vector<1x256xf32>
    %16 = vector.broadcast %15 : vector<1x256xf32> to vector<32x256xf32>
    %17 = arith.mulf %14, %16 : vector<32x256xf32>
    %c64 = arith.constant 64 : index
    %c0_9 = arith.constant 0 : index
    %18 = vector.load %arg30[%c64, %c0_9] : memref<288x256xf32, #tpu.memory_space<vmem>>, vector<32x256xf32>
    tpu.vector_store %arg30[%c64, %c0_9], %17 {strides = array<i32>} : memref<288x256xf32, #tpu.memory_space<vmem>>, vector<32x256xf32>,
    %c1_i32 = arith.constant 1 : i32
    %19 = tpu.dynamic_rotate %3 by %c1_i32 dim 1 : vector<32x256xf32>, i32 -> vector<32x256xf32>
    %c3 = arith.constant 3 : index
    %c0_10 = arith.constant 0 : index
    %20 = vector.load %arg5[%c3, %c0_10] : memref<9x256xf32, #tpu.memory_space<vmem>>, vector<1x256xf32>
    %21 = vector.broadcast %20 : vector<1x256xf32> to vector<32x256xf32>
    %22 = arith.mulf %19, %21 : vector<32x256xf32>
    %c96 = arith.constant 96 : index
    %c0_11 = arith.constant 0 : index
    %23 = vector.load %arg30[%c96, %c0_11] : memref<288x256xf32, #tpu.memory_space<vmem>>, vector<32x256xf32>
    tpu.vector_store %arg30[%c96, %c0_11], %22 {strides = array<i32>} : memref<288x256xf32, #tpu.memory_space<vmem>>, vector<32x256xf32>,
    %c128 = arith.constant 128 : index
    %c0_12 = arith.constant 0 : index
    %24 = vector.load %arg30[%c128, %c0_12] : memref<288x256xf32, #tpu.memory_space<vmem>>, vector<32x256xf32>
    tpu.vector_store %arg30[%c128, %c0_12], %3 {strides = array<i32>} : memref<288x256xf32, #tpu.memory_space<vmem>>, vector<32x256xf32>,
    %c255_i32 = arith.constant 255 : i32
    %25 = tpu.dynamic_rotate %3 by %c255_i32 dim 1 : vector<32x256xf32>, i32 -> vector<32x256xf32>
    %c5 = arith.constant 5 : index
    %c0_13 = arith.constant 0 : index
    %26 = vector.load %arg5[%c5, %c0_13] : memref<9x256xf32, #tpu.memory_space<vmem>>, vector<1x256xf32>
    %27 = vector.broadcast %26 : vector<1x256xf32> to vector<32x256xf32>
    %28 = arith.mulf %25, %27 : vector<32x256xf32>
    %c160 = arith.constant 160 : index
    %c0_14 = arith.constant 0 : index
    %29 = vector.load %arg30[%c160, %c0_14] : memref<288x256xf32, #tpu.memory_space<vmem>>, vector<32x256xf32>
    tpu.vector_store %arg30[%c160, %c0_14], %28 {strides = array<i32>} : memref<288x256xf32, #tpu.memory_space<vmem>>, vector<32x256xf32>,
    %c241_i32 = arith.constant 241 : i32
    %30 = tpu.dynamic_rotate %3 by %c241_i32 dim 1 : vector<32x256xf32>, i32 -> vector<32x256xf32>
    %c6 = arith.constant 6 : index
    %c0_15 = arith.constant 0 : index
    %31 = vector.load %arg5[%c6, %c0_15] : memref<9x256xf32, #tpu.memory_space<vmem>>, vector<1x256xf32>
    %32 = vector.broadcast %31 : vector<1x256xf32> to vector<32x256xf32>
    %33 = arith.mulf %30, %32 : vector<32x256xf32>
    %c192 = arith.constant 192 : index
    %c0_16 = arith.constant 0 : index
    %34 = vector.load %arg30[%c192, %c0_16] : memref<288x256xf32, #tpu.memory_space<vmem>>, vector<32x256xf32>
    tpu.vector_store %arg30[%c192, %c0_16], %33 {strides = array<i32>} : memref<288x256xf32, #tpu.memory_space<vmem>>, vector<32x256xf32>,
    %c240_i32 = arith.constant 240 : i32
    %35 = tpu.dynamic_rotate %3 by %c240_i32 dim 1 : vector<32x256xf32>, i32 -> vector<32x256xf32>
    %c7 = arith.constant 7 : index
    %c0_17 = arith.constant 0 : index
    %36 = vector.load %arg5[%c7, %c0_17] : memref<9x256xf32, #tpu.memory_space<vmem>>, vector<1x256xf32>
    %37 = vector.broadcast %36 : vector<1x256xf32> to vector<32x256xf32>
    %38 = arith.mulf %35, %37 : vector<32x256xf32>
    %c224 = arith.constant 224 : index
    %c0_18 = arith.constant 0 : index
    %39 = vector.load %arg30[%c224, %c0_18] : memref<288x256xf32, #tpu.memory_space<vmem>>, vector<32x256xf32>
    tpu.vector_store %arg30[%c224, %c0_18], %38 {strides = array<i32>} : memref<288x256xf32, #tpu.memory_space<vmem>>, vector<32x256xf32>,
    %c239_i32 = arith.constant 239 : i32
    %40 = tpu.dynamic_rotate %3 by %c239_i32 dim 1 : vector<32x256xf32>, i32 -> vector<32x256xf32>
    %c8 = arith.constant 8 : index
    %c0_19 = arith.constant 0 : index
    %41 = vector.load %arg5[%c8, %c0_19] : memref<9x256xf32, #tpu.memory_space<vmem>>, vector<1x256xf32>
    %42 = vector.broadcast %41 : vector<1x256xf32> to vector<32x256xf32>
    %43 = arith.mulf %40, %42 : vector<32x256xf32>
    %c256 = arith.constant 256 : index
    %c0_20 = arith.constant 0 : index
    %44 = vector.load %arg30[%c256, %c0_20] : memref<288x256xf32, #tpu.memory_space<vmem>>, vector<32x256xf32>
    tpu.vector_store %arg30[%c256, %c0_20], %43 {strides = array<i32>} : memref<288x256xf32, #tpu.memory_space<vmem>>, vector<32x256xf32>,
    %c0_21 = arith.constant 0 : index
    %c0_22 = arith.constant 0 : index
    %c0_23 = arith.constant 0 : index
    %45 = vector.load %arg6[%c0_21, %c0_22, %c0_23] : memref<6x32x288xf32, #tpu.memory_space<vmem>>, vector<1x32x288xf32>
    %46 = vector.shape_cast %45 : vector<1x32x288xf32> to vector<32x288xf32>
    %c0_24 = arith.constant 0 : index
    %c0_25 = arith.constant 0 : index
    %47 = vector.load %arg30[%c0_24, %c0_25] : memref<288x256xf32, #tpu.memory_space<vmem>>, vector<288x256xf32>
    %cst_26 = arith.constant dense<0.000000e+00> : vector<32x256xf32>
    %48 = tpu.matmul %46, %47, %cst_26 {dimension_numbers = #tpu.dot_dimension_numbers<[1], [0], [0], [1], [0, 0, 1, 1], [], []>} : vector<32x288xf32>, vector<288x256xf32>, vector<32x256xf32> -> vector<32x256xf32>
    %c0_27 = arith.constant 0 : index
    %c0_28 = arith.constant 0 : index
    %c0_29 = arith.constant 0 : index
    %49 = vector.load %arg7[%c0_27, %c0_28, %c0_29] : memref<6x32x1xf32, #tpu.memory_space<vmem>>, vector<1x32x1xf32>
    %50 = vector.shape_cast %49 : vector<1x32x1xf32> to vector<32x1xf32>
    %51 = vector.broadcast %50 : vector<32x1xf32> to vector<32x256xf32>
    %52 = arith.addf %48, %51 : vector<32x256xf32>
    %c17_i32_30 = arith.constant 17 : i32
    %53 = tpu.dynamic_rotate %52 by %c17_i32_30 dim 1 : vector<32x256xf32>, i32 -> vector<32x256xf32>
    %c0_31 = arith.constant 0 : index
    %c0_32 = arith.constant 0 : index
    %54 = vector.load %arg5[%c0_31, %c0_32] : memref<9x256xf32, #tpu.memory_space<vmem>>, vector<1x256xf32>
    %55 = vector.broadcast %54 : vector<1x256xf32> to vector<32x256xf32>
    %56 = arith.mulf %53, %55 : vector<32x256xf32>
    %c0_33 = arith.constant 0 : index
    %c0_34 = arith.constant 0 : index
    %57 = vector.load %arg30[%c0_33, %c0_34] : memref<288x256xf32, #tpu.memory_space<vmem>>, vector<32x256xf32>
    tpu.vector_store %arg30[%c0_33, %c0_34], %56 {strides = array<i32>} : memref<288x256xf32, #tpu.memory_space<vmem>>, vector<32x256xf32>,
    %c16_i32_35 = arith.constant 16 : i32
    %58 = tpu.dynamic_rotate %52 by %c16_i32_35 dim 1 : vector<32x256xf32>, i32 -> vector<32x256xf32>
    %c1_36 = arith.constant 1 : index
    %c0_37 = arith.constant 0 : index
    %59 = vector.load %arg5[%c1_36, %c0_37] : memref<9x256xf32, #tpu.memory_space<vmem>>, vector<1x256xf32>
    %60 = vector.broadcast %59 : vector<1x256xf32> to vector<32x256xf32>
    %61 = arith.mulf %58, %60 : vector<32x256xf32>
    %c32_38 = arith.constant 32 : index
    %c0_39 = arith.constant 0 : index
    %62 = vector.load %arg30[%c32_38, %c0_39] : memref<288x256xf32, #tpu.memory_space<vmem>>, vector<32x256xf32>
    tpu.vector_store %arg30[%c32_38, %c0_39], %61 {strides = array<i32>} : memref<288x256xf32, #tpu.memory_space<vmem>>, vector<32x256xf32>,
    %c15_i32_40 = arith.constant 15 : i32
    %63 = tpu.dynamic_rotate %52 by %c15_i32_40 dim 1 : vector<32x256xf32>, i32 -> vector<32x256xf32>
    %c2_41 = arith.constant 2 : index
    %c0_42 = arith.constant 0 : index
    %64 = vector.load %arg5[%c2_41, %c0_42] : memref<9x256xf32, #tpu.memory_space<vmem>>, vector<1x256xf32>
    %65 = vector.broadcast %64 : vector<1x256xf32> to vector<32x256xf32>
    %66 = arith.mulf %63, %65 : vector<32x256xf32>
    %c64_43 = arith.constant 64 : index
    %c0_44 = arith.constant 0 : index
    %67 = vector.load %arg30[%c64_43, %c0_44] : memref<288x256xf32, #tpu.memory_space<vmem>>, vector<32x256xf32>
    tpu.vector_store %arg30[%c64_43, %c0_44], %66 {strides = array<i32>} : memref<288x256xf32, #tpu.memory_space<vmem>>, vector<32x256xf32>,
    %c1_i32_45 = arith.constant 1 : i32
    %68 = tpu.dynamic_rotate %52 by %c1_i32_45 dim 1 : vector<32x256xf32>, i32 -> vector<32x256xf32>
    %c3_46 = arith.constant 3 : index
    %c0_47 = arith.constant 0 : index
    %69 = vector.load %arg5[%c3_46, %c0_47] : memref<9x256xf32, #tpu.memory_space<vmem>>, vector<1x256xf32>
    %70 = vector.broadcast %69 : vector<1x256xf32> to vector<32x256xf32>
    %71 = arith.mulf %68, %70 : vector<32x256xf32>
    %c96_48 = arith.constant 96 : index
    %c0_49 = arith.constant 0 : index
    %72 = vector.load %arg30[%c96_48, %c0_49] : memref<288x256xf32, #tpu.memory_space<vmem>>, vector<32x256xf32>
    tpu.vector_store %arg30[%c96_48, %c0_49], %71 {strides = array<i32>} : memref<288x256xf32, #tpu.memory_space<vmem>>, vector<32x256xf32>,
    %c128_50 = arith.constant 128 : index
    %c0_51 = arith.constant 0 : index
    %73 = vector.load %arg30[%c128_50, %c0_51] : memref<288x256xf32, #tpu.memory_space<vmem>>, vector<32x256xf32>
    tpu.vector_store %arg30[%c128_50, %c0_51], %52 {strides = array<i32>} : memref<288x256xf32, #tpu.memory_space<vmem>>, vector<32x256xf32>,
    %c255_i32_52 = arith.constant 255 : i32
    %74 = tpu.dynamic_rotate %52 by %c255_i32_52 dim 1 : vector<32x256xf32>, i32 -> vector<32x256xf32>
    %c5_53 = arith.constant 5 : index
    %c0_54 = arith.constant 0 : index
    %75 = vector.load %arg5[%c5_53, %c0_54] : memref<9x256xf32, #tpu.memory_space<vmem>>, vector<1x256xf32>
    %76 = vector.broadcast %75 : vector<1x256xf32> to vector<32x256xf32>
    %77 = arith.mulf %74, %76 : vector<32x256xf32>
    %c160_55 = arith.constant 160 : index
    %c0_56 = arith.constant 0 : index
    %78 = vector.load %arg30[%c160_55, %c0_56] : memref<288x256xf32, #tpu.memory_space<vmem>>, vector<32x256xf32>
    tpu.vector_store %arg30[%c160_55, %c0_56], %77 {strides = array<i32>} : memref<288x256xf32, #tpu.memory_space<vmem>>, vector<32x256xf32>,
    %c241_i32_57 = arith.constant 241 : i32
    %79 = tpu.dynamic_rotate %52 by %c241_i32_57 dim 1 : vector<32x256xf32>, i32 -> vector<32x256xf32>
    %c6_58 = arith.constant 6 : index
    %c0_59 = arith.constant 0 : index
    %80 = vector.load %arg5[%c6_58, %c0_59] : memref<9x256xf32, #tpu.memory_space<vmem>>, vector<1x256xf32>
    %81 = vector.broadcast %80 : vector<1x256xf32> to vector<32x256xf32>
    %82 = arith.mulf %79, %81 : vector<32x256xf32>
    %c192_60 = arith.constant 192 : index
    %c0_61 = arith.constant 0 : index
    %83 = vector.load %arg30[%c192_60, %c0_61] : memref<288x256xf32, #tpu.memory_space<vmem>>, vector<32x256xf32>
    tpu.vector_store %arg30[%c192_60, %c0_61], %82 {strides = array<i32>} : memref<288x256xf32, #tpu.memory_space<vmem>>, vector<32x256xf32>,
    %c240_i32_62 = arith.constant 240 : i32
    %84 = tpu.dynamic_rotate %52 by %c240_i32_62 dim 1 : vector<32x256xf32>, i32 -> vector<32x256xf32>
    %c7_63 = arith.constant 7 : index
    %c0_64 = arith.constant 0 : index
    %85 = vector.load %arg5[%c7_63, %c0_64] : memref<9x256xf32, #tpu.memory_space<vmem>>, vector<1x256xf32>
    %86 = vector.broadcast %85 : vector<1x256xf32> to vector<32x256xf32>
    %87 = arith.mulf %84, %86 : vector<32x256xf32>
    %c224_65 = arith.constant 224 : index
    %c0_66 = arith.constant 0 : index
    %88 = vector.load %arg30[%c224_65, %c0_66] : memref<288x256xf32, #tpu.memory_space<vmem>>, vector<32x256xf32>
    tpu.vector_store %arg30[%c224_65, %c0_66], %87 {strides = array<i32>} : memref<288x256xf32, #tpu.memory_space<vmem>>, vector<32x256xf32>,
    %c239_i32_67 = arith.constant 239 : i32
    %89 = tpu.dynamic_rotate %52 by %c239_i32_67 dim 1 : vector<32x256xf32>, i32 -> vector<32x256xf32>
    %c8_68 = arith.constant 8 : index
    %c0_69 = arith.constant 0 : index
    %90 = vector.load %arg5[%c8_68, %c0_69] : memref<9x256xf32, #tpu.memory_space<vmem>>, vector<1x256xf32>
    %91 = vector.broadcast %90 : vector<1x256xf32> to vector<32x256xf32>
    %92 = arith.mulf %89, %91 : vector<32x256xf32>
    %c256_70 = arith.constant 256 : index
    %c0_71 = arith.constant 0 : index
    %93 = vector.load %arg30[%c256_70, %c0_71] : memref<288x256xf32, #tpu.memory_space<vmem>>, vector<32x256xf32>
    tpu.vector_store %arg30[%c256_70, %c0_71], %92 {strides = array<i32>} : memref<288x256xf32, #tpu.memory_space<vmem>>, vector<32x256xf32>,
    %c1_72 = arith.constant 1 : index
    %c0_73 = arith.constant 0 : index
    %c0_74 = arith.constant 0 : index
    %94 = vector.load %arg6[%c1_72, %c0_73, %c0_74] : memref<6x32x288xf32, #tpu.memory_space<vmem>>, vector<1x32x288xf32>
    %95 = vector.shape_cast %94 : vector<1x32x288xf32> to vector<32x288xf32>
    %c0_75 = arith.constant 0 : index
    %c0_76 = arith.constant 0 : index
    %96 = vector.load %arg30[%c0_75, %c0_76] : memref<288x256xf32, #tpu.memory_space<vmem>>, vector<288x256xf32>
    %cst_77 = arith.constant dense<0.000000e+00> : vector<32x256xf32>
    %97 = tpu.matmul %95, %96, %cst_77 {dimension_numbers = #tpu.dot_dimension_numbers<[1], [0], [0], [1], [0, 0, 1, 1], [], []>} : vector<32x288xf32>, vector<288x256xf32>, vector<32x256xf32> -> vector<32x256xf32>
    %c1_78 = arith.constant 1 : index
    %c0_79 = arith.constant 0 : index
    %c0_80 = arith.constant 0 : index
    %98 = vector.load %arg7[%c1_78, %c0_79, %c0_80] : memref<6x32x1xf32, #tpu.memory_space<vmem>>, vector<1x32x1xf32>
    %99 = vector.shape_cast %98 : vector<1x32x1xf32> to vector<32x1xf32>
    %100 = vector.broadcast %99 : vector<32x1xf32> to vector<32x256xf32>
    %101 = arith.addf %97, %100 : vector<32x256xf32>
    %cst_81 = arith.constant 0.000000e+00 : f32
    %102 = vector.broadcast %cst_81 : f32 to vector<32x256xf32>
    %103 = arith.maximumf %101, %102 : vector<32x256xf32>
    %c17_i32_82 = arith.constant 17 : i32
    %104 = tpu.dynamic_rotate %103 by %c17_i32_82 dim 1 : vector<32x256xf32>, i32 -> vector<32x256xf32>
    %c0_83 = arith.constant 0 : index
    %c0_84 = arith.constant 0 : index
    %105 = vector.load %arg5[%c0_83, %c0_84] : memref<9x256xf32, #tpu.memory_space<vmem>>, vector<1x256xf32>
    %106 = vector.broadcast %105 : vector<1x256xf32> to vector<32x256xf32>
    %107 = arith.mulf %104, %106 : vector<32x256xf32>
    %c0_85 = arith.constant 0 : index
    %c0_86 = arith.constant 0 : index
    %108 = vector.load %arg30[%c0_85, %c0_86] : memref<288x256xf32, #tpu.memory_space<vmem>>, vector<32x256xf32>
    tpu.vector_store %arg30[%c0_85, %c0_86], %107 {strides = array<i32>} : memref<288x256xf32, #tpu.memory_space<vmem>>, vector<32x256xf32>,
    %c16_i32_87 = arith.constant 16 : i32
    %109 = tpu.dynamic_rotate %103 by %c16_i32_87 dim 1 : vector<32x256xf32>, i32 -> vector<32x256xf32>
    %c1_88 = arith.constant 1 : index
    %c0_89 = arith.constant 0 : index
    %110 = vector.load %arg5[%c1_88, %c0_89] : memref<9x256xf32, #tpu.memory_space<vmem>>, vector<1x256xf32>
    %111 = vector.broadcast %110 : vector<1x256xf32> to vector<32x256xf32>
    %112 = arith.mulf %109, %111 : vector<32x256xf32>
    %c32_90 = arith.constant 32 : index
    %c0_91 = arith.constant 0 : index
    %113 = vector.load %arg30[%c32_90, %c0_91] : memref<288x256xf32, #tpu.memory_space<vmem>>, vector<32x256xf32>
    tpu.vector_store %arg30[%c32_90, %c0_91], %112 {strides = array<i32>} : memref<288x256xf32, #tpu.memory_space<vmem>>, vector<32x256xf32>,
    %c15_i32_92 = arith.constant 15 : i32
    %114 = tpu.dynamic_rotate %103 by %c15_i32_92 dim 1 : vector<32x256xf32>, i32 -> vector<32x256xf32>
    %c2_93 = arith.constant 2 : index
    %c0_94 = arith.constant 0 : index
    %115 = vector.load %arg5[%c2_93, %c0_94] : memref<9x256xf32, #tpu.memory_space<vmem>>, vector<1x256xf32>
    %116 = vector.broadcast %115 : vector<1x256xf32> to vector<32x256xf32>
    %117 = arith.mulf %114, %116 : vector<32x256xf32>
    %c64_95 = arith.constant 64 : index
    %c0_96 = arith.constant 0 : index
    %118 = vector.load %arg30[%c64_95, %c0_96] : memref<288x256xf32, #tpu.memory_space<vmem>>, vector<32x256xf32>
    tpu.vector_store %arg30[%c64_95, %c0_96], %117 {strides = array<i32>} : memref<288x256xf32, #tpu.memory_space<vmem>>, vector<32x256xf32>,
    %c1_i32_97 = arith.constant 1 : i32
    %119 = tpu.dynamic_rotate %103 by %c1_i32_97 dim 1 : vector<32x256xf32>, i32 -> vector<32x256xf32>
    %c3_98 = arith.constant 3 : index
    %c0_99 = arith.constant 0 : index
    %120 = vector.load %arg5[%c3_98, %c0_99] : memref<9x256xf32, #tpu.memory_space<vmem>>, vector<1x256xf32>
    %121 = vector.broadcast %120 : vector<1x256xf32> to vector<32x256xf32>
    %122 = arith.mulf %119, %121 : vector<32x256xf32>
    %c96_100 = arith.constant 96 : index
    %c0_101 = arith.constant 0 : index
    %123 = vector.load %arg30[%c96_100, %c0_101] : memref<288x256xf32, #tpu.memory_space<vmem>>, vector<32x256xf32>
    tpu.vector_store %arg30[%c96_100, %c0_101], %122 {strides = array<i32>} : memref<288x256xf32, #tpu.memory_space<vmem>>, vector<32x256xf32>,
    %c128_102 = arith.constant 128 : index
    %c0_103 = arith.constant 0 : index
    %124 = vector.load %arg30[%c128_102, %c0_103] : memref<288x256xf32, #tpu.memory_space<vmem>>, vector<32x256xf32>
    tpu.vector_store %arg30[%c128_102, %c0_103], %103 {strides = array<i32>} : memref<288x256xf32, #tpu.memory_space<vmem>>, vector<32x256xf32>,
    %c255_i32_104 = arith.constant 255 : i32
    %125 = tpu.dynamic_rotate %103 by %c255_i32_104 dim 1 : vector<32x256xf32>, i32 -> vector<32x256xf32>
    %c5_105 = arith.constant 5 : index
    %c0_106 = arith.constant 0 : index
    %126 = vector.load %arg5[%c5_105, %c0_106] : memref<9x256xf32, #tpu.memory_space<vmem>>, vector<1x256xf32>
    %127 = vector.broadcast %126 : vector<1x256xf32> to vector<32x256xf32>
    %128 = arith.mulf %125, %127 : vector<32x256xf32>
    %c160_107 = arith.constant 160 : index
    %c0_108 = arith.constant 0 : index
    %129 = vector.load %arg30[%c160_107, %c0_108] : memref<288x256xf32, #tpu.memory_space<vmem>>, vector<32x256xf32>
    tpu.vector_store %arg30[%c160_107, %c0_108], %128 {strides = array<i32>} : memref<288x256xf32, #tpu.memory_space<vmem>>, vector<32x256xf32>,
    %c241_i32_109 = arith.constant 241 : i32
    %130 = tpu.dynamic_rotate %103 by %c241_i32_109 dim 1 : vector<32x256xf32>, i32 -> vector<32x256xf32>
    %c6_110 = arith.constant 6 : index
    %c0_111 = arith.constant 0 : index
    %131 = vector.load %arg5[%c6_110, %c0_111] : memref<9x256xf32, #tpu.memory_space<vmem>>, vector<1x256xf32>
    %132 = vector.broadcast %131 : vector<1x256xf32> to vector<32x256xf32>
    %133 = arith.mulf %130, %132 : vector<32x256xf32>
    %c192_112 = arith.constant 192 : index
    %c0_113 = arith.constant 0 : index
    %134 = vector.load %arg30[%c192_112, %c0_113] : memref<288x256xf32, #tpu.memory_space<vmem>>, vector<32x256xf32>
    tpu.vector_store %arg30[%c192_112, %c0_113], %133 {strides = array<i32>} : memref<288x256xf32, #tpu.memory_space<vmem>>, vector<32x256xf32>,
    %c240_i32_114 = arith.constant 240 : i32
    %135 = tpu.dynamic_rotate %103 by %c240_i32_114 dim 1 : vector<32x256xf32>, i32 -> vector<32x256xf32>
    %c7_115 = arith.constant 7 : index
    %c0_116 = arith.constant 0 : index
    %136 = vector.load %arg5[%c7_115, %c0_116] : memref<9x256xf32, #tpu.memory_space<vmem>>, vector<1x256xf32>
    %137 = vector.broadcast %136 : vector<1x256xf32> to vector<32x256xf32>
    %138 = arith.mulf %135, %137 : vector<32x256xf32>
    %c224_117 = arith.constant 224 : index
    %c0_118 = arith.constant 0 : index
    %139 = vector.load %arg30[%c224_117, %c0_118] : memref<288x256xf32, #tpu.memory_space<vmem>>, vector<32x256xf32>
    tpu.vector_store %arg30[%c224_117, %c0_118], %138 {strides = array<i32>} : memref<288x256xf32, #tpu.memory_space<vmem>>, vector<32x256xf32>,
    %c239_i32_119 = arith.constant 239 : i32
    %140 = tpu.dynamic_rotate %103 by %c239_i32_119 dim 1 : vector<32x256xf32>, i32 -> vector<32x256xf32>
    %c8_120 = arith.constant 8 : index
    %c0_121 = arith.constant 0 : index
    %141 = vector.load %arg5[%c8_120, %c0_121] : memref<9x256xf32, #tpu.memory_space<vmem>>, vector<1x256xf32>
    %142 = vector.broadcast %141 : vector<1x256xf32> to vector<32x256xf32>
    %143 = arith.mulf %140, %142 : vector<32x256xf32>
    %c256_122 = arith.constant 256 : index
    %c0_123 = arith.constant 0 : index
    %144 = vector.load %arg30[%c256_122, %c0_123] : memref<288x256xf32, #tpu.memory_space<vmem>>, vector<32x256xf32>
    tpu.vector_store %arg30[%c256_122, %c0_123], %143 {strides = array<i32>} : memref<288x256xf32, #tpu.memory_space<vmem>>, vector<32x256xf32>,
    %c2_124 = arith.constant 2 : index
    %c0_125 = arith.constant 0 : index
    %c0_126 = arith.constant 0 : index
    %145 = vector.load %arg6[%c2_124, %c0_125, %c0_126] : memref<6x32x288xf32, #tpu.memory_space<vmem>>, vector<1x32x288xf32>
    %146 = vector.shape_cast %145 : vector<1x32x288xf32> to vector<32x288xf32>
    %c0_127 = arith.constant 0 : index
    %c0_128 = arith.constant 0 : index
    %147 = vector.load %arg30[%c0_127, %c0_128] : memref<288x256xf32, #tpu.memory_space<vmem>>, vector<288x256xf32>
    %cst_129 = arith.constant dense<0.000000e+00> : vector<32x256xf32>
    %148 = tpu.matmul %146, %147, %cst_129 {dimension_numbers = #tpu.dot_dimension_numbers<[1], [0], [0], [1], [0, 0, 1, 1], [], []>} : vector<32x288xf32>, vector<288x256xf32>, vector<32x256xf32> -> vector<32x256xf32>
    %c2_130 = arith.constant 2 : index
    %c0_131 = arith.constant 0 : index
    %c0_132 = arith.constant 0 : index
    %149 = vector.load %arg7[%c2_130, %c0_131, %c0_132] : memref<6x32x1xf32, #tpu.memory_space<vmem>>, vector<1x32x1xf32>
    %150 = vector.shape_cast %149 : vector<1x32x1xf32> to vector<32x1xf32>
    %151 = vector.broadcast %150 : vector<32x1xf32> to vector<32x256xf32>
    %152 = arith.addf %148, %151 : vector<32x256xf32>
    %cst_133 = arith.constant 1.000000e+00 : f32
    %153 = vector.broadcast %cst_133 : f32 to vector<32x256xf32>
    %154 = arith.mulf %153, %152 : vector<32x256xf32>
    %155 = arith.addf %52, %154 : vector<32x256xf32>
    %c17_i32_134 = arith.constant 17 : i32
    %156 = tpu.dynamic_rotate %155 by %c17_i32_134 dim 1 : vector<32x256xf32>, i32 -> vector<32x256xf32>
    %c0_135 = arith.constant 0 : index
    %c0_136 = arith.constant 0 : index
    %157 = vector.load %arg5[%c0_135, %c0_136] : memref<9x256xf32, #tpu.memory_space<vmem>>, vector<1x256xf32>
    %158 = vector.broadcast %157 : vector<1x256xf32> to vector<32x256xf32>
    %159 = arith.mulf %156, %158 : vector<32x256xf32>
    %c0_137 = arith.constant 0 : index
    %c0_138 = arith.constant 0 : index
    %160 = vector.load %arg30[%c0_137, %c0_138] : memref<288x256xf32, #tpu.memory_space<vmem>>, vector<32x256xf32>
    tpu.vector_store %arg30[%c0_137, %c0_138], %159 {strides = array<i32>} : memref<288x256xf32, #tpu.memory_space<vmem>>, vector<32x256xf32>,
    %c16_i32_139 = arith.constant 16 : i32
    %161 = tpu.dynamic_rotate %155 by %c16_i32_139 dim 1 : vector<32x256xf32>, i32 -> vector<32x256xf32>
    %c1_140 = arith.constant 1 : index
    %c0_141 = arith.constant 0 : index
    %162 = vector.load %arg5[%c1_140, %c0_141] : memref<9x256xf32, #tpu.memory_space<vmem>>, vector<1x256xf32>
    %163 = vector.broadcast %162 : vector<1x256xf32> to vector<32x256xf32>
    %164 = arith.mulf %161, %163 : vector<32x256xf32>
    %c32_142 = arith.constant 32 : index
    %c0_143 = arith.constant 0 : index
    %165 = vector.load %arg30[%c32_142, %c0_143] : memref<288x256xf32, #tpu.memory_space<vmem>>, vector<32x256xf32>
    tpu.vector_store %arg30[%c32_142, %c0_143], %164 {strides = array<i32>} : memref<288x256xf32, #tpu.memory_space<vmem>>, vector<32x256xf32>,
    %c15_i32_144 = arith.constant 15 : i32
    %166 = tpu.dynamic_rotate %155 by %c15_i32_144 dim 1 : vector<32x256xf32>, i32 -> vector<32x256xf32>
    %c2_145 = arith.constant 2 : index
    %c0_146 = arith.constant 0 : index
    %167 = vector.load %arg5[%c2_145, %c0_146] : memref<9x256xf32, #tpu.memory_space<vmem>>, vector<1x256xf32>
    %168 = vector.broadcast %167 : vector<1x256xf32> to vector<32x256xf32>
    %169 = arith.mulf %166, %168 : vector<32x256xf32>
    %c64_147 = arith.constant 64 : index
    %c0_148 = arith.constant 0 : index
    %170 = vector.load %arg30[%c64_147, %c0_148] : memref<288x256xf32, #tpu.memory_space<vmem>>, vector<32x256xf32>
    tpu.vector_store %arg30[%c64_147, %c0_148], %169 {strides = array<i32>} : memref<288x256xf32, #tpu.memory_space<vmem>>, vector<32x256xf32>,
    %c1_i32_149 = arith.constant 1 : i32
    %171 = tpu.dynamic_rotate %155 by %c1_i32_149 dim 1 : vector<32x256xf32>, i32 -> vector<32x256xf32>
    %c3_150 = arith.constant 3 : index
    %c0_151 = arith.constant 0 : index
    %172 = vector.load %arg5[%c3_150, %c0_151] : memref<9x256xf32, #tpu.memory_space<vmem>>, vector<1x256xf32>
    %173 = vector.broadcast %172 : vector<1x256xf32> to vector<32x256xf32>
    %174 = arith.mulf %171, %173 : vector<32x256xf32>
    %c96_152 = arith.constant 96 : index
    %c0_153 = arith.constant 0 : index
    %175 = vector.load %arg30[%c96_152, %c0_153] : memref<288x256xf32, #tpu.memory_space<vmem>>, vector<32x256xf32>
    tpu.vector_store %arg30[%c96_152, %c0_153], %174 {strides = array<i32>} : memref<288x256xf32, #tpu.memory_space<vmem>>, vector<32x256xf32>,
    %c128_154 = arith.constant 128 : index
    %c0_155 = arith.constant 0 : index
    %176 = vector.load %arg30[%c128_154, %c0_155] : memref<288x256xf32, #tpu.memory_space<vmem>>, vector<32x256xf32>
    tpu.vector_store %arg30[%c128_154, %c0_155], %155 {strides = array<i32>} : memref<288x256xf32, #tpu.memory_space<vmem>>, vector<32x256xf32>,
    %c255_i32_156 = arith.constant 255 : i32
    %177 = tpu.dynamic_rotate %155 by %c255_i32_156 dim 1 : vector<32x256xf32>, i32 -> vector<32x256xf32>
    %c5_157 = arith.constant 5 : index
    %c0_158 = arith.constant 0 : index
    %178 = vector.load %arg5[%c5_157, %c0_158] : memref<9x256xf32, #tpu.memory_space<vmem>>, vector<1x256xf32>
    %179 = vector.broadcast %178 : vector<1x256xf32> to vector<32x256xf32>
    %180 = arith.mulf %177, %179 : vector<32x256xf32>
    %c160_159 = arith.constant 160 : index
    %c0_160 = arith.constant 0 : index
    %181 = vector.load %arg30[%c160_159, %c0_160] : memref<288x256xf32, #tpu.memory_space<vmem>>, vector<32x256xf32>
    tpu.vector_store %arg30[%c160_159, %c0_160], %180 {strides = array<i32>} : memref<288x256xf32, #tpu.memory_space<vmem>>, vector<32x256xf32>,
    %c241_i32_161 = arith.constant 241 : i32
    %182 = tpu.dynamic_rotate %155 by %c241_i32_161 dim 1 : vector<32x256xf32>, i32 -> vector<32x256xf32>
    %c6_162 = arith.constant 6 : index
    %c0_163 = arith.constant 0 : index
    %183 = vector.load %arg5[%c6_162, %c0_163] : memref<9x256xf32, #tpu.memory_space<vmem>>, vector<1x256xf32>
    %184 = vector.broadcast %183 : vector<1x256xf32> to vector<32x256xf32>
    %185 = arith.mulf %182, %184 : vector<32x256xf32>
    %c192_164 = arith.constant 192 : index
    %c0_165 = arith.constant 0 : index
    %186 = vector.load %arg30[%c192_164, %c0_165] : memref<288x256xf32, #tpu.memory_space<vmem>>, vector<32x256xf32>
    tpu.vector_store %arg30[%c192_164, %c0_165], %185 {strides = array<i32>} : memref<288x256xf32, #tpu.memory_space<vmem>>, vector<32x256xf32>,
    %c240_i32_166 = arith.constant 240 : i32
    %187 = tpu.dynamic_rotate %155 by %c240_i32_166 dim 1 : vector<32x256xf32>, i32 -> vector<32x256xf32>
    %c7_167 = arith.constant 7 : index
    %c0_168 = arith.constant 0 : index
    %188 = vector.load %arg5[%c7_167, %c0_168] : memref<9x256xf32, #tpu.memory_space<vmem>>, vector<1x256xf32>
    %189 = vector.broadcast %188 : vector<1x256xf32> to vector<32x256xf32>
    %190 = arith.mulf %187, %189 : vector<32x256xf32>
    %c224_169 = arith.constant 224 : index
    %c0_170 = arith.constant 0 : index
    %191 = vector.load %arg30[%c224_169, %c0_170] : memref<288x256xf32, #tpu.memory_space<vmem>>, vector<32x256xf32>
    tpu.vector_store %arg30[%c224_169, %c0_170], %190 {strides = array<i32>} : memref<288x256xf32, #tpu.memory_space<vmem>>, vector<32x256xf32>,
    %c239_i32_171 = arith.constant 239 : i32
    %192 = tpu.dynamic_rotate %155 by %c239_i32_171 dim 1 : vector<32x256xf32>, i32 -> vector<32x256xf32>
    %c8_172 = arith.constant 8 : index
    %c0_173 = arith.constant 0 : index
    %193 = vector.load %arg5[%c8_172, %c0_173] : memref<9x256xf32, #tpu.memory_space<vmem>>, vector<1x256xf32>
    %194 = vector.broadcast %193 : vector<1x256xf32> to vector<32x256xf32>
    %195 = arith.mulf %192, %194 : vector<32x256xf32>
    %c256_174 = arith.constant 256 : index
    %c0_175 = arith.constant 0 : index
    %196 = vector.load %arg30[%c256_174, %c0_175] : memref<288x256xf32, #tpu.memory_space<vmem>>, vector<32x256xf32>
    tpu.vector_store %arg30[%c256_174, %c0_175], %195 {strides = array<i32>} : memref<288x256xf32, #tpu.memory_space<vmem>>, vector<32x256xf32>,
    %c3_176 = arith.constant 3 : index
    %c0_177 = arith.constant 0 : index
    %c0_178 = arith.constant 0 : index
    %197 = vector.load %arg6[%c3_176, %c0_177, %c0_178] : memref<6x32x288xf32, #tpu.memory_space<vmem>>, vector<1x32x288xf32>
    %198 = vector.shape_cast %197 : vector<1x32x288xf32> to vector<32x288xf32>
    %c0_179 = arith.constant 0 : index
    %c0_180 = arith.constant 0 : index
    %199 = vector.load %arg30[%c0_179, %c0_180] : memref<288x256xf32, #tpu.memory_space<vmem>>, vector<288x256xf32>
    %cst_181 = arith.constant dense<0.000000e+00> : vector<32x256xf32>
    %200 = tpu.matmul %198, %199, %cst_181 {dimension_numbers = #tpu.dot_dimension_numbers<[1], [0], [0], [1], [0, 0, 1, 1], [], []>} : vector<32x288xf32>, vector<288x256xf32>, vector<32x256xf32> -> vector<32x256xf32>
    %c3_182 = arith.constant 3 : index
    %c0_183 = arith.constant 0 : index
    %c0_184 = arith.constant 0 : index
    %201 = vector.load %arg7[%c3_182, %c0_183, %c0_184] : memref<6x32x1xf32, #tpu.memory_space<vmem>>, vector<1x32x1xf32>
    %202 = vector.shape_cast %201 : vector<1x32x1xf32> to vector<32x1xf32>
    %203 = vector.broadcast %202 : vector<32x1xf32> to vector<32x256xf32>
    %204 = arith.addf %200, %203 : vector<32x256xf32>
    %cst_185 = arith.constant 0.000000e+00 : f32
    %205 = vector.broadcast %cst_185 : f32 to vector<32x256xf32>
    %206 = arith.maximumf %204, %205 : vector<32x256xf32>
    %c17_i32_186 = arith.constant 17 : i32
    %207 = tpu.dynamic_rotate %206 by %c17_i32_186 dim 1 : vector<32x256xf32>, i32 -> vector<32x256xf32>
    %c0_187 = arith.constant 0 : index
    %c0_188 = arith.constant 0 : index
    %208 = vector.load %arg5[%c0_187, %c0_188] : memref<9x256xf32, #tpu.memory_space<vmem>>, vector<1x256xf32>
    %209 = vector.broadcast %208 : vector<1x256xf32> to vector<32x256xf32>
    %210 = arith.mulf %207, %209 : vector<32x256xf32>
    %c0_189 = arith.constant 0 : index
    %c0_190 = arith.constant 0 : index
    %211 = vector.load %arg30[%c0_189, %c0_190] : memref<288x256xf32, #tpu.memory_space<vmem>>, vector<32x256xf32>
    tpu.vector_store %arg30[%c0_189, %c0_190], %210 {strides = array<i32>} : memref<288x256xf32, #tpu.memory_space<vmem>>, vector<32x256xf32>,
    %c16_i32_191 = arith.constant 16 : i32
    %212 = tpu.dynamic_rotate %206 by %c16_i32_191 dim 1 : vector<32x256xf32>, i32 -> vector<32x256xf32>
    %c1_192 = arith.constant 1 : index
    %c0_193 = arith.constant 0 : index
    %213 = vector.load %arg5[%c1_192, %c0_193] : memref<9x256xf32, #tpu.memory_space<vmem>>, vector<1x256xf32>
    %214 = vector.broadcast %213 : vector<1x256xf32> to vector<32x256xf32>
    %215 = arith.mulf %212, %214 : vector<32x256xf32>
    %c32_194 = arith.constant 32 : index
    %c0_195 = arith.constant 0 : index
    %216 = vector.load %arg30[%c32_194, %c0_195] : memref<288x256xf32, #tpu.memory_space<vmem>>, vector<32x256xf32>
    tpu.vector_store %arg30[%c32_194, %c0_195], %215 {strides = array<i32>} : memref<288x256xf32, #tpu.memory_space<vmem>>, vector<32x256xf32>,
    %c15_i32_196 = arith.constant 15 : i32
    %217 = tpu.dynamic_rotate %206 by %c15_i32_196 dim 1 : vector<32x256xf32>, i32 -> vector<32x256xf32>
    %c2_197 = arith.constant 2 : index
    %c0_198 = arith.constant 0 : index
    %218 = vector.load %arg5[%c2_197, %c0_198] : memref<9x256xf32, #tpu.memory_space<vmem>>, vector<1x256xf32>
    %219 = vector.broadcast %218 : vector<1x256xf32> to vector<32x256xf32>
    %220 = arith.mulf %217, %219 : vector<32x256xf32>
    %c64_199 = arith.constant 64 : index
    %c0_200 = arith.constant 0 : index
    %221 = vector.load %arg30[%c64_199, %c0_200] : memref<288x256xf32, #tpu.memory_space<vmem>>, vector<32x256xf32>
    tpu.vector_store %arg30[%c64_199, %c0_200], %220 {strides = array<i32>} : memref<288x256xf32, #tpu.memory_space<vmem>>, vector<32x256xf32>,
    %c1_i32_201 = arith.constant 1 : i32
    %222 = tpu.dynamic_rotate %206 by %c1_i32_201 dim 1 : vector<32x256xf32>, i32 -> vector<32x256xf32>
    %c3_202 = arith.constant 3 : index
    %c0_203 = arith.constant 0 : index
    %223 = vector.load %arg5[%c3_202, %c0_203] : memref<9x256xf32, #tpu.memory_space<vmem>>, vector<1x256xf32>
    %224 = vector.broadcast %223 : vector<1x256xf32> to vector<32x256xf32>
    %225 = arith.mulf %222, %224 : vector<32x256xf32>
    %c96_204 = arith.constant 96 : index
    %c0_205 = arith.constant 0 : index
    %226 = vector.load %arg30[%c96_204, %c0_205] : memref<288x256xf32, #tpu.memory_space<vmem>>, vector<32x256xf32>
    tpu.vector_store %arg30[%c96_204, %c0_205], %225 {strides = array<i32>} : memref<288x256xf32, #tpu.memory_space<vmem>>, vector<32x256xf32>,
    %c128_206 = arith.constant 128 : index
    %c0_207 = arith.constant 0 : index
    %227 = vector.load %arg30[%c128_206, %c0_207] : memref<288x256xf32, #tpu.memory_space<vmem>>, vector<32x256xf32>
    tpu.vector_store %arg30[%c128_206, %c0_207], %206 {strides = array<i32>} : memref<288x256xf32, #tpu.memory_space<vmem>>, vector<32x256xf32>,
    %c255_i32_208 = arith.constant 255 : i32
    %228 = tpu.dynamic_rotate %206 by %c255_i32_208 dim 1 : vector<32x256xf32>, i32 -> vector<32x256xf32>
    %c5_209 = arith.constant 5 : index
    %c0_210 = arith.constant 0 : index
    %229 = vector.load %arg5[%c5_209, %c0_210] : memref<9x256xf32, #tpu.memory_space<vmem>>, vector<1x256xf32>
    %230 = vector.broadcast %229 : vector<1x256xf32> to vector<32x256xf32>
    %231 = arith.mulf %228, %230 : vector<32x256xf32>
    %c160_211 = arith.constant 160 : index
    %c0_212 = arith.constant 0 : index
    %232 = vector.load %arg30[%c160_211, %c0_212] : memref<288x256xf32, #tpu.memory_space<vmem>>, vector<32x256xf32>
    tpu.vector_store %arg30[%c160_211, %c0_212], %231 {strides = array<i32>} : memref<288x256xf32, #tpu.memory_space<vmem>>, vector<32x256xf32>,
    %c241_i32_213 = arith.constant 241 : i32
    %233 = tpu.dynamic_rotate %206 by %c241_i32_213 dim 1 : vector<32x256xf32>, i32 -> vector<32x256xf32>
    %c6_214 = arith.constant 6 : index
    %c0_215 = arith.constant 0 : index
    %234 = vector.load %arg5[%c6_214, %c0_215] : memref<9x256xf32, #tpu.memory_space<vmem>>, vector<1x256xf32>
    %235 = vector.broadcast %234 : vector<1x256xf32> to vector<32x256xf32>
    %236 = arith.mulf %233, %235 : vector<32x256xf32>
    %c192_216 = arith.constant 192 : index
    %c0_217 = arith.constant 0 : index
    %237 = vector.load %arg30[%c192_216, %c0_217] : memref<288x256xf32, #tpu.memory_space<vmem>>, vector<32x256xf32>
    tpu.vector_store %arg30[%c192_216, %c0_217], %236 {strides = array<i32>} : memref<288x256xf32, #tpu.memory_space<vmem>>, vector<32x256xf32>,
    %c240_i32_218 = arith.constant 240 : i32
    %238 = tpu.dynamic_rotate %206 by %c240_i32_218 dim 1 : vector<32x256xf32>, i32 -> vector<32x256xf32>
    %c7_219 = arith.constant 7 : index
    %c0_220 = arith.constant 0 : index
    %239 = vector.load %arg5[%c7_219, %c0_220] : memref<9x256xf32, #tpu.memory_space<vmem>>, vector<1x256xf32>
    %240 = vector.broadcast %239 : vector<1x256xf32> to vector<32x256xf32>
    %241 = arith.mulf %238, %240 : vector<32x256xf32>
    %c224_221 = arith.constant 224 : index
    %c0_222 = arith.constant 0 : index
    %242 = vector.load %arg30[%c224_221, %c0_222] : memref<288x256xf32, #tpu.memory_space<vmem>>, vector<32x256xf32>
    tpu.vector_store %arg30[%c224_221, %c0_222], %241 {strides = array<i32>} : memref<288x256xf32, #tpu.memory_space<vmem>>, vector<32x256xf32>,
    %c239_i32_223 = arith.constant 239 : i32
    %243 = tpu.dynamic_rotate %206 by %c239_i32_223 dim 1 : vector<32x256xf32>, i32 -> vector<32x256xf32>
    %c8_224 = arith.constant 8 : index
    %c0_225 = arith.constant 0 : index
    %244 = vector.load %arg5[%c8_224, %c0_225] : memref<9x256xf32, #tpu.memory_space<vmem>>, vector<1x256xf32>
    %245 = vector.broadcast %244 : vector<1x256xf32> to vector<32x256xf32>
    %246 = arith.mulf %243, %245 : vector<32x256xf32>
    %c256_226 = arith.constant 256 : index
    %c0_227 = arith.constant 0 : index
    %247 = vector.load %arg30[%c256_226, %c0_227] : memref<288x256xf32, #tpu.memory_space<vmem>>, vector<32x256xf32>
    tpu.vector_store %arg30[%c256_226, %c0_227], %246 {strides = array<i32>} : memref<288x256xf32, #tpu.memory_space<vmem>>, vector<32x256xf32>,
    %c4 = arith.constant 4 : index
    %c0_228 = arith.constant 0 : index
    %c0_229 = arith.constant 0 : index
    %248 = vector.load %arg6[%c4, %c0_228, %c0_229] : memref<6x32x288xf32, #tpu.memory_space<vmem>>, vector<1x32x288xf32>
    %249 = vector.shape_cast %248 : vector<1x32x288xf32> to vector<32x288xf32>
    %c0_230 = arith.constant 0 : index
    %c0_231 = arith.constant 0 : index
    %250 = vector.load %arg30[%c0_230, %c0_231] : memref<288x256xf32, #tpu.memory_space<vmem>>, vector<288x256xf32>
    %cst_232 = arith.constant dense<0.000000e+00> : vector<32x256xf32>
    %251 = tpu.matmul %249, %250, %cst_232 {dimension_numbers = #tpu.dot_dimension_numbers<[1], [0], [0], [1], [0, 0, 1, 1], [], []>} : vector<32x288xf32>, vector<288x256xf32>, vector<32x256xf32> -> vector<32x256xf32>
    %c4_233 = arith.constant 4 : index
    %c0_234 = arith.constant 0 : index
    %c0_235 = arith.constant 0 : index
    %252 = vector.load %arg7[%c4_233, %c0_234, %c0_235] : memref<6x32x1xf32, #tpu.memory_space<vmem>>, vector<1x32x1xf32>
    %253 = vector.shape_cast %252 : vector<1x32x1xf32> to vector<32x1xf32>
    %254 = vector.broadcast %253 : vector<32x1xf32> to vector<32x256xf32>
    %255 = arith.addf %251, %254 : vector<32x256xf32>
    %cst_236 = arith.constant 1.000000e+00 : f32
    %256 = vector.broadcast %cst_236 : f32 to vector<32x256xf32>
    %257 = arith.mulf %256, %255 : vector<32x256xf32>
    %258 = arith.addf %155, %257 : vector<32x256xf32>
    %c17_i32_237 = arith.constant 17 : i32
    %259 = tpu.dynamic_rotate %258 by %c17_i32_237 dim 1 : vector<32x256xf32>, i32 -> vector<32x256xf32>
    %c0_238 = arith.constant 0 : index
    %c0_239 = arith.constant 0 : index
    %260 = vector.load %arg5[%c0_238, %c0_239] : memref<9x256xf32, #tpu.memory_space<vmem>>, vector<1x256xf32>
    %261 = vector.broadcast %260 : vector<1x256xf32> to vector<32x256xf32>
    %262 = arith.mulf %259, %261 : vector<32x256xf32>
    %c0_240 = arith.constant 0 : index
    %c0_241 = arith.constant 0 : index
    %263 = vector.load %arg30[%c0_240, %c0_241] : memref<288x256xf32, #tpu.memory_space<vmem>>, vector<32x256xf32>
    tpu.vector_store %arg30[%c0_240, %c0_241], %262 {strides = array<i32>} : memref<288x256xf32, #tpu.memory_space<vmem>>, vector<32x256xf32>,
    %c16_i32_242 = arith.constant 16 : i32
    %264 = tpu.dynamic_rotate %258 by %c16_i32_242 dim 1 : vector<32x256xf32>, i32 -> vector<32x256xf32>
    %c1_243 = arith.constant 1 : index
    %c0_244 = arith.constant 0 : index
    %265 = vector.load %arg5[%c1_243, %c0_244] : memref<9x256xf32, #tpu.memory_space<vmem>>, vector<1x256xf32>
    %266 = vector.broadcast %265 : vector<1x256xf32> to vector<32x256xf32>
    %267 = arith.mulf %264, %266 : vector<32x256xf32>
    %c32_245 = arith.constant 32 : index
    %c0_246 = arith.constant 0 : index
    %268 = vector.load %arg30[%c32_245, %c0_246] : memref<288x256xf32, #tpu.memory_space<vmem>>, vector<32x256xf32>
    tpu.vector_store %arg30[%c32_245, %c0_246], %267 {strides = array<i32>} : memref<288x256xf32, #tpu.memory_space<vmem>>, vector<32x256xf32>,
    %c15_i32_247 = arith.constant 15 : i32
    %269 = tpu.dynamic_rotate %258 by %c15_i32_247 dim 1 : vector<32x256xf32>, i32 -> vector<32x256xf32>
    %c2_248 = arith.constant 2 : index
    %c0_249 = arith.constant 0 : index
    %270 = vector.load %arg5[%c2_248, %c0_249] : memref<9x256xf32, #tpu.memory_space<vmem>>, vector<1x256xf32>
    %271 = vector.broadcast %270 : vector<1x256xf32> to vector<32x256xf32>
    %272 = arith.mulf %269, %271 : vector<32x256xf32>
    %c64_250 = arith.constant 64 : index
    %c0_251 = arith.constant 0 : index
    %273 = vector.load %arg30[%c64_250, %c0_251] : memref<288x256xf32, #tpu.memory_space<vmem>>, vector<32x256xf32>
    tpu.vector_store %arg30[%c64_250, %c0_251], %272 {strides = array<i32>} : memref<288x256xf32, #tpu.memory_space<vmem>>, vector<32x256xf32>,
    %c1_i32_252 = arith.constant 1 : i32
    %274 = tpu.dynamic_rotate %258 by %c1_i32_252 dim 1 : vector<32x256xf32>, i32 -> vector<32x256xf32>
    %c3_253 = arith.constant 3 : index
    %c0_254 = arith.constant 0 : index
    %275 = vector.load %arg5[%c3_253, %c0_254] : memref<9x256xf32, #tpu.memory_space<vmem>>, vector<1x256xf32>
    %276 = vector.broadcast %275 : vector<1x256xf32> to vector<32x256xf32>
    %277 = arith.mulf %274, %276 : vector<32x256xf32>
    %c96_255 = arith.constant 96 : index
    %c0_256 = arith.constant 0 : index
    %278 = vector.load %arg30[%c96_255, %c0_256] : memref<288x256xf32, #tpu.memory_space<vmem>>, vector<32x256xf32>
    tpu.vector_store %arg30[%c96_255, %c0_256], %277 {strides = array<i32>} : memref<288x256xf32, #tpu.memory_space<vmem>>, vector<32x256xf32>,
    %c128_257 = arith.constant 128 : index
    %c0_258 = arith.constant 0 : index
    %279 = vector.load %arg30[%c128_257, %c0_258] : memref<288x256xf32, #tpu.memory_space<vmem>>, vector<32x256xf32>
    tpu.vector_store %arg30[%c128_257, %c0_258], %258 {strides = array<i32>} : memref<288x256xf32, #tpu.memory_space<vmem>>, vector<32x256xf32>,
    %c255_i32_259 = arith.constant 255 : i32
    %280 = tpu.dynamic_rotate %258 by %c255_i32_259 dim 1 : vector<32x256xf32>, i32 -> vector<32x256xf32>
    %c5_260 = arith.constant 5 : index
    %c0_261 = arith.constant 0 : index
    %281 = vector.load %arg5[%c5_260, %c0_261] : memref<9x256xf32, #tpu.memory_space<vmem>>, vector<1x256xf32>
    %282 = vector.broadcast %281 : vector<1x256xf32> to vector<32x256xf32>
    %283 = arith.mulf %280, %282 : vector<32x256xf32>
    %c160_262 = arith.constant 160 : index
    %c0_263 = arith.constant 0 : index
    %284 = vector.load %arg30[%c160_262, %c0_263] : memref<288x256xf32, #tpu.memory_space<vmem>>, vector<32x256xf32>
    tpu.vector_store %arg30[%c160_262, %c0_263], %283 {strides = array<i32>} : memref<288x256xf32, #tpu.memory_space<vmem>>, vector<32x256xf32>,
    %c241_i32_264 = arith.constant 241 : i32
    %285 = tpu.dynamic_rotate %258 by %c241_i32_264 dim 1 : vector<32x256xf32>, i32 -> vector<32x256xf32>
    %c6_265 = arith.constant 6 : index
    %c0_266 = arith.constant 0 : index
    %286 = vector.load %arg5[%c6_265, %c0_266] : memref<9x256xf32, #tpu.memory_space<vmem>>, vector<1x256xf32>
    %287 = vector.broadcast %286 : vector<1x256xf32> to vector<32x256xf32>
    %288 = arith.mulf %285, %287 : vector<32x256xf32>
    %c192_267 = arith.constant 192 : index
    %c0_268 = arith.constant 0 : index
    %289 = vector.load %arg30[%c192_267, %c0_268] : memref<288x256xf32, #tpu.memory_space<vmem>>, vector<32x256xf32>
    tpu.vector_store %arg30[%c192_267, %c0_268], %288 {strides = array<i32>} : memref<288x256xf32, #tpu.memory_space<vmem>>, vector<32x256xf32>,
    %c240_i32_269 = arith.constant 240 : i32
    %290 = tpu.dynamic_rotate %258 by %c240_i32_269 dim 1 : vector<32x256xf32>, i32 -> vector<32x256xf32>
    %c7_270 = arith.constant 7 : index
    %c0_271 = arith.constant 0 : index
    %291 = vector.load %arg5[%c7_270, %c0_271] : memref<9x256xf32, #tpu.memory_space<vmem>>, vector<1x256xf32>
    %292 = vector.broadcast %291 : vector<1x256xf32> to vector<32x256xf32>
    %293 = arith.mulf %290, %292 : vector<32x256xf32>
    %c224_272 = arith.constant 224 : index
    %c0_273 = arith.constant 0 : index
    %294 = vector.load %arg30[%c224_272, %c0_273] : memref<288x256xf32, #tpu.memory_space<vmem>>, vector<32x256xf32>
    tpu.vector_store %arg30[%c224_272, %c0_273], %293 {strides = array<i32>} : memref<288x256xf32, #tpu.memory_space<vmem>>, vector<32x256xf32>,
    %c239_i32_274 = arith.constant 239 : i32
    %295 = tpu.dynamic_rotate %258 by %c239_i32_274 dim 1 : vector<32x256xf32>, i32 -> vector<32x256xf32>
    %c8_275 = arith.constant 8 : index
    %c0_276 = arith.constant 0 : index
    %296 = vector.load %arg5[%c8_275, %c0_276] : memref<9x256xf32, #tpu.memory_space<vmem>>, vector<1x256xf32>
    %297 = vector.broadcast %296 : vector<1x256xf32> to vector<32x256xf32>
    %298 = arith.mulf %295, %297 : vector<32x256xf32>
    %c256_277 = arith.constant 256 : index
    %c0_278 = arith.constant 0 : index
    %299 = vector.load %arg30[%c256_277, %c0_278] : memref<288x256xf32, #tpu.memory_space<vmem>>, vector<32x256xf32>
    tpu.vector_store %arg30[%c256_277, %c0_278], %298 {strides = array<i32>} : memref<288x256xf32, #tpu.memory_space<vmem>>, vector<32x256xf32>,
    %c5_279 = arith.constant 5 : index
    %c0_280 = arith.constant 0 : index
    %c0_281 = arith.constant 0 : index
    %300 = vector.load %arg6[%c5_279, %c0_280, %c0_281] : memref<6x32x288xf32, #tpu.memory_space<vmem>>, vector<1x32x288xf32>
    %301 = vector.shape_cast %300 : vector<1x32x288xf32> to vector<32x288xf32>
    %c0_282 = arith.constant 0 : index
    %c0_283 = arith.constant 0 : index
    %302 = vector.load %arg30[%c0_282, %c0_283] : memref<288x256xf32, #tpu.memory_space<vmem>>, vector<288x256xf32>
    %cst_284 = arith.constant dense<0.000000e+00> : vector<32x256xf32>
    %303 = tpu.matmul %301, %302, %cst_284 {dimension_numbers = #tpu.dot_dimension_numbers<[1], [0], [0], [1], [0, 0, 1, 1], [], []>} : vector<32x288xf32>, vector<288x256xf32>, vector<32x256xf32> -> vector<32x256xf32>
    %c5_285 = arith.constant 5 : index
    %c0_286 = arith.constant 0 : index
    %c0_287 = arith.constant 0 : index
    %304 = vector.load %arg7[%c5_285, %c0_286, %c0_287] : memref<6x32x1xf32, #tpu.memory_space<vmem>>, vector<1x32x1xf32>
    %305 = vector.shape_cast %304 : vector<1x32x1xf32> to vector<32x1xf32>
    %306 = vector.broadcast %305 : vector<32x1xf32> to vector<32x256xf32>
    %307 = arith.addf %303, %306 : vector<32x256xf32>
    %308 = arith.addf %307, %52 : vector<32x256xf32>
    %cst_288 = arith.constant dense<0.000000e+00> : vector<256xf32>
    %309 = vector.multi_reduction <add>, %308, %cst_288 [0] : vector<32x256xf32> to vector<256xf32>
    %310 = vector.shape_cast %309 : vector<256xf32> to vector<1x256xf32>
    %cst_289 = arith.constant 3.200000e+01 : f32
    %311 = vector.broadcast %cst_289 : f32 to vector<1x256xf32>
    %312 = arith.divf %310, %311 : vector<1x256xf32>
    %313 = vector.broadcast %312 : vector<1x256xf32> to vector<32x256xf32>
    %314 = arith.subf %308, %313 : vector<32x256xf32>
    %315 = arith.mulf %314, %314 : vector<32x256xf32>
    %cst_290 = arith.constant dense<0.000000e+00> : vector<256xf32>
    %316 = vector.multi_reduction <add>, %315, %cst_290 [0] : vector<32x256xf32> to vector<256xf32>
    %317 = vector.shape_cast %316 : vector<256xf32> to vector<1x256xf32>
    %cst_291 = arith.constant 3.200000e+01 : f32
    %318 = vector.broadcast %cst_291 : f32 to vector<1x256xf32>
    %319 = arith.divf %317, %318 : vector<1x256xf32>
    %320 = vector.broadcast %312 : vector<1x256xf32> to vector<32x256xf32>
    %321 = arith.subf %308, %320 : vector<32x256xf32>
    %cst_292 = arith.constant 9.99999974E-6 : f32
    %322 = vector.broadcast %cst_292 : f32 to vector<1x256xf32>
    %323 = arith.addf %319, %322 : vector<1x256xf32>
    %324 = math.rsqrt %323 : vector<1x256xf32>
    %325 = vector.broadcast %324 : vector<1x256xf32> to vector<32x256xf32>
    %326 = arith.mulf %321, %325 : vector<32x256xf32>
    %c0_293 = arith.constant 0 : index
    %c0_294 = arith.constant 0 : index
    %327 = vector.load %arg10[%c0_293, %c0_294] : memref<32x1xf32, #tpu.memory_space<vmem>>, vector<32x1xf32>
    %328 = vector.broadcast %327 : vector<32x1xf32> to vector<32x256xf32>
    %329 = arith.mulf %326, %328 : vector<32x256xf32>
    %c0_295 = arith.constant 0 : index
    %c0_296 = arith.constant 0 : index
    %330 = vector.load %arg11[%c0_295, %c0_296] : memref<32x1xf32, #tpu.memory_space<vmem>>, vector<32x1xf32>
    %331 = vector.broadcast %330 : vector<32x1xf32> to vector<32x256xf32>
    %332 = arith.addf %329, %331 : vector<32x256xf32>
    %c0_297 = arith.constant 0 : index
    %c0_298 = arith.constant 0 : index
    %333 = vector.load %arg16[%c0_297, %c0_298] : memref<64x32xf32, #tpu.memory_space<vmem>>, vector<64x32xf32>
    %cst_299 = arith.constant dense<0.000000e+00> : vector<64x256xf32>
    %334 = tpu.matmul %333, %332, %cst_299 {dimension_numbers = #tpu.dot_dimension_numbers<[1], [0], [0], [1], [0, 0, 1, 1], [], []>} : vector<64x32xf32>, vector<32x256xf32>, vector<64x256xf32> -> vector<64x256xf32>
    %c0_300 = arith.constant 0 : index
    %c0_301 = arith.constant 0 : index
    %335 = vector.load %arg17[%c0_300, %c0_301] : memref<64x1xf32, #tpu.memory_space<vmem>>, vector<64x1xf32>
    %336 = vector.broadcast %335 : vector<64x1xf32> to vector<64x256xf32>
    %337 = arith.addf %334, %336 : vector<64x256xf32>
    %338 = vector.extract_strided_slice %337 {offsets = [0, 0], sizes = [32, 256], strides = [1, 1]} : vector<64x256xf32> to vector<32x256xf32>
    %339 = vector.extract_strided_slice %337 {offsets = [32, 0], sizes = [32, 256], strides = [1, 1]} : vector<64x256xf32> to vector<32x256xf32>
    %c0_302 = arith.constant 0 : index
    %c0_303 = arith.constant 0 : index
    %340 = vector.load %arg8[%c0_302, %c0_303] : memref<32x32xf32, #tpu.memory_space<vmem>>, vector<32x32xf32>
    %c0_304 = arith.constant 0 : index
    %c0_305 = arith.constant 0 : index
    %341 = vector.load %arg9[%c0_304, %c0_305] : memref<32x8xf32, #tpu.memory_space<vmem>>, vector<32x8xf32>
    %c0_306 = arith.constant 0 : index
    %c0_307 = arith.constant 0 : index
    %342 = vector.load %arg3[%c0_306, %c0_307] : memref<1x32xf32, #tpu.memory_space<vmem>>, vector<1x32xf32>
    %c0_308 = arith.constant 0 : index
    %c0_309 = arith.constant 0 : index
    %343 = vector.load %arg4[%c0_308, %c0_309] : memref<1x32xf32, #tpu.memory_space<vmem>>, vector<1x32xf32>
    %c0_310 = arith.constant 0 : index
    %c0_311 = arith.constant 0 : index
    %c0_312 = arith.constant 0 : index
    %344 = vector.load %arg2[%c0_310, %c0_311, %c0_312] : memref<1x8x32xf32, #tpu.memory_space<vmem>>, vector<1x8x32xf32>
    %345 = vector.shape_cast %344 : vector<1x8x32xf32> to vector<8x32xf32>
    %346 = vector.broadcast %343 : vector<1x32xf32> to vector<8x32xf32>
    %347 = arith.mulf %346, %345 : vector<8x32xf32>
    %348 = vector.broadcast %342 : vector<1x32xf32> to vector<8x32xf32>
    %349 = arith.addf %348, %347 : vector<8x32xf32>
    %c0_313 = arith.constant 0 : index
    %c0_314 = arith.constant 0 : index
    %350 = vector.load %arg12[%c0_313, %c0_314] : memref<1x32xf32, #tpu.memory_space<vmem>>, vector<1x32xf32>
    %c0_315 = arith.constant 0 : index
    %c0_316 = arith.constant 0 : index
    %351 = vector.load %arg13[%c0_315, %c0_316] : memref<1x32xf32, #tpu.memory_space<vmem>>, vector<1x32xf32>
    %cst_317 = arith.constant dense<0.000000e+00> : vector<8xf32>
    %352 = vector.multi_reduction <add>, %349, %cst_317 [1] : vector<8x32xf32> to vector<8xf32>
    %353 = vector.shape_cast %352 : vector<8xf32> to vector<8x1xf32>
    %cst_318 = arith.constant 3.200000e+01 : f32
    %354 = vector.broadcast %cst_318 : f32 to vector<8x1xf32>
    %355 = arith.divf %353, %354 : vector<8x1xf32>
    %356 = vector.broadcast %355 : vector<8x1xf32> to vector<8x32xf32>
    %357 = arith.subf %349, %356 : vector<8x32xf32>
    %358 = arith.mulf %357, %357 : vector<8x32xf32>
    %cst_319 = arith.constant dense<0.000000e+00> : vector<8xf32>
    %359 = vector.multi_reduction <add>, %358, %cst_319 [1] : vector<8x32xf32> to vector<8xf32>
    %360 = vector.shape_cast %359 : vector<8xf32> to vector<8x1xf32>
    %cst_320 = arith.constant 3.200000e+01 : f32
    %361 = vector.broadcast %cst_320 : f32 to vector<8x1xf32>
    %362 = arith.divf %360, %361 : vector<8x1xf32>
    %363 = vector.broadcast %355 : vector<8x1xf32> to vector<8x32xf32>
    %364 = arith.subf %349, %363 : vector<8x32xf32>
    %cst_321 = arith.constant 9.99999974E-6 : f32
    %365 = vector.broadcast %cst_321 : f32 to vector<8x1xf32>
    %366 = arith.addf %362, %365 : vector<8x1xf32>
    %367 = math.rsqrt %366 : vector<8x1xf32>
    %368 = vector.broadcast %367 : vector<8x1xf32> to vector<8x32xf32>
    %369 = arith.mulf %364, %368 : vector<8x32xf32>
    %370 = vector.broadcast %350 : vector<1x32xf32> to vector<8x32xf32>
    %371 = arith.mulf %369, %370 : vector<8x32xf32>
    %372 = vector.broadcast %351 : vector<1x32xf32> to vector<8x32xf32>
    %373 = arith.addf %371, %372 : vector<8x32xf32>
    %c0_322 = arith.constant 0 : index
    %c0_323 = arith.constant 0 : index
    %374 = vector.load %arg18[%c0_322, %c0_323] : memref<32x32xf32, #tpu.memory_space<vmem>>, vector<32x32xf32>
    %cst_324 = arith.constant dense<0.000000e+00> : vector<8x32xf32>
    %375 = tpu.matmul %373, %374, %cst_324 {dimension_numbers = #tpu.dot_dimension_numbers<[1], [0], [0], [1], [0, 0, 1, 1], [], []>} : vector<8x32xf32>, vector<32x32xf32>, vector<8x32xf32> -> vector<8x32xf32>
    %c0_325 = arith.constant 0 : index
    %c0_326 = arith.constant 0 : index
    %376 = vector.load %arg19[%c0_325, %c0_326] : memref<1x32xf32, #tpu.memory_space<vmem>>, vector<1x32xf32>
    %377 = vector.broadcast %376 : vector<1x32xf32> to vector<8x32xf32>
    %378 = arith.addf %375, %377 : vector<8x32xf32>
    %cst_327 = arith.constant dense<0.000000e+00> : vector<32x32xf32>
    %379 = tpu.matmul %341, %378, %cst_327 {dimension_numbers = #tpu.dot_dimension_numbers<[1], [0], [0], [1], [0, 0, 1, 1], [], []>} : vector<32x8xf32>, vector<8x32xf32>, vector<32x32xf32> -> vector<32x32xf32>
    %380 = arith.mulf %379, %340 : vector<32x32xf32>
    %cst_328 = arith.constant dense<0.000000e+00> : vector<32x256xf32>
    %381 = tpu.matmul %380, %338, %cst_328 {dimension_numbers = #tpu.dot_dimension_numbers<[1], [0], [0], [1], [0, 0, 1, 1], [], []>} : vector<32x32xf32>, vector<32x256xf32>, vector<32x256xf32> -> vector<32x256xf32>
    %cst_329 = arith.constant 0.353553385 : f32
    %382 = vector.broadcast %cst_329 : f32 to vector<32x256xf32>
    %383 = arith.mulf %381, %382 : vector<32x256xf32>
    %384 = vector.shape_cast %383 : vector<32x256xf32> to vector<4x8x256xf32>
    %cst_330 = arith.constant dense<0xFF800000> : vector<4x256xf32>
    %385 = vector.multi_reduction <maximumf>, %384, %cst_330 [1] : vector<4x8x256xf32> to vector<4x256xf32>
    %386 = vector.shape_cast %385 : vector<4x256xf32> to vector<4x1x256xf32>
    %387 = vector.broadcast %386 : vector<4x1x256xf32> to vector<4x8x256xf32>
    %388 = arith.subf %384, %387 : vector<4x8x256xf32>
    %389 = math.exp %388 : vector<4x8x256xf32>
    %cst_331 = arith.constant dense<0.000000e+00> : vector<4x256xf32>
    %390 = vector.multi_reduction <add>, %389, %cst_331 [1] : vector<4x8x256xf32> to vector<4x256xf32>
    %391 = vector.shape_cast %390 : vector<4x256xf32> to vector<4x1x256xf32>
    %392 = tpu.reciprocal %391 {approx = true} : vector<4x1x256xf32> -> vector<4x1x256xf32>
    %393 = vector.broadcast %392 : vector<4x1x256xf32> to vector<4x8x256xf32>
    %394 = arith.mulf %389, %393 : vector<4x8x256xf32>
    %cst_332 = arith.constant 9.99999993E-9 : f32
    %395 = vector.broadcast %cst_332 : f32 to vector<4x8x256xf32>
    %396 = arith.addf %394, %395 : vector<4x8x256xf32>
    %cst_333 = arith.constant dense<0.000000e+00> : vector<4x8xf32>
    %397 = vector.multi_reduction <add>, %396, %cst_333 [2] : vector<4x8x256xf32> to vector<4x8xf32>
    %398 = vector.shape_cast %397 : vector<4x8xf32> to vector<4x8x1xf32>
    %399 = tpu.reciprocal %398 {approx = true} : vector<4x8x1xf32> -> vector<4x8x1xf32>
    %400 = vector.broadcast %399 : vector<4x8x1xf32> to vector<4x8x256xf32>
    %401 = arith.mulf %396, %400 : vector<4x8x256xf32>
    %402 = vector.shape_cast %401 : vector<4x8x256xf32> to vector<32x256xf32>
    %cst_334 = arith.constant dense<0.000000e+00> : vector<32x32xf32>
    %403 = tpu.matmul %402, %339, %cst_334 {dimension_numbers = #tpu.dot_dimension_numbers<[1], [1], [0], [0], [0, 0, 1, 0], [], []>} : vector<32x256xf32>, vector<32x256xf32>, vector<32x32xf32> -> vector<32x32xf32>
    %404 = arith.mulf %403, %340 : vector<32x32xf32>
    %cst_335 = arith.constant dense<0.000000e+00> : vector<8x32xf32>
    %405 = tpu.matmul %341, %404, %cst_335 {dimension_numbers = #tpu.dot_dimension_numbers<[0], [0], [1], [1], [0, 1, 1, 1], [], []>} : vector<32x8xf32>, vector<32x32xf32>, vector<8x32xf32> -> vector<8x32xf32>
    %c0_336 = arith.constant 0 : index
    %c0_337 = arith.constant 0 : index
    %406 = vector.load %arg20[%c0_336, %c0_337] : memref<32x96xf32, #tpu.memory_space<vmem>>, vector<32x96xf32>
    %cst_338 = arith.constant dense<0.000000e+00> : vector<8x96xf32>
    %407 = tpu.matmul %405, %406, %cst_338 {dimension_numbers = #tpu.dot_dimension_numbers<[1], [0], [0], [1], [0, 0, 1, 1], [], []>} : vector<8x32xf32>, vector<32x96xf32>, vector<8x96xf32> -> vector<8x96xf32>
    %c0_339 = arith.constant 0 : index
    %c0_340 = arith.constant 0 : index
    %408 = vector.load %arg21[%c0_339, %c0_340] : memref<1x96xf32, #tpu.memory_space<vmem>>, vector<1x96xf32>
    %409 = vector.broadcast %408 : vector<1x96xf32> to vector<8x96xf32>
    %410 = arith.addf %407, %409 : vector<8x96xf32>
    %c0_341 = arith.constant 0 : index
    %c0_342 = arith.constant 0 : index
    %411 = vector.load %arg22[%c0_341, %c0_342] : memref<32x96xf32, #tpu.memory_space<vmem>>, vector<32x96xf32>
    %cst_343 = arith.constant dense<0.000000e+00> : vector<8x96xf32>
    %412 = tpu.matmul %349, %411, %cst_343 {dimension_numbers = #tpu.dot_dimension_numbers<[1], [0], [0], [1], [0, 0, 1, 1], [], []>} : vector<8x32xf32>, vector<32x96xf32>, vector<8x96xf32> -> vector<8x96xf32>
    %c0_344 = arith.constant 0 : index
    %c0_345 = arith.constant 0 : index
    %413 = vector.load %arg23[%c0_344, %c0_345] : memref<1x96xf32, #tpu.memory_space<vmem>>, vector<1x96xf32>
    %414 = vector.broadcast %413 : vector<1x96xf32> to vector<8x96xf32>
    %415 = arith.addf %412, %414 : vector<8x96xf32>
    %416 = vector.extract_strided_slice %410 {offsets = [0, 0], sizes = [8, 32], strides = [1, 1]} : vector<8x96xf32> to vector<8x32xf32>
    %417 = vector.extract_strided_slice %415 {offsets = [0, 0], sizes = [8, 32], strides = [1, 1]} : vector<8x96xf32> to vector<8x32xf32>
    %418 = arith.addf %416, %417 : vector<8x32xf32>
    %419 = arith.negf %418 : vector<8x32xf32>
    %420 = math.exp %419 : vector<8x32xf32>
    %cst_346 = arith.constant 1.000000e+00 : f32
    %421 = vector.broadcast %cst_346 : f32 to vector<8x32xf32>
    %422 = arith.addf %421, %420 : vector<8x32xf32>
    %423 = arith.divf %421, %422 : vector<8x32xf32>
    %424 = vector.extract_strided_slice %410 {offsets = [0, 32], sizes = [8, 32], strides = [1, 1]} : vector<8x96xf32> to vector<8x32xf32>
    %425 = vector.extract_strided_slice %415 {offsets = [0, 32], sizes = [8, 32], strides = [1, 1]} : vector<8x96xf32> to vector<8x32xf32>
    %426 = arith.addf %424, %425 : vector<8x32xf32>
    %427 = arith.negf %426 : vector<8x32xf32>
    %428 = math.exp %427 : vector<8x32xf32>
    %cst_347 = arith.constant 1.000000e+00 : f32
    %429 = vector.broadcast %cst_347 : f32 to vector<8x32xf32>
    %430 = arith.addf %429, %428 : vector<8x32xf32>
    %431 = arith.divf %429, %430 : vector<8x32xf32>
    %432 = vector.extract_strided_slice %410 {offsets = [0, 64], sizes = [8, 32], strides = [1, 1]} : vector<8x96xf32> to vector<8x32xf32>
    %433 = vector.extract_strided_slice %415 {offsets = [0, 64], sizes = [8, 32], strides = [1, 1]} : vector<8x96xf32> to vector<8x32xf32>
    %434 = arith.mulf %423, %433 : vector<8x32xf32>
    %435 = arith.addf %432, %434 : vector<8x32xf32>
    %436 = math.tanh %435 : vector<8x32xf32>
    %cst_348 = arith.constant 1.000000e+00 : f32
    %437 = vector.broadcast %cst_348 : f32 to vector<8x32xf32>
    %438 = arith.subf %437, %431 : vector<8x32xf32>
    %439 = arith.mulf %438, %436 : vector<8x32xf32>
    %440 = arith.mulf %431, %349 : vector<8x32xf32>
    %441 = arith.addf %439, %440 : vector<8x32xf32>
    %c0_349 = arith.constant 0 : index
    %c0_350 = arith.constant 0 : index
    %442 = vector.load %arg14[%c0_349, %c0_350] : memref<1x32xf32, #tpu.memory_space<vmem>>, vector<1x32xf32>
    %c0_351 = arith.constant 0 : index
    %c0_352 = arith.constant 0 : index
    %443 = vector.load %arg15[%c0_351, %c0_352] : memref<1x32xf32, #tpu.memory_space<vmem>>, vector<1x32xf32>
    %cst_353 = arith.constant dense<0.000000e+00> : vector<8xf32>
    %444 = vector.multi_reduction <add>, %441, %cst_353 [1] : vector<8x32xf32> to vector<8xf32>
    %445 = vector.shape_cast %444 : vector<8xf32> to vector<8x1xf32>
    %cst_354 = arith.constant 3.200000e+01 : f32
    %446 = vector.broadcast %cst_354 : f32 to vector<8x1xf32>
    %447 = arith.divf %445, %446 : vector<8x1xf32>
    %448 = vector.broadcast %447 : vector<8x1xf32> to vector<8x32xf32>
    %449 = arith.subf %441, %448 : vector<8x32xf32>
    %450 = arith.mulf %449, %449 : vector<8x32xf32>
    %cst_355 = arith.constant dense<0.000000e+00> : vector<8xf32>
    %451 = vector.multi_reduction <add>, %450, %cst_355 [1] : vector<8x32xf32> to vector<8xf32>
    %452 = vector.shape_cast %451 : vector<8xf32> to vector<8x1xf32>
    %cst_356 = arith.constant 3.200000e+01 : f32
    %453 = vector.broadcast %cst_356 : f32 to vector<8x1xf32>
    %454 = arith.divf %452, %453 : vector<8x1xf32>
    %455 = vector.broadcast %447 : vector<8x1xf32> to vector<8x32xf32>
    %456 = arith.subf %441, %455 : vector<8x32xf32>
    %cst_357 = arith.constant 9.99999974E-6 : f32
    %457 = vector.broadcast %cst_357 : f32 to vector<8x1xf32>
    %458 = arith.addf %454, %457 : vector<8x1xf32>
    %459 = math.rsqrt %458 : vector<8x1xf32>
    %460 = vector.broadcast %459 : vector<8x1xf32> to vector<8x32xf32>
    %461 = arith.mulf %456, %460 : vector<8x32xf32>
    %462 = vector.broadcast %442 : vector<1x32xf32> to vector<8x32xf32>
    %463 = arith.mulf %461, %462 : vector<8x32xf32>
    %464 = vector.broadcast %443 : vector<1x32xf32> to vector<8x32xf32>
    %465 = arith.addf %463, %464 : vector<8x32xf32>
    %c0_358 = arith.constant 0 : index
    %c0_359 = arith.constant 0 : index
    %466 = vector.load %arg24[%c0_358, %c0_359] : memref<32x64xf32, #tpu.memory_space<vmem>>, vector<32x64xf32>
    %cst_360 = arith.constant dense<0.000000e+00> : vector<8x64xf32>
    %467 = tpu.matmul %465, %466, %cst_360 {dimension_numbers = #tpu.dot_dimension_numbers<[1], [0], [0], [1], [0, 0, 1, 1], [], []>} : vector<8x32xf32>, vector<32x64xf32>, vector<8x64xf32> -> vector<8x64xf32>
    %c0_361 = arith.constant 0 : index
    %c0_362 = arith.constant 0 : index
    %468 = vector.load %arg25[%c0_361, %c0_362] : memref<1x64xf32, #tpu.memory_space<vmem>>, vector<1x64xf32>
    %469 = vector.broadcast %468 : vector<1x64xf32> to vector<8x64xf32>
    %470 = arith.addf %467, %469 : vector<8x64xf32>
    %cst_363 = arith.constant 0.000000e+00 : f32
    %471 = vector.broadcast %cst_363 : f32 to vector<8x64xf32>
    %472 = arith.maximumf %470, %471 : vector<8x64xf32>
    %c0_364 = arith.constant 0 : index
    %c0_365 = arith.constant 0 : index
    %473 = vector.load %arg26[%c0_364, %c0_365] : memref<64x32xf32, #tpu.memory_space<vmem>>, vector<64x32xf32>
    %cst_366 = arith.constant dense<0.000000e+00> : vector<8x32xf32>
    %474 = tpu.matmul %472, %473, %cst_366 {dimension_numbers = #tpu.dot_dimension_numbers<[1], [0], [0], [1], [0, 0, 1, 1], [], []>} : vector<8x64xf32>, vector<64x32xf32>, vector<8x32xf32> -> vector<8x32xf32>
    %475 = arith.addf %441, %474 : vector<8x32xf32>
    %c0_367 = arith.constant 0 : index
    %c0_368 = arith.constant 0 : index
    %476 = vector.load %arg27[%c0_367, %c0_368] : memref<1x32xf32, #tpu.memory_space<vmem>>, vector<1x32xf32>
    %477 = vector.broadcast %476 : vector<1x32xf32> to vector<8x32xf32>
    %478 = arith.addf %475, %477 : vector<8x32xf32>
    %c0_369 = arith.constant 0 : index
    %c0_370 = arith.constant 0 : index
    %479 = vector.load %arg12[%c0_369, %c0_370] : memref<1x32xf32, #tpu.memory_space<vmem>>, vector<1x32xf32>
    %c0_371 = arith.constant 0 : index
    %c0_372 = arith.constant 0 : index
    %480 = vector.load %arg13[%c0_371, %c0_372] : memref<1x32xf32, #tpu.memory_space<vmem>>, vector<1x32xf32>
    %cst_373 = arith.constant dense<0.000000e+00> : vector<8xf32>
    %481 = vector.multi_reduction <add>, %478, %cst_373 [1] : vector<8x32xf32> to vector<8xf32>
    %482 = vector.shape_cast %481 : vector<8xf32> to vector<8x1xf32>
    %cst_374 = arith.constant 3.200000e+01 : f32
    %483 = vector.broadcast %cst_374 : f32 to vector<8x1xf32>
    %484 = arith.divf %482, %483 : vector<8x1xf32>
    %485 = vector.broadcast %484 : vector<8x1xf32> to vector<8x32xf32>
    %486 = arith.subf %478, %485 : vector<8x32xf32>
    %487 = arith.mulf %486, %486 : vector<8x32xf32>
    %cst_375 = arith.constant dense<0.000000e+00> : vector<8xf32>
    %488 = vector.multi_reduction <add>, %487, %cst_375 [1] : vector<8x32xf32> to vector<8xf32>
    %489 = vector.shape_cast %488 : vector<8xf32> to vector<8x1xf32>
    %cst_376 = arith.constant 3.200000e+01 : f32
    %490 = vector.broadcast %cst_376 : f32 to vector<8x1xf32>
    %491 = arith.divf %489, %490 : vector<8x1xf32>
    %492 = vector.broadcast %484 : vector<8x1xf32> to vector<8x32xf32>
    %493 = arith.subf %478, %492 : vector<8x32xf32>
    %cst_377 = arith.constant 9.99999974E-6 : f32
    %494 = vector.broadcast %cst_377 : f32 to vector<8x1xf32>
    %495 = arith.addf %491, %494 : vector<8x1xf32>
    %496 = math.rsqrt %495 : vector<8x1xf32>
    %497 = vector.broadcast %496 : vector<8x1xf32> to vector<8x32xf32>
    %498 = arith.mulf %493, %497 : vector<8x32xf32>
    %499 = vector.broadcast %479 : vector<1x32xf32> to vector<8x32xf32>
    %500 = arith.mulf %498, %499 : vector<8x32xf32>
    %501 = vector.broadcast %480 : vector<1x32xf32> to vector<8x32xf32>
    %502 = arith.addf %500, %501 : vector<8x32xf32>
    %c0_378 = arith.constant 0 : index
    %c0_379 = arith.constant 0 : index
    %503 = vector.load %arg18[%c0_378, %c0_379] : memref<32x32xf32, #tpu.memory_space<vmem>>, vector<32x32xf32>
    %cst_380 = arith.constant dense<0.000000e+00> : vector<8x32xf32>
    %504 = tpu.matmul %502, %503, %cst_380 {dimension_numbers = #tpu.dot_dimension_numbers<[1], [0], [0], [1], [0, 0, 1, 1], [], []>} : vector<8x32xf32>, vector<32x32xf32>, vector<8x32xf32> -> vector<8x32xf32>
    %c0_381 = arith.constant 0 : index
    %c0_382 = arith.constant 0 : index
    %505 = vector.load %arg19[%c0_381, %c0_382] : memref<1x32xf32, #tpu.memory_space<vmem>>, vector<1x32xf32>
    %506 = vector.broadcast %505 : vector<1x32xf32> to vector<8x32xf32>
    %507 = arith.addf %504, %506 : vector<8x32xf32>
    %cst_383 = arith.constant dense<0.000000e+00> : vector<32x32xf32>
    %508 = tpu.matmul %341, %507, %cst_383 {dimension_numbers = #tpu.dot_dimension_numbers<[1], [0], [0], [1], [0, 0, 1, 1], [], []>} : vector<32x8xf32>, vector<8x32xf32>, vector<32x32xf32> -> vector<32x32xf32>
    %509 = arith.mulf %508, %340 : vector<32x32xf32>
    %cst_384 = arith.constant dense<0.000000e+00> : vector<32x256xf32>
    %510 = tpu.matmul %509, %338, %cst_384 {dimension_numbers = #tpu.dot_dimension_numbers<[1], [0], [0], [1], [0, 0, 1, 1], [], []>} : vector<32x32xf32>, vector<32x256xf32>, vector<32x256xf32> -> vector<32x256xf32>
    %cst_385 = arith.constant 0.353553385 : f32
    %511 = vector.broadcast %cst_385 : f32 to vector<32x256xf32>
    %512 = arith.mulf %510, %511 : vector<32x256xf32>
    %513 = vector.shape_cast %512 : vector<32x256xf32> to vector<4x8x256xf32>
    %cst_386 = arith.constant dense<0xFF800000> : vector<4x256xf32>
    %514 = vector.multi_reduction <maximumf>, %513, %cst_386 [1] : vector<4x8x256xf32> to vector<4x256xf32>
    %515 = vector.shape_cast %514 : vector<4x256xf32> to vector<4x1x256xf32>
    %516 = vector.broadcast %515 : vector<4x1x256xf32> to vector<4x8x256xf32>
    %517 = arith.subf %513, %516 : vector<4x8x256xf32>
    %518 = math.exp %517 : vector<4x8x256xf32>
    %cst_387 = arith.constant dense<0.000000e+00> : vector<4x256xf32>
    %519 = vector.multi_reduction <add>, %518, %cst_387 [1] : vector<4x8x256xf32> to vector<4x256xf32>
    %520 = vector.shape_cast %519 : vector<4x256xf32> to vector<4x1x256xf32>
    %521 = tpu.reciprocal %520 {approx = true} : vector<4x1x256xf32> -> vector<4x1x256xf32>
    %522 = vector.broadcast %521 : vector<4x1x256xf32> to vector<4x8x256xf32>
    %523 = arith.mulf %518, %522 : vector<4x8x256xf32>
    %cst_388 = arith.constant 9.99999993E-9 : f32
    %524 = vector.broadcast %cst_388 : f32 to vector<4x8x256xf32>
    %525 = arith.addf %523, %524 : vector<4x8x256xf32>
    %cst_389 = arith.constant dense<0.000000e+00> : vector<4x8xf32>
    %526 = vector.multi_reduction <add>, %525, %cst_389 [2] : vector<4x8x256xf32> to vector<4x8xf32>
    %527 = vector.shape_cast %526 : vector<4x8xf32> to vector<4x8x1xf32>
    %528 = tpu.reciprocal %527 {approx = true} : vector<4x8x1xf32> -> vector<4x8x1xf32>
    %529 = vector.broadcast %528 : vector<4x8x1xf32> to vector<4x8x256xf32>
    %530 = arith.mulf %525, %529 : vector<4x8x256xf32>
    %531 = vector.shape_cast %530 : vector<4x8x256xf32> to vector<32x256xf32>
    %cst_390 = arith.constant dense<0.000000e+00> : vector<32x32xf32>
    %532 = tpu.matmul %531, %339, %cst_390 {dimension_numbers = #tpu.dot_dimension_numbers<[1], [1], [0], [0], [0, 0, 1, 0], [], []>} : vector<32x256xf32>, vector<32x256xf32>, vector<32x32xf32> -> vector<32x32xf32>
    %533 = arith.mulf %532, %340 : vector<32x32xf32>
    %cst_391 = arith.constant dense<0.000000e+00> : vector<8x32xf32>
    %534 = tpu.matmul %341, %533, %cst_391 {dimension_numbers = #tpu.dot_dimension_numbers<[0], [0], [1], [1], [0, 1, 1, 1], [], []>} : vector<32x8xf32>, vector<32x32xf32>, vector<8x32xf32> -> vector<8x32xf32>
    %c0_392 = arith.constant 0 : index
    %c0_393 = arith.constant 0 : index
    %535 = vector.load %arg20[%c0_392, %c0_393] : memref<32x96xf32, #tpu.memory_space<vmem>>, vector<32x96xf32>
    %cst_394 = arith.constant dense<0.000000e+00> : vector<8x96xf32>
    %536 = tpu.matmul %534, %535, %cst_394 {dimension_numbers = #tpu.dot_dimension_numbers<[1], [0], [0], [1], [0, 0, 1, 1], [], []>} : vector<8x32xf32>, vector<32x96xf32>, vector<8x96xf32> -> vector<8x96xf32>
    %c0_395 = arith.constant 0 : index
    %c0_396 = arith.constant 0 : index
    %537 = vector.load %arg21[%c0_395, %c0_396] : memref<1x96xf32, #tpu.memory_space<vmem>>, vector<1x96xf32>
    %538 = vector.broadcast %537 : vector<1x96xf32> to vector<8x96xf32>
    %539 = arith.addf %536, %538 : vector<8x96xf32>
    %c0_397 = arith.constant 0 : index
    %c0_398 = arith.constant 0 : index
    %540 = vector.load %arg22[%c0_397, %c0_398] : memref<32x96xf32, #tpu.memory_space<vmem>>, vector<32x96xf32>
    %cst_399 = arith.constant dense<0.000000e+00> : vector<8x96xf32>
    %541 = tpu.matmul %478, %540, %cst_399 {dimension_numbers = #tpu.dot_dimension_numbers<[1], [0], [0], [1], [0, 0, 1, 1], [], []>} : vector<8x32xf32>, vector<32x96xf32>, vector<8x96xf32> -> vector<8x96xf32>
    %c0_400 = arith.constant 0 : index
    %c0_401 = arith.constant 0 : index
    %542 = vector.load %arg23[%c0_400, %c0_401] : memref<1x96xf32, #tpu.memory_space<vmem>>, vector<1x96xf32>
    %543 = vector.broadcast %542 : vector<1x96xf32> to vector<8x96xf32>
    %544 = arith.addf %541, %543 : vector<8x96xf32>
    %545 = vector.extract_strided_slice %539 {offsets = [0, 0], sizes = [8, 32], strides = [1, 1]} : vector<8x96xf32> to vector<8x32xf32>
    %546 = vector.extract_strided_slice %544 {offsets = [0, 0], sizes = [8, 32], strides = [1, 1]} : vector<8x96xf32> to vector<8x32xf32>
    %547 = arith.addf %545, %546 : vector<8x32xf32>
    %548 = arith.negf %547 : vector<8x32xf32>
    %549 = math.exp %548 : vector<8x32xf32>
    %cst_402 = arith.constant 1.000000e+00 : f32
    %550 = vector.broadcast %cst_402 : f32 to vector<8x32xf32>
    %551 = arith.addf %550, %549 : vector<8x32xf32>
    %552 = arith.divf %550, %551 : vector<8x32xf32>
    %553 = vector.extract_strided_slice %539 {offsets = [0, 32], sizes = [8, 32], strides = [1, 1]} : vector<8x96xf32> to vector<8x32xf32>
    %554 = vector.extract_strided_slice %544 {offsets = [0, 32], sizes = [8, 32], strides = [1, 1]} : vector<8x96xf32> to vector<8x32xf32>
    %555 = arith.addf %553, %554 : vector<8x32xf32>
    %556 = arith.negf %555 : vector<8x32xf32>
    %557 = math.exp %556 : vector<8x32xf32>
    %cst_403 = arith.constant 1.000000e+00 : f32
    %558 = vector.broadcast %cst_403 : f32 to vector<8x32xf32>
    %559 = arith.addf %558, %557 : vector<8x32xf32>
    %560 = arith.divf %558, %559 : vector<8x32xf32>
    %561 = vector.extract_strided_slice %539 {offsets = [0, 64], sizes = [8, 32], strides = [1, 1]} : vector<8x96xf32> to vector<8x32xf32>
    %562 = vector.extract_strided_slice %544 {offsets = [0, 64], sizes = [8, 32], strides = [1, 1]} : vector<8x96xf32> to vector<8x32xf32>
    %563 = arith.mulf %552, %562 : vector<8x32xf32>
    %564 = arith.addf %561, %563 : vector<8x32xf32>
    %565 = math.tanh %564 : vector<8x32xf32>
    %cst_404 = arith.constant 1.000000e+00 : f32
    %566 = vector.broadcast %cst_404 : f32 to vector<8x32xf32>
    %567 = arith.subf %566, %560 : vector<8x32xf32>
    %568 = arith.mulf %567, %565 : vector<8x32xf32>
    %569 = arith.mulf %560, %478 : vector<8x32xf32>
    %570 = arith.addf %568, %569 : vector<8x32xf32>
    %c0_405 = arith.constant 0 : index
    %c0_406 = arith.constant 0 : index
    %571 = vector.load %arg14[%c0_405, %c0_406] : memref<1x32xf32, #tpu.memory_space<vmem>>, vector<1x32xf32>
    %c0_407 = arith.constant 0 : index
    %c0_408 = arith.constant 0 : index
    %572 = vector.load %arg15[%c0_407, %c0_408] : memref<1x32xf32, #tpu.memory_space<vmem>>, vector<1x32xf32>
    %cst_409 = arith.constant dense<0.000000e+00> : vector<8xf32>
    %573 = vector.multi_reduction <add>, %570, %cst_409 [1] : vector<8x32xf32> to vector<8xf32>
    %574 = vector.shape_cast %573 : vector<8xf32> to vector<8x1xf32>
    %cst_410 = arith.constant 3.200000e+01 : f32
    %575 = vector.broadcast %cst_410 : f32 to vector<8x1xf32>
    %576 = arith.divf %574, %575 : vector<8x1xf32>
    %577 = vector.broadcast %576 : vector<8x1xf32> to vector<8x32xf32>
    %578 = arith.subf %570, %577 : vector<8x32xf32>
    %579 = arith.mulf %578, %578 : vector<8x32xf32>
    %cst_411 = arith.constant dense<0.000000e+00> : vector<8xf32>
    %580 = vector.multi_reduction <add>, %579, %cst_411 [1] : vector<8x32xf32> to vector<8xf32>
    %581 = vector.shape_cast %580 : vector<8xf32> to vector<8x1xf32>
    %cst_412 = arith.constant 3.200000e+01 : f32
    %582 = vector.broadcast %cst_412 : f32 to vector<8x1xf32>
    %583 = arith.divf %581, %582 : vector<8x1xf32>
    %584 = vector.broadcast %576 : vector<8x1xf32> to vector<8x32xf32>
    %585 = arith.subf %570, %584 : vector<8x32xf32>
    %cst_413 = arith.constant 9.99999974E-6 : f32
    %586 = vector.broadcast %cst_413 : f32 to vector<8x1xf32>
    %587 = arith.addf %583, %586 : vector<8x1xf32>
    %588 = math.rsqrt %587 : vector<8x1xf32>
    %589 = vector.broadcast %588 : vector<8x1xf32> to vector<8x32xf32>
    %590 = arith.mulf %585, %589 : vector<8x32xf32>
    %591 = vector.broadcast %571 : vector<1x32xf32> to vector<8x32xf32>
    %592 = arith.mulf %590, %591 : vector<8x32xf32>
    %593 = vector.broadcast %572 : vector<1x32xf32> to vector<8x32xf32>
    %594 = arith.addf %592, %593 : vector<8x32xf32>
    %c0_414 = arith.constant 0 : index
    %c0_415 = arith.constant 0 : index
    %595 = vector.load %arg24[%c0_414, %c0_415] : memref<32x64xf32, #tpu.memory_space<vmem>>, vector<32x64xf32>
    %cst_416 = arith.constant dense<0.000000e+00> : vector<8x64xf32>
    %596 = tpu.matmul %594, %595, %cst_416 {dimension_numbers = #tpu.dot_dimension_numbers<[1], [0], [0], [1], [0, 0, 1, 1], [], []>} : vector<8x32xf32>, vector<32x64xf32>, vector<8x64xf32> -> vector<8x64xf32>
    %c0_417 = arith.constant 0 : index
    %c0_418 = arith.constant 0 : index
    %597 = vector.load %arg25[%c0_417, %c0_418] : memref<1x64xf32, #tpu.memory_space<vmem>>, vector<1x64xf32>
    %598 = vector.broadcast %597 : vector<1x64xf32> to vector<8x64xf32>
    %599 = arith.addf %596, %598 : vector<8x64xf32>
    %cst_419 = arith.constant 0.000000e+00 : f32
    %600 = vector.broadcast %cst_419 : f32 to vector<8x64xf32>
    %601 = arith.maximumf %599, %600 : vector<8x64xf32>
    %c0_420 = arith.constant 0 : index
    %c0_421 = arith.constant 0 : index
    %602 = vector.load %arg26[%c0_420, %c0_421] : memref<64x32xf32, #tpu.memory_space<vmem>>, vector<64x32xf32>
    %cst_422 = arith.constant dense<0.000000e+00> : vector<8x32xf32>
    %603 = tpu.matmul %601, %602, %cst_422 {dimension_numbers = #tpu.dot_dimension_numbers<[1], [0], [0], [1], [0, 0, 1, 1], [], []>} : vector<8x64xf32>, vector<64x32xf32>, vector<8x32xf32> -> vector<8x32xf32>
    %604 = arith.addf %570, %603 : vector<8x32xf32>
    %c0_423 = arith.constant 0 : index
    %c0_424 = arith.constant 0 : index
    %605 = vector.load %arg27[%c0_423, %c0_424] : memref<1x32xf32, #tpu.memory_space<vmem>>, vector<1x32xf32>
    %606 = vector.broadcast %605 : vector<1x32xf32> to vector<8x32xf32>
    %607 = arith.addf %604, %606 : vector<8x32xf32>
    %c0_425 = arith.constant 0 : index
    %c0_426 = arith.constant 0 : index
    %608 = vector.load %arg12[%c0_425, %c0_426] : memref<1x32xf32, #tpu.memory_space<vmem>>, vector<1x32xf32>
    %c0_427 = arith.constant 0 : index
    %c0_428 = arith.constant 0 : index
    %609 = vector.load %arg13[%c0_427, %c0_428] : memref<1x32xf32, #tpu.memory_space<vmem>>, vector<1x32xf32>
    %cst_429 = arith.constant dense<0.000000e+00> : vector<8xf32>
    %610 = vector.multi_reduction <add>, %607, %cst_429 [1] : vector<8x32xf32> to vector<8xf32>
    %611 = vector.shape_cast %610 : vector<8xf32> to vector<8x1xf32>
    %cst_430 = arith.constant 3.200000e+01 : f32
    %612 = vector.broadcast %cst_430 : f32 to vector<8x1xf32>
    %613 = arith.divf %611, %612 : vector<8x1xf32>
    %614 = vector.broadcast %613 : vector<8x1xf32> to vector<8x32xf32>
    %615 = arith.subf %607, %614 : vector<8x32xf32>
    %616 = arith.mulf %615, %615 : vector<8x32xf32>
    %cst_431 = arith.constant dense<0.000000e+00> : vector<8xf32>
    %617 = vector.multi_reduction <add>, %616, %cst_431 [1] : vector<8x32xf32> to vector<8xf32>
    %618 = vector.shape_cast %617 : vector<8xf32> to vector<8x1xf32>
    %cst_432 = arith.constant 3.200000e+01 : f32
    %619 = vector.broadcast %cst_432 : f32 to vector<8x1xf32>
    %620 = arith.divf %618, %619 : vector<8x1xf32>
    %621 = vector.broadcast %613 : vector<8x1xf32> to vector<8x32xf32>
    %622 = arith.subf %607, %621 : vector<8x32xf32>
    %cst_433 = arith.constant 9.99999974E-6 : f32
    %623 = vector.broadcast %cst_433 : f32 to vector<8x1xf32>
    %624 = arith.addf %620, %623 : vector<8x1xf32>
    %625 = math.rsqrt %624 : vector<8x1xf32>
    %626 = vector.broadcast %625 : vector<8x1xf32> to vector<8x32xf32>
    %627 = arith.mulf %622, %626 : vector<8x32xf32>
    %628 = vector.broadcast %608 : vector<1x32xf32> to vector<8x32xf32>
    %629 = arith.mulf %627, %628 : vector<8x32xf32>
    %630 = vector.broadcast %609 : vector<1x32xf32> to vector<8x32xf32>
    %631 = arith.addf %629, %630 : vector<8x32xf32>
    %c0_434 = arith.constant 0 : index
    %c0_435 = arith.constant 0 : index
    %632 = vector.load %arg18[%c0_434, %c0_435] : memref<32x32xf32, #tpu.memory_space<vmem>>, vector<32x32xf32>
    %cst_436 = arith.constant dense<0.000000e+00> : vector<8x32xf32>
    %633 = tpu.matmul %631, %632, %cst_436 {dimension_numbers = #tpu.dot_dimension_numbers<[1], [0], [0], [1], [0, 0, 1, 1], [], []>} : vector<8x32xf32>, vector<32x32xf32>, vector<8x32xf32> -> vector<8x32xf32>
    %c0_437 = arith.constant 0 : index
    %c0_438 = arith.constant 0 : index
    %634 = vector.load %arg19[%c0_437, %c0_438] : memref<1x32xf32, #tpu.memory_space<vmem>>, vector<1x32xf32>
    %635 = vector.broadcast %634 : vector<1x32xf32> to vector<8x32xf32>
    %636 = arith.addf %633, %635 : vector<8x32xf32>
    %cst_439 = arith.constant dense<0.000000e+00> : vector<32x32xf32>
    %637 = tpu.matmul %341, %636, %cst_439 {dimension_numbers = #tpu.dot_dimension_numbers<[1], [0], [0], [1], [0, 0, 1, 1], [], []>} : vector<32x8xf32>, vector<8x32xf32>, vector<32x32xf32> -> vector<32x32xf32>
    %638 = arith.mulf %637, %340 : vector<32x32xf32>
    %cst_440 = arith.constant dense<0.000000e+00> : vector<32x256xf32>
    %639 = tpu.matmul %638, %338, %cst_440 {dimension_numbers = #tpu.dot_dimension_numbers<[1], [0], [0], [1], [0, 0, 1, 1], [], []>} : vector<32x32xf32>, vector<32x256xf32>, vector<32x256xf32> -> vector<32x256xf32>
    %cst_441 = arith.constant 0.353553385 : f32
    %640 = vector.broadcast %cst_441 : f32 to vector<32x256xf32>
    %641 = arith.mulf %639, %640 : vector<32x256xf32>
    %642 = vector.shape_cast %641 : vector<32x256xf32> to vector<4x8x256xf32>
    %cst_442 = arith.constant dense<0xFF800000> : vector<4x256xf32>
    %643 = vector.multi_reduction <maximumf>, %642, %cst_442 [1] : vector<4x8x256xf32> to vector<4x256xf32>
    %644 = vector.shape_cast %643 : vector<4x256xf32> to vector<4x1x256xf32>
    %645 = vector.broadcast %644 : vector<4x1x256xf32> to vector<4x8x256xf32>
    %646 = arith.subf %642, %645 : vector<4x8x256xf32>
    %647 = math.exp %646 : vector<4x8x256xf32>
    %cst_443 = arith.constant dense<0.000000e+00> : vector<4x256xf32>
    %648 = vector.multi_reduction <add>, %647, %cst_443 [1] : vector<4x8x256xf32> to vector<4x256xf32>
    %649 = vector.shape_cast %648 : vector<4x256xf32> to vector<4x1x256xf32>
    %650 = tpu.reciprocal %649 {approx = true} : vector<4x1x256xf32> -> vector<4x1x256xf32>
    %651 = vector.broadcast %650 : vector<4x1x256xf32> to vector<4x8x256xf32>
    %652 = arith.mulf %647, %651 : vector<4x8x256xf32>
    %cst_444 = arith.constant 9.99999993E-9 : f32
    %653 = vector.broadcast %cst_444 : f32 to vector<4x8x256xf32>
    %654 = arith.addf %652, %653 : vector<4x8x256xf32>
    %cst_445 = arith.constant dense<0.000000e+00> : vector<4x8xf32>
    %655 = vector.multi_reduction <add>, %654, %cst_445 [2] : vector<4x8x256xf32> to vector<4x8xf32>
    %656 = vector.shape_cast %655 : vector<4x8xf32> to vector<4x8x1xf32>
    %657 = tpu.reciprocal %656 {approx = true} : vector<4x8x1xf32> -> vector<4x8x1xf32>
    %658 = vector.broadcast %657 : vector<4x8x1xf32> to vector<4x8x256xf32>
    %659 = arith.mulf %654, %658 : vector<4x8x256xf32>
    %660 = vector.shape_cast %659 : vector<4x8x256xf32> to vector<32x256xf32>
    %cst_446 = arith.constant dense<0.000000e+00> : vector<32x32xf32>
    %661 = tpu.matmul %660, %339, %cst_446 {dimension_numbers = #tpu.dot_dimension_numbers<[1], [1], [0], [0], [0, 0, 1, 0], [], []>} : vector<32x256xf32>, vector<32x256xf32>, vector<32x32xf32> -> vector<32x32xf32>
    %662 = arith.mulf %661, %340 : vector<32x32xf32>
    %cst_447 = arith.constant dense<0.000000e+00> : vector<8x32xf32>
    %663 = tpu.matmul %341, %662, %cst_447 {dimension_numbers = #tpu.dot_dimension_numbers<[0], [0], [1], [1], [0, 1, 1, 1], [], []>} : vector<32x8xf32>, vector<32x32xf32>, vector<8x32xf32> -> vector<8x32xf32>
    %c0_448 = arith.constant 0 : index
    %c0_449 = arith.constant 0 : index
    %664 = vector.load %arg20[%c0_448, %c0_449] : memref<32x96xf32, #tpu.memory_space<vmem>>, vector<32x96xf32>
    %cst_450 = arith.constant dense<0.000000e+00> : vector<8x96xf32>
    %665 = tpu.matmul %663, %664, %cst_450 {dimension_numbers = #tpu.dot_dimension_numbers<[1], [0], [0], [1], [0, 0, 1, 1], [], []>} : vector<8x32xf32>, vector<32x96xf32>, vector<8x96xf32> -> vector<8x96xf32>
    %c0_451 = arith.constant 0 : index
    %c0_452 = arith.constant 0 : index
    %666 = vector.load %arg21[%c0_451, %c0_452] : memref<1x96xf32, #tpu.memory_space<vmem>>, vector<1x96xf32>
    %667 = vector.broadcast %666 : vector<1x96xf32> to vector<8x96xf32>
    %668 = arith.addf %665, %667 : vector<8x96xf32>
    %c0_453 = arith.constant 0 : index
    %c0_454 = arith.constant 0 : index
    %669 = vector.load %arg22[%c0_453, %c0_454] : memref<32x96xf32, #tpu.memory_space<vmem>>, vector<32x96xf32>
    %cst_455 = arith.constant dense<0.000000e+00> : vector<8x96xf32>
    %670 = tpu.matmul %607, %669, %cst_455 {dimension_numbers = #tpu.dot_dimension_numbers<[1], [0], [0], [1], [0, 0, 1, 1], [], []>} : vector<8x32xf32>, vector<32x96xf32>, vector<8x96xf32> -> vector<8x96xf32>
    %c0_456 = arith.constant 0 : index
    %c0_457 = arith.constant 0 : index
    %671 = vector.load %arg23[%c0_456, %c0_457] : memref<1x96xf32, #tpu.memory_space<vmem>>, vector<1x96xf32>
    %672 = vector.broadcast %671 : vector<1x96xf32> to vector<8x96xf32>
    %673 = arith.addf %670, %672 : vector<8x96xf32>
    %674 = vector.extract_strided_slice %668 {offsets = [0, 0], sizes = [8, 32], strides = [1, 1]} : vector<8x96xf32> to vector<8x32xf32>
    %675 = vector.extract_strided_slice %673 {offsets = [0, 0], sizes = [8, 32], strides = [1, 1]} : vector<8x96xf32> to vector<8x32xf32>
    %676 = arith.addf %674, %675 : vector<8x32xf32>
    %677 = arith.negf %676 : vector<8x32xf32>
    %678 = math.exp %677 : vector<8x32xf32>
    %cst_458 = arith.constant 1.000000e+00 : f32
    %679 = vector.broadcast %cst_458 : f32 to vector<8x32xf32>
    %680 = arith.addf %679, %678 : vector<8x32xf32>
    %681 = arith.divf %679, %680 : vector<8x32xf32>
    %682 = vector.extract_strided_slice %668 {offsets = [0, 32], sizes = [8, 32], strides = [1, 1]} : vector<8x96xf32> to vector<8x32xf32>
    %683 = vector.extract_strided_slice %673 {offsets = [0, 32], sizes = [8, 32], strides = [1, 1]} : vector<8x96xf32> to vector<8x32xf32>
    %684 = arith.addf %682, %683 : vector<8x32xf32>
    %685 = arith.negf %684 : vector<8x32xf32>
    %686 = math.exp %685 : vector<8x32xf32>
    %cst_459 = arith.constant 1.000000e+00 : f32
    %687 = vector.broadcast %cst_459 : f32 to vector<8x32xf32>
    %688 = arith.addf %687, %686 : vector<8x32xf32>
    %689 = arith.divf %687, %688 : vector<8x32xf32>
    %690 = vector.extract_strided_slice %668 {offsets = [0, 64], sizes = [8, 32], strides = [1, 1]} : vector<8x96xf32> to vector<8x32xf32>
    %691 = vector.extract_strided_slice %673 {offsets = [0, 64], sizes = [8, 32], strides = [1, 1]} : vector<8x96xf32> to vector<8x32xf32>
    %692 = arith.mulf %681, %691 : vector<8x32xf32>
    %693 = arith.addf %690, %692 : vector<8x32xf32>
    %694 = math.tanh %693 : vector<8x32xf32>
    %cst_460 = arith.constant 1.000000e+00 : f32
    %695 = vector.broadcast %cst_460 : f32 to vector<8x32xf32>
    %696 = arith.subf %695, %689 : vector<8x32xf32>
    %697 = arith.mulf %696, %694 : vector<8x32xf32>
    %698 = arith.mulf %689, %607 : vector<8x32xf32>
    %699 = arith.addf %697, %698 : vector<8x32xf32>
    %c0_461 = arith.constant 0 : index
    %c0_462 = arith.constant 0 : index
    %700 = vector.load %arg14[%c0_461, %c0_462] : memref<1x32xf32, #tpu.memory_space<vmem>>, vector<1x32xf32>
    %c0_463 = arith.constant 0 : index
    %c0_464 = arith.constant 0 : index
    %701 = vector.load %arg15[%c0_463, %c0_464] : memref<1x32xf32, #tpu.memory_space<vmem>>, vector<1x32xf32>
    %cst_465 = arith.constant dense<0.000000e+00> : vector<8xf32>
    %702 = vector.multi_reduction <add>, %699, %cst_465 [1] : vector<8x32xf32> to vector<8xf32>
    %703 = vector.shape_cast %702 : vector<8xf32> to vector<8x1xf32>
    %cst_466 = arith.constant 3.200000e+01 : f32
    %704 = vector.broadcast %cst_466 : f32 to vector<8x1xf32>
    %705 = arith.divf %703, %704 : vector<8x1xf32>
    %706 = vector.broadcast %705 : vector<8x1xf32> to vector<8x32xf32>
    %707 = arith.subf %699, %706 : vector<8x32xf32>
    %708 = arith.mulf %707, %707 : vector<8x32xf32>
    %cst_467 = arith.constant dense<0.000000e+00> : vector<8xf32>
    %709 = vector.multi_reduction <add>, %708, %cst_467 [1] : vector<8x32xf32> to vector<8xf32>
    %710 = vector.shape_cast %709 : vector<8xf32> to vector<8x1xf32>
    %cst_468 = arith.constant 3.200000e+01 : f32
    %711 = vector.broadcast %cst_468 : f32 to vector<8x1xf32>
    %712 = arith.divf %710, %711 : vector<8x1xf32>
    %713 = vector.broadcast %705 : vector<8x1xf32> to vector<8x32xf32>
    %714 = arith.subf %699, %713 : vector<8x32xf32>
    %cst_469 = arith.constant 9.99999974E-6 : f32
    %715 = vector.broadcast %cst_469 : f32 to vector<8x1xf32>
    %716 = arith.addf %712, %715 : vector<8x1xf32>
    %717 = math.rsqrt %716 : vector<8x1xf32>
    %718 = vector.broadcast %717 : vector<8x1xf32> to vector<8x32xf32>
    %719 = arith.mulf %714, %718 : vector<8x32xf32>
    %720 = vector.broadcast %700 : vector<1x32xf32> to vector<8x32xf32>
    %721 = arith.mulf %719, %720 : vector<8x32xf32>
    %722 = vector.broadcast %701 : vector<1x32xf32> to vector<8x32xf32>
    %723 = arith.addf %721, %722 : vector<8x32xf32>
    %c0_470 = arith.constant 0 : index
    %c0_471 = arith.constant 0 : index
    %724 = vector.load %arg24[%c0_470, %c0_471] : memref<32x64xf32, #tpu.memory_space<vmem>>, vector<32x64xf32>
    %cst_472 = arith.constant dense<0.000000e+00> : vector<8x64xf32>
    %725 = tpu.matmul %723, %724, %cst_472 {dimension_numbers = #tpu.dot_dimension_numbers<[1], [0], [0], [1], [0, 0, 1, 1], [], []>} : vector<8x32xf32>, vector<32x64xf32>, vector<8x64xf32> -> vector<8x64xf32>
    %c0_473 = arith.constant 0 : index
    %c0_474 = arith.constant 0 : index
    %726 = vector.load %arg25[%c0_473, %c0_474] : memref<1x64xf32, #tpu.memory_space<vmem>>, vector<1x64xf32>
    %727 = vector.broadcast %726 : vector<1x64xf32> to vector<8x64xf32>
    %728 = arith.addf %725, %727 : vector<8x64xf32>
    %cst_475 = arith.constant 0.000000e+00 : f32
    %729 = vector.broadcast %cst_475 : f32 to vector<8x64xf32>
    %730 = arith.maximumf %728, %729 : vector<8x64xf32>
    %c0_476 = arith.constant 0 : index
    %c0_477 = arith.constant 0 : index
    %731 = vector.load %arg26[%c0_476, %c0_477] : memref<64x32xf32, #tpu.memory_space<vmem>>, vector<64x32xf32>
    %cst_478 = arith.constant dense<0.000000e+00> : vector<8x32xf32>
    %732 = tpu.matmul %730, %731, %cst_478 {dimension_numbers = #tpu.dot_dimension_numbers<[1], [0], [0], [1], [0, 0, 1, 1], [], []>} : vector<8x64xf32>, vector<64x32xf32>, vector<8x32xf32> -> vector<8x32xf32>
    %733 = arith.addf %699, %732 : vector<8x32xf32>
    %c0_479 = arith.constant 0 : index
    %c0_480 = arith.constant 0 : index
    %734 = vector.load %arg27[%c0_479, %c0_480] : memref<1x32xf32, #tpu.memory_space<vmem>>, vector<1x32xf32>
    %735 = vector.broadcast %734 : vector<1x32xf32> to vector<8x32xf32>
    %736 = arith.addf %733, %735 : vector<8x32xf32>
    %cst_481 = arith.constant dense<0.000000e+00> : vector<8x256xf32>
    %737 = vector.multi_reduction <add>, %654, %cst_481 [0] : vector<4x8x256xf32> to vector<8x256xf32>
    %cst_482 = arith.constant 4.000000e+00 : f32
    %738 = vector.broadcast %cst_482 : f32 to vector<8x256xf32>
    %739 = arith.divf %737, %738 : vector<8x256xf32>
    %c0_483 = arith.constant 0 : index
    %c0_484 = arith.constant 0 : index
    %c0_485 = arith.constant 0 : index
    %740 = vector.load %arg29[%c0_483, %c0_484, %c0_485] : memref<1x8x256xf32, #tpu.memory_space<vmem>>, vector<1x8x256xf32>
    %741 = vector.shape_cast %740 : vector<1x8x256xf32> to vector<8x256xf32>
    %742 = vector.shape_cast %739 : vector<8x256xf32> to vector<1x8x256xf32>
    tpu.vector_store %arg29[%c0_483, %c0_484, %c0_485], %742 {strides = array<i32>} : memref<1x8x256xf32, #tpu.memory_space<vmem>>, vector<1x8x256xf32>,
    %cst_486 = arith.constant dense<0.000000e+00> : vector<32x256xf32>
    %743 = tpu.matmul %736, %739, %cst_486 {dimension_numbers = #tpu.dot_dimension_numbers<[0], [0], [1], [1], [0, 1, 1, 1], [], []>} : vector<8x32xf32>, vector<8x256xf32>, vector<32x256xf32> -> vector<32x256xf32>
    %c0_487 = arith.constant 0 : index
    %c0_488 = arith.constant 0 : index
    %c0_489 = arith.constant 0 : index
    %744 = vector.load %arg28[%c0_487, %c0_488, %c0_489] : memref<1x64x256xf32, #tpu.memory_space<vmem>>, vector<1x32x256xf32>
    %745 = vector.shape_cast %744 : vector<1x32x256xf32> to vector<32x256xf32>
    %746 = vector.shape_cast %308 : vector<32x256xf32> to vector<1x32x256xf32>
    tpu.vector_store %arg28[%c0_487, %c0_488, %c0_489], %746 {strides = array<i32>} : memref<1x64x256xf32, #tpu.memory_space<vmem>>, vector<1x32x256xf32>,
    %c0_490 = arith.constant 0 : index
    %c32_491 = arith.constant 32 : index
    %c0_492 = arith.constant 0 : index
    %747 = vector.load %arg28[%c0_490, %c32_491, %c0_492] : memref<1x64x256xf32, #tpu.memory_space<vmem>>, vector<1x32x256xf32>
    %748 = vector.shape_cast %747 : vector<1x32x256xf32> to vector<32x256xf32>
    %749 = vector.shape_cast %743 : vector<32x256xf32> to vector<1x32x256xf32>
    tpu.vector_store %arg28[%c0_490, %c32_491, %c0_492], %749 {strides = array<i32>} : memref<1x64x256xf32, #tpu.memory_space<vmem>>, vector<1x32x256xf32>,
    return
  }
  func.func @transform_0(%arg0: i32) -> (i32, i32, i32) {
    %c0_i32 = arith.constant 0 : i32
    %c0_i32_0 = arith.constant 0 : i32
    %c0_i32_1 = arith.constant 0 : i32
    return %arg0, %c0_i32, %c0_i32_0 : i32, i32, i32
  }
  func.func @transform_1(%arg0: i32) -> (i32, i32, i32) {
    %c0_i32 = arith.constant 0 : i32
    %c0_i32_0 = arith.constant 0 : i32
    %c0_i32_1 = arith.constant 0 : i32
    return %arg0, %c0_i32, %c0_i32_0 : i32, i32, i32
  }
  func.func @transform_2(%arg0: i32) -> (i32, i32) {
    %c0_i32 = arith.constant 0 : i32
    %c0_i32_0 = arith.constant 0 : i32
    %c0_i32_1 = arith.constant 0 : i32
    return %c0_i32, %c0_i32_0 : i32, i32
  }
  func.func @transform_3(%arg0: i32) -> (i32, i32) {
    %c0_i32 = arith.constant 0 : i32
    %c0_i32_0 = arith.constant 0 : i32
    %c0_i32_1 = arith.constant 0 : i32
    return %c0_i32, %c0_i32_0 : i32, i32
  }
  func.func @transform_4(%arg0: i32) -> (i32, i32) {
    %c0_i32 = arith.constant 0 : i32
    %c0_i32_0 = arith.constant 0 : i32
    %c0_i32_1 = arith.constant 0 : i32
    return %c0_i32, %c0_i32_0 : i32, i32
  }
  func.func @transform_5(%arg0: i32) -> (i32, i32, i32) {
    %c0_i32 = arith.constant 0 : i32
    %c0_i32_0 = arith.constant 0 : i32
    %c0_i32_1 = arith.constant 0 : i32
    %c0_i32_2 = arith.constant 0 : i32
    return %c0_i32, %c0_i32_0, %c0_i32_1 : i32, i32, i32
  }
  func.func @transform_6(%arg0: i32) -> (i32, i32, i32) {
    %c0_i32 = arith.constant 0 : i32
    %c0_i32_0 = arith.constant 0 : i32
    %c0_i32_1 = arith.constant 0 : i32
    %c0_i32_2 = arith.constant 0 : i32
    return %c0_i32, %c0_i32_0, %c0_i32_1 : i32, i32, i32
  }
  func.func @transform_7(%arg0: i32) -> (i32, i32) {
    %c0_i32 = arith.constant 0 : i32
    %c0_i32_0 = arith.constant 0 : i32
    %c0_i32_1 = arith.constant 0 : i32
    return %c0_i32, %c0_i32_0 : i32, i32
  }
  func.func @transform_8(%arg0: i32) -> (i32, i32) {
    %c0_i32 = arith.constant 0 : i32
    %c0_i32_0 = arith.constant 0 : i32
    %c0_i32_1 = arith.constant 0 : i32
    return %c0_i32, %c0_i32_0 : i32, i32
  }
  func.func @transform_9(%arg0: i32) -> (i32, i32) {
    %c0_i32 = arith.constant 0 : i32
    %c0_i32_0 = arith.constant 0 : i32
    %c0_i32_1 = arith.constant 0 : i32
    return %c0_i32, %c0_i32_0 : i32, i32
  }
  func.func @transform_10(%arg0: i32) -> (i32, i32) {
    %c0_i32 = arith.constant 0 : i32
    %c0_i32_0 = arith.constant 0 : i32
    %c0_i32_1 = arith.constant 0 : i32
    return %c0_i32, %c0_i32_0 : i32, i32
  }
  func.func @transform_11(%arg0: i32) -> (i32, i32) {
    %c0_i32 = arith.constant 0 : i32
    %c0_i32_0 = arith.constant 0 : i32
    %c0_i32_1 = arith.constant 0 : i32
    return %c0_i32, %c0_i32_0 : i32, i32
  }
  func.func @transform_12(%arg0: i32) -> (i32, i32) {
    %c0_i32 = arith.constant 0 : i32
    %c0_i32_0 = arith.constant 0 : i32
    %c0_i32_1 = arith.constant 0 : i32
    return %c0_i32, %c0_i32_0 : i32, i32
  }
  func.func @transform_13(%arg0: i32) -> (i32, i32) {
    %c0_i32 = arith.constant 0 : i32
    %c0_i32_0 = arith.constant 0 : i32
    %c0_i32_1 = arith.constant 0 : i32
    return %c0_i32, %c0_i32_0 : i32, i32
  }
  func.func @transform_14(%arg0: i32) -> (i32, i32) {
    %c0_i32 = arith.constant 0 : i32
    %c0_i32_0 = arith.constant 0 : i32
    %c0_i32_1 = arith.constant 0 : i32
    return %c0_i32, %c0_i32_0 : i32, i32
  }
  func.func @transform_15(%arg0: i32) -> (i32, i32) {
    %c0_i32 = arith.constant 0 : i32
    %c0_i32_0 = arith.constant 0 : i32
    %c0_i32_1 = arith.constant 0 : i32
    return %c0_i32, %c0_i32_0 : i32, i32
  }
  func.func @transform_16(%arg0: i32) -> (i32, i32) {
    %c0_i32 = arith.constant 0 : i32
    %c0_i32_0 = arith.constant 0 : i32
    %c0_i32_1 = arith.constant 0 : i32
    return %c0_i32, %c0_i32_0 : i32, i32
  }
  func.func @transform_17(%arg0: i32) -> (i32, i32) {
    %c0_i32 = arith.constant 0 : i32
    %c0_i32_0 = arith.constant 0 : i32
    %c0_i32_1 = arith.constant 0 : i32
    return %c0_i32, %c0_i32_0 : i32, i32
  }
  func.func @transform_18(%arg0: i32) -> (i32, i32) {
    %c0_i32 = arith.constant 0 : i32
    %c0_i32_0 = arith.constant 0 : i32
    %c0_i32_1 = arith.constant 0 : i32
    return %c0_i32, %c0_i32_0 : i32, i32
  }
  func.func @transform_19(%arg0: i32) -> (i32, i32) {
    %c0_i32 = arith.constant 0 : i32
    %c0_i32_0 = arith.constant 0 : i32
    %c0_i32_1 = arith.constant 0 : i32
    return %c0_i32, %c0_i32_0 : i32, i32
  }
  func.func @transform_20(%arg0: i32) -> (i32, i32) {
    %c0_i32 = arith.constant 0 : i32
    %c0_i32_0 = arith.constant 0 : i32
    %c0_i32_1 = arith.constant 0 : i32
    return %c0_i32, %c0_i32_0 : i32, i32
  }
  func.func @transform_21(%arg0: i32) -> (i32, i32) {
    %c0_i32 = arith.constant 0 : i32
    %c0_i32_0 = arith.constant 0 : i32
    %c0_i32_1 = arith.constant 0 : i32
    return %c0_i32, %c0_i32_0 : i32, i32
  }
  func.func @transform_22(%arg0: i32) -> (i32, i32) {
    %c0_i32 = arith.constant 0 : i32
    %c0_i32_0 = arith.constant 0 : i32
    %c0_i32_1 = arith.constant 0 : i32
    return %c0_i32, %c0_i32_0 : i32, i32
  }
  func.func @transform_23(%arg0: i32) -> (i32, i32) {
    %c0_i32 = arith.constant 0 : i32
    %c0_i32_0 = arith.constant 0 : i32
    %c0_i32_1 = arith.constant 0 : i32
    return %c0_i32, %c0_i32_0 : i32, i32
  }
  func.func @transform_24(%arg0: i32) -> (i32, i32) {
    %c0_i32 = arith.constant 0 : i32
    %c0_i32_0 = arith.constant 0 : i32
    %c0_i32_1 = arith.constant 0 : i32
    return %c0_i32, %c0_i32_0 : i32, i32
  }
  func.func @transform_25(%arg0: i32) -> (i32, i32) {
    %c0_i32 = arith.constant 0 : i32
    %c0_i32_0 = arith.constant 0 : i32
    %c0_i32_1 = arith.constant 0 : i32
    return %c0_i32, %c0_i32_0 : i32, i32
  }
  func.func @transform_26(%arg0: i32) -> (i32, i32) {
    %c0_i32 = arith.constant 0 : i32
    %c0_i32_0 = arith.constant 0 : i32
    %c0_i32_1 = arith.constant 0 : i32
    return %c0_i32, %c0_i32_0 : i32, i32
  }
  func.func @transform_27(%arg0: i32) -> (i32, i32, i32) {
    %c0_i32 = arith.constant 0 : i32
    %c0_i32_0 = arith.constant 0 : i32
    %c0_i32_1 = arith.constant 0 : i32
    return %arg0, %c0_i32, %c0_i32_0 : i32, i32, i32
  }
  func.func @transform_28(%arg0: i32) -> (i32, i32, i32) {
    %c0_i32 = arith.constant 0 : i32
    %c0_i32_0 = arith.constant 0 : i32
    %c0_i32_1 = arith.constant 0 : i32
    return %arg0, %c0_i32, %c0_i32_0 : i32, i32, i32
  }
}

</mosaic_0001>

<llo_original>
// kernel: _lambda_.1
$region0: #{_lambda_.1}
  #allocation0 [shape = 'u32[]', space=smem, size = 0x4, offset = 0x4, fixed_abs, tag = 'smem constant byte address 0x4 - core index']
  #allocation1 [shape = 'u32[144,128]{1,0:T(1,128)}', space=vmem, size = 0x12000, scoped, tag = 'internal scratch']
  #allocation2 [shape = 'f32[288,256]{1,0:T(8,128)}', space=vmem, size = 0x48000, scoped, tag = 'scratch operand']
  %s0 = inlined_call_operand.vmem [shape: f32[2,3,256], index: 0, kind: input, shape index: {}]
  %s1 = inlined_call_operand.vmem [shape: f32[2,8,32], index: 1, kind: input, shape index: {}]
  %s2 = inlined_call_operand.vmem [shape: f32[1,32], index: 2, kind: input, shape index: {}]
  %s3 = inlined_call_operand.vmem [shape: f32[1,32], index: 3, kind: input, shape index: {}]
  %s4 = inlined_call_operand.vmem [shape: f32[9,256], index: 4, kind: input, shape index: {}]
  %s5 = inlined_call_operand.vmem [shape: f32[6,32,288], index: 5, kind: input, shape index: {}]
  %s6 = inlined_call_operand.vmem [shape: f32[6,32,1], index: 6, kind: input, shape index: {}]
  %s7 = inlined_call_operand.vmem [shape: f32[32,32], index: 7, kind: input, shape index: {}]
  %s8 = inlined_call_operand.vmem [shape: f32[32,8], index: 8, kind: input, shape index: {}]
  %s9 = inlined_call_operand.vmem [shape: f32[32,1], index: 9, kind: input, shape index: {}]
  %s10 = inlined_call_operand.vmem [shape: f32[32,1], index: 10, kind: input, shape index: {}]
  %s11 = inlined_call_operand.vmem [shape: f32[1,32], index: 11, kind: input, shape index: {}]
  %s12 = inlined_call_operand.vmem [shape: f32[1,32], index: 12, kind: input, shape index: {}]
  %s13 = inlined_call_operand.vmem [shape: f32[1,32], index: 13, kind: input, shape index: {}]
  %s14 = inlined_call_operand.vmem [shape: f32[1,32], index: 14, kind: input, shape index: {}]
  %s15 = inlined_call_operand.vmem [shape: f32[64,32], index: 15, kind: input, shape index: {}]
  %s16 = inlined_call_operand.vmem [shape: f32[64,1], index: 16, kind: input, shape index: {}]
  %s17 = inlined_call_operand.vmem [shape: f32[32,32], index: 17, kind: input, shape index: {}]
  %s18 = inlined_call_operand.vmem [shape: f32[1,32], index: 18, kind: input, shape index: {}]
  %s19 = inlined_call_operand.vmem [shape: f32[32,96], index: 19, kind: input, shape index: {}]
  %s20 = inlined_call_operand.vmem [shape: f32[1,96], index: 20, kind: input, shape index: {}]
  %s21 = inlined_call_operand.vmem [shape: f32[32,96], index: 21, kind: input, shape index: {}]
  %s22 = inlined_call_operand.vmem [shape: f32[1,96], index: 22, kind: input, shape index: {}]
  %s23 = inlined_call_operand.vmem [shape: f32[32,64], index: 23, kind: input, shape index: {}]
  %s24 = inlined_call_operand.vmem [shape: f32[1,64], index: 24, kind: input, shape index: {}]
  %s25 = inlined_call_operand.vmem [shape: f32[64,32], index: 25, kind: input, shape index: {}]
  %s26 = inlined_call_operand.vmem [shape: f32[1,32], index: 26, kind: input, shape index: {}]
  %s27 = inlined_call_operand.vmem [shape: f32[2,64,256], index: 27, kind: output, shape index: {0}]
  %s28 = inlined_call_operand.hbm [shape: f32[2,8,256], index: 28, kind: output, shape index: {1}]
  %29 = xla_tuple %s27, %s28
  %s30 = sld [smem:[#allocation0]]
  $region149: #{_lambda_.1} parent=0
    _
  %s32 = ssub.s32 1, %s30
  %s33 = scalar_select 0, %s32, %s30
  $region1: #{_lambda_.1} parent=0
    #allocation3 [shape = 'u8[16384]{0}', space=vmem, size = 0x4000, scoped, tag = 'output window, operand 1']
    #allocation4 [shape = 's32[2]{0}', space=sflag, size = 0x8, scoped, tag = 'scoped memory for _lambda_.1']
    %34 = vsyncpa [#allocation4], 0
    %s35 = scalar_lea.sflag [#allocation4], 1
    %36 = vsyncpa %s35, 0
    loop: start=0, step=1, limit=4
    $region2: #{_lambda_.1} parent=1 // loop_pre_header
      _
    $region3: #{_lambda_.1} parent=1 // loop_header
      %s38 = sphi 0, %s42
      %p39 = scmp.ge.s32.totalorder %s38, 4
      %s48 = sphi 0, %s50
      %s51 = sphi 0, %s48
      %s52 = sphi 0, %s51
      %s68 = sphi 0, %s52
      %s74 = sphi 0, %s76
      %s77 = sphi 0, %s74
      %s78 = sphi 0, %s77
      %s94 = sphi 0, %s78
      %s98 = sphi 0, %s98
      %s100 = sphi 0, %s98
      %s101 = sphi 0, %s100
      %s115 = sphi 0, %s101
      %s119 = sphi 0, %s119
      %s121 = sphi 0, %s119
      %s122 = sphi 0, %s121
      %s136 = sphi 0, %s122
      %s140 = sphi 0, %s140
      %s142 = sphi 0, %s140
      %s143 = sphi 0, %s142
      %s157 = sphi 0, %s143
      %s161 = sphi 0, %s161
      %s163 = sphi 0, %s161
      %s164 = sphi 0, %s163
      %s178 = sphi 0, %s164
      %s182 = sphi 0, %s182
      %s184 = sphi 0, %s182
      %s185 = sphi 0, %s184
      %s199 = sphi 0, %s185
      %s203 = sphi 0, %s203
      %s205 = sphi 0, %s203
      %s206 = sphi 0, %s205
      %s220 = sphi 0, %s206
      %s224 = sphi 0, %s224
      %s226 = sphi 0, %s224
      %s227 = sphi 0, %s226
      %s241 = sphi 0, %s227
      %s245 = sphi 0, %s245
      %s247 = sphi 0, %s245
      %s248 = sphi 0, %s247
      %s262 = sphi 0, %s248
      %s266 = sphi 0, %s266
      %s268 = sphi 0, %s266
      %s269 = sphi 0, %s268
      %s283 = sphi 0, %s269
      %s287 = sphi 0, %s287
      %s289 = sphi 0, %s287
      %s290 = sphi 0, %s289
      %s304 = sphi 0, %s290
      %s308 = sphi 0, %s308
      %s310 = sphi 0, %s308
      %s311 = sphi 0, %s310
      %s325 = sphi 0, %s311
      %s329 = sphi 0, %s329
      %s331 = sphi 0, %s329
      %s332 = sphi 0, %s331
      %s346 = sphi 0, %s332
      %s350 = sphi 0, %s350
      %s352 = sphi 0, %s350
      %s353 = sphi 0, %s352
      %s367 = sphi 0, %s353
      %s371 = sphi 0, %s371
      %s373 = sphi 0, %s371
      %s374 = sphi 0, %s373
      %s388 = sphi 0, %s374
      %s392 = sphi 0, %s392
      %s394 = sphi 0, %s392
      %s395 = sphi 0, %s394
      %s409 = sphi 0, %s395
      %s413 = sphi 0, %s413
      %s415 = sphi 0, %s413
      %s416 = sphi 0, %s415
      %s430 = sphi 0, %s416
      %s434 = sphi 0, %s434
      %s436 = sphi 0, %s434
      %s437 = sphi 0, %s436
      %s451 = sphi 0, %s437
      %s455 = sphi 0, %s455
      %s457 = sphi 0, %s455
      %s458 = sphi 0, %s457
      %s472 = sphi 0, %s458
      %s476 = sphi 0, %s476
      %s478 = sphi 0, %s476
      %s479 = sphi 0, %s478
      %s493 = sphi 0, %s479
      %s497 = sphi 0, %s497
      %s499 = sphi 0, %s497
      %s500 = sphi 0, %s499
      %s514 = sphi 0, %s500
      %s518 = sphi 0, %s518
      %s520 = sphi 0, %s518
      %s521 = sphi 0, %s520
      %s535 = sphi 0, %s521
      %s539 = sphi 0, %s539
      %s541 = sphi 0, %s539
      %s542 = sphi 0, %s541
      %s556 = sphi 0, %s542
      %s560 = sphi 0, %s560
      %s562 = sphi 0, %s560
      %s563 = sphi 0, %s562
      %s577 = sphi 0, %s563
      %s581 = sphi 0, %s581
      %s583 = sphi 0, %s581
      %s584 = sphi 0, %s583
      %s598 = sphi 0, %s584
      %s602 = sphi 0, %s602
      %s604 = sphi 0, %s602
      %s605 = sphi 0, %s604
      %s619 = sphi 0, %s605
      %s625 = sphi 0, %s627
      %s628 = sphi 0, %s625
      %s629 = sphi 0, %s628
      %s645 = sphi 0, %s629
      %s651 = sphi 0, %s653
      %s654 = sphi 0, %s651
      %s655 = sphi 0, %s654
      %s671 = sphi 0, %s655
    $region4: #{_lambda_.1} parent=1 // loop_header_branch
      %41 = sbr.rel (%p39) target = $region8
    $region5: #{_lambda_.1} parent=1 // loop_body
      %s43 = ssub.s32 %s38, 1
      %s44 = ssub.s32 %s38, 2
      %s45 = sadd.s32 %s38, 1
      %s46 = ssub.s32 %s38, %s45
      %p47 = scmp.eq.s32.totalorder %s46, 0
      %s49 = sadd.s32 %s48, 1
      %s50 = scalar_select %p47, %s48, %s49
      %p53 = pneg %p47
      %p54 = scmp.eq.s32.totalorder %s38, 1
      %p55 = por %p53, %p54
      %p56 = scmp.ne.s32.totalorder %s48, %s51
      %p57 = scmp.eq.s32.totalorder %s38, 0
      %p58 = por %p56, %p57
      %p59 = scmp.ne.s32.totalorder %s48, %s51
      %p60 = scmp.eq.s32.totalorder %s43, 1
      %p61 = por %p59, %p60
      %p62 = scmp.ne.s32.totalorder %s51, %s52
      %p63 = scmp.eq.s32.totalorder %s43, 0
      %p64 = por %p62, %p63
      %p65 = scmp.ne.s32.totalorder %s51, %s52
      %p66 = scmp.eq.s32.totalorder %s44, 1
      %p67 = por %p65, %p66
      %p69 = scmp.ne.s32.totalorder %s52, %s68
      %p70 = scmp.eq.s32.totalorder %s44, 0
      %p71 = por %p69, %p70
      %s72 = ssub.s32 %s38, %s45
      %p73 = scmp.eq.s32.totalorder %s72, 0
      %s75 = sadd.s32 %s74, 1
      %s76 = scalar_select %p73, %s74, %s75
      %p79 = pneg %p73
      %p80 = scmp.eq.s32.totalorder %s38, 1
      %p81 = por %p79, %p80
      %p82 = scmp.ne.s32.totalorder %s74, %s77
      %p83 = scmp.eq.s32.totalorder %s38, 0
      %p84 = por %p82, %p83
      %p85 = scmp.ne.s32.totalorder %s74, %s77
      %p86 = scmp.eq.s32.totalorder %s43, 1
      %p87 = por %p85, %p86
      %p88 = scmp.ne.s32.totalorder %s77, %s78
      %p89 = scmp.eq.s32.totalorder %s43, 0
      %p90 = por %p88, %p89
      %p91 = scmp.ne.s32.totalorder %s77, %s78
      %p92 = scmp.eq.s32.totalorder %s44, 1
      %p93 = por %p91, %p92
      %p95 = scmp.ne.s32.totalorder %s78, %s94
      %p96 = scmp.eq.s32.totalorder %s44, 0
      %p97 = por %p95, %p96
      %s99 = sadd.s32 %s98, 1
      %p102 = scmp.eq.s32.totalorder %s38, 1
      %p103 = scmp.ne.s32.totalorder %s98, %s100
      %p104 = scmp.eq.s32.totalorder %s38, 0
      %p105 = por %p103, %p104
      %p106 = scmp.ne.s32.totalorder %s98, %s100
      %p107 = scmp.eq.s32.totalorder %s43, 1
      %p108 = por %p106, %p107
      %p109 = scmp.ne.s32.totalorder %s100, %s101
      %p110 = scmp.eq.s32.totalorder %s43, 0
      %p111 = por %p109, %p110
      %p112 = scmp.ne.s32.totalorder %s100, %s101
      %p113 = scmp.eq.s32.totalorder %s44, 1
      %p114 = por %p112, %p113
      %p116 = scmp.ne.s32.totalorder %s101, %s115
      %p117 = scmp.eq.s32.totalorder %s44, 0
      %p118 = por %p116, %p117
      %s120 = sadd.s32 %s119, 1
      %p123 = scmp.eq.s32.totalorder %s38, 1
      %p124 = scmp.ne.s32.totalorder %s119, %s121
      %p125 = scmp.eq.s32.totalorder %s38, 0
      %p126 = por %p124, %p125
      %p127 = scmp.ne.s32.totalorder %s119, %s121
      %p128 = scmp.eq.s32.totalorder %s43, 1
      %p129 = por %p127, %p128
      %p130 = scmp.ne.s32.totalorder %s121, %s122
      %p131 = scmp.eq.s32.totalorder %s43, 0
      %p132 = por %p130, %p131
      %p133 = scmp.ne.s32.totalorder %s121, %s122
      %p134 = scmp.eq.s32.totalorder %s44, 1
      %p135 = por %p133, %p134
      %p137 = scmp.ne.s32.totalorder %s122, %s136
      %p138 = scmp.eq.s32.totalorder %s44, 0
      %p139 = por %p137, %p138
      %s141 = sadd.s32 %s140, 1
      %p144 = scmp.eq.s32.totalorder %s38, 1
      %p145 = scmp.ne.s32.totalorder %s140, %s142
      %p146 = scmp.eq.s32.totalorder %s38, 0
      %p147 = por %p145, %p146
      %p148 = scmp.ne.s32.totalorder %s140, %s142
      %p149 = scmp.eq.s32.totalorder %s43, 1
      %p150 = por %p148, %p149
      %p151 = scmp.ne.s32.totalorder %s142, %s143
      %p152 = scmp.eq.s32.totalorder %s43, 0
      %p153 = por %p151, %p152
      %p154 = scmp.ne.s32.totalorder %s142, %s143
      %p155 = scmp.eq.s32.totalorder %s44, 1
      %p156 = por %p154, %p155
      %p158 = scmp.ne.s32.totalorder %s143, %s157
      %p159 = scmp.eq.s32.totalorder %s44, 0
      %p160 = por %p158, %p159
      %s162 = sadd.s32 %s161, 1
      %p165 = scmp.eq.s32.totalorder %s38, 1
      %p166 = scmp.ne.s32.totalorder %s161, %s163
      %p167 = scmp.eq.s32.totalorder %s38, 0
      %p168 = por %p166, %p167
      %p169 = scmp.ne.s32.totalorder %s161, %s163
      %p170 = scmp.eq.s32.totalorder %s43, 1
      %p171 = por %p169, %p170
      %p172 = scmp.ne.s32.totalorder %s163, %s164
      %p173 = scmp.eq.s32.totalorder %s43, 0
      %p174 = por %p172, %p173
      %p175 = scmp.ne.s32.totalorder %s163, %s164
      %p176 = scmp.eq.s32.totalorder %s44, 1
      %p177 = por %p175, %p176
      %p179 = scmp.ne.s32.totalorder %s164, %s178
      %p180 = scmp.eq.s32.totalorder %s44, 0
      %p181 = por %p179, %p180
      %s183 = sadd.s32 %s182, 1
      %p186 = scmp.eq.s32.totalorder %s38, 1
      %p187 = scmp.ne.s32.totalorder %s182, %s184
      %p188 = scmp.eq.s32.totalorder %s38, 0
      %p189 = por %p187, %p188
      %p190 = scmp.ne.s32.totalorder %s182, %s184
      %p191 = scmp.eq.s32.totalorder %s43, 1
      %p192 = por %p190, %p191
      %p193 = scmp.ne.s32.totalorder %s184, %s185
      %p194 = scmp.eq.s32.totalorder %s43, 0
      %p195 = por %p193, %p194
      %p196 = scmp.ne.s32.totalorder %s184, %s185
      %p197 = scmp.eq.s32.totalorder %s44, 1
      %p198 = por %p196, %p197
      %p200 = scmp.ne.s32.totalorder %s185, %s199
      %p201 = scmp.eq.s32.totalorder %s44, 0
      %p202 = por %p200, %p201
      %s204 = sadd.s32 %s203, 1
      %p207 = scmp.eq.s32.totalorder %s38, 1
      %p208 = scmp.ne.s32.totalorder %s203, %s205
      %p209 = scmp.eq.s32.totalorder %s38, 0
      %p210 = por %p208, %p209
      %p211 = scmp.ne.s32.totalorder %s203, %s205
      %p212 = scmp.eq.s32.totalorder %s43, 1
      %p213 = por %p211, %p212
      %p214 = scmp.ne.s32.totalorder %s205, %s206
      %p215 = scmp.eq.s32.totalorder %s43, 0
      %p216 = por %p214, %p215
      %p217 = scmp.ne.s32.totalorder %s205, %s206
      %p218 = scmp.eq.s32.totalorder %s44, 1
      %p219 = por %p217, %p218
      %p221 = scmp.ne.s32.totalorder %s206, %s220
      %p222 = scmp.eq.s32.totalorder %s44, 0
      %p223 = por %p221, %p222
      %s225 = sadd.s32 %s224, 1
      %p228 = scmp.eq.s32.totalorder %s38, 1
      %p229 = scmp.ne.s32.totalorder %s224, %s226
      %p230 = scmp.eq.s32.totalorder %s38, 0
      %p231 = por %p229, %p230
      %p232 = scmp.ne.s32.totalorder %s224, %s226
      %p233 = scmp.eq.s32.totalorder %s43, 1
      %p234 = por %p232, %p233
      %p235 = scmp.ne.s32.totalorder %s226, %s227
      %p236 = scmp.eq.s32.totalorder %s43, 0
      %p237 = por %p235, %p236
      %p238 = scmp.ne.s32.totalorder %s226, %s227
      %p239 = scmp.eq.s32.totalorder %s44, 1
      %p240 = por %p238, %p239
      %p242 = scmp.ne.s32.totalorder %s227, %s241
      %p243 = scmp.eq.s32.totalorder %s44, 0
      %p244 = por %p242, %p243
      %s246 = sadd.s32 %s245, 1
      %p249 = scmp.eq.s32.totalorder %s38, 1
      %p250 = scmp.ne.s32.totalorder %s245, %s247
      %p251 = scmp.eq.s32.totalorder %s38, 0
      %p252 = por %p250, %p251
      %p253 = scmp.ne.s32.totalorder %s245, %s247
      %p254 = scmp.eq.s32.totalorder %s43, 1
      %p255 = por %p253, %p254
      %p256 = scmp.ne.s32.totalorder %s247, %s248
      %p257 = scmp.eq.s32.totalorder %s43, 0
      %p258 = por %p256, %p257
      %p259 = scmp.ne.s32.totalorder %s247, %s248
      %p260 = scmp.eq.s32.totalorder %s44, 1
      %p261 = por %p259, %p260
      %p263 = scmp.ne.s32.totalorder %s248, %s262
      %p264 = scmp.eq.s32.totalorder %s44, 0
      %p265 = por %p263, %p264
      %s267 = sadd.s32 %s266, 1
      %p270 = scmp.eq.s32.totalorder %s38, 1
      %p271 = scmp.ne.s32.totalorder %s266, %s268
      %p272 = scmp.eq.s32.totalorder %s38, 0
      %p273 = por %p271, %p272
      %p274 = scmp.ne.s32.totalorder %s266, %s268
      %p275 = scmp.eq.s32.totalorder %s43, 1
      %p276 = por %p274, %p275
      %p277 = scmp.ne.s32.totalorder %s268, %s269
      %p278 = scmp.eq.s32.totalorder %s43, 0
      %p279 = por %p277, %p278
      %p280 = scmp.ne.s32.totalorder %s268, %s269
      %p281 = scmp.eq.s32.totalorder %s44, 1
      %p282 = por %p280, %p281
      %p284 = scmp.ne.s32.totalorder %s269, %s283
      %p285 = scmp.eq.s32.totalorder %s44, 0
      %p286 = por %p284, %p285
      %s288 = sadd.s32 %s287, 1
      %p291 = scmp.eq.s32.totalorder %s38, 1
      %p292 = scmp.ne.s32.totalorder %s287, %s289
      %p293 = scmp.eq.s32.totalorder %s38, 0
      %p294 = por %p292, %p293
      %p295 = scmp.ne.s32.totalorder %s287, %s289
      %p296 = scmp.eq.s32.totalorder %s43, 1
      %p297 = por %p295, %p296
      %p298 = scmp.ne.s32.totalorder %s289, %s290
      %p299 = scmp.eq.s32.totalorder %s43, 0
      %p300 = por %p298, %p299
      %p301 = scmp.ne.s32.totalorder %s289, %s290
      %p302 = scmp.eq.s32.totalorder %s44, 1
      %p303 = por %p301, %p302
      %p305 = scmp.ne.s32.totalorder %s290, %s304
      %p306 = scmp.eq.s32.totalorder %s44, 0
      %p307 = por %p305, %p306
      %s309 = sadd.s32 %s308, 1
      %p312 = scmp.eq.s32.totalorder %s38, 1
      %p313 = scmp.ne.s32.totalorder %s308, %s310
      %p314 = scmp.eq.s32.totalorder %s38, 0
      %p315 = por %p313, %p314
      %p316 = scmp.ne.s32.totalorder %s308, %s310
      %p317 = scmp.eq.s32.totalorder %s43, 1
      %p318 = por %p316, %p317
      %p319 = scmp.ne.s32.totalorder %s310, %s311
      %p320 = scmp.eq.s32.totalorder %s43, 0
      %p321 = por %p319, %p320
      %p322 = scmp.ne.s32.totalorder %s310, %s311
      %p323 = scmp.eq.s32.totalorder %s44, 1
      %p324 = por %p322, %p323
      %p326 = scmp.ne.s32.totalorder %s311, %s325
      %p327 = scmp.eq.s32.totalorder %s44, 0
      %p328 = por %p326, %p327
      %s330 = sadd.s32 %s329, 1
      %p333 = scmp.eq.s32.totalorder %s38, 1
      %p334 = scmp.ne.s32.totalorder %s329, %s331
      %p335 = scmp.eq.s32.totalorder %s38, 0
      %p336 = por %p334, %p335
      %p337 = scmp.ne.s32.totalorder %s329, %s331
      %p338 = scmp.eq.s32.totalorder %s43, 1
      %p339 = por %p337, %p338
      %p340 = scmp.ne.s32.totalorder %s331, %s332
      %p341 = scmp.eq.s32.totalorder %s43, 0
      %p342 = por %p340, %p341
      %p343 = scmp.ne.s32.totalorder %s331, %s332
      %p344 = scmp.eq.s32.totalorder %s44, 1
      %p345 = por %p343, %p344
      %p347 = scmp.ne.s32.totalorder %s332, %s346
      %p348 = scmp.eq.s32.totalorder %s44, 0
      %p349 = por %p347, %p348
      %s351 = sadd.s32 %s350, 1
      %p354 = scmp.eq.s32.totalorder %s38, 1
      %p355 = scmp.ne.s32.totalorder %s350, %s352
      %p356 = scmp.eq.s32.totalorder %s38, 0
      %p357 = por %p355, %p356
      %p358 = scmp.ne.s32.totalorder %s350, %s352
      %p359 = scmp.eq.s32.totalorder %s43, 1
      %p360 = por %p358, %p359
      %p361 = scmp.ne.s32.totalorder %s352, %s353
      %p362 = scmp.eq.s32.totalorder %s43, 0
      %p363 = por %p361, %p362
      %p364 = scmp.ne.s32.totalorder %s352, %s353
      %p365 = scmp.eq.s32.totalorder %s44, 1
      %p366 = por %p364, %p365
      %p368 = scmp.ne.s32.totalorder %s353, %s367
      %p369 = scmp.eq.s32.totalorder %s44, 0
      %p370 = por %p368, %p369
      %s372 = sadd.s32 %s371, 1
      %p375 = scmp.eq.s32.totalorder %s38, 1
      %p376 = scmp.ne.s32.totalorder %s371, %s373
      %p377 = scmp.eq.s32.totalorder %s38, 0
      %p378 = por %p376, %p377
      %p379 = scmp.ne.s32.totalorder %s371, %s373
      %p380 = scmp.eq.s32.totalorder %s43, 1
      %p381 = por %p379, %p380
      %p382 = scmp.ne.s32.totalorder %s373, %s374
      %p383 = scmp.eq.s32.totalorder %s43, 0
      %p384 = por %p382, %p383
      %p385 = scmp.ne.s32.totalorder %s373, %s374
      %p386 = scmp.eq.s32.totalorder %s44, 1
      %p387 = por %p385, %p386
      %p389 = scmp.ne.s32.totalorder %s374, %s388
      %p390 = scmp.eq.s32.totalorder %s44, 0
      %p391 = por %p389, %p390
      %s393 = sadd.s32 %s392, 1
      %p396 = scmp.eq.s32.totalorder %s38, 1
      %p397 = scmp.ne.s32.totalorder %s392, %s394
      %p398 = scmp.eq.s32.totalorder %s38, 0
      %p399 = por %p397, %p398
      %p400 = scmp.ne.s32.totalorder %s392, %s394
      %p401 = scmp.eq.s32.totalorder %s43, 1
      %p402 = por %p400, %p401
      %p403 = scmp.ne.s32.totalorder %s394, %s395
      %p404 = scmp.eq.s32.totalorder %s43, 0
      %p405 = por %p403, %p404
      %p406 = scmp.ne.s32.totalorder %s394, %s395
      %p407 = scmp.eq.s32.totalorder %s44, 1
      %p408 = por %p406, %p407
      %p410 = scmp.ne.s32.totalorder %s395, %s409
      %p411 = scmp.eq.s32.totalorder %s44, 0
      %p412 = por %p410, %p411
      %s414 = sadd.s32 %s413, 1
      %p417 = scmp.eq.s32.totalorder %s38, 1
      %p418 = scmp.ne.s32.totalorder %s413, %s415
      %p419 = scmp.eq.s32.totalorder %s38, 0
      %p420 = por %p418, %p419
      %p421 = scmp.ne.s32.totalorder %s413, %s415
      %p422 = scmp.eq.s32.totalorder %s43, 1
      %p423 = por %p421, %p422
      %p424 = scmp.ne.s32.totalorder %s415, %s416
      %p425 = scmp.eq.s32.totalorder %s43, 0
      %p426 = por %p424, %p425
      %p427 = scmp.ne.s32.totalorder %s415, %s416
      %p428 = scmp.eq.s32.totalorder %s44, 1
      %p429 = por %p427, %p428
      %p431 = scmp.ne.s32.totalorder %s416, %s430
      %p432 = scmp.eq.s32.totalorder %s44, 0
      %p433 = por %p431, %p432
      %s435 = sadd.s32 %s434, 1
      %p438 = scmp.eq.s32.totalorder %s38, 1
      %p439 = scmp.ne.s32.totalorder %s434, %s436
      %p440 = scmp.eq.s32.totalorder %s38, 0
      %p441 = por %p439, %p440
      %p442 = scmp.ne.s32.totalorder %s434, %s436
      %p443 = scmp.eq.s32.totalorder %s43, 1
      %p444 = por %p442, %p443
      %p445 = scmp.ne.s32.totalorder %s436, %s437
      %p446 = scmp.eq.s32.totalorder %s43, 0
      %p447 = por %p445, %p446
      %p448 = scmp.ne.s32.totalorder %s436, %s437
      %p449 = scmp.eq.s32.totalorder %s44, 1
      %p450 = por %p448, %p449
      %p452 = scmp.ne.s32.totalorder %s437, %s451
      %p453 = scmp.eq.s32.totalorder %s44, 0
      %p454 = por %p452, %p453
      %s456 = sadd.s32 %s455, 1
      %p459 = scmp.eq.s32.totalorder %s38, 1
      %p460 = scmp.ne.s32.totalorder %s455, %s457
      %p461 = scmp.eq.s32.totalorder %s38, 0
      %p462 = por %p460, %p461
      %p463 = scmp.ne.s32.totalorder %s455, %s457
      %p464 = scmp.eq.s32.totalorder %s43, 1
      %p465 = por %p463, %p464
      %p466 = scmp.ne.s32.totalorder %s457, %s458
      %p467 = scmp.eq.s32.totalorder %s43, 0
      %p468 = por %p466, %p467
      %p469 = scmp.ne.s32.totalorder %s457, %s458
      %p470 = scmp.eq.s32.totalorder %s44, 1
      %p471 = por %p469, %p470
      %p473 = scmp.ne.s32.totalorder %s458, %s472
      %p474 = scmp.eq.s32.totalorder %s44, 0
      %p475 = por %p473, %p474
      %s477 = sadd.s32 %s476, 1
      %p480 = scmp.eq.s32.totalorder %s38, 1
      %p481 = scmp.ne.s32.totalorder %s476, %s478
      %p482 = scmp.eq.s32.totalorder %s38, 0
      %p483 = por %p481, %p482
      %p484 = scmp.ne.s32.totalorder %s476, %s478
      %p485 = scmp.eq.s32.totalorder %s43, 1
      %p486 = por %p484, %p485
      %p487 = scmp.ne.s32.totalorder %s478, %s479
      %p488 = scmp.eq.s32.totalorder %s43, 0
      %p489 = por %p487, %p488
      %p490 = scmp.ne.s32.totalorder %s478, %s479
      %p491 = scmp.eq.s32.totalorder %s44, 1
      %p492 = por %p490, %p491
      %p494 = scmp.ne.s32.totalorder %s479, %s493
      %p495 = scmp.eq.s32.totalorder %s44, 0
      %p496 = por %p494, %p495
      %s498 = sadd.s32 %s497, 1
      %p501 = scmp.eq.s32.totalorder %s38, 1
      %p502 = scmp.ne.s32.totalorder %s497, %s499
      %p503 = scmp.eq.s32.totalorder %s38, 0
      %p504 = por %p502, %p503
      %p505 = scmp.ne.s32.totalorder %s497, %s499
      %p506 = scmp.eq.s32.totalorder %s43, 1
      %p507 = por %p505, %p506
      %p508 = scmp.ne.s32.totalorder %s499, %s500
      %p509 = scmp.eq.s32.totalorder %s43, 0
      %p510 = por %p508, %p509
      %p511 = scmp.ne.s32.totalorder %s499, %s500
      %p512 = scmp.eq.s32.totalorder %s44, 1
      %p513 = por %p511, %p512
      %p515 = scmp.ne.s32.totalorder %s500, %s514
      %p516 = scmp.eq.s32.totalorder %s44, 0
      %p517 = por %p515, %p516
      %s519 = sadd.s32 %s518, 1
      %p522 = scmp.eq.s32.totalorder %s38, 1
      %p523 = scmp.ne.s32.totalorder %s518, %s520
      %p524 = scmp.eq.s32.totalorder %s38, 0
      %p525 = por %p523, %p524
      %p526 = scmp.ne.s32.totalorder %s518, %s520
      %p527 = scmp.eq.s32.totalorder %s43, 1
      %p528 = por %p526, %p527
      %p529 = scmp.ne.s32.totalorder %s520, %s521
      %p530 = scmp.eq.s32.totalorder %s43, 0
      %p531 = por %p529, %p530
      %p532 = scmp.ne.s32.totalorder %s520, %s521
      %p533 = scmp.eq.s32.totalorder %s44, 1
      %p534 = por %p532, %p533
      %p536 = scmp.ne.s32.totalorder %s521, %s535
      %p537 = scmp.eq.s32.totalorder %s44, 0
      %p538 = por %p536, %p537
      %s540 = sadd.s32 %s539, 1
      %p543 = scmp.eq.s32.totalorder %s38, 1
      %p544 = scmp.ne.s32.totalorder %s539, %s541
      %p545 = scmp.eq.s32.totalorder %s38, 0
      %p546 = por %p544, %p545
      %p547 = scmp.ne.s32.totalorder %s539, %s541
      %p548 = scmp.eq.s32.totalorder %s43, 1
      %p549 = por %p547, %p548
      %p550 = scmp.ne.s32.totalorder %s541, %s542
      %p551 = scmp.eq.s32.totalorder %s43, 0
      %p552 = por %p550, %p551
      %p553 = scmp.ne.s32.totalorder %s541, %s542
      %p554 = scmp.eq.s32.totalorder %s44, 1
      %p555 = por %p553, %p554
      %p557 = scmp.ne.s32.totalorder %s542, %s556
      %p558 = scmp.eq.s32.totalorder %s44, 0
      %p559 = por %p557, %p558
      %s561 = sadd.s32 %s560, 1
      %p564 = scmp.eq.s32.totalorder %s38, 1
      %p565 = scmp.ne.s32.totalorder %s560, %s562
      %p566 = scmp.eq.s32.totalorder %s38, 0
      %p567 = por %p565, %p566
      %p568 = scmp.ne.s32.totalorder %s560, %s562
      %p569 = scmp.eq.s32.totalorder %s43, 1
      %p570 = por %p568, %p569
      %p571 = scmp.ne.s32.totalorder %s562, %s563
      %p572 = scmp.eq.s32.totalorder %s43, 0
      %p573 = por %p571, %p572
      %p574 = scmp.ne.s32.totalorder %s562, %s563
      %p575 = scmp.eq.s32.totalorder %s44, 1
      %p576 = por %p574, %p575
      %p578 = scmp.ne.s32.totalorder %s563, %s577
      %p579 = scmp.eq.s32.totalorder %s44, 0
      %p580 = por %p578, %p579
      %s582 = sadd.s32 %s581, 1
      %p585 = scmp.eq.s32.totalorder %s38, 1
      %p586 = scmp.ne.s32.totalorder %s581, %s583
      %p587 = scmp.eq.s32.totalorder %s38, 0
      %p588 = por %p586, %p587
      %p589 = scmp.ne.s32.totalorder %s581, %s583
      %p590 = scmp.eq.s32.totalorder %s43, 1
      %p591 = por %p589, %p590
      %p592 = scmp.ne.s32.totalorder %s583, %s584
      %p593 = scmp.eq.s32.totalorder %s43, 0
      %p594 = por %p592, %p593
      %p595 = scmp.ne.s32.totalorder %s583, %s584
      %p596 = scmp.eq.s32.totalorder %s44, 1
      %p597 = por %p595, %p596
      %p599 = scmp.ne.s32.totalorder %s584, %s598
      %p600 = scmp.eq.s32.totalorder %s44, 0
      %p601 = por %p599, %p600
      %s603 = sadd.s32 %s602, 1
      %p606 = scmp.eq.s32.totalorder %s38, 1
      %p607 = scmp.ne.s32.totalorder %s602, %s604
      %p608 = scmp.eq.s32.totalorder %s38, 0
      %p609 = por %p607, %p608
      %p610 = scmp.ne.s32.totalorder %s602, %s604
      %p611 = scmp.eq.s32.totalorder %s43, 1
      %p612 = por %p610, %p611
      %p613 = scmp.ne.s32.totalorder %s604, %s605
      %p614 = scmp.eq.s32.totalorder %s43, 0
      %p615 = por %p613, %p614
      %p616 = scmp.ne.s32.totalorder %s604, %s605
      %p617 = scmp.eq.s32.totalorder %s44, 1
      %p618 = por %p616, %p617
      %p620 = scmp.ne.s32.totalorder %s605, %s619
      %p621 = scmp.eq.s32.totalorder %s44, 0
      %p622 = por %p620, %p621
      %s623 = ssub.s32 %s38, %s45
      %p624 = scmp.eq.s32.totalorder %s623, 0
      %s626 = sadd.s32 %s625, 1
      %s627 = scalar_select %p624, %s625, %s626
      %p630 = pneg %p624
      %p631 = scmp.eq.s32.totalorder %s38, 1
      %p632 = por %p630, %p631
      %p633 = scmp.ne.s32.totalorder %s625, %s628
      %p634 = scmp.eq.s32.totalorder %s38, 0
      %p635 = por %p633, %p634
      %p636 = scmp.ne.s32.totalorder %s625, %s628
      %p637 = scmp.eq.s32.totalorder %s43, 1
      %p638 = por %p636, %p637
      %p639 = scmp.ne.s32.totalorder %s628, %s629
      %p640 = scmp.eq.s32.totalorder %s43, 0
      %p641 = por %p639, %p640
      %p642 = scmp.ne.s32.totalorder %s628, %s629
      %p643 = scmp.eq.s32.totalorder %s44, 1
      %p644 = por %p642, %p643
      %p646 = scmp.ne.s32.totalorder %s629, %s645
      %p647 = scmp.eq.s32.totalorder %s44, 0
      %p648 = por %p646, %p647
      %s649 = ssub.s32 %s38, %s45
      %p650 = scmp.eq.s32.totalorder %s649, 0
      %s652 = sadd.s32 %s651, 1
      %s653 = scalar_select %p650, %s651, %s652
      %p656 = pneg %p650
      %p657 = scmp.eq.s32.totalorder %s38, 1
      %p658 = por %p656, %p657
      %p659 = scmp.ne.s32.totalorder %s651, %s654
      %p660 = scmp.eq.s32.totalorder %s38, 0
      %p661 = por %p659, %p660
      %p662 = scmp.ne.s32.totalorder %s651, %s654
      %p663 = scmp.eq.s32.totalorder %s43, 1
      %p664 = por %p662, %p663
      %p665 = scmp.ne.s32.totalorder %s654, %s655
      %p666 = scmp.eq.s32.totalorder %s43, 0
      %p667 = por %p665, %p666
      %p668 = scmp.ne.s32.totalorder %s654, %s655
      %p669 = scmp.eq.s32.totalorder %s44, 1
      %p670 = por %p668, %p669
      %p672 = scmp.ne.s32.totalorder %s655, %s671
      %p673 = scmp.eq.s32.totalorder %s44, 0
      %p674 = por %p672, %p673
      %p675 = scmp.le.s32.totalorder 1, %s38
      %p676 = scmp.lt.s32.totalorder %s38, 3
      %p677 = pnand %p675, %p676
      %p678 = pneg %p677
      // Predicated region
      $region9: #{_lambda_.1} parent=5 // pred_check
        _
      $region10: #{_lambda_.1} parent=5 // pred_check_branch
        %680 = sbr.rel (%p677) target = $region12
      $region11: #{_lambda_.1} parent=5 // pred_region
        %s681 = ssub.s32 %s38, 1
        // Predicated region
        $region13: #{_lambda_.1} parent=11 // pred_check
          %p682 = pneg %p111
        $region14: #{_lambda_.1} parent=11 // pred_check_branch
          %684 = sbr.rel (%p682) target = $region16
        $region15: #{_lambda_.1} parent=11 // pred_region
          _
        $region16: #{_lambda_.1} parent=11 // pred_fallthru
          _
        // Predicated region
        $region17: #{_lambda_.1} parent=11 // pred_check
          %p685 = pneg %p132
        $region18: #{_lambda_.1} parent=11 // pred_check_branch
          %687 = sbr.rel (%p685) target = $region20
        $region19: #{_lambda_.1} parent=11 // pred_region
          _
        $region20: #{_lambda_.1} parent=11 // pred_fallthru
          _
        // Predicated region
        $region21: #{_lambda_.1} parent=11 // pred_check
          %p688 = pneg %p153
        $region22: #{_lambda_.1} parent=11 // pred_check_branch
          %690 = sbr.rel (%p688) target = $region24
        $region23: #{_lambda_.1} parent=11 // pred_region
          _
        $region24: #{_lambda_.1} parent=11 // pred_fallthru
          _
        // Predicated region
        $region25: #{_lambda_.1} parent=11 // pred_check
          %p691 = pneg %p174
        $region26: #{_lambda_.1} parent=11 // pred_check_branch
          %693 = sbr.rel (%p691) target = $region28
        $region27: #{_lambda_.1} parent=11 // pred_region
          _
        $region28: #{_lambda_.1} parent=11 // pred_fallthru
          _
        // Predicated region
        $region29: #{_lambda_.1} parent=11 // pred_check
          %p694 = pneg %p195
        $region30: #{_lambda_.1} parent=11 // pred_check_branch
          %696 = sbr.rel (%p694) target = $region32
        $region31: #{_lambda_.1} parent=11 // pred_region
          _
        $region32: #{_lambda_.1} parent=11 // pred_fallthru
          _
        // Predicated region
        $region33: #{_lambda_.1} parent=11 // pred_check
          %p697 = pneg %p216
        $region34: #{_lambda_.1} parent=11 // pred_check_branch
          %699 = sbr.rel (%p697) target = $region36
        $region35: #{_lambda_.1} parent=11 // pred_region
          _
        $region36: #{_lambda_.1} parent=11 // pred_fallthru
          _
        // Predicated region
        $region37: #{_lambda_.1} parent=11 // pred_check
          %p700 = pneg %p237
        $region38: #{_lambda_.1} parent=11 // pred_check_branch
          %702 = sbr.rel (%p700) target = $region40
        $region39: #{_lambda_.1} parent=11 // pred_region
          _
        $region40: #{_lambda_.1} parent=11 // pred_fallthru
          _
        // Predicated region
        $region41: #{_lambda_.1} parent=11 // pred_check
          %p703 = pneg %p258
        $region42: #{_lambda_.1} parent=11 // pred_check_branch
          %705 = sbr.rel (%p703) target = $region44
        $region43: #{_lambda_.1} parent=11 // pred_region
          _
        $region44: #{_lambda_.1} parent=11 // pred_fallthru
          _
        // Predicated region
        $region45: #{_lambda_.1} parent=11 // pred_check
          %p706 = pneg %p279
        $region46: #{_lambda_.1} parent=11 // pred_check_branch
          %708 = sbr.rel (%p706) target = $region48
        $region47: #{_lambda_.1} parent=11 // pred_region
          _
        $region48: #{_lambda_.1} parent=11 // pred_fallthru
          _
        // Predicated region
        $region49: #{_lambda_.1} parent=11 // pred_check
          %p709 = pneg %p300
        $region50: #{_lambda_.1} parent=11 // pred_check_branch
          %711 = sbr.rel (%p709) target = $region52
        $region51: #{_lambda_.1} parent=11 // pred_region
          _
        $region52: #{_lambda_.1} parent=11 // pred_fallthru
          _
        // Predicated region
        $region53: #{_lambda_.1} parent=11 // pred_check
          %p712 = pneg %p321
        $region54: #{_lambda_.1} parent=11 // pred_check_branch
          %714 = sbr.rel (%p712) target = $region56
        $region55: #{_lambda_.1} parent=11 // pred_region
          _
        $region56: #{_lambda_.1} parent=11 // pred_fallthru
          _
        // Predicated region
        $region57: #{_lambda_.1} parent=11 // pred_check
          %p715 = pneg %p342
        $region58: #{_lambda_.1} parent=11 // pred_check_branch
          %717 = sbr.rel (%p715) target = $region60
        $region59: #{_lambda_.1} parent=11 // pred_region
          _
        $region60: #{_lambda_.1} parent=11 // pred_fallthru
          _
        // Predicated region
        $region61: #{_lambda_.1} parent=11 // pred_check
          %p718 = pneg %p363
        $region62: #{_lambda_.1} parent=11 // pred_check_branch
          %720 = sbr.rel (%p718) target = $region64
        $region63: #{_lambda_.1} parent=11 // pred_region
          _
        $region64: #{_lambda_.1} parent=11 // pred_fallthru
          _
        // Predicated region
        $region65: #{_lambda_.1} parent=11 // pred_check
          %p721 = pneg %p384
        $region66: #{_lambda_.1} parent=11 // pred_check_branch
          %723 = sbr.rel (%p721) target = $region68
        $region67: #{_lambda_.1} parent=11 // pred_region
          _
        $region68: #{_lambda_.1} parent=11 // pred_fallthru
          _
        // Predicated region
        $region69: #{_lambda_.1} parent=11 // pred_check
          %p724 = pneg %p405
        $region70: #{_lambda_.1} parent=11 // pred_check_branch
          %726 = sbr.rel (%p724) target = $region72
        $region71: #{_lambda_.1} parent=11 // pred_region
          _
        $region72: #{_lambda_.1} parent=11 // pred_fallthru
          _
        // Predicated region
        $region73: #{_lambda_.1} parent=11 // pred_check
          %p727 = pneg %p426
        $region74: #{_lambda_.1} parent=11 // pred_check_branch
          %729 = sbr.rel (%p727) target = $region76
        $region75: #{_lambda_.1} parent=11 // pred_region
          _
        $region76: #{_lambda_.1} parent=11 // pred_fallthru
          _
        // Predicated region
        $region77: #{_lambda_.1} parent=11 // pred_check
          %p730 = pneg %p447
        $region78: #{_lambda_.1} parent=11 // pred_check_branch
          %732 = sbr.rel (%p730) target = $region80
        $region79: #{_lambda_.1} parent=11 // pred_region
          _
        $region80: #{_lambda_.1} parent=11 // pred_fallthru
          _
        // Predicated region
        $region81: #{_lambda_.1} parent=11 // pred_check
          %p733 = pneg %p468
        $region82: #{_lambda_.1} parent=11 // pred_check_branch
          %735 = sbr.rel (%p733) target = $region84
        $region83: #{_lambda_.1} parent=11 // pred_region
          _
        $region84: #{_lambda_.1} parent=11 // pred_fallthru
          _
        // Predicated region
        $region85: #{_lambda_.1} parent=11 // pred_check
          %p736 = pneg %p489
        $region86: #{_lambda_.1} parent=11 // pred_check_branch
          %738 = sbr.rel (%p736) target = $region88
        $region87: #{_lambda_.1} parent=11 // pred_region
          _
        $region88: #{_lambda_.1} parent=11 // pred_fallthru
          _
        // Predicated region
        $region89: #{_lambda_.1} parent=11 // pred_check
          %p739 = pneg %p510
        $region90: #{_lambda_.1} parent=11 // pred_check_branch
          %741 = sbr.rel (%p739) target = $region92
        $region91: #{_lambda_.1} parent=11 // pred_region
          _
        $region92: #{_lambda_.1} parent=11 // pred_fallthru
          _
        // Predicated region
        $region93: #{_lambda_.1} parent=11 // pred_check
          %p742 = pneg %p531
        $region94: #{_lambda_.1} parent=11 // pred_check_branch
          %744 = sbr.rel (%p742) target = $region96
        $region95: #{_lambda_.1} parent=11 // pred_region
          _
        $region96: #{_lambda_.1} parent=11 // pred_fallthru
          _
        // Predicated region
        $region97: #{_lambda_.1} parent=11 // pred_check
          %p745 = pneg %p552
        $region98: #{_lambda_.1} parent=11 // pred_check_branch
          %747 = sbr.rel (%p745) target = $region100
        $region99: #{_lambda_.1} parent=11 // pred_region
          _
        $region100: #{_lambda_.1} parent=11 // pred_fallthru
          _
        // Predicated region
        $region101: #{_lambda_.1} parent=11 // pred_check
          %p748 = pneg %p573
        $region102: #{_lambda_.1} parent=11 // pred_check_branch
          %750 = sbr.rel (%p748) target = $region104
        $region103: #{_lambda_.1} parent=11 // pred_region
          _
        $region104: #{_lambda_.1} parent=11 // pred_fallthru
          _
        // Predicated region
        $region105: #{_lambda_.1} parent=11 // pred_check
          %p751 = pneg %p594
        $region106: #{_lambda_.1} parent=11 // pred_check_branch
          %753 = sbr.rel (%p751) target = $region108
        $region107: #{_lambda_.1} parent=11 // pred_region
          _
        $region108: #{_lambda_.1} parent=11 // pred_fallthru
          _
        // Predicated region
        $region109: #{_lambda_.1} parent=11 // pred_check
          %p754 = pneg %p615
        $region110: #{_lambda_.1} parent=11 // pred_check_branch
          %756 = sbr.rel (%p754) target = $region112
        $region111: #{_lambda_.1} parent=11 // pred_region
          _
        $region112: #{_lambda_.1} parent=11 // pred_fallthru
          _
      $region12: #{_lambda_.1} parent=5 // pred_fallthru
        _
      %p757 = scmp.lt.s32.totalorder %s38, 2
      // Predicated region
      $region113: #{_lambda_.1} parent=5 // pred_check
        %p758 = pneg %p757
      $region114: #{_lambda_.1} parent=5 // pred_check_branch
        %760 = sbr.rel (%p758) target = $region116
      $region115: #{_lambda_.1} parent=5 // pred_region
        // Predicated region
        $region117: #{_lambda_.1} parent=115 // pred_check
          %p761 = pneg %p58
        $region118: #{_lambda_.1} parent=115 // pred_check_branch
          %763 = sbr.rel (%p761) target = $region120
        $region119: #{_lambda_.1} parent=115 // pred_region
          %p764 = scmp.lt.s32.totalorder %s38, 1
          %s765 = scalar_select %p764, %s38, 1
          %s766 = smul.addr %s765, 2
          %s767 = smul.addr %s766, 4
          %s768 = scalar_lea.vmem %s0, %s767
        $region120: #{_lambda_.1} parent=115 // pred_fallthru
          _
        // Predicated region
        $region121: #{_lambda_.1} parent=115 // pred_check
          %p769 = pneg %p84
        $region122: #{_lambda_.1} parent=115 // pred_check_branch
          %771 = sbr.rel (%p769) target = $region124
        $region123: #{_lambda_.1} parent=115 // pred_region
          %p772 = scmp.lt.s32.totalorder %s38, 1
          %s773 = scalar_select %p772, %s38, 1
          %s774 = smul.addr %s773, 8
          %s775 = scalar_lea.vmem %s1, %s774
        $region124: #{_lambda_.1} parent=115 // pred_fallthru
          _
      $region116: #{_lambda_.1} parent=5 // pred_fallthru
        _
      %p776 = scmp.le.s32.totalorder 1, %s38
      %p777 = scmp.lt.s32.totalorder %s38, 3
      %p778 = pnand %p776, %p777
      %p779 = pneg %p778
      // Predicated region
      $region125: #{_lambda_.1} parent=5 // pred_check
        _
      $region126: #{_lambda_.1} parent=5 // pred_check_branch
        %781 = sbr.rel (%p778) target = $region128
      $region127: #{_lambda_.1} parent=5 // pred_region
        %s782 = ssub.s32 %s38, 1
        %p783 = scmp.lt.s32.totalorder %s43, 1
        %s784 = scalar_select %p783, %s43, 1
        %s785 = smul.addr %s784, 2
        %s786 = smul.addr %s785, 4
        %s787 = scalar_lea.vmem %s0, %s786
        %p788 = pneg %p64
        %p789 = pneg %p61
        %p790 = scmp.lt.s32.totalorder %s43, 1
        %s791 = scalar_select %p790, %s43, 1
        %s792 = smul.addr %s791, 8
        %s793 = scalar_lea.vmem %s1, %s792
        %p794 = pneg %p90
        %p795 = pneg %p87
        %p796 = pneg %p111
        %p797 = pneg %p108
        %p798 = pneg %p132
        %p799 = pneg %p129
        %p800 = pneg %p153
        %p801 = pneg %p150
        %p802 = pneg %p174
        %p803 = pneg %p171
        %p804 = pneg %p195
        %p805 = pneg %p192
        %p806 = pneg %p216
        %p807 = pneg %p213
        %p808 = pneg %p237
        %p809 = pneg %p234
        %p810 = pneg %p258
        %p811 = pneg %p255
        %p812 = pneg %p279
        %p813 = pneg %p276
        %p814 = pneg %p300
        %p815 = pneg %p297
        %p816 = pneg %p321
        %p817 = pneg %p318
        %p818 = pneg %p342
        %p819 = pneg %p339
        %p820 = pneg %p363
        %p821 = pneg %p360
        %p822 = pneg %p384
        %p823 = pneg %p381
        %p824 = pneg %p405
        %p825 = pneg %p402
        %p826 = pneg %p426
        %p827 = pneg %p423
        %p828 = pneg %p447
        %p829 = pneg %p444
        %p830 = pneg %p468
        %p831 = pneg %p465
        %p832 = pneg %p489
        %p833 = pneg %p486
        %p834 = pneg %p510
        %p835 = pneg %p507
        %p836 = pneg %p531
        %p837 = pneg %p528
        %p838 = pneg %p552
        %p839 = pneg %p549
        %p840 = pneg %p573
        %p841 = pneg %p570
        %p842 = pneg %p594
        %p843 = pneg %p591
        %p844 = pneg %p615
        %p845 = pneg %p612
        %p846 = pneg %p641
        %p847 = pneg %p638
        %p848 = scmp.lt.s32.totalorder %s43, 1
        %s849 = scalar_select %p848, %s43, 1
        %s850 = smul.addr %s849, 16
        %s851 = smul.addr %s850, 8
        %s852 = scalar_lea.vmem %s27, %s851
        %p853 = pneg %p667
        %p854 = pneg %p664
        %s855 = sand.u32 %s654, 1
        %s856 = scalar_lea.sflag [#allocation4], %s855
        %s857 = sand.u32 %s654, 1
        %s858 = smul.addr %s857, 16
        %s859 = scalar_lea.vmem [#allocation3], %s858
        %p860 = scmp.lt.s32.totalorder %s43, 1
        %s861 = scalar_select %p860, %s43, 1
        %s862 = smul.addr %s861, 2
        %s863 = smul.addr %s862, 4
        %s864 = scalar_lea.vmem %s0, %s863
        %p865 = scmp.lt.s32.totalorder %s43, 1
        %s866 = scalar_select %p865, %s43, 1
        %s867 = smul.addr %s866, 8
        %s868 = scalar_lea.vmem %s1, %s867
        %p869 = scmp.lt.s32.totalorder %s43, 1
        %s870 = scalar_select %p869, %s43, 1
        %s871 = smul.addr %s870, 16
        %s872 = smul.addr %s871, 8
        %s873 = scalar_lea.vmem %s27, %s872
        %v874 = vld [vmem:[%s864] sm:$0x77]
        %v876 = vcombine.high %v874, %v874
        %vm878 = vcmask 1042432
        %v879 = vsel %vm878, %v874, 0.0
        %v880 = vsel %vm878, %v876, 0.0
        %881 = vrot.lane.b32.xlu0 %v879, 17
        %v882 = vpop.permute.xlu0 %881
        %883 = vrot.lane.b32.xlu0 0.0, 17
        %v884 = vpop.permute.xlu0 %883
        %885 = vrot.lane.b32.xlu0 %v880, 17
        %v886 = vpop.permute.xlu0 %885
        %v887 = vlaneseq
        %v888 = vand.u32 %v887, 127
        %vm889 = vcmp.lt.s32.totalorder %v888, 17
        %v890 = vsel %vm889, %v882, %v886
        %v891 = vsel %vm889, %v886, %v882
        %v892 = vld [vmem:[%s4] ss:$8 sm:$0x3]
        %v894 = vlaneseq
        %v895 = vshrl.u32 %v894, 7
        %v896 = vsub.s32 0, %v895
        %v897 = vrot.slane %v892, %v896
        %v898 = vlaneseq
        %v899 = vshrl.u32 %v898, 7
        %v900 = vsub.s32 1, %v899
        %v901 = vrot.slane %v892, %v900
        %v904 = vmul.f32 %v891, %v897
        %v905 = vmul.f32 %v890, %v901
        %v906 = vmul.f32 %v884, %v897
        %v907 = vmul.f32 %v884, %v901
        %908 = vst [vmem:[#allocation2] sm:$0xff] %v904
        %909 = vst [vmem:[#allocation2 + $0x8] sm:$0xff] %v905
        %910 = vst [vmem:[#allocation2 + $0x10] sm:$0xff] %v906
        %911 = vst [vmem:[#allocation2 + $0x18] sm:$0xff] %v907
        %912 = vst [vmem:[#allocation2 + $0x20] sm:$0xff] %v906
        %913 = vst [vmem:[#allocation2 + $0x28] sm:$0xff] %v907
        %914 = vst [vmem:[#allocation2 + $0x30] sm:$0xff] %v906
        %915 = vst [vmem:[#allocation2 + $0x38] sm:$0xff] %v907
        %916 = vrot.lane.b32.xlu0 %v879, 16
        %v917 = vpop.permute.xlu0 %916
        %918 = vrot.lane.b32.xlu0 0.0, 16
        %v919 = vpop.permute.xlu0 %918
        %920 = vrot.lane.b32.xlu0 %v880, 16
        %v921 = vpop.permute.xlu0 %920
        %vm922 = vcmp.lt.s32.totalorder %v888, 16
        %v923 = vsel %vm922, %v917, %v921
        %v924 = vsel %vm922, %v921, %v917
        %s925 = scalar_lea.vmem %s4, 1
        %v926 = vld [vmem:[%s925] ss:$8 sm:$0x3]
        %v928 = vlaneseq
        %v929 = vshrl.u32 %v928, 7
        %v930 = vsub.s32 0, %v929
        %v931 = vrot.slane %v926, %v930
        %v932 = vlaneseq
        %v933 = vshrl.u32 %v932, 7
        %v934 = vsub.s32 1, %v933
        %v935 = vrot.slane %v926, %v934
        %v938 = vmul.f32 %v924, %v931
        %v939 = vmul.f32 %v923, %v935
        %v940 = vmul.f32 %v919, %v931
        %v941 = vmul.f32 %v919, %v935
        %942 = vst [vmem:[#allocation2 + $0x40] sm:$0xff] %v938
        %943 = vst [vmem:[#allocation2 + $0x48] sm:$0xff] %v939
        %944 = vst [vmem:[#allocation2 + $0x50] sm:$0xff] %v940
        %945 = vst [vmem:[#allocation2 + $0x58] sm:$0xff] %v941
        %946 = vst [vmem:[#allocation2 + $0x60] sm:$0xff] %v940
        %947 = vst [vmem:[#allocation2 + $0x68] sm:$0xff] %v941
        %948 = vst [vmem:[#allocation2 + $0x70] sm:$0xff] %v940
        %949 = vst [vmem:[#allocation2 + $0x78] sm:$0xff] %v941
        %950 = vrot.lane.b32.xlu0 %v879, 15
        %v951 = vpop.permute.xlu0 %950
        %952 = vrot.lane.b32.xlu0 0.0, 15
        %v953 = vpop.permute.xlu0 %952
        %954 = vrot.lane.b32.xlu0 %v880, 15
        %v955 = vpop.permute.xlu0 %954
        %vm956 = vcmp.lt.s32.totalorder %v888, 15
        %v957 = vsel %vm956, %v951, %v955
        %v958 = vsel %vm956, %v955, %v951
        %s959 = scalar_lea.vmem %s4, 2
        %v960 = vld [vmem:[%s959] ss:$8 sm:$0x3]
        %v962 = vlaneseq
        %v963 = vshrl.u32 %v962, 7
        %v964 = vsub.s32 0, %v963
        %v965 = vrot.slane %v960, %v964
        %v966 = vlaneseq
        %v967 = vshrl.u32 %v966, 7
        %v968 = vsub.s32 1, %v967
        %v969 = vrot.slane %v960, %v968
        %v972 = vmul.f32 %v958, %v965
        %v973 = vmul.f32 %v957, %v969
        %v974 = vmul.f32 %v953, %v965
        %v975 = vmul.f32 %v953, %v969
        %976 = vst [vmem:[#allocation2 + $0x80] sm:$0xff] %v972
        %977 = vst [vmem:[#allocation2 + $0x88] sm:$0xff] %v973
        %978 = vst [vmem:[#allocation2 + $0x90] sm:$0xff] %v974
        %979 = vst [vmem:[#allocation2 + $0x98] sm:$0xff] %v975
        %980 = vst [vmem:[#allocation2 + $0xa0] sm:$0xff] %v974
        %981 = vst [vmem:[#allocation2 + $0xa8] sm:$0xff] %v975
        %982 = vst [vmem:[#allocation2 + $0xb0] sm:$0xff] %v974
        %983 = vst [vmem:[#allocation2 + $0xb8] sm:$0xff] %v975
        %984 = vrot.lane.b32.xlu0 %v879, 1
        %v985 = vpop.permute.xlu0 %984
        %986 = vrot.lane.b32.xlu0 0.0, 1
        %v987 = vpop.permute.xlu0 %986
        %988 = vrot.lane.b32.xlu0 %v880, 1
        %v989 = vpop.permute.xlu0 %988
        %vm990 = vcmp.lt.s32.totalorder %v888, 1
        %v991 = vsel %vm990, %v985, %v989
        %v992 = vsel %vm990, %v989, %v985
        %s993 = scalar_lea.vmem %s4, 3
        %v994 = vld [vmem:[%s993] ss:$8 sm:$0x3]
        %v996 = vlaneseq
        %v997 = vshrl.u32 %v996, 7
        %v998 = vsub.s32 0, %v997
        %v999 = vrot.slane %v994, %v998
        %v1000 = vlaneseq
        %v1001 = vshrl.u32 %v1000, 7
        %v1002 = vsub.s32 1, %v1001
        %v1003 = vrot.slane %v994, %v1002
        %v1006 = vmul.f32 %v992, %v999
        %v1007 = vmul.f32 %v991, %v1003
        %v1008 = vmul.f32 %v987, %v999
        %v1009 = vmul.f32 %v987, %v1003
        %1010 = vst [vmem:[#allocation2 + $0xc0] sm:$0xff] %v1006
        %1011 = vst [vmem:[#allocation2 + $0xc8] sm:$0xff] %v1007
        %1012 = vst [vmem:[#allocation2 + $0xd0] sm:$0xff] %v1008
        %1013 = vst [vmem:[#allocation2 + $0xd8] sm:$0xff] %v1009
        %1014 = vst [vmem:[#allocation2 + $0xe0] sm:$0xff] %v1008
        %1015 = vst [vmem:[#allocation2 + $0xe8] sm:$0xff] %v1009
        %1016 = vst [vmem:[#allocation2 + $0xf0] sm:$0xff] %v1008
        %1017 = vst [vmem:[#allocation2 + $0xf8] sm:$0xff] %v1009
        %1018 = vst [vmem:[#allocation2 + $0x100] sm:$0xff] %v879
        %1019 = vst [vmem:[#allocation2 + $0x108] sm:$0xff] %v880
        %1020 = vst [vmem:[#allocation2 + $0x110] sm:$0xff] 0.0
        %1021 = vst [vmem:[#allocation2 + $0x118] sm:$0xff] 0.0
        %1022 = vst [vmem:[#allocation2 + $0x120] sm:$0xff] 0.0
        %1023 = vst [vmem:[#allocation2 + $0x128] sm:$0xff] 0.0
        %1024 = vst [vmem:[#allocation2 + $0x130] sm:$0xff] 0.0
        %1025 = vst [vmem:[#allocation2 + $0x138] sm:$0xff] 0.0
        %1026 = vrot.lane.b32.xlu0 %v879, 127
        %v1027 = vpop.permute.xlu0 %1026
        %1028 = vrot.lane.b32.xlu0 0.0, 127
        %v1029 = vpop.permute.xlu0 %1028
        %1030 = vrot.lane.b32.xlu0 %v880, 127
        %v1031 = vpop.permute.xlu0 %1030
        %vm1032 = vcmp.lt.s32.totalorder %v888, 127
        %v1033 = vsel %vm1032, %v1027, %v1031
        %v1034 = vsel %vm1032, %v1031, %v1027
        %s1035 = scalar_lea.vmem %s4, 5
        %v1036 = vld [vmem:[%s1035] ss:$8 sm:$0x3]
        %v1038 = vlaneseq
        %v1039 = vshrl.u32 %v1038, 7
        %v1040 = vsub.s32 0, %v1039
        %v1041 = vrot.slane %v1036, %v1040
        %v1042 = vlaneseq
        %v1043 = vshrl.u32 %v1042, 7
        %v1044 = vsub.s32 1, %v1043
        %v1045 = vrot.slane %v1036, %v1044
        %v1048 = vmul.f32 %v1033, %v1041
        %v1049 = vmul.f32 %v1034, %v1045
        %v1050 = vmul.f32 %v1029, %v1041
        %v1051 = vmul.f32 %v1029, %v1045
        %1052 = vst [vmem:[#allocation2 + $0x140] sm:$0xff] %v1048
        %1053 = vst [vmem:[#allocation2 + $0x148] sm:$0xff] %v1049
        %1054 = vst [vmem:[#allocation2 + $0x150] sm:$0xff] %v1050
        %1055 = vst [vmem:[#allocation2 + $0x158] sm:$0xff] %v1051
        %1056 = vst [vmem:[#allocation2 + $0x160] sm:$0xff] %v1050
        %1057 = vst [vmem:[#allocation2 + $0x168] sm:$0xff] %v1051
        %1058 = vst [vmem:[#allocation2 + $0x170] sm:$0xff] %v1050
        %1059 = vst [vmem:[#allocation2 + $0x178] sm:$0xff] %v1051
        %1060 = vrot.lane.b32.xlu0 %v879, 113
        %v1061 = vpop.permute.xlu0 %1060
        %1062 = vrot.lane.b32.xlu0 0.0, 113
        %v1063 = vpop.permute.xlu0 %1062
        %1064 = vrot.lane.b32.xlu0 %v880, 113
        %v1065 = vpop.permute.xlu0 %1064
        %vm1066 = vcmp.lt.s32.totalorder %v888, 113
        %v1067 = vsel %vm1066, %v1061, %v1065
        %v1068 = vsel %vm1066, %v1065, %v1061
        %s1069 = scalar_lea.vmem %s4, 6
        %v1070 = vld [vmem:[%s1069] ss:$8 sm:$0x3]
        %v1072 = vlaneseq
        %v1073 = vshrl.u32 %v1072, 7
        %v1074 = vsub.s32 0, %v1073
        %v1075 = vrot.slane %v1070, %v1074
        %v1076 = vlaneseq
        %v1077 = vshrl.u32 %v1076, 7
        %v1078 = vsub.s32 1, %v1077
        %v1079 = vrot.slane %v1070, %v1078
        %v1082 = vmul.f32 %v1067, %v1075
        %v1083 = vmul.f32 %v1068, %v1079
        %v1084 = vmul.f32 %v1063, %v1075
        %v1085 = vmul.f32 %v1063, %v1079
        %1086 = vst [vmem:[#allocation2 + $0x180] sm:$0xff] %v1082
        %1087 = vst [vmem:[#allocation2 + $0x188] sm:$0xff] %v1083
        %1088 = vst [vmem:[#allocation2 + $0x190] sm:$0xff] %v1084
        %1089 = vst [vmem:[#allocation2 + $0x198] sm:$0xff] %v1085
        %1090 = vst [vmem:[#allocation2 + $0x1a0] sm:$0xff] %v1084
        %1091 = vst [vmem:[#allocation2 + $0x1a8] sm:$0xff] %v1085
        %1092 = vst [vmem:[#allocation2 + $0x1b0] sm:$0xff] %v1084
        %1093 = vst [vmem:[#allocation2 + $0x1b8] sm:$0xff] %v1085
        %1094 = vrot.lane.b32.xlu0 %v879, 112
        %v1095 = vpop.permute.xlu0 %1094
        %1096 = vrot.lane.b32.xlu0 0.0, 112
        %v1097 = vpop.permute.xlu0 %1096
        %1098 = vrot.lane.b32.xlu0 %v880, 112
        %v1099 = vpop.permute.xlu0 %1098
        %vm1100 = vcmp.lt.s32.totalorder %v888, 112
        %v1101 = vsel %vm1100, %v1095, %v1099
        %v1102 = vsel %vm1100, %v1099, %v1095
        %s1103 = scalar_lea.vmem %s4, 7
        %v1104 = vld [vmem:[%s1103] ss:$8 sm:$0x3]
        %v1106 = vlaneseq
        %v1107 = vshrl.u32 %v1106, 7
        %v1108 = vsub.s32 0, %v1107
        %v1109 = vrot.slane %v1104, %v1108
        %v1110 = vlaneseq
        %v1111 = vshrl.u32 %v1110, 7
        %v1112 = vsub.s32 1, %v1111
        %v1113 = vrot.slane %v1104, %v1112
        %v1116 = vmul.f32 %v1101, %v1109
        %v1117 = vmul.f32 %v1102, %v1113
        %v1118 = vmul.f32 %v1097, %v1109
        %v1119 = vmul.f32 %v1097, %v1113
        %1120 = vst [vmem:[#allocation2 + $0x1c0] sm:$0xff] %v1116
        %1121 = vst [vmem:[#allocation2 + $0x1c8] sm:$0xff] %v1117
        %1122 = vst [vmem:[#allocation2 + $0x1d0] sm:$0xff] %v1118
        %1123 = vst [vmem:[#allocation2 + $0x1d8] sm:$0xff] %v1119
        %1124 = vst [vmem:[#allocation2 + $0x1e0] sm:$0xff] %v1118
        %1125 = vst [vmem:[#allocation2 + $0x1e8] sm:$0xff] %v1119
        %1126 = vst [vmem:[#allocation2 + $0x1f0] sm:$0xff] %v1118
        %1127 = vst [vmem:[#allocation2 + $0x1f8] sm:$0xff] %v1119
        %1128 = vrot.lane.b32.xlu0 %v879, 111
        %v1129 = vpop.permute.xlu0 %1128
        %1130 = vrot.lane.b32.xlu0 0.0, 111
        %v1131 = vpop.permute.xlu0 %1130
        %1132 = vrot.lane.b32.xlu0 %v880, 111
        %v1133 = vpop.permute.xlu0 %1132
        %vm1134 = vcmp.lt.s32.totalorder %v888, 111
        %v1135 = vsel %vm1134, %v1129, %v1133
        %v1136 = vsel %vm1134, %v1133, %v1129
        %s1137 = scalar_lea.vmem %s4, 16
        %v1138 = vld [vmem:[%s1137] ss:$8 sm:$0x3]
        %v1140 = vlaneseq
        %v1141 = vshrl.u32 %v1140, 7
        %v1142 = vsub.s32 0, %v1141
        %v1143 = vrot.slane %v1138, %v1142
        %v1144 = vlaneseq
        %v1145 = vshrl.u32 %v1144, 7
        %v1146 = vsub.s32 1, %v1145
        %v1147 = vrot.slane %v1138, %v1146
        %v1150 = vmul.f32 %v1135, %v1143
        %v1151 = vmul.f32 %v1136, %v1147
        %v1152 = vmul.f32 %v1131, %v1143
        %v1153 = vmul.f32 %v1131, %v1147
        %1154 = vst [vmem:[#allocation2 + $0x200] sm:$0xff] %v1150
        %1155 = vst [vmem:[#allocation2 + $0x208] sm:$0xff] %v1151
        %1156 = vst [vmem:[#allocation2 + $0x210] sm:$0xff] %v1152
        %1157 = vst [vmem:[#allocation2 + $0x218] sm:$0xff] %v1153
        %1158 = vst [vmem:[#allocation2 + $0x220] sm:$0xff] %v1152
        %1159 = vst [vmem:[#allocation2 + $0x228] sm:$0xff] %v1153
        %1160 = vst [vmem:[#allocation2 + $0x230] sm:$0xff] %v1152
        %1161 = vst [vmem:[#allocation2 + $0x238] sm:$0xff] %v1153
        %v1162 = vld [vmem:[%s5] sm:$0xff]
        %v1163 = vld [vmem:[%s5 + $0x8] sm:$0xff]
        %v1164 = vld [vmem:[%s5 + $0x10] sm:$0xff]
        %v1165 = vld [vmem:[%s5 + $0x18] sm:$0xff]
        %v1166 = vld [vmem:[%s5 + $0x20] sm:$0xff]
        %v1167 = vld [vmem:[%s5 + $0x28] sm:$0xff]
        %v1168 = vld [vmem:[%s5 + $0x30] sm:$0xff]
        %v1169 = vld [vmem:[%s5 + $0x38] sm:$0xff]
        %v1170 = vld [vmem:[%s5 + $0x40] sm:$0xff]
        %v1171 = vld [vmem:[%s5 + $0x48] sm:$0xff]
        %v1172 = vld [vmem:[%s5 + $0x50] sm:$0xff]
        %v1173 = vld [vmem:[%s5 + $0x58] sm:$0xff]
        %v1174 = vld [vmem:[#allocation2] sm:$0xff]
        %v1175 = vld [vmem:[#allocation2 + $0x8] sm:$0xff]
        %v1176 = vld [vmem:[#allocation2 + $0x10] sm:$0xff]
        %v1177 = vld [vmem:[#allocation2 + $0x18] sm:$0xff]
        %v1178 = vld [vmem:[#allocation2 + $0x20] sm:$0xff]
        %v1179 = vld [vmem:[#allocation2 + $0x28] sm:$0xff]
        %v1180 = vld [vmem:[#allocation2 + $0x30] sm:$0xff]
        %v1181 = vld [vmem:[#allocation2 + $0x38] sm:$0xff]
        %v1182 = vld [vmem:[#allocation2 + $0x40] sm:$0xff]
        %v1183 = vld [vmem:[#allocation2 + $0x48] sm:$0xff]
        %v1184 = vld [vmem:[#allocation2 + $0x50] sm:$0xff]
        %v1185 = vld [vmem:[#allocation2 + $0x58] sm:$0xff]
        %v1186 = vld [vmem:[#allocation2 + $0x60] sm:$0xff]
        %v1187 = vld [vmem:[#allocation2 + $0x68] sm:$0xff]
        %v1188 = vld [vmem:[#allocation2 + $0x70] sm:$0xff]
        %v1189 = vld [vmem:[#allocation2 + $0x78] sm:$0xff]
        %v1190 = vld [vmem:[#allocation2 + $0x80] sm:$0xff]
        %v1191 = vld [vmem:[#allocation2 + $0x88] sm:$0xff]
        %v1192 = vld [vmem:[#allocation2 + $0x90] sm:$0xff]
        %v1193 = vld [vmem:[#allocation2 + $0x98] sm:$0xff]
        %v1194 = vld [vmem:[#allocation2 + $0xa0] sm:$0xff]
        %v1195 = vld [vmem:[#allocation2 + $0xa8] sm:$0xff]
        %v1196 = vld [vmem:[#allocation2 + $0xb0] sm:$0xff]
        %v1197 = vld [vmem:[#allocation2 + $0xb8] sm:$0xff]
        %v1198 = vld [vmem:[#allocation2 + $0xc0] sm:$0xff]
        %v1199 = vld [vmem:[#allocation2 + $0xc8] sm:$0xff]
        %v1200 = vld [vmem:[#allocation2 + $0xd0] sm:$0xff]
        %v1201 = vld [vmem:[#allocation2 + $0xd8] sm:$0xff]
        %v1202 = vld [vmem:[#allocation2 + $0xe0] sm:$0xff]
        %v1203 = vld [vmem:[#allocation2 + $0xe8] sm:$0xff]
        %v1204 = vld [vmem:[#allocation2 + $0xf0] sm:$0xff]
        %v1205 = vld [vmem:[#allocation2 + $0xf8] sm:$0xff]
        %v1206 = vld [vmem:[#allocation2 + $0x100] sm:$0xff]
        %v1207 = vld [vmem:[#allocation2 + $0x108] sm:$0xff]
        %v1208 = vld [vmem:[#allocation2 + $0x110] sm:$0xff]
        %v1209 = vld [vmem:[#allocation2 + $0x118] sm:$0xff]
        %v1210 = vld [vmem:[#allocation2 + $0x120] sm:$0xff]
        %v1211 = vld [vmem:[#allocation2 + $0x128] sm:$0xff]
        %v1212 = vld [vmem:[#allocation2 + $0x130] sm:$0xff]
        %v1213 = vld [vmem:[#allocation2 + $0x138] sm:$0xff]
        %v1214 = vld [vmem:[#allocation2 + $0x140] sm:$0xff]
        %v1215 = vld [vmem:[#allocation2 + $0x148] sm:$0xff]
        %v1216 = vld [vmem:[#allocation2 + $0x150] sm:$0xff]
        %v1217 = vld [vmem:[#allocation2 + $0x158] sm:$0xff]
        %v1218 = vld [vmem:[#allocation2 + $0x160] sm:$0xff]
        %v1219 = vld [vmem:[#allocation2 + $0x168] sm:$0xff]
        %v1220 = vld [vmem:[#allocation2 + $0x170] sm:$0xff]
        %v1221 = vld [vmem:[#allocation2 + $0x178] sm:$0xff]
        %v1222 = vld [vmem:[#allocation2 + $0x180] sm:$0xff]
        %v1223 = vld [vmem:[#allocation2 + $0x188] sm:$0xff]
        %v1224 = vld [vmem:[#allocation2 + $0x190] sm:$0xff]
        %v1225 = vld [vmem:[#allocation2 + $0x198] sm:$0xff]
        %v1226 = vld [vmem:[#allocation2 + $0x1a0] sm:$0xff]
        %v1227 = vld [vmem:[#allocation2 + $0x1a8] sm:$0xff]
        %v1228 = vld [vmem:[#allocation2 + $0x1b0] sm:$0xff]
        %v1229 = vld [vmem:[#allocation2 + $0x1b8] sm:$0xff]
        %v1230 = vld [vmem:[#allocation2 + $0x1c0] sm:$0xff]
        %v1231 = vld [vmem:[#allocation2 + $0x1c8] sm:$0xff]
        %v1232 = vld [vmem:[#allocation2 + $0x1d0] sm:$0xff]
        %v1233 = vld [vmem:[#allocation2 + $0x1d8] sm:$0xff]
        %v1234 = vld [vmem:[#allocation2 + $0x1e0] sm:$0xff]
        %v1235 = vld [vmem:[#allocation2 + $0x1e8] sm:$0xff]
        %v1236 = vld [vmem:[#allocation2 + $0x1f0] sm:$0xff]
        %v1237 = vld [vmem:[#allocation2 + $0x1f8] sm:$0xff]
        %v1238 = vld [vmem:[#allocation2 + $0x200] sm:$0xff]
        %v1239 = vld [vmem:[#allocation2 + $0x208] sm:$0xff]
        %v1240 = vld [vmem:[#allocation2 + $0x210] sm:$0xff]
        %v1241 = vld [vmem:[#allocation2 + $0x218] sm:$0xff]
        %v1242 = vld [vmem:[#allocation2 + $0x220] sm:$0xff]
        %v1243 = vld [vmem:[#allocation2 + $0x228] sm:$0xff]
        %v1244 = vld [vmem:[#allocation2 + $0x230] sm:$0xff]
        %v1245 = vld [vmem:[#allocation2 + $0x238] sm:$0xff]
        %v1246 = vld [vmem:[%s6] sm:$0xff]
        %v1247 = vld [vmem:[%s6 + $0x8] sm:$0xff]
        %v1248 = vld [vmem:[%s6 + $0x10] sm:$0xff]
        %v1249 = vld [vmem:[%s6 + $0x18] sm:$0xff]
        %1251 = vset.pattern.permute.xlu0 0
        %1252 = vperm.xlu0 %1251, %v1246
        %v1253 = vpop.permute.xlu0 %1252
        %1256 = vset.pattern.permute.xlu0 0
        %1257 = vperm.xlu0 %1256, %v1247
        %v1258 = vpop.permute.xlu0 %1257
        %1261 = vset.pattern.permute.xlu0 0
        %1262 = vperm.xlu0 %1261, %v1248
        %v1263 = vpop.permute.xlu0 %1262
        %1266 = vset.pattern.permute.xlu0 0
        %1267 = vperm.xlu0 %1266, %v1249
        %v1268 = vpop.permute.xlu0 %1267
        %vm1270 = vcmask 261120
        %v1272 = vsel %vm1270, %v1164, 0
        %v1275 = vsel %vm1270, %v1167, 0
        %v1278 = vsel %vm1270, %v1170, 0
        %v1281 = vsel %vm1270, %v1173, 0
        %1283 = vmatprep.subr.mxu0 %v1205
        %1284 = vmatpush1.msra.mxu0 %v1204
        %1285 = vmatprep.subr.mxu0 %v1203
        %1286 = vmatpush1.msra.mxu0 %v1202
        %1287 = vmatprep.subr.mxu0 %v1201
        %1288 = vmatpush1.msra.mxu0 %v1200
        %1289 = vmatprep.subr.mxu0 %v1199
        %1290 = vmatpush1.msra.mxu0 %v1198
        %1291 = vmatprep.subr.mxu0 %v1197
        %1292 = vmatpush1.msra.mxu0 %v1196
        %1293 = vmatprep.subr.mxu0 %v1195
        %1294 = vmatpush1.msra.mxu0 %v1194
        %1295 = vmatprep.subr.mxu0 %v1193
        %1296 = vmatpush1.msra.mxu0 %v1192
        %1297 = vmatprep.subr.mxu0 %v1191
        %1298 = vmatpush1.msra.mxu0 %v1190
        %1299 = vmatprep.subr.mxu0 %v1189
        %1300 = vmatpush1.msra.mxu0 %v1188
        %1301 = vmatprep.subr.mxu0 %v1187
        %1302 = vmatpush1.msra.mxu0 %v1186
        %1303 = vmatprep.subr.mxu0 %v1185
        %1304 = vmatpush1.msra.mxu0 %v1184
        %1305 = vmatprep.subr.mxu0 %v1183
        %1306 = vmatpush1.msra.mxu0 %v1182
        %1307 = vmatprep.subr.mxu0 %v1181
        %1308 = vmatpush1.msra.mxu0 %v1180
        %1309 = vmatprep.subr.mxu0 %v1179
        %1310 = vmatpush1.msra.mxu0 %v1178
        %1311 = vmatprep.subr.mxu0 %v1177
        %1312 = vmatpush1.msra.mxu0 %v1176
        %1313 = vmatprep.subr.mxu0 %v1175
        %1314 = vmatpush1.msra.mxu0 %v1174
        %1315 = vmatprep.subr.mxu0 %v1237
        %1316 = vmatpush2.msra.mxu0 %v1236
        %1317 = vmatprep.subr.mxu0 %v1235
        %1318 = vmatpush2.msra.mxu0 %v1234
        %1319 = vmatprep.subr.mxu0 %v1233
        %1320 = vmatpush2.msra.mxu0 %v1232
        %1321 = vmatprep.subr.mxu0 %v1231
        %1322 = vmatpush2.msra.mxu0 %v1230
        %1323 = vmatprep.subr.mxu0 %v1229
        %1324 = vmatpush2.msra.mxu0 %v1228
        %1325 = vmatprep.subr.mxu0 %v1227
        %1326 = vmatpush2.msra.mxu0 %v1226
        %1327 = vmatprep.subr.mxu0 %v1225
        %1328 = vmatpush2.msra.mxu0 %v1224
        %1329 = vmatprep.subr.mxu0 %v1223
        %1330 = vmatpush2.msra.mxu0 %v1222
        %1331 = vmatprep.subr.mxu0 %v1221
        %1332 = vmatpush2.msra.mxu0 %v1220
        %1333 = vmatprep.subr.mxu0 %v1219
        %1334 = vmatpush2.msra.mxu0 %v1218
        %1335 = vmatprep.subr.mxu0 %v1217
        %1336 = vmatpush2.msra.mxu0 %v1216
        %1337 = vmatprep.subr.mxu0 %v1215
        %1338 = vmatpush2.msra.mxu0 %v1214
        %1339 = vmatprep.subr.mxu0 %v1213
        %1340 = vmatpush2.msra.mxu0 %v1212
        %1341 = vmatprep.subr.mxu0 %v1211
        %1342 = vmatpush2.msra.mxu0 %v1210
        %1343 = vmatprep.subr.mxu0 %v1209
        %1344 = vmatpush2.msra.mxu0 %v1208
        %1345 = vmatprep.subr.mxu0 %v1207
        %1346 = vmatpush2.msra.mxu0 %v1206
        %1347 = vmatprep.mubr.f32.mxu0 %v1163
        %1348 = vmatmul.mubr.f32.gmra.mxu0 %v1162
        %v1349 = vpop.f32.mrf.mxu0
        %v1350 = vadd.f32 %v1253, %v1349
        %v1351 = vpop.f32.mrf.mxu0
        %v1352 = vadd.f32 %v1253, %v1351
        %1353 = vmatprep.mubr.f32.mxu0 %v1166
        %1354 = vmatmul.mubr.f32.gmra.mxu0 %v1165
        %v1355 = vpop.f32.mrf.mxu0
        %v1356 = vadd.f32 %v1258, %v1355
        %v1357 = vpop.f32.mrf.mxu0
        %v1358 = vadd.f32 %v1258, %v1357
        %1359 = vmatprep.mubr.f32.mxu0 %v1169
        %1360 = vmatmul.mubr.f32.gmra.mxu0 %v1168
        %v1361 = vpop.f32.mrf.mxu0
        %v1362 = vadd.f32 %v1263, %v1361
        %v1363 = vpop.f32.mrf.mxu0
        %v1364 = vadd.f32 %v1263, %v1363
        %1365 = vmatprep.mubr.f32.mxu0 %v1172
        %1366 = vmatmul.mubr.f32.gmra.mxu0 %v1171
        %v1367 = vpop.f32.mrf.mxu0
        %v1368 = vadd.f32 %v1268, %v1367
        %v1369 = vpop.f32.mrf.mxu0
        %v1370 = vadd.f32 %v1268, %v1369
        %1371 = vdwg.mxu0
        %1372 = vmatprep.subr.mxu0 0.0
        %1373 = vmatpush1.msra.mxu0 0.0
        %1374 = vmatprep.subr.mxu0 0.0
        %1375 = vmatpush1.msra.mxu0 0.0
        %1376 = vmatprep.subr.mxu0 0.0
        %1377 = vmatpush1.msra.mxu0 0.0
        %1378 = vmatprep.subr.mxu0 0.0
        %1379 = vmatpush1.msra.mxu0 0.0
        %1380 = vmatprep.subr.mxu0 0.0
        %1381 = vmatpush1.msra.mxu0 0.0
        %1382 = vmatprep.subr.mxu0 0.0
        %1383 = vmatpush1.msra.mxu0 0.0
        %1384 = vmatprep.subr.mxu0 0.0
        %1385 = vmatpush1.msra.mxu0 0.0
        %1386 = vmatprep.subr.mxu0 0.0
        %1387 = vmatpush1.msra.mxu0 0.0
        %1388 = vmatprep.subr.mxu0 0.0
        %1389 = vmatpush1.msra.mxu0 0.0
        %1390 = vmatprep.subr.mxu0 0.0
        %1391 = vmatpush1.msra.mxu0 0.0
        %1392 = vmatprep.subr.mxu0 0.0
        %1393 = vmatpush1.msra.mxu0 0.0
        %1394 = vmatprep.subr.mxu0 0.0
        %1395 = vmatpush1.msra.mxu0 0.0
        %1396 = vmatprep.subr.mxu0 %v1245
        %1397 = vmatpush1.msra.mxu0 %v1244
        %1398 = vmatprep.subr.mxu0 %v1243
        %1399 = vmatpush1.msra.mxu0 %v1242
        %1400 = vmatprep.subr.mxu0 %v1241
        %1401 = vmatpush1.msra.mxu0 %v1240
        %1402 = vmatprep.subr.mxu0 %v1239
        %1403 = vmatpush1.msra.mxu0 %v1238
        %1404 = vmatprep.subr.mxu0 0.0
        %1405 = vmatpush2.msra.mxu0 0.0
        %1406 = vmatprep.subr.mxu0 0.0
        %1407 = vmatpush2.msra.mxu0 0.0
        %1408 = vmatprep.subr.mxu0 0.0
        %1409 = vmatpush2.msra.mxu0 0.0
        %1410 = vmatprep.subr.mxu0 0.0
        %1411 = vmatpush2.msra.mxu0 0.0
        %1412 = vmatprep.subr.mxu0 0.0
        %1413 = vmatpush2.msra.mxu0 0.0
        %1414 = vmatprep.subr.mxu0 0.0
        %1415 = vmatpush2.msra.mxu0 0.0
        %1416 = vmatprep.subr.mxu0 0.0
        %1417 = vmatpush2.msra.mxu0 0.0
        %1418 = vmatprep.subr.mxu0 0.0
        %1419 = vmatpush2.msra.mxu0 0.0
        %1420 = vmatprep.subr.mxu0 0.0
        %1421 = vmatpush2.msra.mxu0 0.0
        %1422 = vmatprep.subr.mxu0 0.0
        %1423 = vmatpush2.msra.mxu0 0.0
        %1424 = vmatprep.subr.mxu0 0.0
        %1425 = vmatpush2.msra.mxu0 0.0
        %1426 = vmatprep.subr.mxu0 0.0
        %1427 = vmatpush2.msra.mxu0 0.0
        %1428 = vmatprep.subr.mxu0 0.0
        %1429 = vmatpush2.msra.mxu0 0.0
        %1430 = vmatprep.subr.mxu0 0.0
        %1431 = vmatpush2.msra.mxu0 0.0
        %1432 = vmatprep.subr.mxu0 0.0
        %1433 = vmatpush2.msra.mxu0 0.0
        %1434 = vmatprep.subr.mxu0 0.0
        %1435 = vmatpush2.msra.mxu0 0.0
        %1436 = vmatprep.mubr.f32.mxu0 0.0
        %1437 = vmatmul.mubr.f32.gmra.mxu0 %v1272
        %v1438 = vpop.f32.mrf.mxu0
        %v1439 = vadd.f32 %v1350, %v1438
        %v1440 = vpop.f32.mrf.mxu0
        %v1441 = vadd.f32 %v1352, %v1440
        %1442 = vmatprep.mubr.f32.mxu0 0.0
        %1443 = vmatmul.mubr.f32.gmra.mxu0 %v1275
        %v1444 = vpop.f32.mrf.mxu0
        %v1445 = vadd.f32 %v1356, %v1444
        %v1446 = vpop.f32.mrf.mxu0
        %v1447 = vadd.f32 %v1358, %v1446
        %1448 = vmatprep.mubr.f32.mxu0 0.0
        %1449 = vmatmul.mubr.f32.gmra.mxu0 %v1278
        %v1450 = vpop.f32.mrf.mxu0
        %v1451 = vadd.f32 %v1362, %v1450
        %v1452 = vpop.f32.mrf.mxu0
        %v1453 = vadd.f32 %v1364, %v1452
        %1454 = vmatprep.mubr.f32.mxu0 0.0
        %1455 = vmatmul.mubr.f32.gmra.mxu0 %v1281
        %v1456 = vpop.f32.mrf.mxu0
        %v1457 = vadd.f32 %v1368, %v1456
        %v1458 = vpop.f32.mrf.mxu0
        %v1459 = vadd.f32 %v1370, %v1458
        %1460 = vdwg.mxu0
        %1461 = vrot.lane.b32.xlu0 %v1439, 17
        %v1462 = vpop.permute.xlu0 %1461
        %1463 = vrot.lane.b32.xlu0 %v1445, 17
        %v1464 = vpop.permute.xlu0 %1463
        %1465 = vrot.lane.b32.xlu0 %v1451, 17
        %v1466 = vpop.permute.xlu0 %1465
        %1467 = vrot.lane.b32.xlu0 %v1457, 17
        %v1468 = vpop.permute.xlu0 %1467
        %1469 = vrot.lane.b32.xlu0 %v1441, 17
        %v1470 = vpop.permute.xlu0 %1469
        %1471 = vrot.lane.b32.xlu0 %v1447, 17
        %v1472 = vpop.permute.xlu0 %1471
        %1473 = vrot.lane.b32.xlu0 %v1453, 17
        %v1474 = vpop.permute.xlu0 %1473
        %1475 = vrot.lane.b32.xlu0 %v1459, 17
        %v1476 = vpop.permute.xlu0 %1475
        %v1477 = vsel %vm889, %v1462, %v1470
        %v1478 = vsel %vm889, %v1464, %v1472
        %v1479 = vsel %vm889, %v1466, %v1474
        %v1480 = vsel %vm889, %v1468, %v1476
        %v1481 = vsel %vm889, %v1470, %v1462
        %v1482 = vsel %vm889, %v1472, %v1464
        %v1483 = vsel %vm889, %v1474, %v1466
        %v1484 = vsel %vm889, %v1476, %v1468
        %v1485 = vld [vmem:[%s4] ss:$8 sm:$0x3]
        %v1487 = vlaneseq
        %v1488 = vshrl.u32 %v1487, 7
        %v1489 = vsub.s32 0, %v1488
        %v1490 = vrot.slane %v1485, %v1489
        %v1491 = vlaneseq
        %v1492 = vshrl.u32 %v1491, 7
        %v1493 = vsub.s32 1, %v1492
        %v1494 = vrot.slane %v1485, %v1493
        %v1497 = vmul.f32 %v1481, %v1490
        %v1498 = vmul.f32 %v1477, %v1494
        %v1499 = vmul.f32 %v1482, %v1490
        %v1500 = vmul.f32 %v1478, %v1494
        %v1501 = vmul.f32 %v1483, %v1490
        %v1502 = vmul.f32 %v1479, %v1494
        %v1503 = vmul.f32 %v1484, %v1490
        %v1504 = vmul.f32 %v1480, %v1494
        %1505 = vst [vmem:[#allocation2] sm:$0xff] %v1497
        %1506 = vst [vmem:[#allocation2 + $0x8] sm:$0xff] %v1498
        %1507 = vst [vmem:[#allocation2 + $0x10] sm:$0xff] %v1499
        %1508 = vst [vmem:[#allocation2 + $0x18] sm:$0xff] %v1500
        %1509 = vst [vmem:[#allocation2 + $0x20] sm:$0xff] %v1501
        %1510 = vst [vmem:[#allocation2 + $0x28] sm:$0xff] %v1502
        %1511 = vst [vmem:[#allocation2 + $0x30] sm:$0xff] %v1503
        %1512 = vst [vmem:[#allocation2 + $0x38] sm:$0xff] %v1504
        %1513 = vrot.lane.b32.xlu0 %v1439, 16
        %v1514 = vpop.permute.xlu0 %1513
        %1515 = vrot.lane.b32.xlu0 %v1445, 16
        %v1516 = vpop.permute.xlu0 %1515
        %1517 = vrot.lane.b32.xlu0 %v1451, 16
        %v1518 = vpop.permute.xlu0 %1517
        %1519 = vrot.lane.b32.xlu0 %v1457, 16
        %v1520 = vpop.permute.xlu0 %1519
        %1521 = vrot.lane.b32.xlu0 %v1441, 16
        %v1522 = vpop.permute.xlu0 %1521
        %1523 = vrot.lane.b32.xlu0 %v1447, 16
        %v1524 = vpop.permute.xlu0 %1523
        %1525 = vrot.lane.b32.xlu0 %v1453, 16
        %v1526 = vpop.permute.xlu0 %1525
        %1527 = vrot.lane.b32.xlu0 %v1459, 16
        %v1528 = vpop.permute.xlu0 %1527
        %v1529 = vsel %vm922, %v1514, %v1522
        %v1530 = vsel %vm922, %v1516, %v1524
        %v1531 = vsel %vm922, %v1518, %v1526
        %v1532 = vsel %vm922, %v1520, %v1528
        %v1533 = vsel %vm922, %v1522, %v1514
        %v1534 = vsel %vm922, %v1524, %v1516
        %v1535 = vsel %vm922, %v1526, %v1518
        %v1536 = vsel %vm922, %v1528, %v1520
        %v1537 = vld [vmem:[%s925] ss:$8 sm:$0x3]
        %v1539 = vlaneseq
        %v1540 = vshrl.u32 %v1539, 7
        %v1541 = vsub.s32 0, %v1540
        %v1542 = vrot.slane %v1537, %v1541
        %v1543 = vlaneseq
        %v1544 = vshrl.u32 %v1543, 7
        %v1545 = vsub.s32 1, %v1544
        %v1546 = vrot.slane %v1537, %v1545
        %v1549 = vmul.f32 %v1533, %v1542
        %v1550 = vmul.f32 %v1529, %v1546
        %v1551 = vmul.f32 %v1534, %v1542
        %v1552 = vmul.f32 %v1530, %v1546
        %v1553 = vmul.f32 %v1535, %v1542
        %v1554 = vmul.f32 %v1531, %v1546
        %v1555 = vmul.f32 %v1536, %v1542
        %v1556 = vmul.f32 %v1532, %v1546
        %1557 = vst [vmem:[#allocation2 + $0x40] sm:$0xff] %v1549
        %1558 = vst [vmem:[#allocation2 + $0x48] sm:$0xff] %v1550
        %1559 = vst [vmem:[#allocation2 + $0x50] sm:$0xff] %v1551
        %1560 = vst [vmem:[#allocation2 + $0x58] sm:$0xff] %v1552
        %1561 = vst [vmem:[#allocation2 + $0x60] sm:$0xff] %v1553
        %1562 = vst [vmem:[#allocation2 + $0x68] sm:$0xff] %v1554
        %1563 = vst [vmem:[#allocation2 + $0x70] sm:$0xff] %v1555
        %1564 = vst [vmem:[#allocation2 + $0x78] sm:$0xff] %v1556
        %1565 = vrot.lane.b32.xlu0 %v1439, 15
        %v1566 = vpop.permute.xlu0 %1565
        %1567 = vrot.lane.b32.xlu0 %v1445, 15
        %v1568 = vpop.permute.xlu0 %1567
        %1569 = vrot.lane.b32.xlu0 %v1451, 15
        %v1570 = vpop.permute.xlu0 %1569
        %1571 = vrot.lane.b32.xlu0 %v1457, 15
        %v1572 = vpop.permute.xlu0 %1571
        %1573 = vrot.lane.b32.xlu0 %v1441, 15
        %v1574 = vpop.permute.xlu0 %1573
        %1575 = vrot.lane.b32.xlu0 %v1447, 15
        %v1576 = vpop.permute.xlu0 %1575
        %1577 = vrot.lane.b32.xlu0 %v1453, 15
        %v1578 = vpop.permute.xlu0 %1577
        %1579 = vrot.lane.b32.xlu0 %v1459, 15
        %v1580 = vpop.permute.xlu0 %1579
        %v1581 = vsel %vm956, %v1566, %v1574
        %v1582 = vsel %vm956, %v1568, %v1576
        %v1583 = vsel %vm956, %v1570, %v1578
        %v1584 = vsel %vm956, %v1572, %v1580
        %v1585 = vsel %vm956, %v1574, %v1566
        %v1586 = vsel %vm956, %v1576, %v1568
        %v1587 = vsel %vm956, %v1578, %v1570
        %v1588 = vsel %vm956, %v1580, %v1572
        %v1589 = vld [vmem:[%s959] ss:$8 sm:$0x3]
        %v1591 = vlaneseq
        %v1592 = vshrl.u32 %v1591, 7
        %v1593 = vsub.s32 0, %v1592
        %v1594 = vrot.slane %v1589, %v1593
        %v1595 = vlaneseq
        %v1596 = vshrl.u32 %v1595, 7
        %v1597 = vsub.s32 1, %v1596
        %v1598 = vrot.slane %v1589, %v1597
        %v1601 = vmul.f32 %v1585, %v1594
        %v1602 = vmul.f32 %v1581, %v1598
        %v1603 = vmul.f32 %v1586, %v1594
        %v1604 = vmul.f32 %v1582, %v1598
        %v1605 = vmul.f32 %v1587, %v1594
        %v1606 = vmul.f32 %v1583, %v1598
        %v1607 = vmul.f32 %v1588, %v1594
        %v1608 = vmul.f32 %v1584, %v1598
        %1609 = vst [vmem:[#allocation2 + $0x80] sm:$0xff] %v1601
        %1610 = vst [vmem:[#allocation2 + $0x88] sm:$0xff] %v1602
        %1611 = vst [vmem:[#allocation2 + $0x90] sm:$0xff] %v1603
        %1612 = vst [vmem:[#allocation2 + $0x98] sm:$0xff] %v1604
        %1613 = vst [vmem:[#allocation2 + $0xa0] sm:$0xff] %v1605
        %1614 = vst [vmem:[#allocation2 + $0xa8] sm:$0xff] %v1606
        %1615 = vst [vmem:[#allocation2 + $0xb0] sm:$0xff] %v1607
        %1616 = vst [vmem:[#allocation2 + $0xb8] sm:$0xff] %v1608
        %1617 = vrot.lane.b32.xlu0 %v1439, 1
        %v1618 = vpop.permute.xlu0 %1617
        %1619 = vrot.lane.b32.xlu0 %v1445, 1
        %v1620 = vpop.permute.xlu0 %1619
        %1621 = vrot.lane.b32.xlu0 %v1451, 1
        %v1622 = vpop.permute.xlu0 %1621
        %1623 = vrot.lane.b32.xlu0 %v1457, 1
        %v1624 = vpop.permute.xlu0 %1623
        %1625 = vrot.lane.b32.xlu0 %v1441, 1
        %v1626 = vpop.permute.xlu0 %1625
        %1627 = vrot.lane.b32.xlu0 %v1447, 1
        %v1628 = vpop.permute.xlu0 %1627
        %1629 = vrot.lane.b32.xlu0 %v1453, 1
        %v1630 = vpop.permute.xlu0 %1629
        %1631 = vrot.lane.b32.xlu0 %v1459, 1
        %v1632 = vpop.permute.xlu0 %1631
        %v1633 = vsel %vm990, %v1618, %v1626
        %v1634 = vsel %vm990, %v1620, %v1628
        %v1635 = vsel %vm990, %v1622, %v1630
        %v1636 = vsel %vm990, %v1624, %v1632
        %v1637 = vsel %vm990, %v1626, %v1618
        %v1638 = vsel %vm990, %v1628, %v1620
        %v1639 = vsel %vm990, %v1630, %v1622
        %v1640 = vsel %vm990, %v1632, %v1624
        %v1641 = vld [vmem:[%s993] ss:$8 sm:$0x3]
        %v1643 = vlaneseq
        %v1644 = vshrl.u32 %v1643, 7
        %v1645 = vsub.s32 0, %v1644
        %v1646 = vrot.slane %v1641, %v1645
        %v1647 = vlaneseq
        %v1648 = vshrl.u32 %v1647, 7
        %v1649 = vsub.s32 1, %v1648
        %v1650 = vrot.slane %v1641, %v1649
        %v1653 = vmul.f32 %v1637, %v1646
        %v1654 = vmul.f32 %v1633, %v1650
        %v1655 = vmul.f32 %v1638, %v1646
        %v1656 = vmul.f32 %v1634, %v1650
        %v1657 = vmul.f32 %v1639, %v1646
        %v1658 = vmul.f32 %v1635, %v1650
        %v1659 = vmul.f32 %v1640, %v1646
        %v1660 = vmul.f32 %v1636, %v1650
        %1661 = vst [vmem:[#allocation2 + $0xc0] sm:$0xff] %v1653
        %1662 = vst [vmem:[#allocation2 + $0xc8] sm:$0xff] %v1654
        %1663 = vst [vmem:[#allocation2 + $0xd0] sm:$0xff] %v1655
        %1664 = vst [vmem:[#allocation2 + $0xd8] sm:$0xff] %v1656
        %1665 = vst [vmem:[#allocation2 + $0xe0] sm:$0xff] %v1657
        %1666 = vst [vmem:[#allocation2 + $0xe8] sm:$0xff] %v1658
        %1667 = vst [vmem:[#allocation2 + $0xf0] sm:$0xff] %v1659
        %1668 = vst [vmem:[#allocation2 + $0xf8] sm:$0xff] %v1660
        %1669 = vst [vmem:[#allocation2 + $0x100] sm:$0xff] %v1439
        %1670 = vst [vmem:[#allocation2 + $0x108] sm:$0xff] %v1441
        %1671 = vst [vmem:[#allocation2 + $0x110] sm:$0xff] %v1445
        %1672 = vst [vmem:[#allocation2 + $0x118] sm:$0xff] %v1447
        %1673 = vst [vmem:[#allocation2 + $0x120] sm:$0xff] %v1451
        %1674 = vst [vmem:[#allocation2 + $0x128] sm:$0xff] %v1453
        %1675 = vst [vmem:[#allocation2 + $0x130] sm:$0xff] %v1457
        %1676 = vst [vmem:[#allocation2 + $0x138] sm:$0xff] %v1459
        %1677 = vrot.lane.b32.xlu0 %v1439, 127
        %v1678 = vpop.permute.xlu0 %1677
        %1679 = vrot.lane.b32.xlu0 %v1445, 127
        %v1680 = vpop.permute.xlu0 %1679
        %1681 = vrot.lane.b32.xlu0 %v1451, 127
        %v1682 = vpop.permute.xlu0 %1681
        %1683 = vrot.lane.b32.xlu0 %v1457, 127
        %v1684 = vpop.permute.xlu0 %1683
        %1685 = vrot.lane.b32.xlu0 %v1441, 127
        %v1686 = vpop.permute.xlu0 %1685
        %1687 = vrot.lane.b32.xlu0 %v1447, 127
        %v1688 = vpop.permute.xlu0 %1687
        %1689 = vrot.lane.b32.xlu0 %v1453, 127
        %v1690 = vpop.permute.xlu0 %1689
        %1691 = vrot.lane.b32.xlu0 %v1459, 127
        %v1692 = vpop.permute.xlu0 %1691
        %v1693 = vsel %vm1032, %v1678, %v1686
        %v1694 = vsel %vm1032, %v1680, %v1688
        %v1695 = vsel %vm1032, %v1682, %v1690
        %v1696 = vsel %vm1032, %v1684, %v1692
        %v1697 = vsel %vm1032, %v1686, %v1678
        %v1698 = vsel %vm1032, %v1688, %v1680
        %v1699 = vsel %vm1032, %v1690, %v1682
        %v1700 = vsel %vm1032, %v1692, %v1684
        %v1701 = vld [vmem:[%s1035] ss:$8 sm:$0x3]
        %v1703 = vlaneseq
        %v1704 = vshrl.u32 %v1703, 7
        %v1705 = vsub.s32 0, %v1704
        %v1706 = vrot.slane %v1701, %v1705
        %v1707 = vlaneseq
        %v1708 = vshrl.u32 %v1707, 7
        %v1709 = vsub.s32 1, %v1708
        %v1710 = vrot.slane %v1701, %v1709
        %v1713 = vmul.f32 %v1693, %v1706
        %v1714 = vmul.f32 %v1697, %v1710
        %v1715 = vmul.f32 %v1694, %v1706
        %v1716 = vmul.f32 %v1698, %v1710
        %v1717 = vmul.f32 %v1695, %v1706
        %v1718 = vmul.f32 %v1699, %v1710
        %v1719 = vmul.f32 %v1696, %v1706
        %v1720 = vmul.f32 %v1700, %v1710
        %1721 = vst [vmem:[#allocation2 + $0x140] sm:$0xff] %v1713
        %1722 = vst [vmem:[#allocation2 + $0x148] sm:$0xff] %v1714
        %1723 = vst [vmem:[#allocation2 + $0x150] sm:$0xff] %v1715
        %1724 = vst [vmem:[#allocation2 + $0x158] sm:$0xff] %v1716
        %1725 = vst [vmem:[#allocation2 + $0x160] sm:$0xff] %v1717
        %1726 = vst [vmem:[#allocation2 + $0x168] sm:$0xff] %v1718
        %1727 = vst [vmem:[#allocation2 + $0x170] sm:$0xff] %v1719
        %1728 = vst [vmem:[#allocation2 + $0x178] sm:$0xff] %v1720
        %1729 = vrot.lane.b32.xlu0 %v1439, 113
        %v1730 = vpop.permute.xlu0 %1729
        %1731 = vrot.lane.b32.xlu0 %v1445, 113
        %v1732 = vpop.permute.xlu0 %1731
        %1733 = vrot.lane.b32.xlu0 %v1451, 113
        %v1734 = vpop.permute.xlu0 %1733
        %1735 = vrot.lane.b32.xlu0 %v1457, 113
        %v1736 = vpop.permute.xlu0 %1735
        %1737 = vrot.lane.b32.xlu0 %v1441, 113
        %v1738 = vpop.permute.xlu0 %1737
        %1739 = vrot.lane.b32.xlu0 %v1447, 113
        %v1740 = vpop.permute.xlu0 %1739
        %1741 = vrot.lane.b32.xlu0 %v1453, 113
        %v1742 = vpop.permute.xlu0 %1741
        %1743 = vrot.lane.b32.xlu0 %v1459, 113
        %v1744 = vpop.permute.xlu0 %1743
        %v1745 = vsel %vm1066, %v1730, %v1738
        %v1746 = vsel %vm1066, %v1732, %v1740
        %v1747 = vsel %vm1066, %v1734, %v1742
        %v1748 = vsel %vm1066, %v1736, %v1744
        %v1749 = vsel %vm1066, %v1738, %v1730
        %v1750 = vsel %vm1066, %v1740, %v1732
        %v1751 = vsel %vm1066, %v1742, %v1734
        %v1752 = vsel %vm1066, %v1744, %v1736
        %v1753 = vld [vmem:[%s1069] ss:$8 sm:$0x3]
        %v1755 = vlaneseq
        %v1756 = vshrl.u32 %v1755, 7
        %v1757 = vsub.s32 0, %v1756
        %v1758 = vrot.slane %v1753, %v1757
        %v1759 = vlaneseq
        %v1760 = vshrl.u32 %v1759, 7
        %v1761 = vsub.s32 1, %v1760
        %v1762 = vrot.slane %v1753, %v1761
        %v1765 = vmul.f32 %v1745, %v1758
        %v1766 = vmul.f32 %v1749, %v1762
        %v1767 = vmul.f32 %v1746, %v1758
        %v1768 = vmul.f32 %v1750, %v1762
        %v1769 = vmul.f32 %v1747, %v1758
        %v1770 = vmul.f32 %v1751, %v1762
        %v1771 = vmul.f32 %v1748, %v1758
        %v1772 = vmul.f32 %v1752, %v1762
        %1773 = vst [vmem:[#allocation2 + $0x180] sm:$0xff] %v1765
        %1774 = vst [vmem:[#allocation2 + $0x188] sm:$0xff] %v1766
        %1775 = vst [vmem:[#allocation2 + $0x190] sm:$0xff] %v1767
        %1776 = vst [vmem:[#allocation2 + $0x198] sm:$0xff] %v1768
        %1777 = vst [vmem:[#allocation2 + $0x1a0] sm:$0xff] %v1769
        %1778 = vst [vmem:[#allocation2 + $0x1a8] sm:$0xff] %v1770
        %1779 = vst [vmem:[#allocation2 + $0x1b0] sm:$0xff] %v1771
        %1780 = vst [vmem:[#allocation2 + $0x1b8] sm:$0xff] %v1772
        %1781 = vrot.lane.b32.xlu0 %v1439, 112
        %v1782 = vpop.permute.xlu0 %1781
        %1783 = vrot.lane.b32.xlu0 %v1445, 112
        %v1784 = vpop.permute.xlu0 %1783
        %1785 = vrot.lane.b32.xlu0 %v1451, 112
        %v1786 = vpop.permute.xlu0 %1785
        %1787 = vrot.lane.b32.xlu0 %v1457, 112
        %v1788 = vpop.permute.xlu0 %1787
        %1789 = vrot.lane.b32.xlu0 %v1441, 112
        %v1790 = vpop.permute.xlu0 %1789
        %1791 = vrot.lane.b32.xlu0 %v1447, 112
        %v1792 = vpop.permute.xlu0 %1791
        %1793 = vrot.lane.b32.xlu0 %v1453, 112
        %v1794 = vpop.permute.xlu0 %1793
        %1795 = vrot.lane.b32.xlu0 %v1459, 112
        %v1796 = vpop.permute.xlu0 %1795
        %v1797 = vsel %vm1100, %v1782, %v1790
        %v1798 = vsel %vm1100, %v1784, %v1792
        %v1799 = vsel %vm1100, %v1786, %v1794
        %v1800 = vsel %vm1100, %v1788, %v1796
        %v1801 = vsel %vm1100, %v1790, %v1782
        %v1802 = vsel %vm1100, %v1792, %v1784
        %v1803 = vsel %vm1100, %v1794, %v1786
        %v1804 = vsel %vm1100, %v1796, %v1788
        %v1805 = vld [vmem:[%s1103] ss:$8 sm:$0x3]
        %v1807 = vlaneseq
        %v1808 = vshrl.u32 %v1807, 7
        %v1809 = vsub.s32 0, %v1808
        %v1810 = vrot.slane %v1805, %v1809
        %v1811 = vlaneseq
        %v1812 = vshrl.u32 %v1811, 7
        %v1813 = vsub.s32 1, %v1812
        %v1814 = vrot.slane %v1805, %v1813
        %v1817 = vmul.f32 %v1797, %v1810
        %v1818 = vmul.f32 %v1801, %v1814
        %v1819 = vmul.f32 %v1798, %v1810
        %v1820 = vmul.f32 %v1802, %v1814
        %v1821 = vmul.f32 %v1799, %v1810
        %v1822 = vmul.f32 %v1803, %v1814
        %v1823 = vmul.f32 %v1800, %v1810
        %v1824 = vmul.f32 %v1804, %v1814
        %1825 = vst [vmem:[#allocation2 + $0x1c0] sm:$0xff] %v1817
        %1826 = vst [vmem:[#allocation2 + $0x1c8] sm:$0xff] %v1818
        %1827 = vst [vmem:[#allocation2 + $0x1d0] sm:$0xff] %v1819
        %1828 = vst [vmem:[#allocation2 + $0x1d8] sm:$0xff] %v1820
        %1829 = vst [vmem:[#allocation2 + $0x1e0] sm:$0xff] %v1821
        %1830 = vst [vmem:[#allocation2 + $0x1e8] sm:$0xff] %v1822
        %1831 = vst [vmem:[#allocation2 + $0x1f0] sm:$0xff] %v1823
        %1832 = vst [vmem:[#allocation2 + $0x1f8] sm:$0xff] %v1824
        %1833 = vrot.lane.b32.xlu0 %v1439, 111
        %v1834 = vpop.permute.xlu0 %1833
        %1835 = vrot.lane.b32.xlu0 %v1445, 111
        %v1836 = vpop.permute.xlu0 %1835
        %1837 = vrot.lane.b32.xlu0 %v1451, 111
        %v1838 = vpop.permute.xlu0 %1837
        %1839 = vrot.lane.b32.xlu0 %v1457, 111
        %v1840 = vpop.permute.xlu0 %1839
        %1841 = vrot.lane.b32.xlu0 %v1441, 111
        %v1842 = vpop.permute.xlu0 %1841
        %1843 = vrot.lane.b32.xlu0 %v1447, 111
        %v1844 = vpop.permute.xlu0 %1843
        %1845 = vrot.lane.b32.xlu0 %v1453, 111
        %v1846 = vpop.permute.xlu0 %1845
        %1847 = vrot.lane.b32.xlu0 %v1459, 111
        %v1848 = vpop.permute.xlu0 %1847
        %v1849 = vsel %vm1134, %v1834, %v1842
        %v1850 = vsel %vm1134, %v1836, %v1844
        %v1851 = vsel %vm1134, %v1838, %v1846
        %v1852 = vsel %vm1134, %v1840, %v1848
        %v1853 = vsel %vm1134, %v1842, %v1834
        %v1854 = vsel %vm1134, %v1844, %v1836
        %v1855 = vsel %vm1134, %v1846, %v1838
        %v1856 = vsel %vm1134, %v1848, %v1840
        %v1857 = vld [vmem:[%s1137] ss:$8 sm:$0x3]
        %v1859 = vlaneseq
        %v1860 = vshrl.u32 %v1859, 7
        %v1861 = vsub.s32 0, %v1860
        %v1862 = vrot.slane %v1857, %v1861
        %v1863 = vlaneseq
        %v1864 = vshrl.u32 %v1863, 7
        %v1865 = vsub.s32 1, %v1864
        %v1866 = vrot.slane %v1857, %v1865
        %v1869 = vmul.f32 %v1849, %v1862
        %v1870 = vmul.f32 %v1853, %v1866
        %v1871 = vmul.f32 %v1850, %v1862
        %v1872 = vmul.f32 %v1854, %v1866
        %v1873 = vmul.f32 %v1851, %v1862
        %v1874 = vmul.f32 %v1855, %v1866
        %v1875 = vmul.f32 %v1852, %v1862
        %v1876 = vmul.f32 %v1856, %v1866
        %1877 = vst [vmem:[#allocation2 + $0x200] sm:$0xff] %v1869
        %1878 = vst [vmem:[#allocation2 + $0x208] sm:$0xff] %v1870
        %1879 = vst [vmem:[#allocation2 + $0x210] sm:$0xff] %v1871
        %1880 = vst [vmem:[#allocation2 + $0x218] sm:$0xff] %v1872
        %1881 = vst [vmem:[#allocation2 + $0x220] sm:$0xff] %v1873
        %1882 = vst [vmem:[#allocation2 + $0x228] sm:$0xff] %v1874
        %1883 = vst [vmem:[#allocation2 + $0x230] sm:$0xff] %v1875
        %1884 = vst [vmem:[#allocation2 + $0x238] sm:$0xff] %v1876
        %s1885 = scalar_lea.vmem %s5, 96
        %v1886 = vld [vmem:[%s1885] sm:$0xff]
        %v1887 = vld [vmem:[%s1885 + $0x8] sm:$0xff]
        %v1888 = vld [vmem:[%s1885 + $0x10] sm:$0xff]
        %v1889 = vld [vmem:[%s1885 + $0x18] sm:$0xff]
        %v1890 = vld [vmem:[%s1885 + $0x20] sm:$0xff]
        %v1891 = vld [vmem:[%s1885 + $0x28] sm:$0xff]
        %v1892 = vld [vmem:[%s1885 + $0x30] sm:$0xff]
        %v1893 = vld [vmem:[%s1885 + $0x38] sm:$0xff]
        %v1894 = vld [vmem:[%s1885 + $0x40] sm:$0xff]
        %v1895 = vld [vmem:[%s1885 + $0x48] sm:$0xff]
        %v1896 = vld [vmem:[%s1885 + $0x50] sm:$0xff]
        %v1897 = vld [vmem:[%s1885 + $0x58] sm:$0xff]
        %v1898 = vld [vmem:[#allocation2] sm:$0xff]
        %v1899 = vld [vmem:[#allocation2 + $0x8] sm:$0xff]
        %v1900 = vld [vmem:[#allocation2 + $0x10] sm:$0xff]
        %v1901 = vld [vmem:[#allocation2 + $0x18] sm:$0xff]
        %v1902 = vld [vmem:[#allocation2 + $0x20] sm:$0xff]
        %v1903 = vld [vmem:[#allocation2 + $0x28] sm:$0xff]
        %v1904 = vld [vmem:[#allocation2 + $0x30] sm:$0xff]
        %v1905 = vld [vmem:[#allocation2 + $0x38] sm:$0xff]
        %v1906 = vld [vmem:[#allocation2 + $0x40] sm:$0xff]
        %v1907 = vld [vmem:[#allocation2 + $0x48] sm:$0xff]
        %v1908 = vld [vmem:[#allocation2 + $0x50] sm:$0xff]
        %v1909 = vld [vmem:[#allocation2 + $0x58] sm:$0xff]
        %v1910 = vld [vmem:[#allocation2 + $0x60] sm:$0xff]
        %v1911 = vld [vmem:[#allocation2 + $0x68] sm:$0xff]
        %v1912 = vld [vmem:[#allocation2 + $0x70] sm:$0xff]
        %v1913 = vld [vmem:[#allocation2 + $0x78] sm:$0xff]
        %v1914 = vld [vmem:[#allocation2 + $0x80] sm:$0xff]
        %v1915 = vld [vmem:[#allocation2 + $0x88] sm:$0xff]
        %v1916 = vld [vmem:[#allocation2 + $0x90] sm:$0xff]
        %v1917 = vld [vmem:[#allocation2 + $0x98] sm:$0xff]
        %v1918 = vld [vmem:[#allocation2 + $0xa0] sm:$0xff]
        %v1919 = vld [vmem:[#allocation2 + $0xa8] sm:$0xff]
        %v1920 = vld [vmem:[#allocation2 + $0xb0] sm:$0xff]
        %v1921 = vld [vmem:[#allocation2 + $0xb8] sm:$0xff]
        %v1922 = vld [vmem:[#allocation2 + $0xc0] sm:$0xff]
        %v1923 = vld [vmem:[#allocation2 + $0xc8] sm:$0xff]
        %v1924 = vld [vmem:[#allocation2 + $0xd0] sm:$0xff]
        %v1925 = vld [vmem:[#allocation2 + $0xd8] sm:$0xff]
        %v1926 = vld [vmem:[#allocation2 + $0xe0] sm:$0xff]
        %v1927 = vld [vmem:[#allocation2 + $0xe8] sm:$0xff]
        %v1928 = vld [vmem:[#allocation2 + $0xf0] sm:$0xff]
        %v1929 = vld [vmem:[#allocation2 + $0xf8] sm:$0xff]
        %v1930 = vld [vmem:[#allocation2 + $0x100] sm:$0xff]
        %v1931 = vld [vmem:[#allocation2 + $0x108] sm:$0xff]
        %v1932 = vld [vmem:[#allocation2 + $0x110] sm:$0xff]
        %v1933 = vld [vmem:[#allocation2 + $0x118] sm:$0xff]
        %v1934 = vld [vmem:[#allocation2 + $0x120] sm:$0xff]
        %v1935 = vld [vmem:[#allocation2 + $0x128] sm:$0xff]
        %v1936 = vld [vmem:[#allocation2 + $0x130] sm:$0xff]
        %v1937 = vld [vmem:[#allocation2 + $0x138] sm:$0xff]
        %v1938 = vld [vmem:[#allocation2 + $0x140] sm:$0xff]
        %v1939 = vld [vmem:[#allocation2 + $0x148] sm:$0xff]
        %v1940 = vld [vmem:[#allocation2 + $0x150] sm:$0xff]
        %v1941 = vld [vmem:[#allocation2 + $0x158] sm:$0xff]
        %v1942 = vld [vmem:[#allocation2 + $0x160] sm:$0xff]
        %v1943 = vld [vmem:[#allocation2 + $0x168] sm:$0xff]
        %v1944 = vld [vmem:[#allocation2 + $0x170] sm:$0xff]
        %v1945 = vld [vmem:[#allocation2 + $0x178] sm:$0xff]
        %v1946 = vld [vmem:[#allocation2 + $0x180] sm:$0xff]
        %v1947 = vld [vmem:[#allocation2 + $0x188] sm:$0xff]
        %v1948 = vld [vmem:[#allocation2 + $0x190] sm:$0xff]
        %v1949 = vld [vmem:[#allocation2 + $0x198] sm:$0xff]
        %v1950 = vld [vmem:[#allocation2 + $0x1a0] sm:$0xff]
        %v1951 = vld [vmem:[#allocation2 + $0x1a8] sm:$0xff]
        %v1952 = vld [vmem:[#allocation2 + $0x1b0] sm:$0xff]
        %v1953 = vld [vmem:[#allocation2 + $0x1b8] sm:$0xff]
        %v1954 = vld [vmem:[#allocation2 + $0x1c0] sm:$0xff]
        %v1955 = vld [vmem:[#allocation2 + $0x1c8] sm:$0xff]
        %v1956 = vld [vmem:[#allocation2 + $0x1d0] sm:$0xff]
        %v1957 = vld [vmem:[#allocation2 + $0x1d8] sm:$0xff]
        %v1958 = vld [vmem:[#allocation2 + $0x1e0] sm:$0xff]
        %v1959 = vld [vmem:[#allocation2 + $0x1e8] sm:$0xff]
        %v1960 = vld [vmem:[#allocation2 + $0x1f0] sm:$0xff]
        %v1961 = vld [vmem:[#allocation2 + $0x1f8] sm:$0xff]
        %v1962 = vld [vmem:[#allocation2 + $0x200] sm:$0xff]
        %v1963 = vld [vmem:[#allocation2 + $0x208] sm:$0xff]
        %v1964 = vld [vmem:[#allocation2 + $0x210] sm:$0xff]
        %v1965 = vld [vmem:[#allocation2 + $0x218] sm:$0xff]
        %v1966 = vld [vmem:[#allocation2 + $0x220] sm:$0xff]
        %v1967 = vld [vmem:[#allocation2 + $0x228] sm:$0xff]
        %v1968 = vld [vmem:[#allocation2 + $0x230] sm:$0xff]
        %v1969 = vld [vmem:[#allocation2 + $0x238] sm:$0xff]
        %s1970 = scalar_lea.vmem %s6, 32
        %v1971 = vld [vmem:[%s1970] sm:$0xff]
        %v1972 = vld [vmem:[%s1970 + $0x8] sm:$0xff]
        %v1973 = vld [vmem:[%s1970 + $0x10] sm:$0xff]
        %v1974 = vld [vmem:[%s1970 + $0x18] sm:$0xff]
        %1976 = vset.pattern.permute.xlu0 0
        %1977 = vperm.xlu0 %1976, %v1971
        %v1978 = vpop.permute.xlu0 %1977
        %1981 = vset.pattern.permute.xlu0 0
        %1982 = vperm.xlu0 %1981, %v1972
        %v1983 = vpop.permute.xlu0 %1982
        %1986 = vset.pattern.permute.xlu0 0
        %1987 = vperm.xlu0 %1986, %v1973
        %v1988 = vpop.permute.xlu0 %1987
        %1991 = vset.pattern.permute.xlu0 0
        %1992 = vperm.xlu0 %1991, %v1974
        %v1993 = vpop.permute.xlu0 %1992
        %v1996 = vsel %vm1270, %v1888, 0
        %v1999 = vsel %vm1270, %v1891, 0
        %v2002 = vsel %vm1270, %v1894, 0
        %v2005 = vsel %vm1270, %v1897, 0
        %2007 = vmatprep.subr.mxu0 %v1929
        %2008 = vmatpush1.msra.mxu0 %v1928
        %2009 = vmatprep.subr.mxu0 %v1927
        %2010 = vmatpush1.msra.mxu0 %v1926
        %2011 = vmatprep.subr.mxu0 %v1925
        %2012 = vmatpush1.msra.mxu0 %v1924
        %2013 = vmatprep.subr.mxu0 %v1923
        %2014 = vmatpush1.msra.mxu0 %v1922
        %2015 = vmatprep.subr.mxu0 %v1921
        %2016 = vmatpush1.msra.mxu0 %v1920
        %2017 = vmatprep.subr.mxu0 %v1919
        %2018 = vmatpush1.msra.mxu0 %v1918
        %2019 = vmatprep.subr.mxu0 %v1917
        %2020 = vmatpush1.msra.mxu0 %v1916
        %2021 = vmatprep.subr.mxu0 %v1915
        %2022 = vmatpush1.msra.mxu0 %v1914
        %2023 = vmatprep.subr.mxu0 %v1913
        %2024 = vmatpush1.msra.mxu0 %v1912
        %2025 = vmatprep.subr.mxu0 %v1911
        %2026 = vmatpush1.msra.mxu0 %v1910
        %2027 = vmatprep.subr.mxu0 %v1909
        %2028 = vmatpush1.msra.mxu0 %v1908
        %2029 = vmatprep.subr.mxu0 %v1907
        %2030 = vmatpush1.msra.mxu0 %v1906
        %2031 = vmatprep.subr.mxu0 %v1905
        %2032 = vmatpush1.msra.mxu0 %v1904
        %2033 = vmatprep.subr.mxu0 %v1903
        %2034 = vmatpush1.msra.mxu0 %v1902
        %2035 = vmatprep.subr.mxu0 %v1901
        %2036 = vmatpush1.msra.mxu0 %v1900
        %2037 = vmatprep.subr.mxu0 %v1899
        %2038 = vmatpush1.msra.mxu0 %v1898
        %2039 = vmatprep.subr.mxu0 %v1961
        %2040 = vmatpush2.msra.mxu0 %v1960
        %2041 = vmatprep.subr.mxu0 %v1959
        %2042 = vmatpush2.msra.mxu0 %v1958
        %2043 = vmatprep.subr.mxu0 %v1957
        %2044 = vmatpush2.msra.mxu0 %v1956
        %2045 = vmatprep.subr.mxu0 %v1955
        %2046 = vmatpush2.msra.mxu0 %v1954
        %2047 = vmatprep.subr.mxu0 %v1953
        %2048 = vmatpush2.msra.mxu0 %v1952
        %2049 = vmatprep.subr.mxu0 %v1951
        %2050 = vmatpush2.msra.mxu0 %v1950
        %2051 = vmatprep.subr.mxu0 %v1949
        %2052 = vmatpush2.msra.mxu0 %v1948
        %2053 = vmatprep.subr.mxu0 %v1947
        %2054 = vmatpush2.msra.mxu0 %v1946
        %2055 = vmatprep.subr.mxu0 %v1945
        %2056 = vmatpush2.msra.mxu0 %v1944
        %2057 = vmatprep.subr.mxu0 %v1943
        %2058 = vmatpush2.msra.mxu0 %v1942
        %2059 = vmatprep.subr.mxu0 %v1941
        %2060 = vmatpush2.msra.mxu0 %v1940
        %2061 = vmatprep.subr.mxu0 %v1939
        %2062 = vmatpush2.msra.mxu0 %v1938
        %2063 = vmatprep.subr.mxu0 %v1937
        %2064 = vmatpush2.msra.mxu0 %v1936
        %2065 = vmatprep.subr.mxu0 %v1935
        %2066 = vmatpush2.msra.mxu0 %v1934
        %2067 = vmatprep.subr.mxu0 %v1933
        %2068 = vmatpush2.msra.mxu0 %v1932
        %2069 = vmatprep.subr.mxu0 %v1931
        %2070 = vmatpush2.msra.mxu0 %v1930
        %2071 = vmatprep.mubr.f32.mxu0 %v1887
        %2072 = vmatmul.mubr.f32.gmra.mxu0 %v1886
        %v2073 = vpop.f32.mrf.mxu0
        %v2074 = vadd.f32 %v1978, %v2073
        %v2075 = vpop.f32.mrf.mxu0
        %v2076 = vadd.f32 %v1978, %v2075
        %2077 = vmatprep.mubr.f32.mxu0 %v1890
        %2078 = vmatmul.mubr.f32.gmra.mxu0 %v1889
        %v2079 = vpop.f32.mrf.mxu0
        %v2080 = vadd.f32 %v1983, %v2079
        %v2081 = vpop.f32.mrf.mxu0
        %v2082 = vadd.f32 %v1983, %v2081
        %2083 = vmatprep.mubr.f32.mxu0 %v1893
        %2084 = vmatmul.mubr.f32.gmra.mxu0 %v1892
        %v2085 = vpop.f32.mrf.mxu0
        %v2086 = vadd.f32 %v1988, %v2085
        %v2087 = vpop.f32.mrf.mxu0
        %v2088 = vadd.f32 %v1988, %v2087
        %2089 = vmatprep.mubr.f32.mxu0 %v1896
        %2090 = vmatmul.mubr.f32.gmra.mxu0 %v1895
        %v2091 = vpop.f32.mrf.mxu0
        %v2092 = vadd.f32 %v1993, %v2091
        %v2093 = vpop.f32.mrf.mxu0
        %v2094 = vadd.f32 %v1993, %v2093
        %2095 = vdwg.mxu0
        %2096 = vmatprep.subr.mxu0 0.0
        %2097 = vmatpush1.msra.mxu0 0.0
        %2098 = vmatprep.subr.mxu0 0.0
        %2099 = vmatpush1.msra.mxu0 0.0
        %2100 = vmatprep.subr.mxu0 0.0
        %2101 = vmatpush1.msra.mxu0 0.0
        %2102 = vmatprep.subr.mxu0 0.0
        %2103 = vmatpush1.msra.mxu0 0.0
        %2104 = vmatprep.subr.mxu0 0.0
        %2105 = vmatpush1.msra.mxu0 0.0
        %2106 = vmatprep.subr.mxu0 0.0
        %2107 = vmatpush1.msra.mxu0 0.0
        %2108 = vmatprep.subr.mxu0 0.0
        %2109 = vmatpush1.msra.mxu0 0.0
        %2110 = vmatprep.subr.mxu0 0.0
        %2111 = vmatpush1.msra.mxu0 0.0
        %2112 = vmatprep.subr.mxu0 0.0
        %2113 = vmatpush1.msra.mxu0 0.0
        %2114 = vmatprep.subr.mxu0 0.0
        %2115 = vmatpush1.msra.mxu0 0.0
        %2116 = vmatprep.subr.mxu0 0.0
        %2117 = vmatpush1.msra.mxu0 0.0
        %2118 = vmatprep.subr.mxu0 0.0
        %2119 = vmatpush1.msra.mxu0 0.0
        %2120 = vmatprep.subr.mxu0 %v1969
        %2121 = vmatpush1.msra.mxu0 %v1968
        %2122 = vmatprep.subr.mxu0 %v1967
        %2123 = vmatpush1.msra.mxu0 %v1966
        %2124 = vmatprep.subr.mxu0 %v1965
        %2125 = vmatpush1.msra.mxu0 %v1964
        %2126 = vmatprep.subr.mxu0 %v1963
        %2127 = vmatpush1.msra.mxu0 %v1962
        %2128 = vmatprep.subr.mxu0 0.0
        %2129 = vmatpush2.msra.mxu0 0.0
        %2130 = vmatprep.subr.mxu0 0.0
        %2131 = vmatpush2.msra.mxu0 0.0
        %2132 = vmatprep.subr.mxu0 0.0
        %2133 = vmatpush2.msra.mxu0 0.0
        %2134 = vmatprep.subr.mxu0 0.0
        %2135 = vmatpush2.msra.mxu0 0.0
        %2136 = vmatprep.subr.mxu0 0.0
        %2137 = vmatpush2.msra.mxu0 0.0
        %2138 = vmatprep.subr.mxu0 0.0
        %2139 = vmatpush2.msra.mxu0 0.0
        %2140 = vmatprep.subr.mxu0 0.0
        %2141 = vmatpush2.msra.mxu0 0.0
        %2142 = vmatprep.subr.mxu0 0.0
        %2143 = vmatpush2.msra.mxu0 0.0
        %2144 = vmatprep.subr.mxu0 0.0
        %2145 = vmatpush2.msra.mxu0 0.0
        %2146 = vmatprep.subr.mxu0 0.0
        %2147 = vmatpush2.msra.mxu0 0.0
        %2148 = vmatprep.subr.mxu0 0.0
        %2149 = vmatpush2.msra.mxu0 0.0
        %2150 = vmatprep.subr.mxu0 0.0
        %2151 = vmatpush2.msra.mxu0 0.0
        %2152 = vmatprep.subr.mxu0 0.0
        %2153 = vmatpush2.msra.mxu0 0.0
        %2154 = vmatprep.subr.mxu0 0.0
        %2155 = vmatpush2.msra.mxu0 0.0
        %2156 = vmatprep.subr.mxu0 0.0
        %2157 = vmatpush2.msra.mxu0 0.0
        %2158 = vmatprep.subr.mxu0 0.0
        %2159 = vmatpush2.msra.mxu0 0.0
        %2160 = vmatprep.mubr.f32.mxu0 0.0
        %2161 = vmatmul.mubr.f32.gmra.mxu0 %v1996
        %v2162 = vpop.f32.mrf.mxu0
        %v2163 = vadd.f32 %v2074, %v2162
        %v2164 = vpop.f32.mrf.mxu0
        %v2165 = vadd.f32 %v2076, %v2164
        %2166 = vmatprep.mubr.f32.mxu0 0.0
        %2167 = vmatmul.mubr.f32.gmra.mxu0 %v1999
        %v2168 = vpop.f32.mrf.mxu0
        %v2169 = vadd.f32 %v2080, %v2168
        %v2170 = vpop.f32.mrf.mxu0
        %v2171 = vadd.f32 %v2082, %v2170
        %2172 = vmatprep.mubr.f32.mxu0 0.0
        %2173 = vmatmul.mubr.f32.gmra.mxu0 %v2002
        %v2174 = vpop.f32.mrf.mxu0
        %v2175 = vadd.f32 %v2086, %v2174
        %v2176 = vpop.f32.mrf.mxu0
        %v2177 = vadd.f32 %v2088, %v2176
        %2178 = vmatprep.mubr.f32.mxu0 0.0
        %2179 = vmatmul.mubr.f32.gmra.mxu0 %v2005
        %v2180 = vpop.f32.mrf.mxu0
        %v2181 = vadd.f32 %v2092, %v2180
        %v2182 = vpop.f32.mrf.mxu0
        %v2183 = vadd.f32 %v2094, %v2182
        %2184 = vdwg.mxu0
        %v2185 = vmax.f32 %v2163, 0.0
        %v2186 = vmax.f32 %v2165, 0.0
        %v2187 = vmax.f32 %v2169, 0.0
        %v2188 = vmax.f32 %v2171, 0.0
        %v2189 = vmax.f32 %v2175, 0.0
        %v2190 = vmax.f32 %v2177, 0.0
        %v2191 = vmax.f32 %v2181, 0.0
        %v2192 = vmax.f32 %v2183, 0.0
        %2193 = vrot.lane.b32.xlu0 %v2185, 17
        %v2194 = vpop.permute.xlu0 %2193
        %2195 = vrot.lane.b32.xlu0 %v2187, 17
        %v2196 = vpop.permute.xlu0 %2195
        %2197 = vrot.lane.b32.xlu0 %v2189, 17
        %v2198 = vpop.permute.xlu0 %2197
        %2199 = vrot.lane.b32.xlu0 %v2191, 17
        %v2200 = vpop.permute.xlu0 %2199
        %2201 = vrot.lane.b32.xlu0 %v2186, 17
        %v2202 = vpop.permute.xlu0 %2201
        %2203 = vrot.lane.b32.xlu0 %v2188, 17
        %v2204 = vpop.permute.xlu0 %2203
        %2205 = vrot.lane.b32.xlu0 %v2190, 17
        %v2206 = vpop.permute.xlu0 %2205
        %2207 = vrot.lane.b32.xlu0 %v2192, 17
        %v2208 = vpop.permute.xlu0 %2207
        %v2209 = vsel %vm889, %v2194, %v2202
        %v2210 = vsel %vm889, %v2196, %v2204
        %v2211 = vsel %vm889, %v2198, %v2206
        %v2212 = vsel %vm889, %v2200, %v2208
        %v2213 = vsel %vm889, %v2202, %v2194
        %v2214 = vsel %vm889, %v2204, %v2196
        %v2215 = vsel %vm889, %v2206, %v2198
        %v2216 = vsel %vm889, %v2208, %v2200
        %v2217 = vld [vmem:[%s4] ss:$8 sm:$0x3]
        %v2219 = vlaneseq
        %v2220 = vshrl.u32 %v2219, 7
        %v2221 = vsub.s32 0, %v2220
        %v2222 = vrot.slane %v2217, %v2221
        %v2223 = vlaneseq
        %v2224 = vshrl.u32 %v2223, 7
        %v2225 = vsub.s32 1, %v2224
        %v2226 = vrot.slane %v2217, %v2225
        %v2229 = vmul.f32 %v2213, %v2222
        %v2230 = vmul.f32 %v2209, %v2226
        %v2231 = vmul.f32 %v2214, %v2222
        %v2232 = vmul.f32 %v2210, %v2226
        %v2233 = vmul.f32 %v2215, %v2222
        %v2234 = vmul.f32 %v2211, %v2226
        %v2235 = vmul.f32 %v2216, %v2222
        %v2236 = vmul.f32 %v2212, %v2226
        %2237 = vst [vmem:[#allocation2] sm:$0xff] %v2229
        %2238 = vst [vmem:[#allocation2 + $0x8] sm:$0xff] %v2230
        %2239 = vst [vmem:[#allocation2 + $0x10] sm:$0xff] %v2231
        %2240 = vst [vmem:[#allocation2 + $0x18] sm:$0xff] %v2232
        %2241 = vst [vmem:[#allocation2 + $0x20] sm:$0xff] %v2233
        %2242 = vst [vmem:[#allocation2 + $0x28] sm:$0xff] %v2234
        %2243 = vst [vmem:[#allocation2 + $0x30] sm:$0xff] %v2235
        %2244 = vst [vmem:[#allocation2 + $0x38] sm:$0xff] %v2236
        %2245 = vrot.lane.b32.xlu0 %v2185, 16
        %v2246 = vpop.permute.xlu0 %2245
        %2247 = vrot.lane.b32.xlu0 %v2187, 16
        %v2248 = vpop.permute.xlu0 %2247
        %2249 = vrot.lane.b32.xlu0 %v2189, 16
        %v2250 = vpop.permute.xlu0 %2249
        %2251 = vrot.lane.b32.xlu0 %v2191, 16
        %v2252 = vpop.permute.xlu0 %2251
        %2253 = vrot.lane.b32.xlu0 %v2186, 16
        %v2254 = vpop.permute.xlu0 %2253
        %2255 = vrot.lane.b32.xlu0 %v2188, 16
        %v2256 = vpop.permute.xlu0 %2255
        %2257 = vrot.lane.b32.xlu0 %v2190, 16
        %v2258 = vpop.permute.xlu0 %2257
        %2259 = vrot.lane.b32.xlu0 %v2192, 16
        %v2260 = vpop.permute.xlu0 %2259
        %v2261 = vsel %vm922, %v2246, %v2254
        %v2262 = vsel %vm922, %v2248, %v2256
        %v2263 = vsel %vm922, %v2250, %v2258
        %v2264 = vsel %vm922, %v2252, %v2260
        %v2265 = vsel %vm922, %v2254, %v2246
        %v2266 = vsel %vm922, %v2256, %v2248
        %v2267 = vsel %vm922, %v2258, %v2250
        %v2268 = vsel %vm922, %v2260, %v2252
        %v2269 = vld [vmem:[%s925] ss:$8 sm:$0x3]
        %v2271 = vlaneseq
        %v2272 = vshrl.u32 %v2271, 7
        %v2273 = vsub.s32 0, %v2272
        %v2274 = vrot.slane %v2269, %v2273
        %v2275 = vlaneseq
        %v2276 = vshrl.u32 %v2275, 7
        %v2277 = vsub.s32 1, %v2276
        %v2278 = vrot.slane %v2269, %v2277
        %v2281 = vmul.f32 %v2265, %v2274
        %v2282 = vmul.f32 %v2261, %v2278
        %v2283 = vmul.f32 %v2266, %v2274
        %v2284 = vmul.f32 %v2262, %v2278
        %v2285 = vmul.f32 %v2267, %v2274
        %v2286 = vmul.f32 %v2263, %v2278
        %v2287 = vmul.f32 %v2268, %v2274
        %v2288 = vmul.f32 %v2264, %v2278
        %2289 = vst [vmem:[#allocation2 + $0x40] sm:$0xff] %v2281
        %2290 = vst [vmem:[#allocation2 + $0x48] sm:$0xff] %v2282
        %2291 = vst [vmem:[#allocation2 + $0x50] sm:$0xff] %v2283
        %2292 = vst [vmem:[#allocation2 + $0x58] sm:$0xff] %v2284
        %2293 = vst [vmem:[#allocation2 + $0x60] sm:$0xff] %v2285
        %2294 = vst [vmem:[#allocation2 + $0x68] sm:$0xff] %v2286
        %2295 = vst [vmem:[#allocation2 + $0x70] sm:$0xff] %v2287
        %2296 = vst [vmem:[#allocation2 + $0x78] sm:$0xff] %v2288
        %2297 = vrot.lane.b32.xlu0 %v2185, 15
        %v2298 = vpop.permute.xlu0 %2297
        %2299 = vrot.lane.b32.xlu0 %v2187, 15
        %v2300 = vpop.permute.xlu0 %2299
        %2301 = vrot.lane.b32.xlu0 %v2189, 15
        %v2302 = vpop.permute.xlu0 %2301
        %2303 = vrot.lane.b32.xlu0 %v2191, 15
        %v2304 = vpop.permute.xlu0 %2303
        %2305 = vrot.lane.b32.xlu0 %v2186, 15
        %v2306 = vpop.permute.xlu0 %2305
        %2307 = vrot.lane.b32.xlu0 %v2188, 15
        %v2308 = vpop.permute.xlu0 %2307
        %2309 = vrot.lane.b32.xlu0 %v2190, 15
        %v2310 = vpop.permute.xlu0 %2309
        %2311 = vrot.lane.b32.xlu0 %v2192, 15
        %v2312 = vpop.permute.xlu0 %2311
        %v2313 = vsel %vm956, %v2298, %v2306
        %v2314 = vsel %vm956, %v2300, %v2308
        %v2315 = vsel %vm956, %v2302, %v2310
        %v2316 = vsel %vm956, %v2304, %v2312
        %v2317 = vsel %vm956, %v2306, %v2298
        %v2318 = vsel %vm956, %v2308, %v2300
        %v2319 = vsel %vm956, %v2310, %v2302
        %v2320 = vsel %vm956, %v2312, %v2304
        %v2321 = vld [vmem:[%s959] ss:$8 sm:$0x3]
        %v2323 = vlaneseq
        %v2324 = vshrl.u32 %v2323, 7
        %v2325 = vsub.s32 0, %v2324
        %v2326 = vrot.slane %v2321, %v2325
        %v2327 = vlaneseq
        %v2328 = vshrl.u32 %v2327, 7
        %v2329 = vsub.s32 1, %v2328
        %v2330 = vrot.slane %v2321, %v2329
        %v2333 = vmul.f32 %v2317, %v2326
        %v2334 = vmul.f32 %v2313, %v2330
        %v2335 = vmul.f32 %v2318, %v2326
        %v2336 = vmul.f32 %v2314, %v2330
        %v2337 = vmul.f32 %v2319, %v2326
        %v2338 = vmul.f32 %v2315, %v2330
        %v2339 = vmul.f32 %v2320, %v2326
        %v2340 = vmul.f32 %v2316, %v2330
        %2341 = vst [vmem:[#allocation2 + $0x80] sm:$0xff] %v2333
        %2342 = vst [vmem:[#allocation2 + $0x88] sm:$0xff] %v2334
        %2343 = vst [vmem:[#allocation2 + $0x90] sm:$0xff] %v2335
        %2344 = vst [vmem:[#allocation2 + $0x98] sm:$0xff] %v2336
        %2345 = vst [vmem:[#allocation2 + $0xa0] sm:$0xff] %v2337
        %2346 = vst [vmem:[#allocation2 + $0xa8] sm:$0xff] %v2338
        %2347 = vst [vmem:[#allocation2 + $0xb0] sm:$0xff] %v2339
        %2348 = vst [vmem:[#allocation2 + $0xb8] sm:$0xff] %v2340
        %2349 = vrot.lane.b32.xlu0 %v2185, 1
        %v2350 = vpop.permute.xlu0 %2349
        %2351 = vrot.lane.b32.xlu0 %v2187, 1
        %v2352 = vpop.permute.xlu0 %2351
        %2353 = vrot.lane.b32.xlu0 %v2189, 1
        %v2354 = vpop.permute.xlu0 %2353
        %2355 = vrot.lane.b32.xlu0 %v2191, 1
        %v2356 = vpop.permute.xlu0 %2355
        %2357 = vrot.lane.b32.xlu0 %v2186, 1
        %v2358 = vpop.permute.xlu0 %2357
        %2359 = vrot.lane.b32.xlu0 %v2188, 1
        %v2360 = vpop.permute.xlu0 %2359
        %2361 = vrot.lane.b32.xlu0 %v2190, 1
        %v2362 = vpop.permute.xlu0 %2361
        %2363 = vrot.lane.b32.xlu0 %v2192, 1
        %v2364 = vpop.permute.xlu0 %2363
        %v2365 = vsel %vm990, %v2350, %v2358
        %v2366 = vsel %vm990, %v2352, %v2360
        %v2367 = vsel %vm990, %v2354, %v2362
        %v2368 = vsel %vm990, %v2356, %v2364
        %v2369 = vsel %vm990, %v2358, %v2350
        %v2370 = vsel %vm990, %v2360, %v2352
        %v2371 = vsel %vm990, %v2362, %v2354
        %v2372 = vsel %vm990, %v2364, %v2356
        %v2373 = vld [vmem:[%s993] ss:$8 sm:$0x3]
        %v2375 = vlaneseq
        %v2376 = vshrl.u32 %v2375, 7
        %v2377 = vsub.s32 0, %v2376
        %v2378 = vrot.slane %v2373, %v2377
        %v2379 = vlaneseq
        %v2380 = vshrl.u32 %v2379, 7
        %v2381 = vsub.s32 1, %v2380
        %v2382 = vrot.slane %v2373, %v2381
        %v2385 = vmul.f32 %v2369, %v2378
        %v2386 = vmul.f32 %v2365, %v2382
        %v2387 = vmul.f32 %v2370, %v2378
        %v2388 = vmul.f32 %v2366, %v2382
        %v2389 = vmul.f32 %v2371, %v2378
        %v2390 = vmul.f32 %v2367, %v2382
        %v2391 = vmul.f32 %v2372, %v2378
        %v2392 = vmul.f32 %v2368, %v2382
        %2393 = vst [vmem:[#allocation2 + $0xc0] sm:$0xff] %v2385
        %2394 = vst [vmem:[#allocation2 + $0xc8] sm:$0xff] %v2386
        %2395 = vst [vmem:[#allocation2 + $0xd0] sm:$0xff] %v2387
        %2396 = vst [vmem:[#allocation2 + $0xd8] sm:$0xff] %v2388
        %2397 = vst [vmem:[#allocation2 + $0xe0] sm:$0xff] %v2389
        %2398 = vst [vmem:[#allocation2 + $0xe8] sm:$0xff] %v2390
        %2399 = vst [vmem:[#allocation2 + $0xf0] sm:$0xff] %v2391
        %2400 = vst [vmem:[#allocation2 + $0xf8] sm:$0xff] %v2392
        %2401 = vst [vmem:[#allocation2 + $0x100] sm:$0xff] %v2185
        %2402 = vst [vmem:[#allocation2 + $0x108] sm:$0xff] %v2186
        %2403 = vst [vmem:[#allocation2 + $0x110] sm:$0xff] %v2187
        %2404 = vst [vmem:[#allocation2 + $0x118] sm:$0xff] %v2188
        %2405 = vst [vmem:[#allocation2 + $0x120] sm:$0xff] %v2189
        %2406 = vst [vmem:[#allocation2 + $0x128] sm:$0xff] %v2190
        %2407 = vst [vmem:[#allocation2 + $0x130] sm:$0xff] %v2191
        %2408 = vst [vmem:[#allocation2 + $0x138] sm:$0xff] %v2192
        %2409 = vrot.lane.b32.xlu0 %v2185, 127
        %v2410 = vpop.permute.xlu0 %2409
        %2411 = vrot.lane.b32.xlu0 %v2187, 127
        %v2412 = vpop.permute.xlu0 %2411
        %2413 = vrot.lane.b32.xlu0 %v2189, 127
        %v2414 = vpop.permute.xlu0 %2413
        %2415 = vrot.lane.b32.xlu0 %v2191, 127
        %v2416 = vpop.permute.xlu0 %2415
        %2417 = vrot.lane.b32.xlu0 %v2186, 127
        %v2418 = vpop.permute.xlu0 %2417
        %2419 = vrot.lane.b32.xlu0 %v2188, 127
        %v2420 = vpop.permute.xlu0 %2419
        %2421 = vrot.lane.b32.xlu0 %v2190, 127
        %v2422 = vpop.permute.xlu0 %2421
        %2423 = vrot.lane.b32.xlu0 %v2192, 127
        %v2424 = vpop.permute.xlu0 %2423
        %v2425 = vsel %vm1032, %v2410, %v2418
        %v2426 = vsel %vm1032, %v2412, %v2420
        %v2427 = vsel %vm1032, %v2414, %v2422
        %v2428 = vsel %vm1032, %v2416, %v2424
        %v2429 = vsel %vm1032, %v2418, %v2410
        %v2430 = vsel %vm1032, %v2420, %v2412
        %v2431 = vsel %vm1032, %v2422, %v2414
        %v2432 = vsel %vm1032, %v2424, %v2416
        %v2433 = vld [vmem:[%s1035] ss:$8 sm:$0x3]
        %v2435 = vlaneseq
        %v2436 = vshrl.u32 %v2435, 7
        %v2437 = vsub.s32 0, %v2436
        %v2438 = vrot.slane %v2433, %v2437
        %v2439 = vlaneseq
        %v2440 = vshrl.u32 %v2439, 7
        %v2441 = vsub.s32 1, %v2440
        %v2442 = vrot.slane %v2433, %v2441
        %v2445 = vmul.f32 %v2425, %v2438
        %v2446 = vmul.f32 %v2429, %v2442
        %v2447 = vmul.f32 %v2426, %v2438
        %v2448 = vmul.f32 %v2430, %v2442
        %v2449 = vmul.f32 %v2427, %v2438
        %v2450 = vmul.f32 %v2431, %v2442
        %v2451 = vmul.f32 %v2428, %v2438
        %v2452 = vmul.f32 %v2432, %v2442
        %2453 = vst [vmem:[#allocation2 + $0x140] sm:$0xff] %v2445
        %2454 = vst [vmem:[#allocation2 + $0x148] sm:$0xff] %v2446
        %2455 = vst [vmem:[#allocation2 + $0x150] sm:$0xff] %v2447
        %2456 = vst [vmem:[#allocation2 + $0x158] sm:$0xff] %v2448
        %2457 = vst [vmem:[#allocation2 + $0x160] sm:$0xff] %v2449
        %2458 = vst [vmem:[#allocation2 + $0x168] sm:$0xff] %v2450
        %2459 = vst [vmem:[#allocation2 + $0x170] sm:$0xff] %v2451
        %2460 = vst [vmem:[#allocation2 + $0x178] sm:$0xff] %v2452
        %2461 = vrot.lane.b32.xlu0 %v2185, 113
        %v2462 = vpop.permute.xlu0 %2461
        %2463 = vrot.lane.b32.xlu0 %v2187, 113
        %v2464 = vpop.permute.xlu0 %2463
        %2465 = vrot.lane.b32.xlu0 %v2189, 113
        %v2466 = vpop.permute.xlu0 %2465
        %2467 = vrot.lane.b32.xlu0 %v2191, 113
        %v2468 = vpop.permute.xlu0 %2467
        %2469 = vrot.lane.b32.xlu0 %v2186, 113
        %v2470 = vpop.permute.xlu0 %2469
        %2471 = vrot.lane.b32.xlu0 %v2188, 113
        %v2472 = vpop.permute.xlu0 %2471
        %2473 = vrot.lane.b32.xlu0 %v2190, 113
        %v2474 = vpop.permute.xlu0 %2473
        %2475 = vrot.lane.b32.xlu0 %v2192, 113
        %v2476 = vpop.permute.xlu0 %2475
        %v2477 = vsel %vm1066, %v2462, %v2470
        %v2478 = vsel %vm1066, %v2464, %v2472
        %v2479 = vsel %vm1066, %v2466, %v2474
        %v2480 = vsel %vm1066, %v2468, %v2476
        %v2481 = vsel %vm1066, %v2470, %v2462
        %v2482 = vsel %vm1066, %v2472, %v2464
        %v2483 = vsel %vm1066, %v2474, %v2466
        %v2484 = vsel %vm1066, %v2476, %v2468
        %v2485 = vld [vmem:[%s1069] ss:$8 sm:$0x3]
        %v2487 = vlaneseq
        %v2488 = vshrl.u32 %v2487, 7
        %v2489 = vsub.s32 0, %v2488
        %v2490 = vrot.slane %v2485, %v2489
        %v2491 = vlaneseq
        %v2492 = vshrl.u32 %v2491, 7
        %v2493 = vsub.s32 1, %v2492
        %v2494 = vrot.slane %v2485, %v2493
        %v2497 = vmul.f32 %v2477, %v2490
        %v2498 = vmul.f32 %v2481, %v2494
        %v2499 = vmul.f32 %v2478, %v2490
        %v2500 = vmul.f32 %v2482, %v2494
        %v2501 = vmul.f32 %v2479, %v2490
        %v2502 = vmul.f32 %v2483, %v2494
        %v2503 = vmul.f32 %v2480, %v2490
        %v2504 = vmul.f32 %v2484, %v2494
        %2505 = vst [vmem:[#allocation2 + $0x180] sm:$0xff] %v2497
        %2506 = vst [vmem:[#allocation2 + $0x188] sm:$0xff] %v2498
        %2507 = vst [vmem:[#allocation2 + $0x190] sm:$0xff] %v2499
        %2508 = vst [vmem:[#allocation2 + $0x198] sm:$0xff] %v2500
        %2509 = vst [vmem:[#allocation2 + $0x1a0] sm:$0xff] %v2501
        %2510 = vst [vmem:[#allocation2 + $0x1a8] sm:$0xff] %v2502
        %2511 = vst [vmem:[#allocation2 + $0x1b0] sm:$0xff] %v2503
        %2512 = vst [vmem:[#allocation2 + $0x1b8] sm:$0xff] %v2504
        %2513 = vrot.lane.b32.xlu0 %v2185, 112
        %v2514 = vpop.permute.xlu0 %2513
        %2515 = vrot.lane.b32.xlu0 %v2187, 112
        %v2516 = vpop.permute.xlu0 %2515
        %2517 = vrot.lane.b32.xlu0 %v2189, 112
        %v2518 = vpop.permute.xlu0 %2517
        %2519 = vrot.lane.b32.xlu0 %v2191, 112
        %v2520 = vpop.permute.xlu0 %2519
        %2521 = vrot.lane.b32.xlu0 %v2186, 112
        %v2522 = vpop.permute.xlu0 %2521
        %2523 = vrot.lane.b32.xlu0 %v2188, 112
        %v2524 = vpop.permute.xlu0 %2523
        %2525 = vrot.lane.b32.xlu0 %v2190, 112
        %v2526 = vpop.permute.xlu0 %2525
        %2527 = vrot.lane.b32.xlu0 %v2192, 112
        %v2528 = vpop.permute.xlu0 %2527
        %v2529 = vsel %vm1100, %v2514, %v2522
        %v2530 = vsel %vm1100, %v2516, %v2524
        %v2531 = vsel %vm1100, %v2518, %v2526
        %v2532 = vsel %vm1100, %v2520, %v2528
        %v2533 = vsel %vm1100, %v2522, %v2514
        %v2534 = vsel %vm1100, %v2524, %v2516
        %v2535 = vsel %vm1100, %v2526, %v2518
        %v2536 = vsel %vm1100, %v2528, %v2520
        %v2537 = vld [vmem:[%s1103] ss:$8 sm:$0x3]
        %v2539 = vlaneseq
        %v2540 = vshrl.u32 %v2539, 7
        %v2541 = vsub.s32 0, %v2540
        %v2542 = vrot.slane %v2537, %v2541
        %v2543 = vlaneseq
        %v2544 = vshrl.u32 %v2543, 7
        %v2545 = vsub.s32 1, %v2544
        %v2546 = vrot.slane %v2537, %v2545
        %v2549 = vmul.f32 %v2529, %v2542
        %v2550 = vmul.f32 %v2533, %v2546
        %v2551 = vmul.f32 %v2530, %v2542
        %v2552 = vmul.f32 %v2534, %v2546
        %v2553 = vmul.f32 %v2531, %v2542
        %v2554 = vmul.f32 %v2535, %v2546
        %v2555 = vmul.f32 %v2532, %v2542
        %v2556 = vmul.f32 %v2536, %v2546
        %2557 = vst [vmem:[#allocation2 + $0x1c0] sm:$0xff] %v2549
        %2558 = vst [vmem:[#allocation2 + $0x1c8] sm:$0xff] %v2550
        %2559 = vst [vmem:[#allocation2 + $0x1d0] sm:$0xff] %v2551
        %2560 = vst [vmem:[#allocation2 + $0x1d8] sm:$0xff] %v2552
        %2561 = vst [vmem:[#allocation2 + $0x1e0] sm:$0xff] %v2553
        %2562 = vst [vmem:[#allocation2 + $0x1e8] sm:$0xff] %v2554
        %2563 = vst [vmem:[#allocation2 + $0x1f0] sm:$0xff] %v2555
        %2564 = vst [vmem:[#allocation2 + $0x1f8] sm:$0xff] %v2556
        %2565 = vrot.lane.b32.xlu0 %v2185, 111
        %v2566 = vpop.permute.xlu0 %2565
        %2567 = vrot.lane.b32.xlu0 %v2187, 111
        %v2568 = vpop.permute.xlu0 %2567
        %2569 = vrot.lane.b32.xlu0 %v2189, 111
        %v2570 = vpop.permute.xlu0 %2569
        %2571 = vrot.lane.b32.xlu0 %v2191, 111
        %v2572 = vpop.permute.xlu0 %2571
        %2573 = vrot.lane.b32.xlu0 %v2186, 111
        %v2574 = vpop.permute.xlu0 %2573
        %2575 = vrot.lane.b32.xlu0 %v2188, 111
        %v2576 = vpop.permute.xlu0 %2575
        %2577 = vrot.lane.b32.xlu0 %v2190, 111
        %v2578 = vpop.permute.xlu0 %2577
        %2579 = vrot.lane.b32.xlu0 %v2192, 111
        %v2580 = vpop.permute.xlu0 %2579
        %v2581 = vsel %vm1134, %v2566, %v2574
        %v2582 = vsel %vm1134, %v2568, %v2576
        %v2583 = vsel %vm1134, %v2570, %v2578
        %v2584 = vsel %vm1134, %v2572, %v2580
        %v2585 = vsel %vm1134, %v2574, %v2566
        %v2586 = vsel %vm1134, %v2576, %v2568
        %v2587 = vsel %vm1134, %v2578, %v2570
        %v2588 = vsel %vm1134, %v2580, %v2572
        %v2589 = vld [vmem:[%s1137] ss:$8 sm:$0x3]
        %v2591 = vlaneseq
        %v2592 = vshrl.u32 %v2591, 7
        %v2593 = vsub.s32 0, %v2592
        %v2594 = vrot.slane %v2589, %v2593
        %v2595 = vlaneseq
        %v2596 = vshrl.u32 %v2595, 7
        %v2597 = vsub.s32 1, %v2596
        %v2598 = vrot.slane %v2589, %v2597
        %v2601 = vmul.f32 %v2581, %v2594
        %v2602 = vmul.f32 %v2585, %v2598
        %v2603 = vmul.f32 %v2582, %v2594
        %v2604 = vmul.f32 %v2586, %v2598
        %v2605 = vmul.f32 %v2583, %v2594
        %v2606 = vmul.f32 %v2587, %v2598
        %v2607 = vmul.f32 %v2584, %v2594
        %v2608 = vmul.f32 %v2588, %v2598
        %2609 = vst [vmem:[#allocation2 + $0x200] sm:$0xff] %v2601
        %2610 = vst [vmem:[#allocation2 + $0x208] sm:$0xff] %v2602
        %2611 = vst [vmem:[#allocation2 + $0x210] sm:$0xff] %v2603
        %2612 = vst [vmem:[#allocation2 + $0x218] sm:$0xff] %v2604
        %2613 = vst [vmem:[#allocation2 + $0x220] sm:$0xff] %v2605
        %2614 = vst [vmem:[#allocation2 + $0x228] sm:$0xff] %v2606
        %2615 = vst [vmem:[#allocation2 + $0x230] sm:$0xff] %v2607
        %2616 = vst [vmem:[#allocation2 + $0x238] sm:$0xff] %v2608
        %s2617 = scalar_lea.vmem %s5, 192
        %v2618 = vld [vmem:[%s2617] sm:$0xff]
        %v2619 = vld [vmem:[%s2617 + $0x8] sm:$0xff]
        %v2620 = vld [vmem:[%s2617 + $0x10] sm:$0xff]
        %v2621 = vld [vmem:[%s2617 + $0x18] sm:$0xff]
        %v2622 = vld [vmem:[%s2617 + $0x20] sm:$0xff]
        %v2623 = vld [vmem:[%s2617 + $0x28] sm:$0xff]
        %v2624 = vld [vmem:[%s2617 + $0x30] sm:$0xff]
        %v2625 = vld [vmem:[%s2617 + $0x38] sm:$0xff]
        %v2626 = vld [vmem:[%s2617 + $0x40] sm:$0xff]
        %v2627 = vld [vmem:[%s2617 + $0x48] sm:$0xff]
        %v2628 = vld [vmem:[%s2617 + $0x50] sm:$0xff]
        %v2629 = vld [vmem:[%s2617 + $0x58] sm:$0xff]
        %v2630 = vld [vmem:[#allocation2] sm:$0xff]
        %v2631 = vld [vmem:[#allocation2 + $0x8] sm:$0xff]
        %v2632 = vld [vmem:[#allocation2 + $0x10] sm:$0xff]
        %v2633 = vld [vmem:[#allocation2 + $0x18] sm:$0xff]
        %v2634 = vld [vmem:[#allocation2 + $0x20] sm:$0xff]
        %v2635 = vld [vmem:[#allocation2 + $0x28] sm:$0xff]
        %v2636 = vld [vmem:[#allocation2 + $0x30] sm:$0xff]
        %v2637 = vld [vmem:[#allocation2 + $0x38] sm:$0xff]
        %v2638 = vld [vmem:[#allocation2 + $0x40] sm:$0xff]
        %v2639 = vld [vmem:[#allocation2 + $0x48] sm:$0xff]
        %v2640 = vld [vmem:[#allocation2 + $0x50] sm:$0xff]
        %v2641 = vld [vmem:[#allocation2 + $0x58] sm:$0xff]
        %v2642 = vld [vmem:[#allocation2 + $0x60] sm:$0xff]
        %v2643 = vld [vmem:[#allocation2 + $0x68] sm:$0xff]
        %v2644 = vld [vmem:[#allocation2 + $0x70] sm:$0xff]
        %v2645 = vld [vmem:[#allocation2 + $0x78] sm:$0xff]
        %v2646 = vld [vmem:[#allocation2 + $0x80] sm:$0xff]
        %v2647 = vld [vmem:[#allocation2 + $0x88] sm:$0xff]
        %v2648 = vld [vmem:[#allocation2 + $0x90] sm:$0xff]
        %v2649 = vld [vmem:[#allocation2 + $0x98] sm:$0xff]
        %v2650 = vld [vmem:[#allocation2 + $0xa0] sm:$0xff]
        %v2651 = vld [vmem:[#allocation2 + $0xa8] sm:$0xff]
        %v2652 = vld [vmem:[#allocation2 + $0xb0] sm:$0xff]
        %v2653 = vld [vmem:[#allocation2 + $0xb8] sm:$0xff]
        %v2654 = vld [vmem:[#allocation2 + $0xc0] sm:$0xff]
        %v2655 = vld [vmem:[#allocation2 + $0xc8] sm:$0xff]
        %v2656 = vld [vmem:[#allocation2 + $0xd0] sm:$0xff]
        %v2657 = vld [vmem:[#allocation2 + $0xd8] sm:$0xff]
        %v2658 = vld [vmem:[#allocation2 + $0xe0] sm:$0xff]
        %v2659 = vld [vmem:[#allocation2 + $0xe8] sm:$0xff]
        %v2660 = vld [vmem:[#allocation2 + $0xf0] sm:$0xff]
        %v2661 = vld [vmem:[#allocation2 + $0xf8] sm:$0xff]
        %v2662 = vld [vmem:[#allocation2 + $0x100] sm:$0xff]
        %v2663 = vld [vmem:[#allocation2 + $0x108] sm:$0xff]
        %v2664 = vld [vmem:[#allocation2 + $0x110] sm:$0xff]
        %v2665 = vld [vmem:[#allocation2 + $0x118] sm:$0xff]
        %v2666 = vld [vmem:[#allocation2 + $0x120] sm:$0xff]
        %v2667 = vld [vmem:[#allocation2 + $0x128] sm:$0xff]
        %v2668 = vld [vmem:[#allocation2 + $0x130] sm:$0xff]
        %v2669 = vld [vmem:[#allocation2 + $0x138] sm:$0xff]
        %v2670 = vld [vmem:[#allocation2 + $0x140] sm:$0xff]
        %v2671 = vld [vmem:[#allocation2 + $0x148] sm:$0xff]
        %v2672 = vld [vmem:[#allocation2 + $0x150] sm:$0xff]
        %v2673 = vld [vmem:[#allocation2 + $0x158] sm:$0xff]
        %v2674 = vld [vmem:[#allocation2 + $0x160] sm:$0xff]
        %v2675 = vld [vmem:[#allocation2 + $0x168] sm:$0xff]
        %v2676 = vld [vmem:[#allocation2 + $0x170] sm:$0xff]
        %v2677 = vld [vmem:[#allocation2 + $0x178] sm:$0xff]
        %v2678 = vld [vmem:[#allocation2 + $0x180] sm:$0xff]
        %v2679 = vld [vmem:[#allocation2 + $0x188] sm:$0xff]
        %v2680 = vld [vmem:[#allocation2 + $0x190] sm:$0xff]
        %v2681 = vld [vmem:[#allocation2 + $0x198] sm:$0xff]
        %v2682 = vld [vmem:[#allocation2 + $0x1a0] sm:$0xff]
        %v2683 = vld [vmem:[#allocation2 + $0x1a8] sm:$0xff]
        %v2684 = vld [vmem:[#allocation2 + $0x1b0] sm:$0xff]
        %v2685 = vld [vmem:[#allocation2 + $0x1b8] sm:$0xff]
        %v2686 = vld [vmem:[#allocation2 + $0x1c0] sm:$0xff]
        %v2687 = vld [vmem:[#allocation2 + $0x1c8] sm:$0xff]
        %v2688 = vld [vmem:[#allocation2 + $0x1d0] sm:$0xff]
        %v2689 = vld [vmem:[#allocation2 + $0x1d8] sm:$0xff]
        %v2690 = vld [vmem:[#allocation2 + $0x1e0] sm:$0xff]
        %v2691 = vld [vmem:[#allocation2 + $0x1e8] sm:$0xff]
        %v2692 = vld [vmem:[#allocation2 + $0x1f0] sm:$0xff]
        %v2693 = vld [vmem:[#allocation2 + $0x1f8] sm:$0xff]
        %v2694 = vld [vmem:[#allocation2 + $0x200] sm:$0xff]
        %v2695 = vld [vmem:[#allocation2 + $0x208] sm:$0xff]
        %v2696 = vld [vmem:[#allocation2 + $0x210] sm:$0xff]
        %v2697 = vld [vmem:[#allocation2 + $0x218] sm:$0xff]
        %v2698 = vld [vmem:[#allocation2 + $0x220] sm:$0xff]
        %v2699 = vld [vmem:[#allocation2 + $0x228] sm:$0xff]
        %v2700 = vld [vmem:[#allocation2 + $0x230] sm:$0xff]
        %v2701 = vld [vmem:[#allocation2 + $0x238] sm:$0xff]
        %s2702 = scalar_lea.vmem %s6, 64
        %v2703 = vld [vmem:[%s2702] sm:$0xff]
        %v2704 = vld [vmem:[%s2702 + $0x8] sm:$0xff]
        %v2705 = vld [vmem:[%s2702 + $0x10] sm:$0xff]
        %v2706 = vld [vmem:[%s2702 + $0x18] sm:$0xff]
        %2708 = vset.pattern.permute.xlu0 0
        %2709 = vperm.xlu0 %2708, %v2703
        %v2710 = vpop.permute.xlu0 %2709
        %2713 = vset.pattern.permute.xlu0 0
        %2714 = vperm.xlu0 %2713, %v2704
        %v2715 = vpop.permute.xlu0 %2714
        %2718 = vset.pattern.permute.xlu0 0
        %2719 = vperm.xlu0 %2718, %v2705
        %v2720 = vpop.permute.xlu0 %2719
        %2723 = vset.pattern.permute.xlu0 0
        %2724 = vperm.xlu0 %2723, %v2706
        %v2725 = vpop.permute.xlu0 %2724
        %v2728 = vsel %vm1270, %v2620, 0
        %v2731 = vsel %vm1270, %v2623, 0
        %v2734 = vsel %vm1270, %v2626, 0
        %v2737 = vsel %vm1270, %v2629, 0
        %2739 = vmatprep.subr.mxu0 %v2661
        %2740 = vmatpush1.msra.mxu0 %v2660
        %2741 = vmatprep.subr.mxu0 %v2659
        %2742 = vmatpush1.msra.mxu0 %v2658
        %2743 = vmatprep.subr.mxu0 %v2657
        %2744 = vmatpush1.msra.mxu0 %v2656
        %2745 = vmatprep.subr.mxu0 %v2655
        %2746 = vmatpush1.msra.mxu0 %v2654
        %2747 = vmatprep.subr.mxu0 %v2653
        %2748 = vmatpush1.msra.mxu0 %v2652
        %2749 = vmatprep.subr.mxu0 %v2651
        %2750 = vmatpush1.msra.mxu0 %v2650
        %2751 = vmatprep.subr.mxu0 %v2649
        %2752 = vmatpush1.msra.mxu0 %v2648
        %2753 = vmatprep.subr.mxu0 %v2647
        %2754 = vmatpush1.msra.mxu0 %v2646
        %2755 = vmatprep.subr.mxu0 %v2645
        %2756 = vmatpush1.msra.mxu0 %v2644
        %2757 = vmatprep.subr.mxu0 %v2643
        %2758 = vmatpush1.msra.mxu0 %v2642
        %2759 = vmatprep.subr.mxu0 %v2641
        %2760 = vmatpush1.msra.mxu0 %v2640
        %2761 = vmatprep.subr.mxu0 %v2639
        %2762 = vmatpush1.msra.mxu0 %v2638
        %2763 = vmatprep.subr.mxu0 %v2637
        %2764 = vmatpush1.msra.mxu0 %v2636
        %2765 = vmatprep.subr.mxu0 %v2635
        %2766 = vmatpush1.msra.mxu0 %v2634
        %2767 = vmatprep.subr.mxu0 %v2633
        %2768 = vmatpush1.msra.mxu0 %v2632
        %2769 = vmatprep.subr.mxu0 %v2631
        %2770 = vmatpush1.msra.mxu0 %v2630
        %2771 = vmatprep.subr.mxu0 %v2693
        %2772 = vmatpush2.msra.mxu0 %v2692
        %2773 = vmatprep.subr.mxu0 %v2691
        %2774 = vmatpush2.msra.mxu0 %v2690
        %2775 = vmatprep.subr.mxu0 %v2689
        %2776 = vmatpush2.msra.mxu0 %v2688
        %2777 = vmatprep.subr.mxu0 %v2687
        %2778 = vmatpush2.msra.mxu0 %v2686
        %2779 = vmatprep.subr.mxu0 %v2685
        %2780 = vmatpush2.msra.mxu0 %v2684
        %2781 = vmatprep.subr.mxu0 %v2683
        %2782 = vmatpush2.msra.mxu0 %v2682
        %2783 = vmatprep.subr.mxu0 %v2681
        %2784 = vmatpush2.msra.mxu0 %v2680
        %2785 = vmatprep.subr.mxu0 %v2679
        %2786 = vmatpush2.msra.mxu0 %v2678
        %2787 = vmatprep.subr.mxu0 %v2677
        %2788 = vmatpush2.msra.mxu0 %v2676
        %2789 = vmatprep.subr.mxu0 %v2675
        %2790 = vmatpush2.msra.mxu0 %v2674
        %2791 = vmatprep.subr.mxu0 %v2673
        %2792 = vmatpush2.msra.mxu0 %v2672
        %2793 = vmatprep.subr.mxu0 %v2671
        %2794 = vmatpush2.msra.mxu0 %v2670
        %2795 = vmatprep.subr.mxu0 %v2669
        %2796 = vmatpush2.msra.mxu0 %v2668
        %2797 = vmatprep.subr.mxu0 %v2667
        %2798 = vmatpush2.msra.mxu0 %v2666
        %2799 = vmatprep.subr.mxu0 %v2665
        %2800 = vmatpush2.msra.mxu0 %v2664
        %2801 = vmatprep.subr.mxu0 %v2663
        %2802 = vmatpush2.msra.mxu0 %v2662
        %2803 = vmatprep.mubr.f32.mxu0 %v2619
        %2804 = vmatmul.mubr.f32.gmra.mxu0 %v2618
        %v2805 = vpop.f32.mrf.mxu0
        %v2806 = vadd.f32 %v2710, %v2805
        %v2807 = vpop.f32.mrf.mxu0
        %v2808 = vadd.f32 %v2710, %v2807
        %2809 = vmatprep.mubr.f32.mxu0 %v2622
        %2810 = vmatmul.mubr.f32.gmra.mxu0 %v2621
        %v2811 = vpop.f32.mrf.mxu0
        %v2812 = vadd.f32 %v2715, %v2811
        %v2813 = vpop.f32.mrf.mxu0
        %v2814 = vadd.f32 %v2715, %v2813
        %2815 = vmatprep.mubr.f32.mxu0 %v2625
        %2816 = vmatmul.mubr.f32.gmra.mxu0 %v2624
        %v2817 = vpop.f32.mrf.mxu0
        %v2818 = vadd.f32 %v2720, %v2817
        %v2819 = vpop.f32.mrf.mxu0
        %v2820 = vadd.f32 %v2720, %v2819
        %2821 = vmatprep.mubr.f32.mxu0 %v2628
        %2822 = vmatmul.mubr.f32.gmra.mxu0 %v2627
        %v2823 = vpop.f32.mrf.mxu0
        %v2824 = vadd.f32 %v2725, %v2823
        %v2825 = vpop.f32.mrf.mxu0
        %v2826 = vadd.f32 %v2725, %v2825
        %2827 = vdwg.mxu0
        %2828 = vmatprep.subr.mxu0 0.0
        %2829 = vmatpush1.msra.mxu0 0.0
        %2830 = vmatprep.subr.mxu0 0.0
        %2831 = vmatpush1.msra.mxu0 0.0
        %2832 = vmatprep.subr.mxu0 0.0
        %2833 = vmatpush1.msra.mxu0 0.0
        %2834 = vmatprep.subr.mxu0 0.0
        %2835 = vmatpush1.msra.mxu0 0.0
        %2836 = vmatprep.subr.mxu0 0.0
        %2837 = vmatpush1.msra.mxu0 0.0
        %2838 = vmatprep.subr.mxu0 0.0
        %2839 = vmatpush1.msra.mxu0 0.0
        %2840 = vmatprep.subr.mxu0 0.0
        %2841 = vmatpush1.msra.mxu0 0.0
        %2842 = vmatprep.subr.mxu0 0.0
        %2843 = vmatpush1.msra.mxu0 0.0
        %2844 = vmatprep.subr.mxu0 0.0
        %2845 = vmatpush1.msra.mxu0 0.0
        %2846 = vmatprep.subr.mxu0 0.0
        %2847 = vmatpush1.msra.mxu0 0.0
        %2848 = vmatprep.subr.mxu0 0.0
        %2849 = vmatpush1.msra.mxu0 0.0
        %2850 = vmatprep.subr.mxu0 0.0
        %2851 = vmatpush1.msra.mxu0 0.0
        %2852 = vmatprep.subr.mxu0 %v2701
        %2853 = vmatpush1.msra.mxu0 %v2700
        %2854 = vmatprep.subr.mxu0 %v2699
        %2855 = vmatpush1.msra.mxu0 %v2698
        %2856 = vmatprep.subr.mxu0 %v2697
        %2857 = vmatpush1.msra.mxu0 %v2696
        %2858 = vmatprep.subr.mxu0 %v2695
        %2859 = vmatpush1.msra.mxu0 %v2694
        %2860 = vmatprep.subr.mxu0 0.0
        %2861 = vmatpush2.msra.mxu0 0.0
        %2862 = vmatprep.subr.mxu0 0.0
        %2863 = vmatpush2.msra.mxu0 0.0
        %2864 = vmatprep.subr.mxu0 0.0
        %2865 = vmatpush2.msra.mxu0 0.0
        %2866 = vmatprep.subr.mxu0 0.0
        %2867 = vmatpush2.msra.mxu0 0.0
        %2868 = vmatprep.subr.mxu0 0.0
        %2869 = vmatpush2.msra.mxu0 0.0
        %2870 = vmatprep.subr.mxu0 0.0
        %2871 = vmatpush2.msra.mxu0 0.0
        %2872 = vmatprep.subr.mxu0 0.0
        %2873 = vmatpush2.msra.mxu0 0.0
        %2874 = vmatprep.subr.mxu0 0.0
        %2875 = vmatpush2.msra.mxu0 0.0
        %2876 = vmatprep.subr.mxu0 0.0
        %2877 = vmatpush2.msra.mxu0 0.0
        %2878 = vmatprep.subr.mxu0 0.0
        %2879 = vmatpush2.msra.mxu0 0.0
        %2880 = vmatprep.subr.mxu0 0.0
        %2881 = vmatpush2.msra.mxu0 0.0
        %2882 = vmatprep.subr.mxu0 0.0
        %2883 = vmatpush2.msra.mxu0 0.0
        %2884 = vmatprep.subr.mxu0 0.0
        %2885 = vmatpush2.msra.mxu0 0.0
        %2886 = vmatprep.subr.mxu0 0.0
        %2887 = vmatpush2.msra.mxu0 0.0
        %2888 = vmatprep.subr.mxu0 0.0
        %2889 = vmatpush2.msra.mxu0 0.0
        %2890 = vmatprep.subr.mxu0 0.0
        %2891 = vmatpush2.msra.mxu0 0.0
        %2892 = vmatprep.mubr.f32.mxu0 0.0
        %2893 = vmatmul.mubr.f32.gmra.mxu0 %v2728
        %v2894 = vpop.f32.mrf.mxu0
        %v2895 = vadd.f32 %v2806, %v2894
        %v2896 = vpop.f32.mrf.mxu0
        %v2897 = vadd.f32 %v2808, %v2896
        %2898 = vmatprep.mubr.f32.mxu0 0.0
        %2899 = vmatmul.mubr.f32.gmra.mxu0 %v2731
        %v2900 = vpop.f32.mrf.mxu0
        %v2901 = vadd.f32 %v2812, %v2900
        %v2902 = vpop.f32.mrf.mxu0
        %v2903 = vadd.f32 %v2814, %v2902
        %2904 = vmatprep.mubr.f32.mxu0 0.0
        %2905 = vmatmul.mubr.f32.gmra.mxu0 %v2734
        %v2906 = vpop.f32.mrf.mxu0
        %v2907 = vadd.f32 %v2818, %v2906
        %v2908 = vpop.f32.mrf.mxu0
        %v2909 = vadd.f32 %v2820, %v2908
        %2910 = vmatprep.mubr.f32.mxu0 0.0
        %2911 = vmatmul.mubr.f32.gmra.mxu0 %v2737
        %v2912 = vpop.f32.mrf.mxu0
        %v2913 = vadd.f32 %v2824, %v2912
        %v2914 = vpop.f32.mrf.mxu0
        %v2915 = vadd.f32 %v2826, %v2914
        %2916 = vdwg.mxu0
        %v2917 = vadd.f32 %v1439, %v2895
        %v2918 = vadd.f32 %v1441, %v2897
        %v2919 = vadd.f32 %v1445, %v2901
        %v2920 = vadd.f32 %v1447, %v2903
        %v2921 = vadd.f32 %v1451, %v2907
        %v2922 = vadd.f32 %v1453, %v2909
        %v2923 = vadd.f32 %v1457, %v2913
        %v2924 = vadd.f32 %v1459, %v2915
        %2925 = vrot.lane.b32.xlu0 %v2917, 17
        %v2926 = vpop.permute.xlu0 %2925
        %2927 = vrot.lane.b32.xlu0 %v2919, 17
        %v2928 = vpop.permute.xlu0 %2927
        %2929 = vrot.lane.b32.xlu0 %v2921, 17
        %v2930 = vpop.permute.xlu0 %2929
        %2931 = vrot.lane.b32.xlu0 %v2923, 17
        %v2932 = vpop.permute.xlu0 %2931
        %2933 = vrot.lane.b32.xlu0 %v2918, 17
        %v2934 = vpop.permute.xlu0 %2933
        %2935 = vrot.lane.b32.xlu0 %v2920, 17
        %v2936 = vpop.permute.xlu0 %2935
        %2937 = vrot.lane.b32.xlu0 %v2922, 17
        %v2938 = vpop.permute.xlu0 %2937
        %2939 = vrot.lane.b32.xlu0 %v2924, 17
        %v2940 = vpop.permute.xlu0 %2939
        %v2941 = vsel %vm889, %v2926, %v2934
        %v2942 = vsel %vm889, %v2928, %v2936
        %v2943 = vsel %vm889, %v2930, %v2938
        %v2944 = vsel %vm889, %v2932, %v2940
        %v2945 = vsel %vm889, %v2934, %v2926
        %v2946 = vsel %vm889, %v2936, %v2928
        %v2947 = vsel %vm889, %v2938, %v2930
        %v2948 = vsel %vm889, %v2940, %v2932
        %v2949 = vld [vmem:[%s4] ss:$8 sm:$0x3]
        %v2951 = vlaneseq
        %v2952 = vshrl.u32 %v2951, 7
        %v2953 = vsub.s32 0, %v2952
        %v2954 = vrot.slane %v2949, %v2953
        %v2955 = vlaneseq
        %v2956 = vshrl.u32 %v2955, 7
        %v2957 = vsub.s32 1, %v2956
        %v2958 = vrot.slane %v2949, %v2957
        %v2961 = vmul.f32 %v2945, %v2954
        %v2962 = vmul.f32 %v2941, %v2958
        %v2963 = vmul.f32 %v2946, %v2954
        %v2964 = vmul.f32 %v2942, %v2958
        %v2965 = vmul.f32 %v2947, %v2954
        %v2966 = vmul.f32 %v2943, %v2958
        %v2967 = vmul.f32 %v2948, %v2954
        %v2968 = vmul.f32 %v2944, %v2958
        %2969 = vst [vmem:[#allocation2] sm:$0xff] %v2961
        %2970 = vst [vmem:[#allocation2 + $0x8] sm:$0xff] %v2962
        %2971 = vst [vmem:[#allocation2 + $0x10] sm:$0xff] %v2963
        %2972 = vst [vmem:[#allocation2 + $0x18] sm:$0xff] %v2964
        %2973 = vst [vmem:[#allocation2 + $0x20] sm:$0xff] %v2965
        %2974 = vst [vmem:[#allocation2 + $0x28] sm:$0xff] %v2966
        %2975 = vst [vmem:[#allocation2 + $0x30] sm:$0xff] %v2967
        %2976 = vst [vmem:[#allocation2 + $0x38] sm:$0xff] %v2968
        %2977 = vrot.lane.b32.xlu0 %v2917, 16
        %v2978 = vpop.permute.xlu0 %2977
        %2979 = vrot.lane.b32.xlu0 %v2919, 16
        %v2980 = vpop.permute.xlu0 %2979
        %2981 = vrot.lane.b32.xlu0 %v2921, 16
        %v2982 = vpop.permute.xlu0 %2981
        %2983 = vrot.lane.b32.xlu0 %v2923, 16
        %v2984 = vpop.permute.xlu0 %2983
        %2985 = vrot.lane.b32.xlu0 %v2918, 16
        %v2986 = vpop.permute.xlu0 %2985
        %2987 = vrot.lane.b32.xlu0 %v2920, 16
        %v2988 = vpop.permute.xlu0 %2987
        %2989 = vrot.lane.b32.xlu0 %v2922, 16
        %v2990 = vpop.permute.xlu0 %2989
        %2991 = vrot.lane.b32.xlu0 %v2924, 16
        %v2992 = vpop.permute.xlu0 %2991
        %v2993 = vsel %vm922, %v2978, %v2986
        %v2994 = vsel %vm922, %v2980, %v2988
        %v2995 = vsel %vm922, %v2982, %v2990
        %v2996 = vsel %vm922, %v2984, %v2992
        %v2997 = vsel %vm922, %v2986, %v2978
        %v2998 = vsel %vm922, %v2988, %v2980
        %v2999 = vsel %vm922, %v2990, %v2982
        %v3000 = vsel %vm922, %v2992, %v2984
        %v3001 = vld [vmem:[%s925] ss:$8 sm:$0x3]
        %v3003 = vlaneseq
        %v3004 = vshrl.u32 %v3003, 7
        %v3005 = vsub.s32 0, %v3004
        %v3006 = vrot.slane %v3001, %v3005
        %v3007 = vlaneseq
        %v3008 = vshrl.u32 %v3007, 7
        %v3009 = vsub.s32 1, %v3008
        %v3010 = vrot.slane %v3001, %v3009
        %v3013 = vmul.f32 %v2997, %v3006
        %v3014 = vmul.f32 %v2993, %v3010
        %v3015 = vmul.f32 %v2998, %v3006
        %v3016 = vmul.f32 %v2994, %v3010
        %v3017 = vmul.f32 %v2999, %v3006
        %v3018 = vmul.f32 %v2995, %v3010
        %v3019 = vmul.f32 %v3000, %v3006
        %v3020 = vmul.f32 %v2996, %v3010
        %3021 = vst [vmem:[#allocation2 + $0x40] sm:$0xff] %v3013
        %3022 = vst [vmem:[#allocation2 + $0x48] sm:$0xff] %v3014
        %3023 = vst [vmem:[#allocation2 + $0x50] sm:$0xff] %v3015
        %3024 = vst [vmem:[#allocation2 + $0x58] sm:$0xff] %v3016
        %3025 = vst [vmem:[#allocation2 + $0x60] sm:$0xff] %v3017
        %3026 = vst [vmem:[#allocation2 + $0x68] sm:$0xff] %v3018
        %3027 = vst [vmem:[#allocation2 + $0x70] sm:$0xff] %v3019
        %3028 = vst [vmem:[#allocation2 + $0x78] sm:$0xff] %v3020
        %3029 = vrot.lane.b32.xlu0 %v2917, 15
        %v3030 = vpop.permute.xlu0 %3029
        %3031 = vrot.lane.b32.xlu0 %v2919, 15
        %v3032 = vpop.permute.xlu0 %3031
        %3033 = vrot.lane.b32.xlu0 %v2921, 15
        %v3034 = vpop.permute.xlu0 %3033
        %3035 = vrot.lane.b32.xlu0 %v2923, 15
        %v3036 = vpop.permute.xlu0 %3035
        %3037 = vrot.lane.b32.xlu0 %v2918, 15
        %v3038 = vpop.permute.xlu0 %3037
        %3039 = vrot.lane.b32.xlu0 %v2920, 15
        %v3040 = vpop.permute.xlu0 %3039
        %3041 = vrot.lane.b32.xlu0 %v2922, 15
        %v3042 = vpop.permute.xlu0 %3041
        %3043 = vrot.lane.b32.xlu0 %v2924, 15
        %v3044 = vpop.permute.xlu0 %3043
        %v3045 = vsel %vm956, %v3030, %v3038
        %v3046 = vsel %vm956, %v3032, %v3040
        %v3047 = vsel %vm956, %v3034, %v3042
        %v3048 = vsel %vm956, %v3036, %v3044
        %v3049 = vsel %vm956, %v3038, %v3030
        %v3050 = vsel %vm956, %v3040, %v3032
        %v3051 = vsel %vm956, %v3042, %v3034
        %v3052 = vsel %vm956, %v3044, %v3036
        %v3053 = vld [vmem:[%s959] ss:$8 sm:$0x3]
        %v3055 = vlaneseq
        %v3056 = vshrl.u32 %v3055, 7
        %v3057 = vsub.s32 0, %v3056
        %v3058 = vrot.slane %v3053, %v3057
        %v3059 = vlaneseq
        %v3060 = vshrl.u32 %v3059, 7
        %v3061 = vsub.s32 1, %v3060
        %v3062 = vrot.slane %v3053, %v3061
        %v3065 = vmul.f32 %v3049, %v3058
        %v3066 = vmul.f32 %v3045, %v3062
        %v3067 = vmul.f32 %v3050, %v3058
        %v3068 = vmul.f32 %v3046, %v3062
        %v3069 = vmul.f32 %v3051, %v3058
        %v3070 = vmul.f32 %v3047, %v3062
        %v3071 = vmul.f32 %v3052, %v3058
        %v3072 = vmul.f32 %v3048, %v3062
        %3073 = vst [vmem:[#allocation2 + $0x80] sm:$0xff] %v3065
        %3074 = vst [vmem:[#allocation2 + $0x88] sm:$0xff] %v3066
        %3075 = vst [vmem:[#allocation2 + $0x90] sm:$0xff] %v3067
        %3076 = vst [vmem:[#allocation2 + $0x98] sm:$0xff] %v3068
        %3077 = vst [vmem:[#allocation2 + $0xa0] sm:$0xff] %v3069
        %3078 = vst [vmem:[#allocation2 + $0xa8] sm:$0xff] %v3070
        %3079 = vst [vmem:[#allocation2 + $0xb0] sm:$0xff] %v3071
        %3080 = vst [vmem:[#allocation2 + $0xb8] sm:$0xff] %v3072
        %3081 = vrot.lane.b32.xlu0 %v2917, 1
        %v3082 = vpop.permute.xlu0 %3081
        %3083 = vrot.lane.b32.xlu0 %v2919, 1
        %v3084 = vpop.permute.xlu0 %3083
        %3085 = vrot.lane.b32.xlu0 %v2921, 1
        %v3086 = vpop.permute.xlu0 %3085
        %3087 = vrot.lane.b32.xlu0 %v2923, 1
        %v3088 = vpop.permute.xlu0 %3087
        %3089 = vrot.lane.b32.xlu0 %v2918, 1
        %v3090 = vpop.permute.xlu0 %3089
        %3091 = vrot.lane.b32.xlu0 %v2920, 1
        %v3092 = vpop.permute.xlu0 %3091
        %3093 = vrot.lane.b32.xlu0 %v2922, 1
        %v3094 = vpop.permute.xlu0 %3093
        %3095 = vrot.lane.b32.xlu0 %v2924, 1
        %v3096 = vpop.permute.xlu0 %3095
        %v3097 = vsel %vm990, %v3082, %v3090
        %v3098 = vsel %vm990, %v3084, %v3092
        %v3099 = vsel %vm990, %v3086, %v3094
        %v3100 = vsel %vm990, %v3088, %v3096
        %v3101 = vsel %vm990, %v3090, %v3082
        %v3102 = vsel %vm990, %v3092, %v3084
        %v3103 = vsel %vm990, %v3094, %v3086
        %v3104 = vsel %vm990, %v3096, %v3088
        %v3105 = vld [vmem:[%s993] ss:$8 sm:$0x3]
        %v3107 = vlaneseq
        %v3108 = vshrl.u32 %v3107, 7
        %v3109 = vsub.s32 0, %v3108
        %v3110 = vrot.slane %v3105, %v3109
        %v3111 = vlaneseq
        %v3112 = vshrl.u32 %v3111, 7
        %v3113 = vsub.s32 1, %v3112
        %v3114 = vrot.slane %v3105, %v3113
        %v3117 = vmul.f32 %v3101, %v3110
        %v3118 = vmul.f32 %v3097, %v3114
        %v3119 = vmul.f32 %v3102, %v3110
        %v3120 = vmul.f32 %v3098, %v3114
        %v3121 = vmul.f32 %v3103, %v3110
        %v3122 = vmul.f32 %v3099, %v3114
        %v3123 = vmul.f32 %v3104, %v3110
        %v3124 = vmul.f32 %v3100, %v3114
        %3125 = vst [vmem:[#allocation2 + $0xc0] sm:$0xff] %v3117
        %3126 = vst [vmem:[#allocation2 + $0xc8] sm:$0xff] %v3118
        %3127 = vst [vmem:[#allocation2 + $0xd0] sm:$0xff] %v3119
        %3128 = vst [vmem:[#allocation2 + $0xd8] sm:$0xff] %v3120
        %3129 = vst [vmem:[#allocation2 + $0xe0] sm:$0xff] %v3121
        %3130 = vst [vmem:[#allocation2 + $0xe8] sm:$0xff] %v3122
        %3131 = vst [vmem:[#allocation2 + $0xf0] sm:$0xff] %v3123
        %3132 = vst [vmem:[#allocation2 + $0xf8] sm:$0xff] %v3124
        %3133 = vst [vmem:[#allocation2 + $0x100] sm:$0xff] %v2917
        %3134 = vst [vmem:[#allocation2 + $0x108] sm:$0xff] %v2918
        %3135 = vst [vmem:[#allocation2 + $0x110] sm:$0xff] %v2919
        %3136 = vst [vmem:[#allocation2 + $0x118] sm:$0xff] %v2920
        %3137 = vst [vmem:[#allocation2 + $0x120] sm:$0xff] %v2921
        %3138 = vst [vmem:[#allocation2 + $0x128] sm:$0xff] %v2922
        %3139 = vst [vmem:[#allocation2 + $0x130] sm:$0xff] %v2923
        %3140 = vst [vmem:[#allocation2 + $0x138] sm:$0xff] %v2924
        %3141 = vrot.lane.b32.xlu0 %v2917, 127
        %v3142 = vpop.permute.xlu0 %3141
        %3143 = vrot.lane.b32.xlu0 %v2919, 127
        %v3144 = vpop.permute.xlu0 %3143
        %3145 = vrot.lane.b32.xlu0 %v2921, 127
        %v3146 = vpop.permute.xlu0 %3145
        %3147 = vrot.lane.b32.xlu0 %v2923, 127
        %v3148 = vpop.permute.xlu0 %3147
        %3149 = vrot.lane.b32.xlu0 %v2918, 127
        %v3150 = vpop.permute.xlu0 %3149
        %3151 = vrot.lane.b32.xlu0 %v2920, 127
        %v3152 = vpop.permute.xlu0 %3151
        %3153 = vrot.lane.b32.xlu0 %v2922, 127
        %v3154 = vpop.permute.xlu0 %3153
        %3155 = vrot.lane.b32.xlu0 %v2924, 127
        %v3156 = vpop.permute.xlu0 %3155
        %v3157 = vsel %vm1032, %v3142, %v3150
        %v3158 = vsel %vm1032, %v3144, %v3152
        %v3159 = vsel %vm1032, %v3146, %v3154
        %v3160 = vsel %vm1032, %v3148, %v3156
        %v3161 = vsel %vm1032, %v3150, %v3142
        %v3162 = vsel %vm1032, %v3152, %v3144
        %v3163 = vsel %vm1032, %v3154, %v3146
        %v3164 = vsel %vm1032, %v3156, %v3148
        %v3165 = vld [vmem:[%s1035] ss:$8 sm:$0x3]
        %v3167 = vlaneseq
        %v3168 = vshrl.u32 %v3167, 7
        %v3169 = vsub.s32 0, %v3168
        %v3170 = vrot.slane %v3165, %v3169
        %v3171 = vlaneseq
        %v3172 = vshrl.u32 %v3171, 7
        %v3173 = vsub.s32 1, %v3172
        %v3174 = vrot.slane %v3165, %v3173
        %v3177 = vmul.f32 %v3157, %v3170
        %v3178 = vmul.f32 %v3161, %v3174
        %v3179 = vmul.f32 %v3158, %v3170
        %v3180 = vmul.f32 %v3162, %v3174
        %v3181 = vmul.f32 %v3159, %v3170
        %v3182 = vmul.f32 %v3163, %v3174
        %v3183 = vmul.f32 %v3160, %v3170
        %v3184 = vmul.f32 %v3164, %v3174
        %3185 = vst [vmem:[#allocation2 + $0x140] sm:$0xff] %v3177
        %3186 = vst [vmem:[#allocation2 + $0x148] sm:$0xff] %v3178
        %3187 = vst [vmem:[#allocation2 + $0x150] sm:$0xff] %v3179
        %3188 = vst [vmem:[#allocation2 + $0x158] sm:$0xff] %v3180
        %3189 = vst [vmem:[#allocation2 + $0x160] sm:$0xff] %v3181
        %3190 = vst [vmem:[#allocation2 + $0x168] sm:$0xff] %v3182
        %3191 = vst [vmem:[#allocation2 + $0x170] sm:$0xff] %v3183
        %3192 = vst [vmem:[#allocation2 + $0x178] sm:$0xff] %v3184
        %3193 = vrot.lane.b32.xlu0 %v2917, 113
        %v3194 = vpop.permute.xlu0 %3193
        %3195 = vrot.lane.b32.xlu0 %v2919, 113
        %v3196 = vpop.permute.xlu0 %3195
        %3197 = vrot.lane.b32.xlu0 %v2921, 113
        %v3198 = vpop.permute.xlu0 %3197
        %3199 = vrot.lane.b32.xlu0 %v2923, 113
        %v3200 = vpop.permute.xlu0 %3199
        %3201 = vrot.lane.b32.xlu0 %v2918, 113
        %v3202 = vpop.permute.xlu0 %3201
        %3203 = vrot.lane.b32.xlu0 %v2920, 113
        %v3204 = vpop.permute.xlu0 %3203
        %3205 = vrot.lane.b32.xlu0 %v2922, 113
        %v3206 = vpop.permute.xlu0 %3205
        %3207 = vrot.lane.b32.xlu0 %v2924, 113
        %v3208 = vpop.permute.xlu0 %3207
        %v3209 = vsel %vm1066, %v3194, %v3202
        %v3210 = vsel %vm1066, %v3196, %v3204
        %v3211 = vsel %vm1066, %v3198, %v3206
        %v3212 = vsel %vm1066, %v3200, %v3208
        %v3213 = vsel %vm1066, %v3202, %v3194
        %v3214 = vsel %vm1066, %v3204, %v3196
        %v3215 = vsel %vm1066, %v3206, %v3198
        %v3216 = vsel %vm1066, %v3208, %v3200
        %v3217 = vld [vmem:[%s1069] ss:$8 sm:$0x3]
        %v3219 = vlaneseq
        %v3220 = vshrl.u32 %v3219, 7
        %v3221 = vsub.s32 0, %v3220
        %v3222 = vrot.slane %v3217, %v3221
        %v3223 = vlaneseq
        %v3224 = vshrl.u32 %v3223, 7
        %v3225 = vsub.s32 1, %v3224
        %v3226 = vrot.slane %v3217, %v3225
        %v3229 = vmul.f32 %v3209, %v3222
        %v3230 = vmul.f32 %v3213, %v3226
        %v3231 = vmul.f32 %v3210, %v3222
        %v3232 = vmul.f32 %v3214, %v3226
        %v3233 = vmul.f32 %v3211, %v3222
        %v3234 = vmul.f32 %v3215, %v3226
        %v3235 = vmul.f32 %v3212, %v3222
        %v3236 = vmul.f32 %v3216, %v3226
        %3237 = vst [vmem:[#allocation2 + $0x180] sm:$0xff] %v3229
        %3238 = vst [vmem:[#allocation2 + $0x188] sm:$0xff] %v3230
        %3239 = vst [vmem:[#allocation2 + $0x190] sm:$0xff] %v3231
        %3240 = vst [vmem:[#allocation2 + $0x198] sm:$0xff] %v3232
        %3241 = vst [vmem:[#allocation2 + $0x1a0] sm:$0xff] %v3233
        %3242 = vst [vmem:[#allocation2 + $0x1a8] sm:$0xff] %v3234
        %3243 = vst [vmem:[#allocation2 + $0x1b0] sm:$0xff] %v3235
        %3244 = vst [vmem:[#allocation2 + $0x1b8] sm:$0xff] %v3236
        %3245 = vrot.lane.b32.xlu0 %v2917, 112
        %v3246 = vpop.permute.xlu0 %3245
        %3247 = vrot.lane.b32.xlu0 %v2919, 112
        %v3248 = vpop.permute.xlu0 %3247
        %3249 = vrot.lane.b32.xlu0 %v2921, 112
        %v3250 = vpop.permute.xlu0 %3249
        %3251 = vrot.lane.b32.xlu0 %v2923, 112
        %v3252 = vpop.permute.xlu0 %3251
        %3253 = vrot.lane.b32.xlu0 %v2918, 112
        %v3254 = vpop.permute.xlu0 %3253
        %3255 = vrot.lane.b32.xlu0 %v2920, 112
        %v3256 = vpop.permute.xlu0 %3255
        %3257 = vrot.lane.b32.xlu0 %v2922, 112
        %v3258 = vpop.permute.xlu0 %3257
        %3259 = vrot.lane.b32.xlu0 %v2924, 112
        %v3260 = vpop.permute.xlu0 %3259
        %v3261 = vsel %vm1100, %v3246, %v3254
        %v3262 = vsel %vm1100, %v3248, %v3256
        %v3263 = vsel %vm1100, %v3250, %v3258
        %v3264 = vsel %vm1100, %v3252, %v3260
        %v3265 = vsel %vm1100, %v3254, %v3246
        %v3266 = vsel %vm1100, %v3256, %v3248
        %v3267 = vsel %vm1100, %v3258, %v3250
        %v3268 = vsel %vm1100, %v3260, %v3252
        %v3269 = vld [vmem:[%s1103] ss:$8 sm:$0x3]
        %v3271 = vlaneseq
        %v3272 = vshrl.u32 %v3271, 7
        %v3273 = vsub.s32 0, %v3272
        %v3274 = vrot.slane %v3269, %v3273
        %v3275 = vlaneseq
        %v3276 = vshrl.u32 %v3275, 7
        %v3277 = vsub.s32 1, %v3276
        %v3278 = vrot.slane %v3269, %v3277
        %v3281 = vmul.f32 %v3261, %v3274
        %v3282 = vmul.f32 %v3265, %v3278
        %v3283 = vmul.f32 %v3262, %v3274
        %v3284 = vmul.f32 %v3266, %v3278
        %v3285 = vmul.f32 %v3263, %v3274
        %v3286 = vmul.f32 %v3267, %v3278
        %v3287 = vmul.f32 %v3264, %v3274
        %v3288 = vmul.f32 %v3268, %v3278
        %3289 = vst [vmem:[#allocation2 + $0x1c0] sm:$0xff] %v3281
        %3290 = vst [vmem:[#allocation2 + $0x1c8] sm:$0xff] %v3282
        %3291 = vst [vmem:[#allocation2 + $0x1d0] sm:$0xff] %v3283
        %3292 = vst [vmem:[#allocation2 + $0x1d8] sm:$0xff] %v3284
        %3293 = vst [vmem:[#allocation2 + $0x1e0] sm:$0xff] %v3285
        %3294 = vst [vmem:[#allocation2 + $0x1e8] sm:$0xff] %v3286
        %3295 = vst [vmem:[#allocation2 + $0x1f0] sm:$0xff] %v3287
        %3296 = vst [vmem:[#allocation2 + $0x1f8] sm:$0xff] %v3288
        %3297 = vrot.lane.b32.xlu0 %v2917, 111
        %v3298 = vpop.permute.xlu0 %3297
        %3299 = vrot.lane.b32.xlu0 %v2919, 111
        %v3300 = vpop.permute.xlu0 %3299
        %3301 = vrot.lane.b32.xlu0 %v2921, 111
        %v3302 = vpop.permute.xlu0 %3301
        %3303 = vrot.lane.b32.xlu0 %v2923, 111
        %v3304 = vpop.permute.xlu0 %3303
        %3305 = vrot.lane.b32.xlu0 %v2918, 111
        %v3306 = vpop.permute.xlu0 %3305
        %3307 = vrot.lane.b32.xlu0 %v2920, 111
        %v3308 = vpop.permute.xlu0 %3307
        %3309 = vrot.lane.b32.xlu0 %v2922, 111
        %v3310 = vpop.permute.xlu0 %3309
        %3311 = vrot.lane.b32.xlu0 %v2924, 111
        %v3312 = vpop.permute.xlu0 %3311
        %v3313 = vsel %vm1134, %v3298, %v3306
        %v3314 = vsel %vm1134, %v3300, %v3308
        %v3315 = vsel %vm1134, %v3302, %v3310
        %v3316 = vsel %vm1134, %v3304, %v3312
        %v3317 = vsel %vm1134, %v3306, %v3298
        %v3318 = vsel %vm1134, %v3308, %v3300
        %v3319 = vsel %vm1134, %v3310, %v3302
        %v3320 = vsel %vm1134, %v3312, %v3304
        %v3321 = vld [vmem:[%s1137] ss:$8 sm:$0x3]
        %v3323 = vlaneseq
        %v3324 = vshrl.u32 %v3323, 7
        %v3325 = vsub.s32 0, %v3324
        %v3326 = vrot.slane %v3321, %v3325
        %v3327 = vlaneseq
        %v3328 = vshrl.u32 %v3327, 7
        %v3329 = vsub.s32 1, %v3328
        %v3330 = vrot.slane %v3321, %v3329
        %v3333 = vmul.f32 %v3313, %v3326
        %v3334 = vmul.f32 %v3317, %v3330
        %v3335 = vmul.f32 %v3314, %v3326
        %v3336 = vmul.f32 %v3318, %v3330
        %v3337 = vmul.f32 %v3315, %v3326
        %v3338 = vmul.f32 %v3319, %v3330
        %v3339 = vmul.f32 %v3316, %v3326
        %v3340 = vmul.f32 %v3320, %v3330
        %3341 = vst [vmem:[#allocation2 + $0x200] sm:$0xff] %v3333
        %3342 = vst [vmem:[#allocation2 + $0x208] sm:$0xff] %v3334
        %3343 = vst [vmem:[#allocation2 + $0x210] sm:$0xff] %v3335
        %3344 = vst [vmem:[#allocation2 + $0x218] sm:$0xff] %v3336
        %3345 = vst [vmem:[#allocation2 + $0x220] sm:$0xff] %v3337
        %3346 = vst [vmem:[#allocation2 + $0x228] sm:$0xff] %v3338
        %3347 = vst [vmem:[#allocation2 + $0x230] sm:$0xff] %v3339
        %3348 = vst [vmem:[#allocation2 + $0x238] sm:$0xff] %v3340
        %s3349 = scalar_lea.vmem %s5, 288
        %v3350 = vld [vmem:[%s3349] sm:$0xff]
        %v3351 = vld [vmem:[%s3349 + $0x8] sm:$0xff]
        %v3352 = vld [vmem:[%s3349 + $0x10] sm:$0xff]
        %v3353 = vld [vmem:[%s3349 + $0x18] sm:$0xff]
        %v3354 = vld [vmem:[%s3349 + $0x20] sm:$0xff]
        %v3355 = vld [vmem:[%s3349 + $0x28] sm:$0xff]
        %v3356 = vld [vmem:[%s3349 + $0x30] sm:$0xff]
        %v3357 = vld [vmem:[%s3349 + $0x38] sm:$0xff]
        %v3358 = vld [vmem:[%s3349 + $0x40] sm:$0xff]
        %v3359 = vld [vmem:[%s3349 + $0x48] sm:$0xff]
        %v3360 = vld [vmem:[%s3349 + $0x50] sm:$0xff]
        %v3361 = vld [vmem:[%s3349 + $0x58] sm:$0xff]
        %v3362 = vld [vmem:[#allocation2] sm:$0xff]
        %v3363 = vld [vmem:[#allocation2 + $0x8] sm:$0xff]
        %v3364 = vld [vmem:[#allocation2 + $0x10] sm:$0xff]
        %v3365 = vld [vmem:[#allocation2 + $0x18] sm:$0xff]
        %v3366 = vld [vmem:[#allocation2 + $0x20] sm:$0xff]
        %v3367 = vld [vmem:[#allocation2 + $0x28] sm:$0xff]
        %v3368 = vld [vmem:[#allocation2 + $0x30] sm:$0xff]
        %v3369 = vld [vmem:[#allocation2 + $0x38] sm:$0xff]
        %v3370 = vld [vmem:[#allocation2 + $0x40] sm:$0xff]
        %v3371 = vld [vmem:[#allocation2 + $0x48] sm:$0xff]
        %v3372 = vld [vmem:[#allocation2 + $0x50] sm:$0xff]
        %v3373 = vld [vmem:[#allocation2 + $0x58] sm:$0xff]
        %v3374 = vld [vmem:[#allocation2 + $0x60] sm:$0xff]
        %v3375 = vld [vmem:[#allocation2 + $0x68] sm:$0xff]
        %v3376 = vld [vmem:[#allocation2 + $0x70] sm:$0xff]
        %v3377 = vld [vmem:[#allocation2 + $0x78] sm:$0xff]
        %v3378 = vld [vmem:[#allocation2 + $0x80] sm:$0xff]
        %v3379 = vld [vmem:[#allocation2 + $0x88] sm:$0xff]
        %v3380 = vld [vmem:[#allocation2 + $0x90] sm:$0xff]
        %v3381 = vld [vmem:[#allocation2 + $0x98] sm:$0xff]
        %v3382 = vld [vmem:[#allocation2 + $0xa0] sm:$0xff]
        %v3383 = vld [vmem:[#allocation2 + $0xa8] sm:$0xff]
        %v3384 = vld [vmem:[#allocation2 + $0xb0] sm:$0xff]
        %v3385 = vld [vmem:[#allocation2 + $0xb8] sm:$0xff]
        %v3386 = vld [vmem:[#allocation2 + $0xc0] sm:$0xff]
        %v3387 = vld [vmem:[#allocation2 + $0xc8] sm:$0xff]
        %v3388 = vld [vmem:[#allocation2 + $0xd0] sm:$0xff]
        %v3389 = vld [vmem:[#allocation2 + $0xd8] sm:$0xff]
        %v3390 = vld [vmem:[#allocation2 + $0xe0] sm:$0xff]
        %v3391 = vld [vmem:[#allocation2 + $0xe8] sm:$0xff]
        %v3392 = vld [vmem:[#allocation2 + $0xf0] sm:$0xff]
        %v3393 = vld [vmem:[#allocation2 + $0xf8] sm:$0xff]
        %v3394 = vld [vmem:[#allocation2 + $0x100] sm:$0xff]
        %v3395 = vld [vmem:[#allocation2 + $0x108] sm:$0xff]
        %v3396 = vld [vmem:[#allocation2 + $0x110] sm:$0xff]
        %v3397 = vld [vmem:[#allocation2 + $0x118] sm:$0xff]
        %v3398 = vld [vmem:[#allocation2 + $0x120] sm:$0xff]
        %v3399 = vld [vmem:[#allocation2 + $0x128] sm:$0xff]
        %v3400 = vld [vmem:[#allocation2 + $0x130] sm:$0xff]
        %v3401 = vld [vmem:[#allocation2 + $0x138] sm:$0xff]
        %v3402 = vld [vmem:[#allocation2 + $0x140] sm:$0xff]
        %v3403 = vld [vmem:[#allocation2 + $0x148] sm:$0xff]
        %v3404 = vld [vmem:[#allocation2 + $0x150] sm:$0xff]
        %v3405 = vld [vmem:[#allocation2 + $0x158] sm:$0xff]
        %v3406 = vld [vmem:[#allocation2 + $0x160] sm:$0xff]
        %v3407 = vld [vmem:[#allocation2 + $0x168] sm:$0xff]
        %v3408 = vld [vmem:[#allocation2 + $0x170] sm:$0xff]
        %v3409 = vld [vmem:[#allocation2 + $0x178] sm:$0xff]
        %v3410 = vld [vmem:[#allocation2 + $0x180] sm:$0xff]
        %v3411 = vld [vmem:[#allocation2 + $0x188] sm:$0xff]
        %v3412 = vld [vmem:[#allocation2 + $0x190] sm:$0xff]
        %v3413 = vld [vmem:[#allocation2 + $0x198] sm:$0xff]
        %v3414 = vld [vmem:[#allocation2 + $0x1a0] sm:$0xff]
        %v3415 = vld [vmem:[#allocation2 + $0x1a8] sm:$0xff]
        %v3416 = vld [vmem:[#allocation2 + $0x1b0] sm:$0xff]
        %v3417 = vld [vmem:[#allocation2 + $0x1b8] sm:$0xff]
        %v3418 = vld [vmem:[#allocation2 + $0x1c0] sm:$0xff]
        %v3419 = vld [vmem:[#allocation2 + $0x1c8] sm:$0xff]
        %v3420 = vld [vmem:[#allocation2 + $0x1d0] sm:$0xff]
        %v3421 = vld [vmem:[#allocation2 + $0x1d8] sm:$0xff]
        %v3422 = vld [vmem:[#allocation2 + $0x1e0] sm:$0xff]
        %v3423 = vld [vmem:[#allocation2 + $0x1e8] sm:$0xff]
        %v3424 = vld [vmem:[#allocation2 + $0x1f0] sm:$0xff]
        %v3425 = vld [vmem:[#allocation2 + $0x1f8] sm:$0xff]
        %v3426 = vld [vmem:[#allocation2 + $0x200] sm:$0xff]
        %v3427 = vld [vmem:[#allocation2 + $0x208] sm:$0xff]
        %v3428 = vld [vmem:[#allocation2 + $0x210] sm:$0xff]
        %v3429 = vld [vmem:[#allocation2 + $0x218] sm:$0xff]
        %v3430 = vld [vmem:[#allocation2 + $0x220] sm:$0xff]
        %v3431 = vld [vmem:[#allocation2 + $0x228] sm:$0xff]
        %v3432 = vld [vmem:[#allocation2 + $0x230] sm:$0xff]
        %v3433 = vld [vmem:[#allocation2 + $0x238] sm:$0xff]
        %s3434 = scalar_lea.vmem %s6, 96
        %v3435 = vld [vmem:[%s3434] sm:$0xff]
        %v3436 = vld [vmem:[%s3434 + $0x8] sm:$0xff]
        %v3437 = vld [vmem:[%s3434 + $0x10] sm:$0xff]
        %v3438 = vld [vmem:[%s3434 + $0x18] sm:$0xff]
        %3440 = vset.pattern.permute.xlu0 0
        %3441 = vperm.xlu0 %3440, %v3435
        %v3442 = vpop.permute.xlu0 %3441
        %3445 = vset.pattern.permute.xlu0 0
        %3446 = vperm.xlu0 %3445, %v3436
        %v3447 = vpop.permute.xlu0 %3446
        %3450 = vset.pattern.permute.xlu0 0
        %3451 = vperm.xlu0 %3450, %v3437
        %v3452 = vpop.permute.xlu0 %3451
        %3455 = vset.pattern.permute.xlu0 0
        %3456 = vperm.xlu0 %3455, %v3438
        %v3457 = vpop.permute.xlu0 %3456
        %v3460 = vsel %vm1270, %v3352, 0
        %v3463 = vsel %vm1270, %v3355, 0
        %v3466 = vsel %vm1270, %v3358, 0
        %v3469 = vsel %vm1270, %v3361, 0
        %3471 = vmatprep.subr.mxu0 %v3393
        %3472 = vmatpush1.msra.mxu0 %v3392
        %3473 = vmatprep.subr.mxu0 %v3391
        %3474 = vmatpush1.msra.mxu0 %v3390
        %3475 = vmatprep.subr.mxu0 %v3389
        %3476 = vmatpush1.msra.mxu0 %v3388
        %3477 = vmatprep.subr.mxu0 %v3387
        %3478 = vmatpush1.msra.mxu0 %v3386
        %3479 = vmatprep.subr.mxu0 %v3385
        %3480 = vmatpush1.msra.mxu0 %v3384
        %3481 = vmatprep.subr.mxu0 %v3383
        %3482 = vmatpush1.msra.mxu0 %v3382
        %3483 = vmatprep.subr.mxu0 %v3381
        %3484 = vmatpush1.msra.mxu0 %v3380
        %3485 = vmatprep.subr.mxu0 %v3379
        %3486 = vmatpush1.msra.mxu0 %v3378
        %3487 = vmatprep.subr.mxu0 %v3377
        %3488 = vmatpush1.msra.mxu0 %v3376
        %3489 = vmatprep.subr.mxu0 %v3375
        %3490 = vmatpush1.msra.mxu0 %v3374
        %3491 = vmatprep.subr.mxu0 %v3373
        %3492 = vmatpush1.msra.mxu0 %v3372
        %3493 = vmatprep.subr.mxu0 %v3371
        %3494 = vmatpush1.msra.mxu0 %v3370
        %3495 = vmatprep.subr.mxu0 %v3369
        %3496 = vmatpush1.msra.mxu0 %v3368
        %3497 = vmatprep.subr.mxu0 %v3367
        %3498 = vmatpush1.msra.mxu0 %v3366
        %3499 = vmatprep.subr.mxu0 %v3365
        %3500 = vmatpush1.msra.mxu0 %v3364
        %3501 = vmatprep.subr.mxu0 %v3363
        %3502 = vmatpush1.msra.mxu0 %v3362
        %3503 = vmatprep.subr.mxu0 %v3425
        %3504 = vmatpush2.msra.mxu0 %v3424
        %3505 = vmatprep.subr.mxu0 %v3423
        %3506 = vmatpush2.msra.mxu0 %v3422
        %3507 = vmatprep.subr.mxu0 %v3421
        %3508 = vmatpush2.msra.mxu0 %v3420
        %3509 = vmatprep.subr.mxu0 %v3419
        %3510 = vmatpush2.msra.mxu0 %v3418
        %3511 = vmatprep.subr.mxu0 %v3417
        %3512 = vmatpush2.msra.mxu0 %v3416
        %3513 = vmatprep.subr.mxu0 %v3415
        %3514 = vmatpush2.msra.mxu0 %v3414
        %3515 = vmatprep.subr.mxu0 %v3413
        %3516 = vmatpush2.msra.mxu0 %v3412
        %3517 = vmatprep.subr.mxu0 %v3411
        %3518 = vmatpush2.msra.mxu0 %v3410
        %3519 = vmatprep.subr.mxu0 %v3409
        %3520 = vmatpush2.msra.mxu0 %v3408
        %3521 = vmatprep.subr.mxu0 %v3407
        %3522 = vmatpush2.msra.mxu0 %v3406
        %3523 = vmatprep.subr.mxu0 %v3405
        %3524 = vmatpush2.msra.mxu0 %v3404
        %3525 = vmatprep.subr.mxu0 %v3403
        %3526 = vmatpush2.msra.mxu0 %v3402
        %3527 = vmatprep.subr.mxu0 %v3401
        %3528 = vmatpush2.msra.mxu0 %v3400
        %3529 = vmatprep.subr.mxu0 %v3399
        %3530 = vmatpush2.msra.mxu0 %v3398
        %3531 = vmatprep.subr.mxu0 %v3397
        %3532 = vmatpush2.msra.mxu0 %v3396
        %3533 = vmatprep.subr.mxu0 %v3395
        %3534 = vmatpush2.msra.mxu0 %v3394
        %3535 = vmatprep.mubr.f32.mxu0 %v3351
        %3536 = vmatmul.mubr.f32.gmra.mxu0 %v3350
        %v3537 = vpop.f32.mrf.mxu0
        %v3538 = vadd.f32 %v3442, %v3537
        %v3539 = vpop.f32.mrf.mxu0
        %v3540 = vadd.f32 %v3442, %v3539
        %3541 = vmatprep.mubr.f32.mxu0 %v3354
        %3542 = vmatmul.mubr.f32.gmra.mxu0 %v3353
        %v3543 = vpop.f32.mrf.mxu0
        %v3544 = vadd.f32 %v3447, %v3543
        %v3545 = vpop.f32.mrf.mxu0
        %v3546 = vadd.f32 %v3447, %v3545
        %3547 = vmatprep.mubr.f32.mxu0 %v3357
        %3548 = vmatmul.mubr.f32.gmra.mxu0 %v3356
        %v3549 = vpop.f32.mrf.mxu0
        %v3550 = vadd.f32 %v3452, %v3549
        %v3551 = vpop.f32.mrf.mxu0
        %v3552 = vadd.f32 %v3452, %v3551
        %3553 = vmatprep.mubr.f32.mxu0 %v3360
        %3554 = vmatmul.mubr.f32.gmra.mxu0 %v3359
        %v3555 = vpop.f32.mrf.mxu0
        %v3556 = vadd.f32 %v3457, %v3555
        %v3557 = vpop.f32.mrf.mxu0
        %v3558 = vadd.f32 %v3457, %v3557
        %3559 = vdwg.mxu0
        %3560 = vmatprep.subr.mxu0 0.0
        %3561 = vmatpush1.msra.mxu0 0.0
        %3562 = vmatprep.subr.mxu0 0.0
        %3563 = vmatpush1.msra.mxu0 0.0
        %3564 = vmatprep.subr.mxu0 0.0
        %3565 = vmatpush1.msra.mxu0 0.0
        %3566 = vmatprep.subr.mxu0 0.0
        %3567 = vmatpush1.msra.mxu0 0.0
        %3568 = vmatprep.subr.mxu0 0.0
        %3569 = vmatpush1.msra.mxu0 0.0
        %3570 = vmatprep.subr.mxu0 0.0
        %3571 = vmatpush1.msra.mxu0 0.0
        %3572 = vmatprep.subr.mxu0 0.0
        %3573 = vmatpush1.msra.mxu0 0.0
        %3574 = vmatprep.subr.mxu0 0.0
        %3575 = vmatpush1.msra.mxu0 0.0
        %3576 = vmatprep.subr.mxu0 0.0
        %3577 = vmatpush1.msra.mxu0 0.0
        %3578 = vmatprep.subr.mxu0 0.0
        %3579 = vmatpush1.msra.mxu0 0.0
        %3580 = vmatprep.subr.mxu0 0.0
        %3581 = vmatpush1.msra.mxu0 0.0
        %3582 = vmatprep.subr.mxu0 0.0
        %3583 = vmatpush1.msra.mxu0 0.0
        %3584 = vmatprep.subr.mxu0 %v3433
        %3585 = vmatpush1.msra.mxu0 %v3432
        %3586 = vmatprep.subr.mxu0 %v3431
        %3587 = vmatpush1.msra.mxu0 %v3430
        %3588 = vmatprep.subr.mxu0 %v3429
        %3589 = vmatpush1.msra.mxu0 %v3428
        %3590 = vmatprep.subr.mxu0 %v3427
        %3591 = vmatpush1.msra.mxu0 %v3426
        %3592 = vmatprep.subr.mxu0 0.0
        %3593 = vmatpush2.msra.mxu0 0.0
        %3594 = vmatprep.subr.mxu0 0.0
        %3595 = vmatpush2.msra.mxu0 0.0
        %3596 = vmatprep.subr.mxu0 0.0
        %3597 = vmatpush2.msra.mxu0 0.0
        %3598 = vmatprep.subr.mxu0 0.0
        %3599 = vmatpush2.msra.mxu0 0.0
        %3600 = vmatprep.subr.mxu0 0.0
        %3601 = vmatpush2.msra.mxu0 0.0
        %3602 = vmatprep.subr.mxu0 0.0
        %3603 = vmatpush2.msra.mxu0 0.0
        %3604 = vmatprep.subr.mxu0 0.0
        %3605 = vmatpush2.msra.mxu0 0.0
        %3606 = vmatprep.subr.mxu0 0.0
        %3607 = vmatpush2.msra.mxu0 0.0
        %3608 = vmatprep.subr.mxu0 0.0
        %3609 = vmatpush2.msra.mxu0 0.0
        %3610 = vmatprep.subr.mxu0 0.0
        %3611 = vmatpush2.msra.mxu0 0.0
        %3612 = vmatprep.subr.mxu0 0.0
        %3613 = vmatpush2.msra.mxu0 0.0
        %3614 = vmatprep.subr.mxu0 0.0
        %3615 = vmatpush2.msra.mxu0 0.0
        %3616 = vmatprep.subr.mxu0 0.0
        %3617 = vmatpush2.msra.mxu0 0.0
        %3618 = vmatprep.subr.mxu0 0.0
        %3619 = vmatpush2.msra.mxu0 0.0
        %3620 = vmatprep.subr.mxu0 0.0
        %3621 = vmatpush2.msra.mxu0 0.0
        %3622 = vmatprep.subr.mxu0 0.0
        %3623 = vmatpush2.msra.mxu0 0.0
        %3624 = vmatprep.mubr.f32.mxu0 0.0
        %3625 = vmatmul.mubr.f32.gmra.mxu0 %v3460
        %v3626 = vpop.f32.mrf.mxu0
        %v3627 = vadd.f32 %v3538, %v3626
        %v3628 = vpop.f32.mrf.mxu0
        %v3629 = vadd.f32 %v3540, %v3628
        %3630 = vmatprep.mubr.f32.mxu0 0.0
        %3631 = vmatmul.mubr.f32.gmra.mxu0 %v3463
        %v3632 = vpop.f32.mrf.mxu0
        %v3633 = vadd.f32 %v3544, %v3632
        %v3634 = vpop.f32.mrf.mxu0
        %v3635 = vadd.f32 %v3546, %v3634
        %3636 = vmatprep.mubr.f32.mxu0 0.0
        %3637 = vmatmul.mubr.f32.gmra.mxu0 %v3466
        %v3638 = vpop.f32.mrf.mxu0
        %v3639 = vadd.f32 %v3550, %v3638
        %v3640 = vpop.f32.mrf.mxu0
        %v3641 = vadd.f32 %v3552, %v3640
        %3642 = vmatprep.mubr.f32.mxu0 0.0
        %3643 = vmatmul.mubr.f32.gmra.mxu0 %v3469
        %v3644 = vpop.f32.mrf.mxu0
        %v3645 = vadd.f32 %v3556, %v3644
        %v3646 = vpop.f32.mrf.mxu0
        %v3647 = vadd.f32 %v3558, %v3646
        %3648 = vdwg.mxu0
        %v3649 = vmax.f32 %v3627, 0.0
        %v3650 = vmax.f32 %v3629, 0.0
        %v3651 = vmax.f32 %v3633, 0.0
        %v3652 = vmax.f32 %v3635, 0.0
        %v3653 = vmax.f32 %v3639, 0.0
        %v3654 = vmax.f32 %v3641, 0.0
        %v3655 = vmax.f32 %v3645, 0.0
        %v3656 = vmax.f32 %v3647, 0.0
        %3657 = vrot.lane.b32.xlu0 %v3649, 17
        %v3658 = vpop.permute.xlu0 %3657
        %3659 = vrot.lane.b32.xlu0 %v3651, 17
        %v3660 = vpop.permute.xlu0 %3659
        %3661 = vrot.lane.b32.xlu0 %v3653, 17
        %v3662 = vpop.permute.xlu0 %3661
        %3663 = vrot.lane.b32.xlu0 %v3655, 17
        %v3664 = vpop.permute.xlu0 %3663
        %3665 = vrot.lane.b32.xlu0 %v3650, 17
        %v3666 = vpop.permute.xlu0 %3665
        %3667 = vrot.lane.b32.xlu0 %v3652, 17
        %v3668 = vpop.permute.xlu0 %3667
        %3669 = vrot.lane.b32.xlu0 %v3654, 17
        %v3670 = vpop.permute.xlu0 %3669
        %3671 = vrot.lane.b32.xlu0 %v3656, 17
        %v3672 = vpop.permute.xlu0 %3671
        %v3673 = vsel %vm889, %v3658, %v3666
        %v3674 = vsel %vm889, %v3660, %v3668
        %v3675 = vsel %vm889, %v3662, %v3670
        %v3676 = vsel %vm889, %v3664, %v3672
        %v3677 = vsel %vm889, %v3666, %v3658
        %v3678 = vsel %vm889, %v3668, %v3660
        %v3679 = vsel %vm889, %v3670, %v3662
        %v3680 = vsel %vm889, %v3672, %v3664
        %v3681 = vld [vmem:[%s4] ss:$8 sm:$0x3]
        %v3683 = vlaneseq
        %v3684 = vshrl.u32 %v3683, 7
        %v3685 = vsub.s32 0, %v3684
        %v3686 = vrot.slane %v3681, %v3685
        %v3687 = vlaneseq
        %v3688 = vshrl.u32 %v3687, 7
        %v3689 = vsub.s32 1, %v3688
        %v3690 = vrot.slane %v3681, %v3689
        %v3693 = vmul.f32 %v3677, %v3686
        %v3694 = vmul.f32 %v3673, %v3690
        %v3695 = vmul.f32 %v3678, %v3686
        %v3696 = vmul.f32 %v3674, %v3690
        %v3697 = vmul.f32 %v3679, %v3686
        %v3698 = vmul.f32 %v3675, %v3690
        %v3699 = vmul.f32 %v3680, %v3686
        %v3700 = vmul.f32 %v3676, %v3690
        %3701 = vst [vmem:[#allocation2] sm:$0xff] %v3693
        %3702 = vst [vmem:[#allocation2 + $0x8] sm:$0xff] %v3694
        %3703 = vst [vmem:[#allocation2 + $0x10] sm:$0xff] %v3695
        %3704 = vst [vmem:[#allocation2 + $0x18] sm:$0xff] %v3696
        %3705 = vst [vmem:[#allocation2 + $0x20] sm:$0xff] %v3697
        %3706 = vst [vmem:[#allocation2 + $0x28] sm:$0xff] %v3698
        %3707 = vst [vmem:[#allocation2 + $0x30] sm:$0xff] %v3699
        %3708 = vst [vmem:[#allocation2 + $0x38] sm:$0xff] %v3700
        %3709 = vrot.lane.b32.xlu0 %v3649, 16
        %v3710 = vpop.permute.xlu0 %3709
        %3711 = vrot.lane.b32.xlu0 %v3651, 16
        %v3712 = vpop.permute.xlu0 %3711
        %3713 = vrot.lane.b32.xlu0 %v3653, 16
        %v3714 = vpop.permute.xlu0 %3713
        %3715 = vrot.lane.b32.xlu0 %v3655, 16
        %v3716 = vpop.permute.xlu0 %3715
        %3717 = vrot.lane.b32.xlu0 %v3650, 16
        %v3718 = vpop.permute.xlu0 %3717
        %3719 = vrot.lane.b32.xlu0 %v3652, 16
        %v3720 = vpop.permute.xlu0 %3719
        %3721 = vrot.lane.b32.xlu0 %v3654, 16
        %v3722 = vpop.permute.xlu0 %3721
        %3723 = vrot.lane.b32.xlu0 %v3656, 16
        %v3724 = vpop.permute.xlu0 %3723
        %v3725 = vsel %vm922, %v3710, %v3718
        %v3726 = vsel %vm922, %v3712, %v3720
        %v3727 = vsel %vm922, %v3714, %v3722
        %v3728 = vsel %vm922, %v3716, %v3724
        %v3729 = vsel %vm922, %v3718, %v3710
        %v3730 = vsel %vm922, %v3720, %v3712
        %v3731 = vsel %vm922, %v3722, %v3714
        %v3732 = vsel %vm922, %v3724, %v3716
        %v3733 = vld [vmem:[%s925] ss:$8 sm:$0x3]
        %v3735 = vlaneseq
        %v3736 = vshrl.u32 %v3735, 7
        %v3737 = vsub.s32 0, %v3736
        %v3738 = vrot.slane %v3733, %v3737
        %v3739 = vlaneseq
        %v3740 = vshrl.u32 %v3739, 7
        %v3741 = vsub.s32 1, %v3740
        %v3742 = vrot.slane %v3733, %v3741
        %v3745 = vmul.f32 %v3729, %v3738
        %v3746 = vmul.f32 %v3725, %v3742
        %v3747 = vmul.f32 %v3730, %v3738
        %v3748 = vmul.f32 %v3726, %v3742
        %v3749 = vmul.f32 %v3731, %v3738
        %v3750 = vmul.f32 %v3727, %v3742
        %v3751 = vmul.f32 %v3732, %v3738
        %v3752 = vmul.f32 %v3728, %v3742
        %3753 = vst [vmem:[#allocation2 + $0x40] sm:$0xff] %v3745
        %3754 = vst [vmem:[#allocation2 + $0x48] sm:$0xff] %v3746
        %3755 = vst [vmem:[#allocation2 + $0x50] sm:$0xff] %v3747
        %3756 = vst [vmem:[#allocation2 + $0x58] sm:$0xff] %v3748
        %3757 = vst [vmem:[#allocation2 + $0x60] sm:$0xff] %v3749
        %3758 = vst [vmem:[#allocation2 + $0x68] sm:$0xff] %v3750
        %3759 = vst [vmem:[#allocation2 + $0x70] sm:$0xff] %v3751
        %3760 = vst [vmem:[#allocation2 + $0x78] sm:$0xff] %v3752
        %3761 = vrot.lane.b32.xlu0 %v3649, 15
        %v3762 = vpop.permute.xlu0 %3761
        %3763 = vrot.lane.b32.xlu0 %v3651, 15
        %v3764 = vpop.permute.xlu0 %3763
        %3765 = vrot.lane.b32.xlu0 %v3653, 15
        %v3766 = vpop.permute.xlu0 %3765
        %3767 = vrot.lane.b32.xlu0 %v3655, 15
        %v3768 = vpop.permute.xlu0 %3767
        %3769 = vrot.lane.b32.xlu0 %v3650, 15
        %v3770 = vpop.permute.xlu0 %3769
        %3771 = vrot.lane.b32.xlu0 %v3652, 15
        %v3772 = vpop.permute.xlu0 %3771
        %3773 = vrot.lane.b32.xlu0 %v3654, 15
        %v3774 = vpop.permute.xlu0 %3773
        %3775 = vrot.lane.b32.xlu0 %v3656, 15
        %v3776 = vpop.permute.xlu0 %3775
        %v3777 = vsel %vm956, %v3762, %v3770
        %v3778 = vsel %vm956, %v3764, %v3772
        %v3779 = vsel %vm956, %v3766, %v3774
        %v3780 = vsel %vm956, %v3768, %v3776
        %v3781 = vsel %vm956, %v3770, %v3762
        %v3782 = vsel %vm956, %v3772, %v3764
        %v3783 = vsel %vm956, %v3774, %v3766
        %v3784 = vsel %vm956, %v3776, %v3768
        %v3785 = vld [vmem:[%s959] ss:$8 sm:$0x3]
        %v3787 = vlaneseq
        %v3788 = vshrl.u32 %v3787, 7
        %v3789 = vsub.s32 0, %v3788
        %v3790 = vrot.slane %v3785, %v3789
        %v3791 = vlaneseq
        %v3792 = vshrl.u32 %v3791, 7
        %v3793 = vsub.s32 1, %v3792
        %v3794 = vrot.slane %v3785, %v3793
        %v3797 = vmul.f32 %v3781, %v3790
        %v3798 = vmul.f32 %v3777, %v3794
        %v3799 = vmul.f32 %v3782, %v3790
        %v3800 = vmul.f32 %v3778, %v3794
        %v3801 = vmul.f32 %v3783, %v3790
        %v3802 = vmul.f32 %v3779, %v3794
        %v3803 = vmul.f32 %v3784, %v3790
        %v3804 = vmul.f32 %v3780, %v3794
        %3805 = vst [vmem:[#allocation2 + $0x80] sm:$0xff] %v3797
        %3806 = vst [vmem:[#allocation2 + $0x88] sm:$0xff] %v3798
        %3807 = vst [vmem:[#allocation2 + $0x90] sm:$0xff] %v3799
        %3808 = vst [vmem:[#allocation2 + $0x98] sm:$0xff] %v3800
        %3809 = vst [vmem:[#allocation2 + $0xa0] sm:$0xff] %v3801
        %3810 = vst [vmem:[#allocation2 + $0xa8] sm:$0xff] %v3802
        %3811 = vst [vmem:[#allocation2 + $0xb0] sm:$0xff] %v3803
        %3812 = vst [vmem:[#allocation2 + $0xb8] sm:$0xff] %v3804
        %3813 = vrot.lane.b32.xlu0 %v3649, 1
        %v3814 = vpop.permute.xlu0 %3813
        %3815 = vrot.lane.b32.xlu0 %v3651, 1
        %v3816 = vpop.permute.xlu0 %3815
        %3817 = vrot.lane.b32.xlu0 %v3653, 1
        %v3818 = vpop.permute.xlu0 %3817
        %3819 = vrot.lane.b32.xlu0 %v3655, 1
        %v3820 = vpop.permute.xlu0 %3819
        %3821 = vrot.lane.b32.xlu0 %v3650, 1
        %v3822 = vpop.permute.xlu0 %3821
        %3823 = vrot.lane.b32.xlu0 %v3652, 1
        %v3824 = vpop.permute.xlu0 %3823
        %3825 = vrot.lane.b32.xlu0 %v3654, 1
        %v3826 = vpop.permute.xlu0 %3825
        %3827 = vrot.lane.b32.xlu0 %v3656, 1
        %v3828 = vpop.permute.xlu0 %3827
        %v3829 = vsel %vm990, %v3814, %v3822
        %v3830 = vsel %vm990, %v3816, %v3824
        %v3831 = vsel %vm990, %v3818, %v3826
        %v3832 = vsel %vm990, %v3820, %v3828
        %v3833 = vsel %vm990, %v3822, %v3814
        %v3834 = vsel %vm990, %v3824, %v3816
        %v3835 = vsel %vm990, %v3826, %v3818
        %v3836 = vsel %vm990, %v3828, %v3820
        %v3837 = vld [vmem:[%s993] ss:$8 sm:$0x3]
        %v3839 = vlaneseq
        %v3840 = vshrl.u32 %v3839, 7
        %v3841 = vsub.s32 0, %v3840
        %v3842 = vrot.slane %v3837, %v3841
        %v3843 = vlaneseq
        %v3844 = vshrl.u32 %v3843, 7
        %v3845 = vsub.s32 1, %v3844
        %v3846 = vrot.slane %v3837, %v3845
        %v3849 = vmul.f32 %v3833, %v3842
        %v3850 = vmul.f32 %v3829, %v3846
        %v3851 = vmul.f32 %v3834, %v3842
        %v3852 = vmul.f32 %v3830, %v3846
        %v3853 = vmul.f32 %v3835, %v3842
        %v3854 = vmul.f32 %v3831, %v3846
        %v3855 = vmul.f32 %v3836, %v3842
        %v3856 = vmul.f32 %v3832, %v3846
        %3857 = vst [vmem:[#allocation2 + $0xc0] sm:$0xff] %v3849
        %3858 = vst [vmem:[#allocation2 + $0xc8] sm:$0xff] %v3850
        %3859 = vst [vmem:[#allocation2 + $0xd0] sm:$0xff] %v3851
        %3860 = vst [vmem:[#allocation2 + $0xd8] sm:$0xff] %v3852
        %3861 = vst [vmem:[#allocation2 + $0xe0] sm:$0xff] %v3853
        %3862 = vst [vmem:[#allocation2 + $0xe8] sm:$0xff] %v3854
        %3863 = vst [vmem:[#allocation2 + $0xf0] sm:$0xff] %v3855
        %3864 = vst [vmem:[#allocation2 + $0xf8] sm:$0xff] %v3856
        %3865 = vst [vmem:[#allocation2 + $0x100] sm:$0xff] %v3649
        %3866 = vst [vmem:[#allocation2 + $0x108] sm:$0xff] %v3650
        %3867 = vst [vmem:[#allocation2 + $0x110] sm:$0xff] %v3651
        %3868 = vst [vmem:[#allocation2 + $0x118] sm:$0xff] %v3652
        %3869 = vst [vmem:[#allocation2 + $0x120] sm:$0xff] %v3653
        %3870 = vst [vmem:[#allocation2 + $0x128] sm:$0xff] %v3654
        %3871 = vst [vmem:[#allocation2 + $0x130] sm:$0xff] %v3655
        %3872 = vst [vmem:[#allocation2 + $0x138] sm:$0xff] %v3656
        %3873 = vrot.lane.b32.xlu0 %v3649, 127
        %v3874 = vpop.permute.xlu0 %3873
        %3875 = vrot.lane.b32.xlu0 %v3651, 127
        %v3876 = vpop.permute.xlu0 %3875
        %3877 = vrot.lane.b32.xlu0 %v3653, 127
        %v3878 = vpop.permute.xlu0 %3877
        %3879 = vrot.lane.b32.xlu0 %v3655, 127
        %v3880 = vpop.permute.xlu0 %3879
        %3881 = vrot.lane.b32.xlu0 %v3650, 127
        %v3882 = vpop.permute.xlu0 %3881
        %3883 = vrot.lane.b32.xlu0 %v3652, 127
        %v3884 = vpop.permute.xlu0 %3883
        %3885 = vrot.lane.b32.xlu0 %v3654, 127
        %v3886 = vpop.permute.xlu0 %3885
        %3887 = vrot.lane.b32.xlu0 %v3656, 127
        %v3888 = vpop.permute.xlu0 %3887
        %v3889 = vsel %vm1032, %v3874, %v3882
        %v3890 = vsel %vm1032, %v3876, %v3884
        %v3891 = vsel %vm1032, %v3878, %v3886
        %v3892 = vsel %vm1032, %v3880, %v3888
        %v3893 = vsel %vm1032, %v3882, %v3874
        %v3894 = vsel %vm1032, %v3884, %v3876
        %v3895 = vsel %vm1032, %v3886, %v3878
        %v3896 = vsel %vm1032, %v3888, %v3880
        %v3897 = vld [vmem:[%s1035] ss:$8 sm:$0x3]
        %v3899 = vlaneseq
        %v3900 = vshrl.u32 %v3899, 7
        %v3901 = vsub.s32 0, %v3900
        %v3902 = vrot.slane %v3897, %v3901
        %v3903 = vlaneseq
        %v3904 = vshrl.u32 %v3903, 7
        %v3905 = vsub.s32 1, %v3904
        %v3906 = vrot.slane %v3897, %v3905
        %v3909 = vmul.f32 %v3889, %v3902
        %v3910 = vmul.f32 %v3893, %v3906
        %v3911 = vmul.f32 %v3890, %v3902
        %v3912 = vmul.f32 %v3894, %v3906
        %v3913 = vmul.f32 %v3891, %v3902
        %v3914 = vmul.f32 %v3895, %v3906
        %v3915 = vmul.f32 %v3892, %v3902
        %v3916 = vmul.f32 %v3896, %v3906
        %3917 = vst [vmem:[#allocation2 + $0x140] sm:$0xff] %v3909
        %3918 = vst [vmem:[#allocation2 + $0x148] sm:$0xff] %v3910
        %3919 = vst [vmem:[#allocation2 + $0x150] sm:$0xff] %v3911
        %3920 = vst [vmem:[#allocation2 + $0x158] sm:$0xff] %v3912
        %3921 = vst [vmem:[#allocation2 + $0x160] sm:$0xff] %v3913
        %3922 = vst [vmem:[#allocation2 + $0x168] sm:$0xff] %v3914
        %3923 = vst [vmem:[#allocation2 + $0x170] sm:$0xff] %v3915
        %3924 = vst [vmem:[#allocation2 + $0x178] sm:$0xff] %v3916
        %3925 = vrot.lane.b32.xlu0 %v3649, 113
        %v3926 = vpop.permute.xlu0 %3925
        %3927 = vrot.lane.b32.xlu0 %v3651, 113
        %v3928 = vpop.permute.xlu0 %3927
        %3929 = vrot.lane.b32.xlu0 %v3653, 113
        %v3930 = vpop.permute.xlu0 %3929
        %3931 = vrot.lane.b32.xlu0 %v3655, 113
        %v3932 = vpop.permute.xlu0 %3931
        %3933 = vrot.lane.b32.xlu0 %v3650, 113
        %v3934 = vpop.permute.xlu0 %3933
        %3935 = vrot.lane.b32.xlu0 %v3652, 113
        %v3936 = vpop.permute.xlu0 %3935
        %3937 = vrot.lane.b32.xlu0 %v3654, 113
        %v3938 = vpop.permute.xlu0 %3937
        %3939 = vrot.lane.b32.xlu0 %v3656, 113
        %v3940 = vpop.permute.xlu0 %3939
        %v3941 = vsel %vm1066, %v3926, %v3934
        %v3942 = vsel %vm1066, %v3928, %v3936
        %v3943 = vsel %vm1066, %v3930, %v3938
        %v3944 = vsel %vm1066, %v3932, %v3940
        %v3945 = vsel %vm1066, %v3934, %v3926
        %v3946 = vsel %vm1066, %v3936, %v3928
        %v3947 = vsel %vm1066, %v3938, %v3930
        %v3948 = vsel %vm1066, %v3940, %v3932
        %v3949 = vld [vmem:[%s1069] ss:$8 sm:$0x3]
        %v3951 = vlaneseq
        %v3952 = vshrl.u32 %v3951, 7
        %v3953 = vsub.s32 0, %v3952
        %v3954 = vrot.slane %v3949, %v3953
        %v3955 = vlaneseq
        %v3956 = vshrl.u32 %v3955, 7
        %v3957 = vsub.s32 1, %v3956
        %v3958 = vrot.slane %v3949, %v3957
        %v3961 = vmul.f32 %v3941, %v3954
        %v3962 = vmul.f32 %v3945, %v3958
        %v3963 = vmul.f32 %v3942, %v3954
        %v3964 = vmul.f32 %v3946, %v3958
        %v3965 = vmul.f32 %v3943, %v3954
        %v3966 = vmul.f32 %v3947, %v3958
        %v3967 = vmul.f32 %v3944, %v3954
        %v3968 = vmul.f32 %v3948, %v3958
        %3969 = vst [vmem:[#allocation2 + $0x180] sm:$0xff] %v3961
        %3970 = vst [vmem:[#allocation2 + $0x188] sm:$0xff] %v3962
        %3971 = vst [vmem:[#allocation2 + $0x190] sm:$0xff] %v3963
        %3972 = vst [vmem:[#allocation2 + $0x198] sm:$0xff] %v3964
        %3973 = vst [vmem:[#allocation2 + $0x1a0] sm:$0xff] %v3965
        %3974 = vst [vmem:[#allocation2 + $0x1a8] sm:$0xff] %v3966
        %3975 = vst [vmem:[#allocation2 + $0x1b0] sm:$0xff] %v3967
        %3976 = vst [vmem:[#allocation2 + $0x1b8] sm:$0xff] %v3968
        %3977 = vrot.lane.b32.xlu0 %v3649, 112
        %v3978 = vpop.permute.xlu0 %3977
        %3979 = vrot.lane.b32.xlu0 %v3651, 112
        %v3980 = vpop.permute.xlu0 %3979
        %3981 = vrot.lane.b32.xlu0 %v3653, 112
        %v3982 = vpop.permute.xlu0 %3981
        %3983 = vrot.lane.b32.xlu0 %v3655, 112
        %v3984 = vpop.permute.xlu0 %3983
        %3985 = vrot.lane.b32.xlu0 %v3650, 112
        %v3986 = vpop.permute.xlu0 %3985
        %3987 = vrot.lane.b32.xlu0 %v3652, 112
        %v3988 = vpop.permute.xlu0 %3987
        %3989 = vrot.lane.b32.xlu0 %v3654, 112
        %v3990 = vpop.permute.xlu0 %3989
        %3991 = vrot.lane.b32.xlu0 %v3656, 112
        %v3992 = vpop.permute.xlu0 %3991
        %v3993 = vsel %vm1100, %v3978, %v3986
        %v3994 = vsel %vm1100, %v3980, %v3988
        %v3995 = vsel %vm1100, %v3982, %v3990
        %v3996 = vsel %vm1100, %v3984, %v3992
        %v3997 = vsel %vm1100, %v3986, %v3978
        %v3998 = vsel %vm1100, %v3988, %v3980
        %v3999 = vsel %vm1100, %v3990, %v3982
        %v4000 = vsel %vm1100, %v3992, %v3984
        %v4001 = vld [vmem:[%s1103] ss:$8 sm:$0x3]
        %v4003 = vlaneseq
        %v4004 = vshrl.u32 %v4003, 7
        %v4005 = vsub.s32 0, %v4004
        %v4006 = vrot.slane %v4001, %v4005
        %v4007 = vlaneseq
        %v4008 = vshrl.u32 %v4007, 7
        %v4009 = vsub.s32 1, %v4008
        %v4010 = vrot.slane %v4001, %v4009
        %v4013 = vmul.f32 %v3993, %v4006
        %v4014 = vmul.f32 %v3997, %v4010
        %v4015 = vmul.f32 %v3994, %v4006
        %v4016 = vmul.f32 %v3998, %v4010
        %v4017 = vmul.f32 %v3995, %v4006
        %v4018 = vmul.f32 %v3999, %v4010
        %v4019 = vmul.f32 %v3996, %v4006
        %v4020 = vmul.f32 %v4000, %v4010
        %4021 = vst [vmem:[#allocation2 + $0x1c0] sm:$0xff] %v4013
        %4022 = vst [vmem:[#allocation2 + $0x1c8] sm:$0xff] %v4014
        %4023 = vst [vmem:[#allocation2 + $0x1d0] sm:$0xff] %v4015
        %4024 = vst [vmem:[#allocation2 + $0x1d8] sm:$0xff] %v4016
        %4025 = vst [vmem:[#allocation2 + $0x1e0] sm:$0xff] %v4017
        %4026 = vst [vmem:[#allocation2 + $0x1e8] sm:$0xff] %v4018
        %4027 = vst [vmem:[#allocation2 + $0x1f0] sm:$0xff] %v4019
        %4028 = vst [vmem:[#allocation2 + $0x1f8] sm:$0xff] %v4020
        %4029 = vrot.lane.b32.xlu0 %v3649, 111
        %v4030 = vpop.permute.xlu0 %4029
        %4031 = vrot.lane.b32.xlu0 %v3651, 111
        %v4032 = vpop.permute.xlu0 %4031
        %4033 = vrot.lane.b32.xlu0 %v3653, 111
        %v4034 = vpop.permute.xlu0 %4033
        %4035 = vrot.lane.b32.xlu0 %v3655, 111
        %v4036 = vpop.permute.xlu0 %4035
        %4037 = vrot.lane.b32.xlu0 %v3650, 111
        %v4038 = vpop.permute.xlu0 %4037
        %4039 = vrot.lane.b32.xlu0 %v3652, 111
        %v4040 = vpop.permute.xlu0 %4039
        %4041 = vrot.lane.b32.xlu0 %v3654, 111
        %v4042 = vpop.permute.xlu0 %4041
        %4043 = vrot.lane.b32.xlu0 %v3656, 111
        %v4044 = vpop.permute.xlu0 %4043
        %v4045 = vsel %vm1134, %v4030, %v4038
        %v4046 = vsel %vm1134, %v4032, %v4040
        %v4047 = vsel %vm1134, %v4034, %v4042
        %v4048 = vsel %vm1134, %v4036, %v4044
        %v4049 = vsel %vm1134, %v4038, %v4030
        %v4050 = vsel %vm1134, %v4040, %v4032
        %v4051 = vsel %vm1134, %v4042, %v4034
        %v4052 = vsel %vm1134, %v4044, %v4036
        %v4053 = vld [vmem:[%s1137] ss:$8 sm:$0x3]
        %v4055 = vlaneseq
        %v4056 = vshrl.u32 %v4055, 7
        %v4057 = vsub.s32 0, %v4056
        %v4058 = vrot.slane %v4053, %v4057
        %v4059 = vlaneseq
        %v4060 = vshrl.u32 %v4059, 7
        %v4061 = vsub.s32 1, %v4060
        %v4062 = vrot.slane %v4053, %v4061
        %v4065 = vmul.f32 %v4045, %v4058
        %v4066 = vmul.f32 %v4049, %v4062
        %v4067 = vmul.f32 %v4046, %v4058
        %v4068 = vmul.f32 %v4050, %v4062
        %v4069 = vmul.f32 %v4047, %v4058
        %v4070 = vmul.f32 %v4051, %v4062
        %v4071 = vmul.f32 %v4048, %v4058
        %v4072 = vmul.f32 %v4052, %v4062
        %4073 = vst [vmem:[#allocation2 + $0x200] sm:$0xff] %v4065
        %4074 = vst [vmem:[#allocation2 + $0x208] sm:$0xff] %v4066
        %4075 = vst [vmem:[#allocation2 + $0x210] sm:$0xff] %v4067
        %4076 = vst [vmem:[#allocation2 + $0x218] sm:$0xff] %v4068
        %4077 = vst [vmem:[#allocation2 + $0x220] sm:$0xff] %v4069
        %4078 = vst [vmem:[#allocation2 + $0x228] sm:$0xff] %v4070
        %4079 = vst [vmem:[#allocation2 + $0x230] sm:$0xff] %v4071
        %4080 = vst [vmem:[#allocation2 + $0x238] sm:$0xff] %v4072
        %s4081 = scalar_lea.vmem %s5, 384
        %v4082 = vld [vmem:[%s4081] sm:$0xff]
        %v4083 = vld [vmem:[%s4081 + $0x8] sm:$0xff]
        %v4084 = vld [vmem:[%s4081 + $0x10] sm:$0xff]
        %v4085 = vld [vmem:[%s4081 + $0x18] sm:$0xff]
        %v4086 = vld [vmem:[%s4081 + $0x20] sm:$0xff]
        %v4087 = vld [vmem:[%s4081 + $0x28] sm:$0xff]
        %v4088 = vld [vmem:[%s4081 + $0x30] sm:$0xff]
        %v4089 = vld [vmem:[%s4081 + $0x38] sm:$0xff]
        %v4090 = vld [vmem:[%s4081 + $0x40] sm:$0xff]
        %v4091 = vld [vmem:[%s4081 + $0x48] sm:$0xff]
        %v4092 = vld [vmem:[%s4081 + $0x50] sm:$0xff]
        %v4093 = vld [vmem:[%s4081 + $0x58] sm:$0xff]
        %v4094 = vld [vmem:[#allocation2] sm:$0xff]
        %v4095 = vld [vmem:[#allocation2 + $0x8] sm:$0xff]
        %v4096 = vld [vmem:[#allocation2 + $0x10] sm:$0xff]
        %v4097 = vld [vmem:[#allocation2 + $0x18] sm:$0xff]
        %v4098 = vld [vmem:[#allocation2 + $0x20] sm:$0xff]
        %v4099 = vld [vmem:[#allocation2 + $0x28] sm:$0xff]
        %v4100 = vld [vmem:[#allocation2 + $0x30] sm:$0xff]
        %v4101 = vld [vmem:[#allocation2 + $0x38] sm:$0xff]
        %v4102 = vld [vmem:[#allocation2 + $0x40] sm:$0xff]
        %v4103 = vld [vmem:[#allocation2 + $0x48] sm:$0xff]
        %v4104 = vld [vmem:[#allocation2 + $0x50] sm:$0xff]
        %v4105 = vld [vmem:[#allocation2 + $0x58] sm:$0xff]
        %v4106 = vld [vmem:[#allocation2 + $0x60] sm:$0xff]
        %v4107 = vld [vmem:[#allocation2 + $0x68] sm:$0xff]
        %v4108 = vld [vmem:[#allocation2 + $0x70] sm:$0xff]
        %v4109 = vld [vmem:[#allocation2 + $0x78] sm:$0xff]
        %v4110 = vld [vmem:[#allocation2 + $0x80] sm:$0xff]
        %v4111 = vld [vmem:[#allocation2 + $0x88] sm:$0xff]
        %v4112 = vld [vmem:[#allocation2 + $0x90] sm:$0xff]
        %v4113 = vld [vmem:[#allocation2 + $0x98] sm:$0xff]
        %v4114 = vld [vmem:[#allocation2 + $0xa0] sm:$0xff]
        %v4115 = vld [vmem:[#allocation2 + $0xa8] sm:$0xff]
        %v4116 = vld [vmem:[#allocation2 + $0xb0] sm:$0xff]
        %v4117 = vld [vmem:[#allocation2 + $0xb8] sm:$0xff]
        %v4118 = vld [vmem:[#allocation2 + $0xc0] sm:$0xff]
        %v4119 = vld [vmem:[#allocation2 + $0xc8] sm:$0xff]
        %v4120 = vld [vmem:[#allocation2 + $0xd0] sm:$0xff]
        %v4121 = vld [vmem:[#allocation2 + $0xd8] sm:$0xff]
        %v4122 = vld [vmem:[#allocation2 + $0xe0] sm:$0xff]
        %v4123 = vld [vmem:[#allocation2 + $0xe8] sm:$0xff]
        %v4124 = vld [vmem:[#allocation2 + $0xf0] sm:$0xff]
        %v4125 = vld [vmem:[#allocation2 + $0xf8] sm:$0xff]
        %v4126 = vld [vmem:[#allocation2 + $0x100] sm:$0xff]
        %v4127 = vld [vmem:[#allocation2 + $0x108] sm:$0xff]
        %v4128 = vld [vmem:[#allocation2 + $0x110] sm:$0xff]
        %v4129 = vld [vmem:[#allocation2 + $0x118] sm:$0xff]
        %v4130 = vld [vmem:[#allocation2 + $0x120] sm:$0xff]
        %v4131 = vld [vmem:[#allocation2 + $0x128] sm:$0xff]
        %v4132 = vld [vmem:[#allocation2 + $0x130] sm:$0xff]
        %v4133 = vld [vmem:[#allocation2 + $0x138] sm:$0xff]
        %v4134 = vld [vmem:[#allocation2 + $0x140] sm:$0xff]
        %v4135 = vld [vmem:[#allocation2 + $0x148] sm:$0xff]
        %v4136 = vld [vmem:[#allocation2 + $0x150] sm:$0xff]
        %v4137 = vld [vmem:[#allocation2 + $0x158] sm:$0xff]
        %v4138 = vld [vmem:[#allocation2 + $0x160] sm:$0xff]
        %v4139 = vld [vmem:[#allocation2 + $0x168] sm:$0xff]
        %v4140 = vld [vmem:[#allocation2 + $0x170] sm:$0xff]
        %v4141 = vld [vmem:[#allocation2 + $0x178] sm:$0xff]
        %v4142 = vld [vmem:[#allocation2 + $0x180] sm:$0xff]
        %v4143 = vld [vmem:[#allocation2 + $0x188] sm:$0xff]
        %v4144 = vld [vmem:[#allocation2 + $0x190] sm:$0xff]
        %v4145 = vld [vmem:[#allocation2 + $0x198] sm:$0xff]
        %v4146 = vld [vmem:[#allocation2 + $0x1a0] sm:$0xff]
        %v4147 = vld [vmem:[#allocation2 + $0x1a8] sm:$0xff]
        %v4148 = vld [vmem:[#allocation2 + $0x1b0] sm:$0xff]
        %v4149 = vld [vmem:[#allocation2 + $0x1b8] sm:$0xff]
        %v4150 = vld [vmem:[#allocation2 + $0x1c0] sm:$0xff]
        %v4151 = vld [vmem:[#allocation2 + $0x1c8] sm:$0xff]
        %v4152 = vld [vmem:[#allocation2 + $0x1d0] sm:$0xff]
        %v4153 = vld [vmem:[#allocation2 + $0x1d8] sm:$0xff]
        %v4154 = vld [vmem:[#allocation2 + $0x1e0] sm:$0xff]
        %v4155 = vld [vmem:[#allocation2 + $0x1e8] sm:$0xff]
        %v4156 = vld [vmem:[#allocation2 + $0x1f0] sm:$0xff]
        %v4157 = vld [vmem:[#allocation2 + $0x1f8] sm:$0xff]
        %v4158 = vld [vmem:[#allocation2 + $0x200] sm:$0xff]
        %v4159 = vld [vmem:[#allocation2 + $0x208] sm:$0xff]
        %v4160 = vld [vmem:[#allocation2 + $0x210] sm:$0xff]
        %v4161 = vld [vmem:[#allocation2 + $0x218] sm:$0xff]
        %v4162 = vld [vmem:[#allocation2 + $0x220] sm:$0xff]
        %v4163 = vld [vmem:[#allocation2 + $0x228] sm:$0xff]
        %v4164 = vld [vmem:[#allocation2 + $0x230] sm:$0xff]
        %v4165 = vld [vmem:[#allocation2 + $0x238] sm:$0xff]
        %s4166 = scalar_lea.vmem %s6, 128
        %v4167 = vld [vmem:[%s4166] sm:$0xff]
        %v4168 = vld [vmem:[%s4166 + $0x8] sm:$0xff]
        %v4169 = vld [vmem:[%s4166 + $0x10] sm:$0xff]
        %v4170 = vld [vmem:[%s4166 + $0x18] sm:$0xff]
        %4172 = vset.pattern.permute.xlu0 0
        %4173 = vperm.xlu0 %4172, %v4167
        %v4174 = vpop.permute.xlu0 %4173
        %4177 = vset.pattern.permute.xlu0 0
        %4178 = vperm.xlu0 %4177, %v4168
        %v4179 = vpop.permute.xlu0 %4178
        %4182 = vset.pattern.permute.xlu0 0
        %4183 = vperm.xlu0 %4182, %v4169
        %v4184 = vpop.permute.xlu0 %4183
        %4187 = vset.pattern.permute.xlu0 0
        %4188 = vperm.xlu0 %4187, %v4170
        %v4189 = vpop.permute.xlu0 %4188
        %v4192 = vsel %vm1270, %v4084, 0
        %v4195 = vsel %vm1270, %v4087, 0
        %v4198 = vsel %vm1270, %v4090, 0
        %v4201 = vsel %vm1270, %v4093, 0
        %4203 = vmatprep.subr.mxu0 %v4125
        %4204 = vmatpush1.msra.mxu0 %v4124
        %4205 = vmatprep.subr.mxu0 %v4123
        %4206 = vmatpush1.msra.mxu0 %v4122
        %4207 = vmatprep.subr.mxu0 %v4121
        %4208 = vmatpush1.msra.mxu0 %v4120
        %4209 = vmatprep.subr.mxu0 %v4119
        %4210 = vmatpush1.msra.mxu0 %v4118
        %4211 = vmatprep.subr.mxu0 %v4117
        %4212 = vmatpush1.msra.mxu0 %v4116
        %4213 = vmatprep.subr.mxu0 %v4115
        %4214 = vmatpush1.msra.mxu0 %v4114
        %4215 = vmatprep.subr.mxu0 %v4113
        %4216 = vmatpush1.msra.mxu0 %v4112
        %4217 = vmatprep.subr.mxu0 %v4111
        %4218 = vmatpush1.msra.mxu0 %v4110
        %4219 = vmatprep.subr.mxu0 %v4109
        %4220 = vmatpush1.msra.mxu0 %v4108
        %4221 = vmatprep.subr.mxu0 %v4107
        %4222 = vmatpush1.msra.mxu0 %v4106
        %4223 = vmatprep.subr.mxu0 %v4105
        %4224 = vmatpush1.msra.mxu0 %v4104
        %4225 = vmatprep.subr.mxu0 %v4103
        %4226 = vmatpush1.msra.mxu0 %v4102
        %4227 = vmatprep.subr.mxu0 %v4101
        %4228 = vmatpush1.msra.mxu0 %v4100
        %4229 = vmatprep.subr.mxu0 %v4099
        %4230 = vmatpush1.msra.mxu0 %v4098
        %4231 = vmatprep.subr.mxu0 %v4097
        %4232 = vmatpush1.msra.mxu0 %v4096
        %4233 = vmatprep.subr.mxu0 %v4095
        %4234 = vmatpush1.msra.mxu0 %v4094
        %4235 = vmatprep.subr.mxu0 %v4157
        %4236 = vmatpush2.msra.mxu0 %v4156
        %4237 = vmatprep.subr.mxu0 %v4155
        %4238 = vmatpush2.msra.mxu0 %v4154
        %4239 = vmatprep.subr.mxu0 %v4153
        %4240 = vmatpush2.msra.mxu0 %v4152
        %4241 = vmatprep.subr.mxu0 %v4151
        %4242 = vmatpush2.msra.mxu0 %v4150
        %4243 = vmatprep.subr.mxu0 %v4149
        %4244 = vmatpush2.msra.mxu0 %v4148
        %4245 = vmatprep.subr.mxu0 %v4147
        %4246 = vmatpush2.msra.mxu0 %v4146
        %4247 = vmatprep.subr.mxu0 %v4145
        %4248 = vmatpush2.msra.mxu0 %v4144
        %4249 = vmatprep.subr.mxu0 %v4143
        %4250 = vmatpush2.msra.mxu0 %v4142
        %4251 = vmatprep.subr.mxu0 %v4141
        %4252 = vmatpush2.msra.mxu0 %v4140
        %4253 = vmatprep.subr.mxu0 %v4139
        %4254 = vmatpush2.msra.mxu0 %v4138
        %4255 = vmatprep.subr.mxu0 %v4137
        %4256 = vmatpush2.msra.mxu0 %v4136
        %4257 = vmatprep.subr.mxu0 %v4135
        %4258 = vmatpush2.msra.mxu0 %v4134
        %4259 = vmatprep.subr.mxu0 %v4133
        %4260 = vmatpush2.msra.mxu0 %v4132
        %4261 = vmatprep.subr.mxu0 %v4131
        %4262 = vmatpush2.msra.mxu0 %v4130
        %4263 = vmatprep.subr.mxu0 %v4129
        %4264 = vmatpush2.msra.mxu0 %v4128
        %4265 = vmatprep.subr.mxu0 %v4127
        %4266 = vmatpush2.msra.mxu0 %v4126
        %4267 = vmatprep.mubr.f32.mxu0 %v4083
        %4268 = vmatmul.mubr.f32.gmra.mxu0 %v4082
        %v4269 = vpop.f32.mrf.mxu0
        %v4270 = vadd.f32 %v4174, %v4269
        %v4271 = vpop.f32.mrf.mxu0
        %v4272 = vadd.f32 %v4174, %v4271
        %4273 = vmatprep.mubr.f32.mxu0 %v4086
        %4274 = vmatmul.mubr.f32.gmra.mxu0 %v4085
        %v4275 = vpop.f32.mrf.mxu0
        %v4276 = vadd.f32 %v4179, %v4275
        %v4277 = vpop.f32.mrf.mxu0
        %v4278 = vadd.f32 %v4179, %v4277
        %4279 = vmatprep.mubr.f32.mxu0 %v4089
        %4280 = vmatmul.mubr.f32.gmra.mxu0 %v4088
        %v4281 = vpop.f32.mrf.mxu0
        %v4282 = vadd.f32 %v4184, %v4281
        %v4283 = vpop.f32.mrf.mxu0
        %v4284 = vadd.f32 %v4184, %v4283
        %4285 = vmatprep.mubr.f32.mxu0 %v4092
        %4286 = vmatmul.mubr.f32.gmra.mxu0 %v4091
        %v4287 = vpop.f32.mrf.mxu0
        %v4288 = vadd.f32 %v4189, %v4287
        %v4289 = vpop.f32.mrf.mxu0
        %v4290 = vadd.f32 %v4189, %v4289
        %4291 = vdwg.mxu0
        %4292 = vmatprep.subr.mxu0 0.0
        %4293 = vmatpush1.msra.mxu0 0.0
        %4294 = vmatprep.subr.mxu0 0.0
        %4295 = vmatpush1.msra.mxu0 0.0
        %4296 = vmatprep.subr.mxu0 0.0
        %4297 = vmatpush1.msra.mxu0 0.0
        %4298 = vmatprep.subr.mxu0 0.0
        %4299 = vmatpush1.msra.mxu0 0.0
        %4300 = vmatprep.subr.mxu0 0.0
        %4301 = vmatpush1.msra.mxu0 0.0
        %4302 = vmatprep.subr.mxu0 0.0
        %4303 = vmatpush1.msra.mxu0 0.0
        %4304 = vmatprep.subr.mxu0 0.0
        %4305 = vmatpush1.msra.mxu0 0.0
        %4306 = vmatprep.subr.mxu0 0.0
        %4307 = vmatpush1.msra.mxu0 0.0
        %4308 = vmatprep.subr.mxu0 0.0
        %4309 = vmatpush1.msra.mxu0 0.0
        %4310 = vmatprep.subr.mxu0 0.0
        %4311 = vmatpush1.msra.mxu0 0.0
        %4312 = vmatprep.subr.mxu0 0.0
        %4313 = vmatpush1.msra.mxu0 0.0
        %4314 = vmatprep.subr.mxu0 0.0
        %4315 = vmatpush1.msra.mxu0 0.0
        %4316 = vmatprep.subr.mxu0 %v4165
        %4317 = vmatpush1.msra.mxu0 %v4164
        %4318 = vmatprep.subr.mxu0 %v4163
        %4319 = vmatpush1.msra.mxu0 %v4162
        %4320 = vmatprep.subr.mxu0 %v4161
        %4321 = vmatpush1.msra.mxu0 %v4160
        %4322 = vmatprep.subr.mxu0 %v4159
        %4323 = vmatpush1.msra.mxu0 %v4158
        %4324 = vmatprep.subr.mxu0 0.0
        %4325 = vmatpush2.msra.mxu0 0.0
        %4326 = vmatprep.subr.mxu0 0.0
        %4327 = vmatpush2.msra.mxu0 0.0
        %4328 = vmatprep.subr.mxu0 0.0
        %4329 = vmatpush2.msra.mxu0 0.0
        %4330 = vmatprep.subr.mxu0 0.0
        %4331 = vmatpush2.msra.mxu0 0.0
        %4332 = vmatprep.subr.mxu0 0.0
        %4333 = vmatpush2.msra.mxu0 0.0
        %4334 = vmatprep.subr.mxu0 0.0
        %4335 = vmatpush2.msra.mxu0 0.0
        %4336 = vmatprep.subr.mxu0 0.0
        %4337 = vmatpush2.msra.mxu0 0.0
        %4338 = vmatprep.subr.mxu0 0.0
        %4339 = vmatpush2.msra.mxu0 0.0
        %4340 = vmatprep.subr.mxu0 0.0
        %4341 = vmatpush2.msra.mxu0 0.0
        %4342 = vmatprep.subr.mxu0 0.0
        %4343 = vmatpush2.msra.mxu0 0.0
        %4344 = vmatprep.subr.mxu0 0.0
        %4345 = vmatpush2.msra.mxu0 0.0
        %4346 = vmatprep.subr.mxu0 0.0
        %4347 = vmatpush2.msra.mxu0 0.0
        %4348 = vmatprep.subr.mxu0 0.0
        %4349 = vmatpush2.msra.mxu0 0.0
        %4350 = vmatprep.subr.mxu0 0.0
        %4351 = vmatpush2.msra.mxu0 0.0
        %4352 = vmatprep.subr.mxu0 0.0
        %4353 = vmatpush2.msra.mxu0 0.0
        %4354 = vmatprep.subr.mxu0 0.0
        %4355 = vmatpush2.msra.mxu0 0.0
        %4356 = vmatprep.mubr.f32.mxu0 0.0
        %4357 = vmatmul.mubr.f32.gmra.mxu0 %v4192
        %v4358 = vpop.f32.mrf.mxu0
        %v4359 = vadd.f32 %v4270, %v4358
        %v4360 = vpop.f32.mrf.mxu0
        %v4361 = vadd.f32 %v4272, %v4360
        %4362 = vmatprep.mubr.f32.mxu0 0.0
        %4363 = vmatmul.mubr.f32.gmra.mxu0 %v4195
        %v4364 = vpop.f32.mrf.mxu0
        %v4365 = vadd.f32 %v4276, %v4364
        %v4366 = vpop.f32.mrf.mxu0
        %v4367 = vadd.f32 %v4278, %v4366
        %4368 = vmatprep.mubr.f32.mxu0 0.0
        %4369 = vmatmul.mubr.f32.gmra.mxu0 %v4198
        %v4370 = vpop.f32.mrf.mxu0
        %v4371 = vadd.f32 %v4282, %v4370
        %v4372 = vpop.f32.mrf.mxu0
        %v4373 = vadd.f32 %v4284, %v4372
        %4374 = vmatprep.mubr.f32.mxu0 0.0
        %4375 = vmatmul.mubr.f32.gmra.mxu0 %v4201
        %v4376 = vpop.f32.mrf.mxu0
        %v4377 = vadd.f32 %v4288, %v4376
        %v4378 = vpop.f32.mrf.mxu0
        %v4379 = vadd.f32 %v4290, %v4378
        %4380 = vdwg.mxu0
        %v4381 = vadd.f32 %v2917, %v4359
        %v4382 = vadd.f32 %v2918, %v4361
        %v4383 = vadd.f32 %v2919, %v4365
        %v4384 = vadd.f32 %v2920, %v4367
        %v4385 = vadd.f32 %v2921, %v4371
        %v4386 = vadd.f32 %v2922, %v4373
        %v4387 = vadd.f32 %v2923, %v4377
        %v4388 = vadd.f32 %v2924, %v4379
        %4389 = vrot.lane.b32.xlu0 %v4381, 17
        %v4390 = vpop.permute.xlu0 %4389
        %4391 = vrot.lane.b32.xlu0 %v4383, 17
        %v4392 = vpop.permute.xlu0 %4391
        %4393 = vrot.lane.b32.xlu0 %v4385, 17
        %v4394 = vpop.permute.xlu0 %4393
        %4395 = vrot.lane.b32.xlu0 %v4387, 17
        %v4396 = vpop.permute.xlu0 %4395
        %4397 = vrot.lane.b32.xlu0 %v4382, 17
        %v4398 = vpop.permute.xlu0 %4397
        %4399 = vrot.lane.b32.xlu0 %v4384, 17
        %v4400 = vpop.permute.xlu0 %4399
        %4401 = vrot.lane.b32.xlu0 %v4386, 17
        %v4402 = vpop.permute.xlu0 %4401
        %4403 = vrot.lane.b32.xlu0 %v4388, 17
        %v4404 = vpop.permute.xlu0 %4403
        %v4405 = vsel %vm889, %v4390, %v4398
        %v4406 = vsel %vm889, %v4392, %v4400
        %v4407 = vsel %vm889, %v4394, %v4402
        %v4408 = vsel %vm889, %v4396, %v4404
        %v4409 = vsel %vm889, %v4398, %v4390
        %v4410 = vsel %vm889, %v4400, %v4392
        %v4411 = vsel %vm889, %v4402, %v4394
        %v4412 = vsel %vm889, %v4404, %v4396
        %v4413 = vld [vmem:[%s4] ss:$8 sm:$0x3]
        %v4415 = vlaneseq
        %v4416 = vshrl.u32 %v4415, 7
        %v4417 = vsub.s32 0, %v4416
        %v4418 = vrot.slane %v4413, %v4417
        %v4419 = vlaneseq
        %v4420 = vshrl.u32 %v4419, 7
        %v4421 = vsub.s32 1, %v4420
        %v4422 = vrot.slane %v4413, %v4421
        %v4425 = vmul.f32 %v4409, %v4418
        %v4426 = vmul.f32 %v4405, %v4422
        %v4427 = vmul.f32 %v4410, %v4418
        %v4428 = vmul.f32 %v4406, %v4422
        %v4429 = vmul.f32 %v4411, %v4418
        %v4430 = vmul.f32 %v4407, %v4422
        %v4431 = vmul.f32 %v4412, %v4418
        %v4432 = vmul.f32 %v4408, %v4422
        %4433 = vst [vmem:[#allocation2] sm:$0xff] %v4425
        %4434 = vst [vmem:[#allocation2 + $0x8] sm:$0xff] %v4426
        %4435 = vst [vmem:[#allocation2 + $0x10] sm:$0xff] %v4427
        %4436 = vst [vmem:[#allocation2 + $0x18] sm:$0xff] %v4428
        %4437 = vst [vmem:[#allocation2 + $0x20] sm:$0xff] %v4429
        %4438 = vst [vmem:[#allocation2 + $0x28] sm:$0xff] %v4430
        %4439 = vst [vmem:[#allocation2 + $0x30] sm:$0xff] %v4431
        %4440 = vst [vmem:[#allocation2 + $0x38] sm:$0xff] %v4432
        %4441 = vrot.lane.b32.xlu0 %v4381, 16
        %v4442 = vpop.permute.xlu0 %4441
        %4443 = vrot.lane.b32.xlu0 %v4383, 16
        %v4444 = vpop.permute.xlu0 %4443
        %4445 = vrot.lane.b32.xlu0 %v4385, 16
        %v4446 = vpop.permute.xlu0 %4445
        %4447 = vrot.lane.b32.xlu0 %v4387, 16
        %v4448 = vpop.permute.xlu0 %4447
        %4449 = vrot.lane.b32.xlu0 %v4382, 16
        %v4450 = vpop.permute.xlu0 %4449
        %4451 = vrot.lane.b32.xlu0 %v4384, 16
        %v4452 = vpop.permute.xlu0 %4451
        %4453 = vrot.lane.b32.xlu0 %v4386, 16
        %v4454 = vpop.permute.xlu0 %4453
        %4455 = vrot.lane.b32.xlu0 %v4388, 16
        %v4456 = vpop.permute.xlu0 %4455
        %v4457 = vsel %vm922, %v4442, %v4450
        %v4458 = vsel %vm922, %v4444, %v4452
        %v4459 = vsel %vm922, %v4446, %v4454
        %v4460 = vsel %vm922, %v4448, %v4456
        %v4461 = vsel %vm922, %v4450, %v4442
        %v4462 = vsel %vm922, %v4452, %v4444
        %v4463 = vsel %vm922, %v4454, %v4446
        %v4464 = vsel %vm922, %v4456, %v4448
        %v4465 = vld [vmem:[%s925] ss:$8 sm:$0x3]
        %v4467 = vlaneseq
        %v4468 = vshrl.u32 %v4467, 7
        %v4469 = vsub.s32 0, %v4468
        %v4470 = vrot.slane %v4465, %v4469
        %v4471 = vlaneseq
        %v4472 = vshrl.u32 %v4471, 7
        %v4473 = vsub.s32 1, %v4472
        %v4474 = vrot.slane %v4465, %v4473
        %v4477 = vmul.f32 %v4461, %v4470
        %v4478 = vmul.f32 %v4457, %v4474
        %v4479 = vmul.f32 %v4462, %v4470
        %v4480 = vmul.f32 %v4458, %v4474
        %v4481 = vmul.f32 %v4463, %v4470
        %v4482 = vmul.f32 %v4459, %v4474
        %v4483 = vmul.f32 %v4464, %v4470
        %v4484 = vmul.f32 %v4460, %v4474
        %4485 = vst [vmem:[#allocation2 + $0x40] sm:$0xff] %v4477
        %4486 = vst [vmem:[#allocation2 + $0x48] sm:$0xff] %v4478
        %4487 = vst [vmem:[#allocation2 + $0x50] sm:$0xff] %v4479
        %4488 = vst [vmem:[#allocation2 + $0x58] sm:$0xff] %v4480
        %4489 = vst [vmem:[#allocation2 + $0x60] sm:$0xff] %v4481
        %4490 = vst [vmem:[#allocation2 + $0x68] sm:$0xff] %v4482
        %4491 = vst [vmem:[#allocation2 + $0x70] sm:$0xff] %v4483
        %4492 = vst [vmem:[#allocation2 + $0x78] sm:$0xff] %v4484
        %4493 = vrot.lane.b32.xlu0 %v4381, 15
        %v4494 = vpop.permute.xlu0 %4493
        %4495 = vrot.lane.b32.xlu0 %v4383, 15
        %v4496 = vpop.permute.xlu0 %4495
        %4497 = vrot.lane.b32.xlu0 %v4385, 15
        %v4498 = vpop.permute.xlu0 %4497
        %4499 = vrot.lane.b32.xlu0 %v4387, 15
        %v4500 = vpop.permute.xlu0 %4499
        %4501 = vrot.lane.b32.xlu0 %v4382, 15
        %v4502 = vpop.permute.xlu0 %4501
        %4503 = vrot.lane.b32.xlu0 %v4384, 15
        %v4504 = vpop.permute.xlu0 %4503
        %4505 = vrot.lane.b32.xlu0 %v4386, 15
        %v4506 = vpop.permute.xlu0 %4505
        %4507 = vrot.lane.b32.xlu0 %v4388, 15
        %v4508 = vpop.permute.xlu0 %4507
        %v4509 = vsel %vm956, %v4494, %v4502
        %v4510 = vsel %vm956, %v4496, %v4504
        %v4511 = vsel %vm956, %v4498, %v4506
        %v4512 = vsel %vm956, %v4500, %v4508
        %v4513 = vsel %vm956, %v4502, %v4494
        %v4514 = vsel %vm956, %v4504, %v4496
        %v4515 = vsel %vm956, %v4506, %v4498
        %v4516 = vsel %vm956, %v4508, %v4500
        %v4517 = vld [vmem:[%s959] ss:$8 sm:$0x3]
        %v4519 = vlaneseq
        %v4520 = vshrl.u32 %v4519, 7
        %v4521 = vsub.s32 0, %v4520
        %v4522 = vrot.slane %v4517, %v4521
        %v4523 = vlaneseq
        %v4524 = vshrl.u32 %v4523, 7
        %v4525 = vsub.s32 1, %v4524
        %v4526 = vrot.slane %v4517, %v4525
        %v4529 = vmul.f32 %v4513, %v4522
        %v4530 = vmul.f32 %v4509, %v4526
        %v4531 = vmul.f32 %v4514, %v4522
        %v4532 = vmul.f32 %v4510, %v4526
        %v4533 = vmul.f32 %v4515, %v4522
        %v4534 = vmul.f32 %v4511, %v4526
        %v4535 = vmul.f32 %v4516, %v4522
        %v4536 = vmul.f32 %v4512, %v4526
        %4537 = vst [vmem:[#allocation2 + $0x80] sm:$0xff] %v4529
        %4538 = vst [vmem:[#allocation2 + $0x88] sm:$0xff] %v4530
        %4539 = vst [vmem:[#allocation2 + $0x90] sm:$0xff] %v4531
        %4540 = vst [vmem:[#allocation2 + $0x98] sm:$0xff] %v4532
        %4541 = vst [vmem:[#allocation2 + $0xa0] sm:$0xff] %v4533
        %4542 = vst [vmem:[#allocation2 + $0xa8] sm:$0xff] %v4534
        %4543 = vst [vmem:[#allocation2 + $0xb0] sm:$0xff] %v4535
        %4544 = vst [vmem:[#allocation2 + $0xb8] sm:$0xff] %v4536
        %4545 = vrot.lane.b32.xlu0 %v4381, 1
        %v4546 = vpop.permute.xlu0 %4545
        %4547 = vrot.lane.b32.xlu0 %v4383, 1
        %v4548 = vpop.permute.xlu0 %4547
        %4549 = vrot.lane.b32.xlu0 %v4385, 1
        %v4550 = vpop.permute.xlu0 %4549
        %4551 = vrot.lane.b32.xlu0 %v4387, 1
        %v4552 = vpop.permute.xlu0 %4551
        %4553 = vrot.lane.b32.xlu0 %v4382, 1
        %v4554 = vpop.permute.xlu0 %4553
        %4555 = vrot.lane.b32.xlu0 %v4384, 1
        %v4556 = vpop.permute.xlu0 %4555
        %4557 = vrot.lane.b32.xlu0 %v4386, 1
        %v4558 = vpop.permute.xlu0 %4557
        %4559 = vrot.lane.b32.xlu0 %v4388, 1
        %v4560 = vpop.permute.xlu0 %4559
        %v4561 = vsel %vm990, %v4546, %v4554
        %v4562 = vsel %vm990, %v4548, %v4556
        %v4563 = vsel %vm990, %v4550, %v4558
        %v4564 = vsel %vm990, %v4552, %v4560
        %v4565 = vsel %vm990, %v4554, %v4546
        %v4566 = vsel %vm990, %v4556, %v4548
        %v4567 = vsel %vm990, %v4558, %v4550
        %v4568 = vsel %vm990, %v4560, %v4552
        %v4569 = vld [vmem:[%s993] ss:$8 sm:$0x3]
        %v4571 = vlaneseq
        %v4572 = vshrl.u32 %v4571, 7
        %v4573 = vsub.s32 0, %v4572
        %v4574 = vrot.slane %v4569, %v4573
        %v4575 = vlaneseq
        %v4576 = vshrl.u32 %v4575, 7
        %v4577 = vsub.s32 1, %v4576
        %v4578 = vrot.slane %v4569, %v4577
        %v4581 = vmul.f32 %v4565, %v4574
        %v4582 = vmul.f32 %v4561, %v4578
        %v4583 = vmul.f32 %v4566, %v4574
        %v4584 = vmul.f32 %v4562, %v4578
        %v4585 = vmul.f32 %v4567, %v4574
        %v4586 = vmul.f32 %v4563, %v4578
        %v4587 = vmul.f32 %v4568, %v4574
        %v4588 = vmul.f32 %v4564, %v4578
        %4589 = vst [vmem:[#allocation2 + $0xc0] sm:$0xff] %v4581
        %4590 = vst [vmem:[#allocation2 + $0xc8] sm:$0xff] %v4582
        %4591 = vst [vmem:[#allocation2 + $0xd0] sm:$0xff] %v4583
        %4592 = vst [vmem:[#allocation2 + $0xd8] sm:$0xff] %v4584
        %4593 = vst [vmem:[#allocation2 + $0xe0] sm:$0xff] %v4585
        %4594 = vst [vmem:[#allocation2 + $0xe8] sm:$0xff] %v4586
        %4595 = vst [vmem:[#allocation2 + $0xf0] sm:$0xff] %v4587
        %4596 = vst [vmem:[#allocation2 + $0xf8] sm:$0xff] %v4588
        %4597 = vst [vmem:[#allocation2 + $0x100] sm:$0xff] %v4381
        %4598 = vst [vmem:[#allocation2 + $0x108] sm:$0xff] %v4382
        %4599 = vst [vmem:[#allocation2 + $0x110] sm:$0xff] %v4383
        %4600 = vst [vmem:[#allocation2 + $0x118] sm:$0xff] %v4384
        %4601 = vst [vmem:[#allocation2 + $0x120] sm:$0xff] %v4385
        %4602 = vst [vmem:[#allocation2 + $0x128] sm:$0xff] %v4386
        %4603 = vst [vmem:[#allocation2 + $0x130] sm:$0xff] %v4387
        %4604 = vst [vmem:[#allocation2 + $0x138] sm:$0xff] %v4388
        %4605 = vrot.lane.b32.xlu0 %v4381, 127
        %v4606 = vpop.permute.xlu0 %4605
        %4607 = vrot.lane.b32.xlu0 %v4383, 127
        %v4608 = vpop.permute.xlu0 %4607
        %4609 = vrot.lane.b32.xlu0 %v4385, 127
        %v4610 = vpop.permute.xlu0 %4609
        %4611 = vrot.lane.b32.xlu0 %v4387, 127
        %v4612 = vpop.permute.xlu0 %4611
        %4613 = vrot.lane.b32.xlu0 %v4382, 127
        %v4614 = vpop.permute.xlu0 %4613
        %4615 = vrot.lane.b32.xlu0 %v4384, 127
        %v4616 = vpop.permute.xlu0 %4615
        %4617 = vrot.lane.b32.xlu0 %v4386, 127
        %v4618 = vpop.permute.xlu0 %4617
        %4619 = vrot.lane.b32.xlu0 %v4388, 127
        %v4620 = vpop.permute.xlu0 %4619
        %v4621 = vsel %vm1032, %v4606, %v4614
        %v4622 = vsel %vm1032, %v4608, %v4616
        %v4623 = vsel %vm1032, %v4610, %v4618
        %v4624 = vsel %vm1032, %v4612, %v4620
        %v4625 = vsel %vm1032, %v4614, %v4606
        %v4626 = vsel %vm1032, %v4616, %v4608
        %v4627 = vsel %vm1032, %v4618, %v4610
        %v4628 = vsel %vm1032, %v4620, %v4612
        %v4629 = vld [vmem:[%s1035] ss:$8 sm:$0x3]
        %v4631 = vlaneseq
        %v4632 = vshrl.u32 %v4631, 7
        %v4633 = vsub.s32 0, %v4632
        %v4634 = vrot.slane %v4629, %v4633
        %v4635 = vlaneseq
        %v4636 = vshrl.u32 %v4635, 7
        %v4637 = vsub.s32 1, %v4636
        %v4638 = vrot.slane %v4629, %v4637
        %v4641 = vmul.f32 %v4621, %v4634
        %v4642 = vmul.f32 %v4625, %v4638
        %v4643 = vmul.f32 %v4622, %v4634
        %v4644 = vmul.f32 %v4626, %v4638
        %v4645 = vmul.f32 %v4623, %v4634
        %v4646 = vmul.f32 %v4627, %v4638
        %v4647 = vmul.f32 %v4624, %v4634
        %v4648 = vmul.f32 %v4628, %v4638
        %4649 = vst [vmem:[#allocation2 + $0x140] sm:$0xff] %v4641
        %4650 = vst [vmem:[#allocation2 + $0x148] sm:$0xff] %v4642
        %4651 = vst [vmem:[#allocation2 + $0x150] sm:$0xff] %v4643
        %4652 = vst [vmem:[#allocation2 + $0x158] sm:$0xff] %v4644
        %4653 = vst [vmem:[#allocation2 + $0x160] sm:$0xff] %v4645
        %4654 = vst [vmem:[#allocation2 + $0x168] sm:$0xff] %v4646
        %4655 = vst [vmem:[#allocation2 + $0x170] sm:$0xff] %v4647
        %4656 = vst [vmem:[#allocation2 + $0x178] sm:$0xff] %v4648
        %4657 = vrot.lane.b32.xlu0 %v4381, 113
        %v4658 = vpop.permute.xlu0 %4657
        %4659 = vrot.lane.b32.xlu0 %v4383, 113
        %v4660 = vpop.permute.xlu0 %4659
        %4661 = vrot.lane.b32.xlu0 %v4385, 113
        %v4662 = vpop.permute.xlu0 %4661
        %4663 = vrot.lane.b32.xlu0 %v4387, 113
        %v4664 = vpop.permute.xlu0 %4663
        %4665 = vrot.lane.b32.xlu0 %v4382, 113
        %v4666 = vpop.permute.xlu0 %4665
        %4667 = vrot.lane.b32.xlu0 %v4384, 113
        %v4668 = vpop.permute.xlu0 %4667
        %4669 = vrot.lane.b32.xlu0 %v4386, 113
        %v4670 = vpop.permute.xlu0 %4669
        %4671 = vrot.lane.b32.xlu0 %v4388, 113
        %v4672 = vpop.permute.xlu0 %4671
        %v4673 = vsel %vm1066, %v4658, %v4666
        %v4674 = vsel %vm1066, %v4660, %v4668
        %v4675 = vsel %vm1066, %v4662, %v4670
        %v4676 = vsel %vm1066, %v4664, %v4672
        %v4677 = vsel %vm1066, %v4666, %v4658
        %v4678 = vsel %vm1066, %v4668, %v4660
        %v4679 = vsel %vm1066, %v4670, %v4662
        %v4680 = vsel %vm1066, %v4672, %v4664
        %v4681 = vld [vmem:[%s1069] ss:$8 sm:$0x3]
        %v4683 = vlaneseq
        %v4684 = vshrl.u32 %v4683, 7
        %v4685 = vsub.s32 0, %v4684
        %v4686 = vrot.slane %v4681, %v4685
        %v4687 = vlaneseq
        %v4688 = vshrl.u32 %v4687, 7
        %v4689 = vsub.s32 1, %v4688
        %v4690 = vrot.slane %v4681, %v4689
        %v4693 = vmul.f32 %v4673, %v4686
        %v4694 = vmul.f32 %v4677, %v4690
        %v4695 = vmul.f32 %v4674, %v4686
        %v4696 = vmul.f32 %v4678, %v4690
        %v4697 = vmul.f32 %v4675, %v4686
        %v4698 = vmul.f32 %v4679, %v4690
        %v4699 = vmul.f32 %v4676, %v4686
        %v4700 = vmul.f32 %v4680, %v4690
        %4701 = vst [vmem:[#allocation2 + $0x180] sm:$0xff] %v4693
        %4702 = vst [vmem:[#allocation2 + $0x188] sm:$0xff] %v4694
        %4703 = vst [vmem:[#allocation2 + $0x190] sm:$0xff] %v4695
        %4704 = vst [vmem:[#allocation2 + $0x198] sm:$0xff] %v4696
        %4705 = vst [vmem:[#allocation2 + $0x1a0] sm:$0xff] %v4697
        %4706 = vst [vmem:[#allocation2 + $0x1a8] sm:$0xff] %v4698
        %4707 = vst [vmem:[#allocation2 + $0x1b0] sm:$0xff] %v4699
        %4708 = vst [vmem:[#allocation2 + $0x1b8] sm:$0xff] %v4700
        %4709 = vrot.lane.b32.xlu0 %v4381, 112
        %v4710 = vpop.permute.xlu0 %4709
        %4711 = vrot.lane.b32.xlu0 %v4383, 112
        %v4712 = vpop.permute.xlu0 %4711
        %4713 = vrot.lane.b32.xlu0 %v4385, 112
        %v4714 = vpop.permute.xlu0 %4713
        %4715 = vrot.lane.b32.xlu0 %v4387, 112
        %v4716 = vpop.permute.xlu0 %4715
        %4717 = vrot.lane.b32.xlu0 %v4382, 112
        %v4718 = vpop.permute.xlu0 %4717
        %4719 = vrot.lane.b32.xlu0 %v4384, 112
        %v4720 = vpop.permute.xlu0 %4719
        %4721 = vrot.lane.b32.xlu0 %v4386, 112
        %v4722 = vpop.permute.xlu0 %4721
        %4723 = vrot.lane.b32.xlu0 %v4388, 112
        %v4724 = vpop.permute.xlu0 %4723
        %v4725 = vsel %vm1100, %v4710, %v4718
        %v4726 = vsel %vm1100, %v4712, %v4720
        %v4727 = vsel %vm1100, %v4714, %v4722
        %v4728 = vsel %vm1100, %v4716, %v4724
        %v4729 = vsel %vm1100, %v4718, %v4710
        %v4730 = vsel %vm1100, %v4720, %v4712
        %v4731 = vsel %vm1100, %v4722, %v4714
        %v4732 = vsel %vm1100, %v4724, %v4716
        %v4733 = vld [vmem:[%s1103] ss:$8 sm:$0x3]
        %v4735 = vlaneseq
        %v4736 = vshrl.u32 %v4735, 7
        %v4737 = vsub.s32 0, %v4736
        %v4738 = vrot.slane %v4733, %v4737
        %v4739 = vlaneseq
        %v4740 = vshrl.u32 %v4739, 7
        %v4741 = vsub.s32 1, %v4740
        %v4742 = vrot.slane %v4733, %v4741
        %v4745 = vmul.f32 %v4725, %v4738
        %v4746 = vmul.f32 %v4729, %v4742
        %v4747 = vmul.f32 %v4726, %v4738
        %v4748 = vmul.f32 %v4730, %v4742
        %v4749 = vmul.f32 %v4727, %v4738
        %v4750 = vmul.f32 %v4731, %v4742
        %v4751 = vmul.f32 %v4728, %v4738
        %v4752 = vmul.f32 %v4732, %v4742
        %4753 = vst [vmem:[#allocation2 + $0x1c0] sm:$0xff] %v4745
        %4754 = vst [vmem:[#allocation2 + $0x1c8] sm:$0xff] %v4746
        %4755 = vst [vmem:[#allocation2 + $0x1d0] sm:$0xff] %v4747
        %4756 = vst [vmem:[#allocation2 + $0x1d8] sm:$0xff] %v4748
        %4757 = vst [vmem:[#allocation2 + $0x1e0] sm:$0xff] %v4749
        %4758 = vst [vmem:[#allocation2 + $0x1e8] sm:$0xff] %v4750
        %4759 = vst [vmem:[#allocation2 + $0x1f0] sm:$0xff] %v4751
        %4760 = vst [vmem:[#allocation2 + $0x1f8] sm:$0xff] %v4752
        %4761 = vrot.lane.b32.xlu0 %v4381, 111
        %v4762 = vpop.permute.xlu0 %4761
        %4763 = vrot.lane.b32.xlu0 %v4383, 111
        %v4764 = vpop.permute.xlu0 %4763
        %4765 = vrot.lane.b32.xlu0 %v4385, 111
        %v4766 = vpop.permute.xlu0 %4765
        %4767 = vrot.lane.b32.xlu0 %v4387, 111
        %v4768 = vpop.permute.xlu0 %4767
        %4769 = vrot.lane.b32.xlu0 %v4382, 111
        %v4770 = vpop.permute.xlu0 %4769
        %4771 = vrot.lane.b32.xlu0 %v4384, 111
        %v4772 = vpop.permute.xlu0 %4771
        %4773 = vrot.lane.b32.xlu0 %v4386, 111
        %v4774 = vpop.permute.xlu0 %4773
        %4775 = vrot.lane.b32.xlu0 %v4388, 111
        %v4776 = vpop.permute.xlu0 %4775
        %v4777 = vsel %vm1134, %v4762, %v4770
        %v4778 = vsel %vm1134, %v4764, %v4772
        %v4779 = vsel %vm1134, %v4766, %v4774
        %v4780 = vsel %vm1134, %v4768, %v4776
        %v4781 = vsel %vm1134, %v4770, %v4762
        %v4782 = vsel %vm1134, %v4772, %v4764
        %v4783 = vsel %vm1134, %v4774, %v4766
        %v4784 = vsel %vm1134, %v4776, %v4768
        %v4785 = vld [vmem:[%s1137] ss:$8 sm:$0x3]
        %v4787 = vlaneseq
        %v4788 = vshrl.u32 %v4787, 7
        %v4789 = vsub.s32 0, %v4788
        %v4790 = vrot.slane %v4785, %v4789
        %v4791 = vlaneseq
        %v4792 = vshrl.u32 %v4791, 7
        %v4793 = vsub.s32 1, %v4792
        %v4794 = vrot.slane %v4785, %v4793
        %v4797 = vmul.f32 %v4777, %v4790
        %v4798 = vmul.f32 %v4781, %v4794
        %v4799 = vmul.f32 %v4778, %v4790
        %v4800 = vmul.f32 %v4782, %v4794
        %v4801 = vmul.f32 %v4779, %v4790
        %v4802 = vmul.f32 %v4783, %v4794
        %v4803 = vmul.f32 %v4780, %v4790
        %v4804 = vmul.f32 %v4784, %v4794
        %4805 = vst [vmem:[#allocation2 + $0x200] sm:$0xff] %v4797
        %4806 = vst [vmem:[#allocation2 + $0x208] sm:$0xff] %v4798
        %4807 = vst [vmem:[#allocation2 + $0x210] sm:$0xff] %v4799
        %4808 = vst [vmem:[#allocation2 + $0x218] sm:$0xff] %v4800
        %4809 = vst [vmem:[#allocation2 + $0x220] sm:$0xff] %v4801
        %4810 = vst [vmem:[#allocation2 + $0x228] sm:$0xff] %v4802
        %4811 = vst [vmem:[#allocation2 + $0x230] sm:$0xff] %v4803
        %4812 = vst [vmem:[#allocation2 + $0x238] sm:$0xff] %v4804
        %s4813 = scalar_lea.vmem %s5, 480
        %v4814 = vld [vmem:[%s4813] sm:$0xff]
        %v4815 = vld [vmem:[%s4813 + $0x8] sm:$0xff]
        %v4816 = vld [vmem:[%s4813 + $0x10] sm:$0xff]
        %v4817 = vld [vmem:[%s4813 + $0x18] sm:$0xff]
        %v4818 = vld [vmem:[%s4813 + $0x20] sm:$0xff]
        %v4819 = vld [vmem:[%s4813 + $0x28] sm:$0xff]
        %v4820 = vld [vmem:[%s4813 + $0x30] sm:$0xff]
        %v4821 = vld [vmem:[%s4813 + $0x38] sm:$0xff]
        %v4822 = vld [vmem:[%s4813 + $0x40] sm:$0xff]
        %v4823 = vld [vmem:[%s4813 + $0x48] sm:$0xff]
        %v4824 = vld [vmem:[%s4813 + $0x50] sm:$0xff]
        %v4825 = vld [vmem:[%s4813 + $0x58] sm:$0xff]
        %v4826 = vld [vmem:[#allocation2] sm:$0xff]
        %v4827 = vld [vmem:[#allocation2 + $0x8] sm:$0xff]
        %v4828 = vld [vmem:[#allocation2 + $0x10] sm:$0xff]
        %v4829 = vld [vmem:[#allocation2 + $0x18] sm:$0xff]
        %v4830 = vld [vmem:[#allocation2 + $0x20] sm:$0xff]
        %v4831 = vld [vmem:[#allocation2 + $0x28] sm:$0xff]
        %v4832 = vld [vmem:[#allocation2 + $0x30] sm:$0xff]
        %v4833 = vld [vmem:[#allocation2 + $0x38] sm:$0xff]
        %v4834 = vld [vmem:[#allocation2 + $0x40] sm:$0xff]
        %v4835 = vld [vmem:[#allocation2 + $0x48] sm:$0xff]
        %v4836 = vld [vmem:[#allocation2 + $0x50] sm:$0xff]
        %v4837 = vld [vmem:[#allocation2 + $0x58] sm:$0xff]
        %v4838 = vld [vmem:[#allocation2 + $0x60] sm:$0xff]
        %v4839 = vld [vmem:[#allocation2 + $0x68] sm:$0xff]
        %v4840 = vld [vmem:[#allocation2 + $0x70] sm:$0xff]
        %v4841 = vld [vmem:[#allocation2 + $0x78] sm:$0xff]
        %v4842 = vld [vmem:[#allocation2 + $0x80] sm:$0xff]
        %v4843 = vld [vmem:[#allocation2 + $0x88] sm:$0xff]
        %v4844 = vld [vmem:[#allocation2 + $0x90] sm:$0xff]
        %v4845 = vld [vmem:[#allocation2 + $0x98] sm:$0xff]
        %v4846 = vld [vmem:[#allocation2 + $0xa0] sm:$0xff]
        %v4847 = vld [vmem:[#allocation2 + $0xa8] sm:$0xff]
        %v4848 = vld [vmem:[#allocation2 + $0xb0] sm:$0xff]
        %v4849 = vld [vmem:[#allocation2 + $0xb8] sm:$0xff]
        %v4850 = vld [vmem:[#allocation2 + $0xc0] sm:$0xff]
        %v4851 = vld [vmem:[#allocation2 + $0xc8] sm:$0xff]
        %v4852 = vld [vmem:[#allocation2 + $0xd0] sm:$0xff]
        %v4853 = vld [vmem:[#allocation2 + $0xd8] sm:$0xff]
        %v4854 = vld [vmem:[#allocation2 + $0xe0] sm:$0xff]
        %v4855 = vld [vmem:[#allocation2 + $0xe8] sm:$0xff]
        %v4856 = vld [vmem:[#allocation2 + $0xf0] sm:$0xff]
        %v4857 = vld [vmem:[#allocation2 + $0xf8] sm:$0xff]
        %v4858 = vld [vmem:[#allocation2 + $0x100] sm:$0xff]
        %v4859 = vld [vmem:[#allocation2 + $0x108] sm:$0xff]
        %v4860 = vld [vmem:[#allocation2 + $0x110] sm:$0xff]
        %v4861 = vld [vmem:[#allocation2 + $0x118] sm:$0xff]
        %v4862 = vld [vmem:[#allocation2 + $0x120] sm:$0xff]
        %v4863 = vld [vmem:[#allocation2 + $0x128] sm:$0xff]
        %v4864 = vld [vmem:[#allocation2 + $0x130] sm:$0xff]
        %v4865 = vld [vmem:[#allocation2 + $0x138] sm:$0xff]
        %v4866 = vld [vmem:[#allocation2 + $0x140] sm:$0xff]
        %v4867 = vld [vmem:[#allocation2 + $0x148] sm:$0xff]
        %v4868 = vld [vmem:[#allocation2 + $0x150] sm:$0xff]
        %v4869 = vld [vmem:[#allocation2 + $0x158] sm:$0xff]
        %v4870 = vld [vmem:[#allocation2 + $0x160] sm:$0xff]
        %v4871 = vld [vmem:[#allocation2 + $0x168] sm:$0xff]
        %v4872 = vld [vmem:[#allocation2 + $0x170] sm:$0xff]
        %v4873 = vld [vmem:[#allocation2 + $0x178] sm:$0xff]
        %v4874 = vld [vmem:[#allocation2 + $0x180] sm:$0xff]
        %v4875 = vld [vmem:[#allocation2 + $0x188] sm:$0xff]
        %v4876 = vld [vmem:[#allocation2 + $0x190] sm:$0xff]
        %v4877 = vld [vmem:[#allocation2 + $0x198] sm:$0xff]
        %v4878 = vld [vmem:[#allocation2 + $0x1a0] sm:$0xff]
        %v4879 = vld [vmem:[#allocation2 + $0x1a8] sm:$0xff]
        %v4880 = vld [vmem:[#allocation2 + $0x1b0] sm:$0xff]
        %v4881 = vld [vmem:[#allocation2 + $0x1b8] sm:$0xff]
        %v4882 = vld [vmem:[#allocation2 + $0x1c0] sm:$0xff]
        %v4883 = vld [vmem:[#allocation2 + $0x1c8] sm:$0xff]
        %v4884 = vld [vmem:[#allocation2 + $0x1d0] sm:$0xff]
        %v4885 = vld [vmem:[#allocation2 + $0x1d8] sm:$0xff]
        %v4886 = vld [vmem:[#allocation2 + $0x1e0] sm:$0xff]
        %v4887 = vld [vmem:[#allocation2 + $0x1e8] sm:$0xff]
        %v4888 = vld [vmem:[#allocation2 + $0x1f0] sm:$0xff]
        %v4889 = vld [vmem:[#allocation2 + $0x1f8] sm:$0xff]
        %v4890 = vld [vmem:[#allocation2 + $0x200] sm:$0xff]
        %v4891 = vld [vmem:[#allocation2 + $0x208] sm:$0xff]
        %v4892 = vld [vmem:[#allocation2 + $0x210] sm:$0xff]
        %v4893 = vld [vmem:[#allocation2 + $0x218] sm:$0xff]
        %v4894 = vld [vmem:[#allocation2 + $0x220] sm:$0xff]
        %v4895 = vld [vmem:[#allocation2 + $0x228] sm:$0xff]
        %v4896 = vld [vmem:[#allocation2 + $0x230] sm:$0xff]
        %v4897 = vld [vmem:[#allocation2 + $0x238] sm:$0xff]
        %s4898 = scalar_lea.vmem %s6, 160
        %v4899 = vld [vmem:[%s4898] sm:$0xff]
        %v4900 = vld [vmem:[%s4898 + $0x8] sm:$0xff]
        %v4901 = vld [vmem:[%s4898 + $0x10] sm:$0xff]
        %v4902 = vld [vmem:[%s4898 + $0x18] sm:$0xff]
        %4904 = vset.pattern.permute.xlu0 0
        %4905 = vperm.xlu0 %4904, %v4899
        %v4906 = vpop.permute.xlu0 %4905
        %4909 = vset.pattern.permute.xlu0 0
        %4910 = vperm.xlu0 %4909, %v4900
        %v4911 = vpop.permute.xlu0 %4910
        %4914 = vset.pattern.permute.xlu0 0
        %4915 = vperm.xlu0 %4914, %v4901
        %v4916 = vpop.permute.xlu0 %4915
        %4919 = vset.pattern.permute.xlu0 0
        %4920 = vperm.xlu0 %4919, %v4902
        %v4921 = vpop.permute.xlu0 %4920
        %v4924 = vsel %vm1270, %v4816, 0
        %v4927 = vsel %vm1270, %v4819, 0
        %v4930 = vsel %vm1270, %v4822, 0
        %v4933 = vsel %vm1270, %v4825, 0
        %4935 = vmatprep.subr.mxu0 %v4857
        %4936 = vmatpush1.msra.mxu0 %v4856
        %4937 = vmatprep.subr.mxu0 %v4855
        %4938 = vmatpush1.msra.mxu0 %v4854
        %4939 = vmatprep.subr.mxu0 %v4853
        %4940 = vmatpush1.msra.mxu0 %v4852
        %4941 = vmatprep.subr.mxu0 %v4851
        %4942 = vmatpush1.msra.mxu0 %v4850
        %4943 = vmatprep.subr.mxu0 %v4849
        %4944 = vmatpush1.msra.mxu0 %v4848
        %4945 = vmatprep.subr.mxu0 %v4847
        %4946 = vmatpush1.msra.mxu0 %v4846
        %4947 = vmatprep.subr.mxu0 %v4845
        %4948 = vmatpush1.msra.mxu0 %v4844
        %4949 = vmatprep.subr.mxu0 %v4843
        %4950 = vmatpush1.msra.mxu0 %v4842
        %4951 = vmatprep.subr.mxu0 %v4841
        %4952 = vmatpush1.msra.mxu0 %v4840
        %4953 = vmatprep.subr.mxu0 %v4839
        %4954 = vmatpush1.msra.mxu0 %v4838
        %4955 = vmatprep.subr.mxu0 %v4837
        %4956 = vmatpush1.msra.mxu0 %v4836
        %4957 = vmatprep.subr.mxu0 %v4835
        %4958 = vmatpush1.msra.mxu0 %v4834
        %4959 = vmatprep.subr.mxu0 %v4833
        %4960 = vmatpush1.msra.mxu0 %v4832
        %4961 = vmatprep.subr.mxu0 %v4831
        %4962 = vmatpush1.msra.mxu0 %v4830
        %4963 = vmatprep.subr.mxu0 %v4829
        %4964 = vmatpush1.msra.mxu0 %v4828
        %4965 = vmatprep.subr.mxu0 %v4827
        %4966 = vmatpush1.msra.mxu0 %v4826
        %4967 = vmatprep.subr.mxu0 %v4889
        %4968 = vmatpush2.msra.mxu0 %v4888
        %4969 = vmatprep.subr.mxu0 %v4887
        %4970 = vmatpush2.msra.mxu0 %v4886
        %4971 = vmatprep.subr.mxu0 %v4885
        %4972 = vmatpush2.msra.mxu0 %v4884
        %4973 = vmatprep.subr.mxu0 %v4883
        %4974 = vmatpush2.msra.mxu0 %v4882
        %4975 = vmatprep.subr.mxu0 %v4881
        %4976 = vmatpush2.msra.mxu0 %v4880
        %4977 = vmatprep.subr.mxu0 %v4879
        %4978 = vmatpush2.msra.mxu0 %v4878
        %4979 = vmatprep.subr.mxu0 %v4877
        %4980 = vmatpush2.msra.mxu0 %v4876
        %4981 = vmatprep.subr.mxu0 %v4875
        %4982 = vmatpush2.msra.mxu0 %v4874
        %4983 = vmatprep.subr.mxu0 %v4873
        %4984 = vmatpush2.msra.mxu0 %v4872
        %4985 = vmatprep.subr.mxu0 %v4871
        %4986 = vmatpush2.msra.mxu0 %v4870
        %4987 = vmatprep.subr.mxu0 %v4869
        %4988 = vmatpush2.msra.mxu0 %v4868
        %4989 = vmatprep.subr.mxu0 %v4867
        %4990 = vmatpush2.msra.mxu0 %v4866
        %4991 = vmatprep.subr.mxu0 %v4865
        %4992 = vmatpush2.msra.mxu0 %v4864
        %4993 = vmatprep.subr.mxu0 %v4863
        %4994 = vmatpush2.msra.mxu0 %v4862
        %4995 = vmatprep.subr.mxu0 %v4861
        %4996 = vmatpush2.msra.mxu0 %v4860
        %4997 = vmatprep.subr.mxu0 %v4859
        %4998 = vmatpush2.msra.mxu0 %v4858
        %4999 = vmatprep.mubr.f32.mxu0 %v4815
        %5000 = vmatmul.mubr.f32.gmra.mxu0 %v4814
        %v5001 = vpop.f32.mrf.mxu0
        %v5002 = vadd.f32 %v4906, %v5001
        %v5003 = vpop.f32.mrf.mxu0
        %v5004 = vadd.f32 %v4906, %v5003
        %5005 = vmatprep.mubr.f32.mxu0 %v4818
        %5006 = vmatmul.mubr.f32.gmra.mxu0 %v4817
        %v5007 = vpop.f32.mrf.mxu0
        %v5008 = vadd.f32 %v4911, %v5007
        %v5009 = vpop.f32.mrf.mxu0
        %v5010 = vadd.f32 %v4911, %v5009
        %5011 = vmatprep.mubr.f32.mxu0 %v4821
        %5012 = vmatmul.mubr.f32.gmra.mxu0 %v4820
        %v5013 = vpop.f32.mrf.mxu0
        %v5014 = vadd.f32 %v4916, %v5013
        %v5015 = vpop.f32.mrf.mxu0
        %v5016 = vadd.f32 %v4916, %v5015
        %5017 = vmatprep.mubr.f32.mxu0 %v4824
        %5018 = vmatmul.mubr.f32.gmra.mxu0 %v4823
        %v5019 = vpop.f32.mrf.mxu0
        %v5020 = vadd.f32 %v4921, %v5019
        %v5021 = vpop.f32.mrf.mxu0
        %v5022 = vadd.f32 %v4921, %v5021
        %5023 = vdwg.mxu0
        %5024 = vmatprep.subr.mxu0 0.0
        %5025 = vmatpush1.msra.mxu0 0.0
        %5026 = vmatprep.subr.mxu0 0.0
        %5027 = vmatpush1.msra.mxu0 0.0
        %5028 = vmatprep.subr.mxu0 0.0
        %5029 = vmatpush1.msra.mxu0 0.0
        %5030 = vmatprep.subr.mxu0 0.0
        %5031 = vmatpush1.msra.mxu0 0.0
        %5032 = vmatprep.subr.mxu0 0.0
        %5033 = vmatpush1.msra.mxu0 0.0
        %5034 = vmatprep.subr.mxu0 0.0
        %5035 = vmatpush1.msra.mxu0 0.0
        %5036 = vmatprep.subr.mxu0 0.0
        %5037 = vmatpush1.msra.mxu0 0.0
        %5038 = vmatprep.subr.mxu0 0.0
        %5039 = vmatpush1.msra.mxu0 0.0
        %5040 = vmatprep.subr.mxu0 0.0
        %5041 = vmatpush1.msra.mxu0 0.0
        %5042 = vmatprep.subr.mxu0 0.0
        %5043 = vmatpush1.msra.mxu0 0.0
        %5044 = vmatprep.subr.mxu0 0.0
        %5045 = vmatpush1.msra.mxu0 0.0
        %5046 = vmatprep.subr.mxu0 0.0
        %5047 = vmatpush1.msra.mxu0 0.0
        %5048 = vmatprep.subr.mxu0 %v4897
        %5049 = vmatpush1.msra.mxu0 %v4896
        %5050 = vmatprep.subr.mxu0 %v4895
        %5051 = vmatpush1.msra.mxu0 %v4894
        %5052 = vmatprep.subr.mxu0 %v4893
        %5053 = vmatpush1.msra.mxu0 %v4892
        %5054 = vmatprep.subr.mxu0 %v4891
        %5055 = vmatpush1.msra.mxu0 %v4890
        %5056 = vmatprep.subr.mxu0 0.0
        %5057 = vmatpush2.msra.mxu0 0.0
        %5058 = vmatprep.subr.mxu0 0.0
        %5059 = vmatpush2.msra.mxu0 0.0
        %5060 = vmatprep.subr.mxu0 0.0
        %5061 = vmatpush2.msra.mxu0 0.0
        %5062 = vmatprep.subr.mxu0 0.0
        %5063 = vmatpush2.msra.mxu0 0.0
        %5064 = vmatprep.subr.mxu0 0.0
        %5065 = vmatpush2.msra.mxu0 0.0
        %5066 = vmatprep.subr.mxu0 0.0
        %5067 = vmatpush2.msra.mxu0 0.0
        %5068 = vmatprep.subr.mxu0 0.0
        %5069 = vmatpush2.msra.mxu0 0.0
        %5070 = vmatprep.subr.mxu0 0.0
        %5071 = vmatpush2.msra.mxu0 0.0
        %5072 = vmatprep.subr.mxu0 0.0
        %5073 = vmatpush2.msra.mxu0 0.0
        %5074 = vmatprep.subr.mxu0 0.0
        %5075 = vmatpush2.msra.mxu0 0.0
        %5076 = vmatprep.subr.mxu0 0.0
        %5077 = vmatpush2.msra.mxu0 0.0
        %5078 = vmatprep.subr.mxu0 0.0
        %5079 = vmatpush2.msra.mxu0 0.0
        %5080 = vmatprep.subr.mxu0 0.0
        %5081 = vmatpush2.msra.mxu0 0.0
        %5082 = vmatprep.subr.mxu0 0.0
        %5083 = vmatpush2.msra.mxu0 0.0
        %5084 = vmatprep.subr.mxu0 0.0
        %5085 = vmatpush2.msra.mxu0 0.0
        %5086 = vmatprep.subr.mxu0 0.0
        %5087 = vmatpush2.msra.mxu0 0.0
        %5088 = vmatprep.mubr.f32.mxu0 0.0
        %5089 = vmatmul.mubr.f32.gmra.mxu0 %v4924
        %v5090 = vpop.f32.mrf.mxu0
        %v5091 = vadd.f32 %v5002, %v5090
        %v5092 = vpop.f32.mrf.mxu0
        %v5093 = vadd.f32 %v5004, %v5092
        %5094 = vmatprep.mubr.f32.mxu0 0.0
        %5095 = vmatmul.mubr.f32.gmra.mxu0 %v4927
        %v5096 = vpop.f32.mrf.mxu0
        %v5097 = vadd.f32 %v5008, %v5096
        %v5098 = vpop.f32.mrf.mxu0
        %v5099 = vadd.f32 %v5010, %v5098
        %5100 = vmatprep.mubr.f32.mxu0 0.0
        %5101 = vmatmul.mubr.f32.gmra.mxu0 %v4930
        %v5102 = vpop.f32.mrf.mxu0
        %v5103 = vadd.f32 %v5014, %v5102
        %v5104 = vpop.f32.mrf.mxu0
        %v5105 = vadd.f32 %v5016, %v5104
        %5106 = vmatprep.mubr.f32.mxu0 0.0
        %5107 = vmatmul.mubr.f32.gmra.mxu0 %v4933
        %v5108 = vpop.f32.mrf.mxu0
        %v5109 = vadd.f32 %v5020, %v5108
        %v5110 = vpop.f32.mrf.mxu0
        %v5111 = vadd.f32 %v5022, %v5110
        %5112 = vdwg.mxu0
        %v5113 = vadd.f32 %v5091, %v1439
        %v5114 = vadd.f32 %v5093, %v1441
        %v5115 = vadd.f32 %v5097, %v1445
        %v5116 = vadd.f32 %v5099, %v1447
        %v5117 = vadd.f32 %v5103, %v1451
        %v5118 = vadd.f32 %v5105, %v1453
        %v5119 = vadd.f32 %v5109, %v1457
        %v5120 = vadd.f32 %v5111, %v1459
        %v5121 = vadd.f32 %v5113, %v5115
        %v5122 = vadd.f32 %v5121, %v5117
        %v5123 = vadd.f32 %v5122, %v5119
        %v5124 = vrot.slane %v5123, 4
        %v5125 = vadd.f32 %v5123, %v5124
        %v5126 = vrot.slane %v5125, 2
        %v5127 = vadd.f32 %v5125, %v5126
        %v5128 = vrot.slane %v5127, 1
        %v5129 = vadd.f32 %v5127, %v5128
        %v5130 = vadd.f32 %v5114, %v5116
        %v5131 = vadd.f32 %v5130, %v5118
        %v5132 = vadd.f32 %v5131, %v5120
        %v5133 = vrot.slane %v5132, 4
        %v5134 = vadd.f32 %v5132, %v5133
        %v5135 = vrot.slane %v5134, 2
        %v5136 = vadd.f32 %v5134, %v5135
        %v5137 = vrot.slane %v5136, 1
        %v5138 = vadd.f32 %v5136, %v5137
        %v5139 = vrcp.pop 32.0
        %v5140 = vmul.f32 %v5129, %v5139
        %v5141 = vmul.f32 %v5138, %v5139
        %v5142 = vsub.f32 %v5113, %v5140
        %v5143 = vsub.f32 %v5114, %v5141
        %v5144 = vsub.f32 %v5115, %v5140
        %v5145 = vsub.f32 %v5116, %v5141
        %v5146 = vsub.f32 %v5117, %v5140
        %v5147 = vsub.f32 %v5118, %v5141
        %v5148 = vsub.f32 %v5119, %v5140
        %v5149 = vsub.f32 %v5120, %v5141
        %v5150 = vmul.f32 %v5142, %v5142
        %v5151 = vmul.f32 %v5143, %v5143
        %v5152 = vmul.f32 %v5144, %v5144
        %v5153 = vmul.f32 %v5145, %v5145
        %v5154 = vmul.f32 %v5146, %v5146
        %v5155 = vmul.f32 %v5147, %v5147
        %v5156 = vmul.f32 %v5148, %v5148
        %v5157 = vmul.f32 %v5149, %v5149
        %v5158 = vadd.f32 %v5150, %v5152
        %v5159 = vadd.f32 %v5158, %v5154
        %v5160 = vadd.f32 %v5159, %v5156
        %v5161 = vrot.slane %v5160, 4
        %v5162 = vadd.f32 %v5160, %v5161
        %v5163 = vrot.slane %v5162, 2
        %v5164 = vadd.f32 %v5162, %v5163
        %v5165 = vrot.slane %v5164, 1
        %v5166 = vadd.f32 %v5164, %v5165
        %v5167 = vadd.f32 %v5151, %v5153
        %v5168 = vadd.f32 %v5167, %v5155
        %v5169 = vadd.f32 %v5168, %v5157
        %v5170 = vrot.slane %v5169, 4
        %v5171 = vadd.f32 %v5169, %v5170
        %v5172 = vrot.slane %v5171, 2
        %v5173 = vadd.f32 %v5171, %v5172
        %v5174 = vrot.slane %v5173, 1
        %v5175 = vadd.f32 %v5173, %v5174
        %v5176 = vmul.f32 %v5166, %v5139
        %v5177 = vmul.f32 %v5175, %v5139
        %v5178 = vadd.f32 %v5176, 1e-05
        %v5179 = vadd.f32 %v5177, 1e-05
        %v5180 = vrsqrt.pop %v5178
        %v5181 = vrsqrt.pop %v5179
        %v5182 = vmul.f32 %v5142, %v5180
        %v5183 = vmul.f32 %v5143, %v5181
        %v5184 = vmul.f32 %v5144, %v5180
        %v5185 = vmul.f32 %v5145, %v5181
        %v5186 = vmul.f32 %v5146, %v5180
        %v5187 = vmul.f32 %v5147, %v5181
        %v5188 = vmul.f32 %v5148, %v5180
        %v5189 = vmul.f32 %v5149, %v5181
        %v5190 = vld [vmem:[%s9] sm:$0xff]
        %v5191 = vld [vmem:[%s9 + $0x8] sm:$0xff]
        %v5192 = vld [vmem:[%s9 + $0x10] sm:$0xff]
        %v5193 = vld [vmem:[%s9 + $0x18] sm:$0xff]
        %5195 = vset.pattern.permute.xlu0 0
        %5196 = vperm.xlu0 %5195, %v5190
        %v5197 = vpop.permute.xlu0 %5196
        %5200 = vset.pattern.permute.xlu0 0
        %5201 = vperm.xlu0 %5200, %v5191
        %v5202 = vpop.permute.xlu0 %5201
        %5205 = vset.pattern.permute.xlu0 0
        %5206 = vperm.xlu0 %5205, %v5192
        %v5207 = vpop.permute.xlu0 %5206
        %5210 = vset.pattern.permute.xlu0 0
        %5211 = vperm.xlu0 %5210, %v5193
        %v5212 = vpop.permute.xlu0 %5211
        %v5214 = vmul.f32 %v5182, %v5197
        %v5215 = vmul.f32 %v5183, %v5197
        %v5216 = vmul.f32 %v5184, %v5202
        %v5217 = vmul.f32 %v5185, %v5202
        %v5218 = vmul.f32 %v5186, %v5207
        %v5219 = vmul.f32 %v5187, %v5207
        %v5220 = vmul.f32 %v5188, %v5212
        %v5221 = vmul.f32 %v5189, %v5212
        %v5222 = vld [vmem:[%s10] sm:$0xff]
        %v5223 = vld [vmem:[%s10 + $0x8] sm:$0xff]
        %v5224 = vld [vmem:[%s10 + $0x10] sm:$0xff]
        %v5225 = vld [vmem:[%s10 + $0x18] sm:$0xff]
        %5227 = vset.pattern.permute.xlu0 0
        %5228 = vperm.xlu0 %5227, %v5222
        %v5229 = vpop.permute.xlu0 %5228
        %5232 = vset.pattern.permute.xlu0 0
        %5233 = vperm.xlu0 %5232, %v5223
        %v5234 = vpop.permute.xlu0 %5233
        %5237 = vset.pattern.permute.xlu0 0
        %5238 = vperm.xlu0 %5237, %v5224
        %v5239 = vpop.permute.xlu0 %5238
        %5242 = vset.pattern.permute.xlu0 0
        %5243 = vperm.xlu0 %5242, %v5225
        %v5244 = vpop.permute.xlu0 %5243
        %v5246 = vadd.f32 %v5214, %v5229
        %v5247 = vadd.f32 %v5215, %v5229
        %v5248 = vadd.f32 %v5216, %v5234
        %v5249 = vadd.f32 %v5217, %v5234
        %v5250 = vadd.f32 %v5218, %v5239
        %v5251 = vadd.f32 %v5219, %v5239
        %v5252 = vadd.f32 %v5220, %v5244
        %v5253 = vadd.f32 %v5221, %v5244
        %v5254 = vld [vmem:[%s15] sm:$0xff]
        %v5255 = vld [vmem:[%s15 + $0x8] sm:$0xff]
        %v5256 = vld [vmem:[%s15 + $0x10] sm:$0xff]
        %v5257 = vld [vmem:[%s15 + $0x18] sm:$0xff]
        %v5258 = vld [vmem:[%s15 + $0x20] sm:$0xff]
        %v5259 = vld [vmem:[%s15 + $0x28] sm:$0xff]
        %v5260 = vld [vmem:[%s15 + $0x30] sm:$0xff]
        %v5261 = vld [vmem:[%s15 + $0x38] sm:$0xff]
        %v5262 = vld [vmem:[%s16] sm:$0xff]
        %v5263 = vld [vmem:[%s16 + $0x8] sm:$0xff]
        %v5264 = vld [vmem:[%s16 + $0x10] sm:$0xff]
        %v5265 = vld [vmem:[%s16 + $0x18] sm:$0xff]
        %v5266 = vld [vmem:[%s16 + $0x20] sm:$0xff]
        %v5267 = vld [vmem:[%s16 + $0x28] sm:$0xff]
        %v5268 = vld [vmem:[%s16 + $0x30] sm:$0xff]
        %v5269 = vld [vmem:[%s16 + $0x38] sm:$0xff]
        %5271 = vset.pattern.permute.xlu0 0
        %5272 = vperm.xlu0 %5271, %v5262
        %v5273 = vpop.permute.xlu0 %5272
        %5276 = vset.pattern.permute.xlu0 0
        %5277 = vperm.xlu0 %5276, %v5263
        %v5278 = vpop.permute.xlu0 %5277
        %5281 = vset.pattern.permute.xlu0 0
        %5282 = vperm.xlu0 %5281, %v5264
        %v5283 = vpop.permute.xlu0 %5282
        %5286 = vset.pattern.permute.xlu0 0
        %5287 = vperm.xlu0 %5286, %v5265
        %v5288 = vpop.permute.xlu0 %5287
        %5291 = vset.pattern.permute.xlu0 0
        %5292 = vperm.xlu0 %5291, %v5266
        %v5293 = vpop.permute.xlu0 %5292
        %5296 = vset.pattern.permute.xlu0 0
        %5297 = vperm.xlu0 %5296, %v5267
        %v5298 = vpop.permute.xlu0 %5297
        %5301 = vset.pattern.permute.xlu0 0
        %5302 = vperm.xlu0 %5301, %v5268
        %v5303 = vpop.permute.xlu0 %5302
        %5306 = vset.pattern.permute.xlu0 0
        %5307 = vperm.xlu0 %5306, %v5269
        %v5308 = vpop.permute.xlu0 %5307
        %v5311 = vsel %vm1270, %v5254, 0
        %v5314 = vsel %vm1270, %v5255, 0
        %v5317 = vsel %vm1270, %v5256, 0
        %v5320 = vsel %vm1270, %v5257, 0
        %v5323 = vsel %vm1270, %v5258, 0
        %v5326 = vsel %vm1270, %v5259, 0
        %v5329 = vsel %vm1270, %v5260, 0
        %v5332 = vsel %vm1270, %v5261, 0
        %5334 = vmatprep.subr.mxu0 0.0
        %5335 = vmatpush1.msra.mxu0 0.0
        %5336 = vmatprep.subr.mxu0 0.0
        %5337 = vmatpush1.msra.mxu0 0.0
        %5338 = vmatprep.subr.mxu0 0.0
        %5339 = vmatpush1.msra.mxu0 0.0
        %5340 = vmatprep.subr.mxu0 0.0
        %5341 = vmatpush1.msra.mxu0 0.0
        %5342 = vmatprep.subr.mxu0 0.0
        %5343 = vmatpush1.msra.mxu0 0.0
        %5344 = vmatprep.subr.mxu0 0.0
        %5345 = vmatpush1.msra.mxu0 0.0
        %5346 = vmatprep.subr.mxu0 0.0
        %5347 = vmatpush1.msra.mxu0 0.0
        %5348 = vmatprep.subr.mxu0 0.0
        %5349 = vmatpush1.msra.mxu0 0.0
        %5350 = vmatprep.subr.mxu0 0.0
        %5351 = vmatpush1.msra.mxu0 0.0
        %5352 = vmatprep.subr.mxu0 0.0
        %5353 = vmatpush1.msra.mxu0 0.0
        %5354 = vmatprep.subr.mxu0 0.0
        %5355 = vmatpush1.msra.mxu0 0.0
        %5356 = vmatprep.subr.mxu0 0.0
        %5357 = vmatpush1.msra.mxu0 0.0
        %5358 = vmatprep.subr.mxu0 %v5253
        %5359 = vmatpush1.msra.mxu0 %v5252
        %5360 = vmatprep.subr.mxu0 %v5251
        %5361 = vmatpush1.msra.mxu0 %v5250
        %5362 = vmatprep.subr.mxu0 %v5249
        %5363 = vmatpush1.msra.mxu0 %v5248
        %5364 = vmatprep.subr.mxu0 %v5247
        %5365 = vmatpush1.msra.mxu0 %v5246
        %5366 = vmatprep.subr.mxu0 0.0
        %5367 = vmatpush2.msra.mxu0 0.0
        %5368 = vmatprep.subr.mxu0 0.0
        %5369 = vmatpush2.msra.mxu0 0.0
        %5370 = vmatprep.subr.mxu0 0.0
        %5371 = vmatpush2.msra.mxu0 0.0
        %5372 = vmatprep.subr.mxu0 0.0
        %5373 = vmatpush2.msra.mxu0 0.0
        %5374 = vmatprep.subr.mxu0 0.0
        %5375 = vmatpush2.msra.mxu0 0.0
        %5376 = vmatprep.subr.mxu0 0.0
        %5377 = vmatpush2.msra.mxu0 0.0
        %5378 = vmatprep.subr.mxu0 0.0
        %5379 = vmatpush2.msra.mxu0 0.0
        %5380 = vmatprep.subr.mxu0 0.0
        %5381 = vmatpush2.msra.mxu0 0.0
        %5382 = vmatprep.subr.mxu0 0.0
        %5383 = vmatpush2.msra.mxu0 0.0
        %5384 = vmatprep.subr.mxu0 0.0
        %5385 = vmatpush2.msra.mxu0 0.0
        %5386 = vmatprep.subr.mxu0 0.0
        %5387 = vmatpush2.msra.mxu0 0.0
        %5388 = vmatprep.subr.mxu0 0.0
        %5389 = vmatpush2.msra.mxu0 0.0
        %5390 = vmatprep.subr.mxu0 0.0
        %5391 = vmatpush2.msra.mxu0 0.0
        %5392 = vmatprep.subr.mxu0 0.0
        %5393 = vmatpush2.msra.mxu0 0.0
        %5394 = vmatprep.subr.mxu0 0.0
        %5395 = vmatpush2.msra.mxu0 0.0
        %5396 = vmatprep.subr.mxu0 0.0
        %5397 = vmatpush2.msra.mxu0 0.0
        %5398 = vmatprep.mubr.f32.mxu0 0.0
        %5399 = vmatmul.mubr.f32.gmra.mxu0 %v5311
        %v5400 = vpop.f32.mrf.mxu0
        %v5401 = vadd.f32 %v5273, %v5400
        %v5402 = vpop.f32.mrf.mxu0
        %v5403 = vadd.f32 %v5273, %v5402
        %5404 = vmatprep.mubr.f32.mxu0 0.0
        %5405 = vmatmul.mubr.f32.gmra.mxu0 %v5314
        %v5406 = vpop.f32.mrf.mxu0
        %v5407 = vadd.f32 %v5278, %v5406
        %v5408 = vpop.f32.mrf.mxu0
        %v5409 = vadd.f32 %v5278, %v5408
        %5410 = vmatprep.mubr.f32.mxu0 0.0
        %5411 = vmatmul.mubr.f32.gmra.mxu0 %v5317
        %v5412 = vpop.f32.mrf.mxu0
        %v5413 = vadd.f32 %v5283, %v5412
        %v5414 = vpop.f32.mrf.mxu0
        %v5415 = vadd.f32 %v5283, %v5414
        %5416 = vmatprep.mubr.f32.mxu0 0.0
        %5417 = vmatmul.mubr.f32.gmra.mxu0 %v5320
        %v5418 = vpop.f32.mrf.mxu0
        %v5419 = vadd.f32 %v5288, %v5418
        %v5420 = vpop.f32.mrf.mxu0
        %v5421 = vadd.f32 %v5288, %v5420
        %5422 = vmatprep.mubr.f32.mxu0 0.0
        %5423 = vmatmul.mubr.f32.gmra.mxu0 %v5323
        %v5424 = vpop.f32.mrf.mxu0
        %v5425 = vadd.f32 %v5293, %v5424
        %v5426 = vpop.f32.mrf.mxu0
        %v5427 = vadd.f32 %v5293, %v5426
        %5428 = vmatprep.mubr.f32.mxu0 0.0
        %5429 = vmatmul.mubr.f32.gmra.mxu0 %v5326
        %v5430 = vpop.f32.mrf.mxu0
        %v5431 = vadd.f32 %v5298, %v5430
        %v5432 = vpop.f32.mrf.mxu0
        %v5433 = vadd.f32 %v5298, %v5432
        %5434 = vmatprep.mubr.f32.mxu0 0.0
        %5435 = vmatmul.mubr.f32.gmra.mxu0 %v5329
        %v5436 = vpop.f32.mrf.mxu0
        %v5437 = vadd.f32 %v5303, %v5436
        %v5438 = vpop.f32.mrf.mxu0
        %v5439 = vadd.f32 %v5303, %v5438
        %5440 = vmatprep.mubr.f32.mxu0 0.0
        %5441 = vmatmul.mubr.f32.gmra.mxu0 %v5332
        %v5442 = vpop.f32.mrf.mxu0
        %v5443 = vadd.f32 %v5308, %v5442
        %v5444 = vpop.f32.mrf.mxu0
        %v5445 = vadd.f32 %v5308, %v5444
        %5446 = vdwg.mxu0
        %v5447 = vld [vmem:[%s7] sm:$0xff]
        %v5448 = vld [vmem:[%s7 + $0x8] sm:$0xff]
        %v5449 = vld [vmem:[%s7 + $0x10] sm:$0xff]
        %v5450 = vld [vmem:[%s7 + $0x18] sm:$0xff]
        %v5451 = vld [vmem:[%s8] sm:$0xff]
        %v5452 = vld [vmem:[%s8 + $0x8] sm:$0xff]
        %v5453 = vld [vmem:[%s8 + $0x10] sm:$0xff]
        %v5454 = vld [vmem:[%s8 + $0x18] sm:$0xff]
        %v5455 = vld [vmem:[%s2] sm:$0x1]
        %v5456 = vld [vmem:[%s3] sm:$0x1]
        %v5457 = vld [vmem:[%s868] sm:$0xff]
        %v5459 = vlaneseq
        %v5460 = vshrl.u32 %v5459, 7
        %v5461 = vsub.s32 0, %v5460
        %v5462 = vrot.slane %v5456, %v5461
        %v5464 = vmul.f32 %v5462, %v5457
        %v5466 = vlaneseq
        %v5467 = vshrl.u32 %v5466, 7
        %v5468 = vsub.s32 0, %v5467
        %v5469 = vrot.slane %v5455, %v5468
        %v5471 = vadd.f32 %v5469, %v5464
        %v5472 = vld [vmem:[%s11] sm:$0x1]
        %v5473 = vld [vmem:[%s12] sm:$0x1]
        %v5474 = vsel %vm1270, %v5471, 0.0
        %5475 = vadd.xlane.f32.xlu0 %v5474
        %v5476 = vpop.xlane.xlu0 %5475
        %v5477 = vmul.f32 %v5476, %v5139
        %v5478 = vsub.f32 %v5471, %v5477
        %v5479 = vmul.f32 %v5478, %v5478
        %v5480 = vsel %vm1270, %v5479, 0.0
        %5481 = vadd.xlane.f32.xlu0 %v5480
        %v5482 = vpop.xlane.xlu0 %5481
        %v5483 = vmul.f32 %v5482, %v5139
        %v5484 = vadd.f32 %v5483, 1e-05
        %v5485 = vrsqrt.pop %v5484
        %v5486 = vmul.f32 %v5478, %v5485
        %v5488 = vlaneseq
        %v5489 = vshrl.u32 %v5488, 7
        %v5490 = vsub.s32 0, %v5489
        %v5491 = vrot.slane %v5472, %v5490
        %v5493 = vmul.f32 %v5486, %v5491
        %v5495 = vlaneseq
        %v5496 = vshrl.u32 %v5495, 7
        %v5497 = vsub.s32 0, %v5496
        %v5498 = vrot.slane %v5473, %v5497
        %v5500 = vadd.f32 %v5493, %v5498
        %v5501 = vld [vmem:[%s17] sm:$0xff]
        %v5502 = vld [vmem:[%s17 + $0x8] sm:$0xff]
        %v5503 = vld [vmem:[%s17 + $0x10] sm:$0xff]
        %v5504 = vld [vmem:[%s17 + $0x18] sm:$0xff]
        %v5505 = vld [vmem:[%s18] sm:$0x1]
        %v5507 = vlaneseq
        %v5508 = vshrl.u32 %v5507, 7
        %v5509 = vsub.s32 0, %v5508
        %v5510 = vrot.slane %v5505, %v5509
        %v5513 = vsel %vm1270, %v5500, 0
        %5515 = vmatprep.subr.mxu0 0.0
        %5516 = vmatpush1.msra.mxu0 0.0
        %5517 = vmatprep.subr.mxu0 0.0
        %5518 = vmatpush1.msra.mxu0 0.0
        %5519 = vmatprep.subr.mxu0 0.0
        %5520 = vmatpush1.msra.mxu0 0.0
        %5521 = vmatprep.subr.mxu0 0.0
        %5522 = vmatpush1.msra.mxu0 0.0
        %5523 = vmatprep.subr.mxu0 0.0
        %5524 = vmatpush1.msra.mxu0 0.0
        %5525 = vmatprep.subr.mxu0 0.0
        %5526 = vmatpush1.msra.mxu0 0.0
        %5527 = vmatprep.subr.mxu0 0.0
        %5528 = vmatpush1.msra.mxu0 0.0
        %5529 = vmatprep.subr.mxu0 0.0
        %5530 = vmatpush1.msra.mxu0 0.0
        %5531 = vmatprep.subr.mxu0 0.0
        %5532 = vmatpush1.msra.mxu0 0.0
        %5533 = vmatprep.subr.mxu0 0.0
        %5534 = vmatpush1.msra.mxu0 0.0
        %5535 = vmatprep.subr.mxu0 0.0
        %5536 = vmatpush1.msra.mxu0 0.0
        %5537 = vmatprep.subr.mxu0 0.0
        %5538 = vmatpush1.msra.mxu0 0.0
        %5539 = vmatprep.subr.mxu0 0.0
        %5540 = vmatpush1.msra.mxu0 %v5504
        %5541 = vmatprep.subr.mxu0 0.0
        %5542 = vmatpush1.msra.mxu0 %v5503
        %5543 = vmatprep.subr.mxu0 0.0
        %5544 = vmatpush1.msra.mxu0 %v5502
        %5545 = vmatprep.subr.mxu0 0.0
        %5546 = vmatpush1.msra.mxu0 %v5501
        %5547 = vmatprep.subr.mxu0 0.0
        %5548 = vmatpush2.msra.mxu0 0.0
        %5549 = vmatprep.subr.mxu0 0.0
        %5550 = vmatpush2.msra.mxu0 0.0
        %5551 = vmatprep.subr.mxu0 0.0
        %5552 = vmatpush2.msra.mxu0 0.0
        %5553 = vmatprep.subr.mxu0 0.0
        %5554 = vmatpush2.msra.mxu0 0.0
        %5555 = vmatprep.subr.mxu0 0.0
        %5556 = vmatpush2.msra.mxu0 0.0
        %5557 = vmatprep.subr.mxu0 0.0
        %5558 = vmatpush2.msra.mxu0 0.0
        %5559 = vmatprep.subr.mxu0 0.0
        %5560 = vmatpush2.msra.mxu0 0.0
        %5561 = vmatprep.subr.mxu0 0.0
        %5562 = vmatpush2.msra.mxu0 0.0
        %5563 = vmatprep.subr.mxu0 0.0
        %5564 = vmatpush2.msra.mxu0 0.0
        %5565 = vmatprep.subr.mxu0 0.0
        %5566 = vmatpush2.msra.mxu0 0.0
        %5567 = vmatprep.subr.mxu0 0.0
        %5568 = vmatpush2.msra.mxu0 0.0
        %5569 = vmatprep.subr.mxu0 0.0
        %5570 = vmatpush2.msra.mxu0 0.0
        %5571 = vmatprep.subr.mxu0 0.0
        %5572 = vmatpush2.msra.mxu0 0.0
        %5573 = vmatprep.subr.mxu0 0.0
        %5574 = vmatpush2.msra.mxu0 0.0
        %5575 = vmatprep.subr.mxu0 0.0
        %5576 = vmatpush2.msra.mxu0 0.0
        %5577 = vmatprep.subr.mxu0 0.0
        %5578 = vmatpush2.msra.mxu0 0.0
        %5579 = vmatprep.mubr.f32.mxu0 0.0
        %5580 = vmatmul.mubr.f32.gmra.mxu0 %v5513
        %v5581 = vpop.f32.mrf.mxu0
        %v5582 = vadd.f32 %v5510, %v5581
        %v5583 = vpop.f32.mrf.mxu0
        %5584 = vdwg.mxu0
        %vm5585 = vcmask 64512
        %v5587 = vsel %vm5585, %v5451, 0
        %v5590 = vsel %vm5585, %v5452, 0
        %v5593 = vsel %vm5585, %v5453, 0
        %v5596 = vsel %vm5585, %v5454, 0
        %5598 = vmatprep.subr.mxu0 0.0
        %5599 = vmatpush1.msra.mxu0 0.0
        %5600 = vmatprep.subr.mxu0 0.0
        %5601 = vmatpush1.msra.mxu0 0.0
        %5602 = vmatprep.subr.mxu0 0.0
        %5603 = vmatpush1.msra.mxu0 0.0
        %5604 = vmatprep.subr.mxu0 0.0
        %5605 = vmatpush1.msra.mxu0 0.0
        %5606 = vmatprep.subr.mxu0 0.0
        %5607 = vmatpush1.msra.mxu0 0.0
        %5608 = vmatprep.subr.mxu0 0.0
        %5609 = vmatpush1.msra.mxu0 0.0
        %5610 = vmatprep.subr.mxu0 0.0
        %5611 = vmatpush1.msra.mxu0 0.0
        %5612 = vmatprep.subr.mxu0 0.0
        %5613 = vmatpush1.msra.mxu0 0.0
        %5614 = vmatprep.subr.mxu0 0.0
        %5615 = vmatpush1.msra.mxu0 0.0
        %5616 = vmatprep.subr.mxu0 0.0
        %5617 = vmatpush1.msra.mxu0 0.0
        %5618 = vmatprep.subr.mxu0 0.0
        %5619 = vmatpush1.msra.mxu0 0.0
        %5620 = vmatprep.subr.mxu0 0.0
        %5621 = vmatpush1.msra.mxu0 0.0
        %5622 = vmatprep.subr.mxu0 0.0
        %5623 = vmatpush1.msra.mxu0 0.0
        %5624 = vmatprep.subr.mxu0 0.0
        %5625 = vmatpush1.msra.mxu0 0.0
        %5626 = vmatprep.subr.mxu0 0.0
        %5627 = vmatpush1.msra.mxu0 0.0
        %5628 = vmatprep.subr.mxu0 0.0
        %5629 = vmatpush1.msra.mxu0 %v5582
        %5630 = vmatprep.subr.mxu0 0.0
        %5631 = vmatpush2.msra.mxu0 0.0
        %5632 = vmatprep.subr.mxu0 0.0
        %5633 = vmatpush2.msra.mxu0 0.0
        %5634 = vmatprep.subr.mxu0 0.0
        %5635 = vmatpush2.msra.mxu0 0.0
        %5636 = vmatprep.subr.mxu0 0.0
        %5637 = vmatpush2.msra.mxu0 0.0
        %5638 = vmatprep.subr.mxu0 0.0
        %5639 = vmatpush2.msra.mxu0 0.0
        %5640 = vmatprep.subr.mxu0 0.0
        %5641 = vmatpush2.msra.mxu0 0.0
        %5642 = vmatprep.subr.mxu0 0.0
        %5643 = vmatpush2.msra.mxu0 0.0
        %5644 = vmatprep.subr.mxu0 0.0
        %5645 = vmatpush2.msra.mxu0 0.0
        %5646 = vmatprep.subr.mxu0 0.0
        %5647 = vmatpush2.msra.mxu0 0.0
        %5648 = vmatprep.subr.mxu0 0.0
        %5649 = vmatpush2.msra.mxu0 0.0
        %5650 = vmatprep.subr.mxu0 0.0
        %5651 = vmatpush2.msra.mxu0 0.0
        %5652 = vmatprep.subr.mxu0 0.0
        %5653 = vmatpush2.msra.mxu0 0.0
        %5654 = vmatprep.subr.mxu0 0.0
        %5655 = vmatpush2.msra.mxu0 0.0
        %5656 = vmatprep.subr.mxu0 0.0
        %5657 = vmatpush2.msra.mxu0 0.0
        %5658 = vmatprep.subr.mxu0 0.0
        %5659 = vmatpush2.msra.mxu0 0.0
        %5660 = vmatprep.subr.mxu0 0.0
        %5661 = vmatpush2.msra.mxu0 0.0
        %5662 = vmatprep.mubr.f32.mxu0 0.0
        %5663 = vmatmul.mubr.f32.gmra.mxu0 %v5587
        %v5664 = vpop.f32.mrf.mxu0
        %v5665 = vadd.f32 0.0, %v5664
        %v5666 = vpop.f32.mrf.mxu0
        %5667 = vmatprep.mubr.f32.mxu0 0.0
        %5668 = vmatmul.mubr.f32.gmra.mxu0 %v5590
        %v5669 = vpop.f32.mrf.mxu0
        %v5670 = vadd.f32 0.0, %v5669
        %v5671 = vpop.f32.mrf.mxu0
        %5672 = vmatprep.mubr.f32.mxu0 0.0
        %5673 = vmatmul.mubr.f32.gmra.mxu0 %v5593
        %v5674 = vpop.f32.mrf.mxu0
        %v5675 = vadd.f32 0.0, %v5674
        %v5676 = vpop.f32.mrf.mxu0
        %5677 = vmatprep.mubr.f32.mxu0 0.0
        %5678 = vmatmul.mubr.f32.gmra.mxu0 %v5596
        %v5679 = vpop.f32.mrf.mxu0
        %v5680 = vadd.f32 0.0, %v5679
        %v5681 = vpop.f32.mrf.mxu0
        %5682 = vdwg.mxu0
        %v5683 = vmul.f32 %v5665, %v5447
        %v5684 = vmul.f32 %v5670, %v5448
        %v5685 = vmul.f32 %v5675, %v5449
        %v5686 = vmul.f32 %v5680, %v5450
        %v5688 = vsel %vm1270, %v5683, 0
        %v5691 = vsel %vm1270, %v5684, 0
        %v5694 = vsel %vm1270, %v5685, 0
        %v5697 = vsel %vm1270, %v5686, 0
        %5699 = vmatprep.subr.mxu0 0.0
        %5700 = vmatpush1.msra.mxu0 0.0
        %5701 = vmatprep.subr.mxu0 0.0
        %5702 = vmatpush1.msra.mxu0 0.0
        %5703 = vmatprep.subr.mxu0 0.0
        %5704 = vmatpush1.msra.mxu0 0.0
        %5705 = vmatprep.subr.mxu0 0.0
        %5706 = vmatpush1.msra.mxu0 0.0
        %5707 = vmatprep.subr.mxu0 0.0
        %5708 = vmatpush1.msra.mxu0 0.0
        %5709 = vmatprep.subr.mxu0 0.0
        %5710 = vmatpush1.msra.mxu0 0.0
        %5711 = vmatprep.subr.mxu0 0.0
        %5712 = vmatpush1.msra.mxu0 0.0
        %5713 = vmatprep.subr.mxu0 0.0
        %5714 = vmatpush1.msra.mxu0 0.0
        %5715 = vmatprep.subr.mxu0 0.0
        %5716 = vmatpush1.msra.mxu0 0.0
        %5717 = vmatprep.subr.mxu0 0.0
        %5718 = vmatpush1.msra.mxu0 0.0
        %5719 = vmatprep.subr.mxu0 0.0
        %5720 = vmatpush1.msra.mxu0 0.0
        %5721 = vmatprep.subr.mxu0 0.0
        %5722 = vmatpush1.msra.mxu0 0.0
        %5723 = vmatprep.subr.mxu0 %v5421
        %5724 = vmatpush1.msra.mxu0 %v5419
        %5725 = vmatprep.subr.mxu0 %v5415
        %5726 = vmatpush1.msra.mxu0 %v5413
        %5727 = vmatprep.subr.mxu0 %v5409
        %5728 = vmatpush1.msra.mxu0 %v5407
        %5729 = vmatprep.subr.mxu0 %v5403
        %5730 = vmatpush1.msra.mxu0 %v5401
        %5731 = vmatprep.subr.mxu0 0.0
        %5732 = vmatpush2.msra.mxu0 0.0
        %5733 = vmatprep.subr.mxu0 0.0
        %5734 = vmatpush2.msra.mxu0 0.0
        %5735 = vmatprep.subr.mxu0 0.0
        %5736 = vmatpush2.msra.mxu0 0.0
        %5737 = vmatprep.subr.mxu0 0.0
        %5738 = vmatpush2.msra.mxu0 0.0
        %5739 = vmatprep.subr.mxu0 0.0
        %5740 = vmatpush2.msra.mxu0 0.0
        %5741 = vmatprep.subr.mxu0 0.0
        %5742 = vmatpush2.msra.mxu0 0.0
        %5743 = vmatprep.subr.mxu0 0.0
        %5744 = vmatpush2.msra.mxu0 0.0
        %5745 = vmatprep.subr.mxu0 0.0
        %5746 = vmatpush2.msra.mxu0 0.0
        %5747 = vmatprep.subr.mxu0 0.0
        %5748 = vmatpush2.msra.mxu0 0.0
        %5749 = vmatprep.subr.mxu0 0.0
        %5750 = vmatpush2.msra.mxu0 0.0
        %5751 = vmatprep.subr.mxu0 0.0
        %5752 = vmatpush2.msra.mxu0 0.0
        %5753 = vmatprep.subr.mxu0 0.0
        %5754 = vmatpush2.msra.mxu0 0.0
        %5755 = vmatprep.subr.mxu0 0.0
        %5756 = vmatpush2.msra.mxu0 0.0
        %5757 = vmatprep.subr.mxu0 0.0
        %5758 = vmatpush2.msra.mxu0 0.0
        %5759 = vmatprep.subr.mxu0 0.0
        %5760 = vmatpush2.msra.mxu0 0.0
        %5761 = vmatprep.subr.mxu0 0.0
        %5762 = vmatpush2.msra.mxu0 0.0
        %5763 = vmatprep.mubr.f32.mxu0 0.0
        %5764 = vmatmul.mubr.f32.gmra.mxu0 %v5688
        %v5765 = vpop.f32.mrf.mxu0
        %v5766 = vadd.f32 0.0, %v5765
        %v5767 = vpop.f32.mrf.mxu0
        %v5768 = vadd.f32 0.0, %v5767
        %5769 = vmatprep.mubr.f32.mxu0 0.0
        %5770 = vmatmul.mubr.f32.gmra.mxu0 %v5691
        %v5771 = vpop.f32.mrf.mxu0
        %v5772 = vadd.f32 0.0, %v5771
        %v5773 = vpop.f32.mrf.mxu0
        %v5774 = vadd.f32 0.0, %v5773
        %5775 = vmatprep.mubr.f32.mxu0 0.0
        %5776 = vmatmul.mubr.f32.gmra.mxu0 %v5694
        %v5777 = vpop.f32.mrf.mxu0
        %v5778 = vadd.f32 0.0, %v5777
        %v5779 = vpop.f32.mrf.mxu0
        %v5780 = vadd.f32 0.0, %v5779
        %5781 = vmatprep.mubr.f32.mxu0 0.0
        %5782 = vmatmul.mubr.f32.gmra.mxu0 %v5697
        %v5783 = vpop.f32.mrf.mxu0
        %v5784 = vadd.f32 0.0, %v5783
        %v5785 = vpop.f32.mrf.mxu0
        %v5786 = vadd.f32 0.0, %v5785
        %5787 = vdwg.mxu0
        %v5788 = vmul.f32 %v5766, 0.35355338
        %v5789 = vmul.f32 %v5768, 0.35355338
        %v5790 = vmul.f32 %v5772, 0.35355338
        %v5791 = vmul.f32 %v5774, 0.35355338
        %v5792 = vmul.f32 %v5778, 0.35355338
        %v5793 = vmul.f32 %v5780, 0.35355338
        %v5794 = vmul.f32 %v5784, 0.35355338
        %v5795 = vmul.f32 %v5786, 0.35355338
        %v5796 = vrot.slane %v5788, 4
        %v5797 = vmax.f32 %v5788, %v5796
        %v5798 = vrot.slane %v5797, 2
        %v5799 = vmax.f32 %v5797, %v5798
        %v5800 = vrot.slane %v5799, 1
        %v5801 = vmax.f32 %v5799, %v5800
        %v5802 = vrot.slane %v5789, 4
        %v5803 = vmax.f32 %v5789, %v5802
        %v5804 = vrot.slane %v5803, 2
        %v5805 = vmax.f32 %v5803, %v5804
        %v5806 = vrot.slane %v5805, 1
        %v5807 = vmax.f32 %v5805, %v5806
        %v5808 = vrot.slane %v5790, 4
        %v5809 = vmax.f32 %v5790, %v5808
        %v5810 = vrot.slane %v5809, 2
        %v5811 = vmax.f32 %v5809, %v5810
        %v5812 = vrot.slane %v5811, 1
        %v5813 = vmax.f32 %v5811, %v5812
        %v5814 = vrot.slane %v5791, 4
        %v5815 = vmax.f32 %v5791, %v5814
        %v5816 = vrot.slane %v5815, 2
        %v5817 = vmax.f32 %v5815, %v5816
        %v5818 = vrot.slane %v5817, 1
        %v5819 = vmax.f32 %v5817, %v5818
        %v5820 = vrot.slane %v5792, 4
        %v5821 = vmax.f32 %v5792, %v5820
        %v5822 = vrot.slane %v5821, 2
        %v5823 = vmax.f32 %v5821, %v5822
        %v5824 = vrot.slane %v5823, 1
        %v5825 = vmax.f32 %v5823, %v5824
        %v5826 = vrot.slane %v5793, 4
        %v5827 = vmax.f32 %v5793, %v5826
        %v5828 = vrot.slane %v5827, 2
        %v5829 = vmax.f32 %v5827, %v5828
        %v5830 = vrot.slane %v5829, 1
        %v5831 = vmax.f32 %v5829, %v5830
        %v5832 = vrot.slane %v5794, 4
        %v5833 = vmax.f32 %v5794, %v5832
        %v5834 = vrot.slane %v5833, 2
        %v5835 = vmax.f32 %v5833, %v5834
        %v5836 = vrot.slane %v5835, 1
        %v5837 = vmax.f32 %v5835, %v5836
        %v5838 = vrot.slane %v5795, 4
        %v5839 = vmax.f32 %v5795, %v5838
        %v5840 = vrot.slane %v5839, 2
        %v5841 = vmax.f32 %v5839, %v5840
        %v5842 = vrot.slane %v5841, 1
        %v5843 = vmax.f32 %v5841, %v5842
        %v5844 = vsub.f32 %v5788, %v5801
        %v5845 = vsub.f32 %v5789, %v5807
        %v5846 = vsub.f32 %v5790, %v5813
        %v5847 = vsub.f32 %v5791, %v5819
        %v5848 = vsub.f32 %v5792, %v5825
        %v5849 = vsub.f32 %v5793, %v5831
        %v5850 = vsub.f32 %v5794, %v5837
        %v5851 = vsub.f32 %v5795, %v5843
        %v5852 = vmul.f32 %v5844, 1.442695
        %v5853 = vpow.pop %v5852
        %v5854 = vmul.f32 %v5845, 1.442695
        %v5855 = vpow.pop %v5854
        %v5856 = vmul.f32 %v5846, 1.442695
        %v5857 = vpow.pop %v5856
        %v5858 = vmul.f32 %v5847, 1.442695
        %v5859 = vpow.pop %v5858
        %v5860 = vmul.f32 %v5848, 1.442695
        %v5861 = vpow.pop %v5860
        %v5862 = vmul.f32 %v5849, 1.442695
        %v5863 = vpow.pop %v5862
        %v5864 = vmul.f32 %v5850, 1.442695
        %v5865 = vpow.pop %v5864
        %v5866 = vmul.f32 %v5851, 1.442695
        %v5867 = vpow.pop %v5866
        %v5868 = vrot.slane %v5853, 4
        %v5869 = vadd.f32 %v5853, %v5868
        %v5870 = vrot.slane %v5869, 2
        %v5871 = vadd.f32 %v5869, %v5870
        %v5872 = vrot.slane %v5871, 1
        %v5873 = vadd.f32 %v5871, %v5872
        %v5874 = vrot.slane %v5855, 4
        %v5875 = vadd.f32 %v5855, %v5874
        %v5876 = vrot.slane %v5875, 2
        %v5877 = vadd.f32 %v5875, %v5876
        %v5878 = vrot.slane %v5877, 1
        %v5879 = vadd.f32 %v5877, %v5878
        %v5880 = vrot.slane %v5857, 4
        %v5881 = vadd.f32 %v5857, %v5880
        %v5882 = vrot.slane %v5881, 2
        %v5883 = vadd.f32 %v5881, %v5882
        %v5884 = vrot.slane %v5883, 1
        %v5885 = vadd.f32 %v5883, %v5884
        %v5886 = vrot.slane %v5859, 4
        %v5887 = vadd.f32 %v5859, %v5886
        %v5888 = vrot.slane %v5887, 2
        %v5889 = vadd.f32 %v5887, %v5888
        %v5890 = vrot.slane %v5889, 1
        %v5891 = vadd.f32 %v5889, %v5890
        %v5892 = vrot.slane %v5861, 4
        %v5893 = vadd.f32 %v5861, %v5892
        %v5894 = vrot.slane %v5893, 2
        %v5895 = vadd.f32 %v5893, %v5894
        %v5896 = vrot.slane %v5895, 1
        %v5897 = vadd.f32 %v5895, %v5896
        %v5898 = vrot.slane %v5863, 4
        %v5899 = vadd.f32 %v5863, %v5898
        %v5900 = vrot.slane %v5899, 2
        %v5901 = vadd.f32 %v5899, %v5900
        %v5902 = vrot.slane %v5901, 1
        %v5903 = vadd.f32 %v5901, %v5902
        %v5904 = vrot.slane %v5865, 4
        %v5905 = vadd.f32 %v5865, %v5904
        %v5906 = vrot.slane %v5905, 2
        %v5907 = vadd.f32 %v5905, %v5906
        %v5908 = vrot.slane %v5907, 1
        %v5909 = vadd.f32 %v5907, %v5908
        %v5910 = vrot.slane %v5867, 4
        %v5911 = vadd.f32 %v5867, %v5910
        %v5912 = vrot.slane %v5911, 2
        %v5913 = vadd.f32 %v5911, %v5912
        %v5914 = vrot.slane %v5913, 1
        %v5915 = vadd.f32 %v5913, %v5914
        %v5916 = vrcp.pop %v5873
        %v5917 = vrcp.pop %v5879
        %v5918 = vrcp.pop %v5885
        %v5919 = vrcp.pop %v5891
        %v5920 = vrcp.pop %v5897
        %v5921 = vrcp.pop %v5903
        %v5922 = vrcp.pop %v5909
        %v5923 = vrcp.pop %v5915
        %v5924 = vmul.f32 %v5853, %v5916
        %v5925 = vmul.f32 %v5855, %v5917
        %v5926 = vmul.f32 %v5857, %v5918
        %v5927 = vmul.f32 %v5859, %v5919
        %v5928 = vmul.f32 %v5861, %v5920
        %v5929 = vmul.f32 %v5863, %v5921
        %v5930 = vmul.f32 %v5865, %v5922
        %v5931 = vmul.f32 %v5867, %v5923
        %v5932 = vadd.f32 %v5924, 1e-08
        %v5933 = vadd.f32 %v5925, 1e-08
        %v5934 = vadd.f32 %v5926, 1e-08
        %v5935 = vadd.f32 %v5927, 1e-08
        %v5936 = vadd.f32 %v5928, 1e-08
        %v5937 = vadd.f32 %v5929, 1e-08
        %v5938 = vadd.f32 %v5930, 1e-08
        %v5939 = vadd.f32 %v5931, 1e-08
        %v5940 = vadd.f32 %v5932, %v5933
        %5941 = vadd.xlane.f32.xlu0 %v5940
        %v5942 = vpop.xlane.xlu0 %5941
        %v5943 = vadd.f32 %v5934, %v5935
        %5944 = vadd.xlane.f32.xlu0 %v5943
        %v5945 = vpop.xlane.xlu0 %5944
        %v5946 = vadd.f32 %v5936, %v5937
        %5947 = vadd.xlane.f32.xlu0 %v5946
        %v5948 = vpop.xlane.xlu0 %5947
        %v5949 = vadd.f32 %v5938, %v5939
        %5950 = vadd.xlane.f32.xlu0 %v5949
        %v5951 = vpop.xlane.xlu0 %5950
        %v5952 = vrcp.pop %v5942
        %v5953 = vrcp.pop %v5945
        %v5954 = vrcp.pop %v5948
        %v5955 = vrcp.pop %v5951
        %v5956 = vmul.f32 %v5932, %v5952
        %v5957 = vmul.f32 %v5933, %v5952
        %v5958 = vmul.f32 %v5934, %v5953
        %v5959 = vmul.f32 %v5935, %v5953
        %v5960 = vmul.f32 %v5936, %v5954
        %v5961 = vmul.f32 %v5937, %v5954
        %v5962 = vmul.f32 %v5938, %v5955
        %v5963 = vmul.f32 %v5939, %v5955
        %5964 = vmatprep.subr.mxu0 0.0
        %5965 = vmatpush1.xpose.msra.mxu0 0.0
        %5966 = vmatprep.subr.mxu0 0.0
        %5967 = vmatpush1.xpose.msra.mxu0 0.0
        %5968 = vmatprep.subr.mxu0 0.0
        %5969 = vmatpush1.xpose.msra.mxu0 0.0
        %5970 = vmatprep.subr.mxu0 0.0
        %5971 = vmatpush1.xpose.msra.mxu0 0.0
        %5972 = vmatprep.subr.mxu0 0.0
        %5973 = vmatpush1.xpose.msra.mxu0 0.0
        %5974 = vmatprep.subr.mxu0 0.0
        %5975 = vmatpush1.xpose.msra.mxu0 0.0
        %5976 = vmatprep.subr.mxu0 0.0
        %5977 = vmatpush1.xpose.msra.mxu0 0.0
        %5978 = vmatprep.subr.mxu0 0.0
        %5979 = vmatpush1.xpose.msra.mxu0 0.0
        %5980 = vmatprep.subr.mxu0 0.0
        %5981 = vmatpush1.xpose.msra.mxu0 0.0
        %5982 = vmatprep.subr.mxu0 0.0
        %5983 = vmatpush1.xpose.msra.mxu0 0.0
        %5984 = vmatprep.subr.mxu0 0.0
        %5985 = vmatpush1.xpose.msra.mxu0 0.0
        %5986 = vmatprep.subr.mxu0 0.0
        %5987 = vmatpush1.xpose.msra.mxu0 0.0
        %5988 = vmatprep.subr.mxu0 %v5445
        %5989 = vmatpush1.xpose.msra.mxu0 %v5443
        %5990 = vmatprep.subr.mxu0 %v5439
        %5991 = vmatpush1.xpose.msra.mxu0 %v5437
        %5992 = vmatprep.subr.mxu0 %v5433
        %5993 = vmatpush1.xpose.msra.mxu0 %v5431
        %5994 = vmatprep.subr.mxu0 %v5427
        %5995 = vmatpush1.xpose.msra.mxu0 %v5425
        %5996 = vmatprep.subr.mxu0 0.0
        %5997 = vmatpush2.xpose.msra.mxu0 0.0
        %5998 = vmatprep.subr.mxu0 0.0
        %5999 = vmatpush2.xpose.msra.mxu0 0.0
        %6000 = vmatprep.subr.mxu0 0.0
        %6001 = vmatpush2.xpose.msra.mxu0 0.0
        %6002 = vmatprep.subr.mxu0 0.0
        %6003 = vmatpush2.xpose.msra.mxu0 0.0
        %6004 = vmatprep.subr.mxu0 0.0
        %6005 = vmatpush2.xpose.msra.mxu0 0.0
        %6006 = vmatprep.subr.mxu0 0.0
        %6007 = vmatpush2.xpose.msra.mxu0 0.0
        %6008 = vmatprep.subr.mxu0 0.0
        %6009 = vmatpush2.xpose.msra.mxu0 0.0
        %6010 = vmatprep.subr.mxu0 0.0
        %6011 = vmatpush2.xpose.msra.mxu0 0.0
        %6012 = vmatprep.subr.mxu0 0.0
        %6013 = vmatpush2.xpose.msra.mxu0 0.0
        %6014 = vmatprep.subr.mxu0 0.0
        %6015 = vmatpush2.xpose.msra.mxu0 0.0
        %6016 = vmatprep.subr.mxu0 0.0
        %6017 = vmatpush2.xpose.msra.mxu0 0.0
        %6018 = vmatprep.subr.mxu0 0.0
        %6019 = vmatpush2.xpose.msra.mxu0 0.0
        %6020 = vmatprep.subr.mxu0 0.0
        %6021 = vmatpush2.xpose.msra.mxu0 0.0
        %6022 = vmatprep.subr.mxu0 0.0
        %6023 = vmatpush2.xpose.msra.mxu0 0.0
        %6024 = vmatprep.subr.mxu0 0.0
        %6025 = vmatpush2.xpose.msra.mxu0 0.0
        %6026 = vmatprep.subr.mxu0 0.0
        %6027 = vmatpush2.xpose.msra.mxu0 0.0
        %6028 = vmatprep.mubr.f32.mxu0 %v5957
        %6029 = vmatmul.mubr.f32.gmra.mxu0 %v5956
        %v6030 = vpop.f32.mrf.mxu0
        %v6031 = vadd.f32 0.0, %v6030
        %v6032 = vpop.f32.mrf.mxu0
        %6033 = vmatprep.mubr.f32.mxu0 %v5959
        %6034 = vmatmul.mubr.f32.gmra.mxu0 %v5958
        %v6035 = vpop.f32.mrf.mxu0
        %v6036 = vadd.f32 0.0, %v6035
        %v6037 = vpop.f32.mrf.mxu0
        %6038 = vmatprep.mubr.f32.mxu0 %v5961
        %6039 = vmatmul.mubr.f32.gmra.mxu0 %v5960
        %v6040 = vpop.f32.mrf.mxu0
        %v6041 = vadd.f32 0.0, %v6040
        %v6042 = vpop.f32.mrf.mxu0
        %6043 = vmatprep.mubr.f32.mxu0 %v5963
        %6044 = vmatmul.mubr.f32.gmra.mxu0 %v5962
        %v6045 = vpop.f32.mrf.mxu0
        %v6046 = vadd.f32 0.0, %v6045
        %v6047 = vpop.f32.mrf.mxu0
        %6048 = vdwg.mxu0
        %v6049 = vmul.f32 %v6031, %v5447
        %v6050 = vmul.f32 %v6036, %v5448
        %v6051 = vmul.f32 %v6041, %v5449
        %v6052 = vmul.f32 %v6046, %v5450
        %6053 = vxpose.xlu0.b32.start [1/16] %v5451, 128
        %6054 = vxpose.xlu0.b32.cont [2/16] %v5452, 128
        %6055 = vxpose.xlu0.b32.cont [3/16] %v5453, 128
        %6056 = vxpose.xlu0.b32.cont [4/16] %v5454, 128
        %6057 = vxpose.xlu0.b32.cont [5/16] 0.0, 128
        %6058 = vxpose.xlu0.b32.cont [6/16] 0.0, 128
        %6059 = vxpose.xlu0.b32.cont [7/16] 0.0, 128
        %6060 = vxpose.xlu0.b32.cont [8/16] 0.0, 128
        %6061 = vxpose.xlu0.b32.cont [9/16] 0.0, 128
        %6062 = vxpose.xlu0.b32.cont [10/16] 0.0, 128
        %6063 = vxpose.xlu0.b32.cont [11/16] 0.0, 128
        %6064 = vxpose.xlu0.b32.cont [12/16] 0.0, 128
        %6065 = vxpose.xlu0.b32.cont [13/16] 0.0, 128
        %6066 = vxpose.xlu0.b32.cont [14/16] 0.0, 128
        %6067 = vxpose.xlu0.b32.cont [15/16] 0.0, 128
        %6068 = vxpose.xlu0.b32.end [16/16] 0.0, 128
        %v6069 = vpop.trf.xlu0
        %v6070 = vpop.trf.xlu0
        %v6071 = vpop.trf.xlu0
        %v6072 = vpop.trf.xlu0
        %v6073 = vpop.trf.xlu0
        %v6074 = vpop.trf.xlu0
        %v6075 = vpop.trf.xlu0
        %v6076 = vpop.trf.xlu0
        %v6077 = vpop.trf.xlu0
        %v6078 = vpop.trf.xlu0
        %v6079 = vpop.trf.xlu0
        %v6080 = vpop.trf.xlu0
        %v6081 = vpop.trf.xlu0
        %v6082 = vpop.trf.xlu0
        %v6083 = vpop.trf.xlu0
        %v6084 = vpop.trf.xlu0
        %v6086 = vsel %vm1270, %v6069, 0
        %6088 = vmatprep.subr.mxu0 0.0
        %6089 = vmatpush1.msra.mxu0 0.0
        %6090 = vmatprep.subr.mxu0 0.0
        %6091 = vmatpush1.msra.mxu0 0.0
        %6092 = vmatprep.subr.mxu0 0.0
        %6093 = vmatpush1.msra.mxu0 0.0
        %6094 = vmatprep.subr.mxu0 0.0
        %6095 = vmatpush1.msra.mxu0 0.0
        %6096 = vmatprep.subr.mxu0 0.0
        %6097 = vmatpush1.msra.mxu0 0.0
        %6098 = vmatprep.subr.mxu0 0.0
        %6099 = vmatpush1.msra.mxu0 0.0
        %6100 = vmatprep.subr.mxu0 0.0
        %6101 = vmatpush1.msra.mxu0 0.0
        %6102 = vmatprep.subr.mxu0 0.0
        %6103 = vmatpush1.msra.mxu0 0.0
        %6104 = vmatprep.subr.mxu0 0.0
        %6105 = vmatpush1.msra.mxu0 0.0
        %6106 = vmatprep.subr.mxu0 0.0
        %6107 = vmatpush1.msra.mxu0 0.0
        %6108 = vmatprep.subr.mxu0 0.0
        %6109 = vmatpush1.msra.mxu0 0.0
        %6110 = vmatprep.subr.mxu0 0.0
        %6111 = vmatpush1.msra.mxu0 0.0
        %6112 = vmatprep.subr.mxu0 0.0
        %6113 = vmatpush1.msra.mxu0 %v6052
        %6114 = vmatprep.subr.mxu0 0.0
        %6115 = vmatpush1.msra.mxu0 %v6051
        %6116 = vmatprep.subr.mxu0 0.0
        %6117 = vmatpush1.msra.mxu0 %v6050
        %6118 = vmatprep.subr.mxu0 0.0
        %6119 = vmatpush1.msra.mxu0 %v6049
        %6120 = vmatprep.subr.mxu0 0.0
        %6121 = vmatpush2.msra.mxu0 0.0
        %6122 = vmatprep.subr.mxu0 0.0
        %6123 = vmatpush2.msra.mxu0 0.0
        %6124 = vmatprep.subr.mxu0 0.0
        %6125 = vmatpush2.msra.mxu0 0.0
        %6126 = vmatprep.subr.mxu0 0.0
        %6127 = vmatpush2.msra.mxu0 0.0
        %6128 = vmatprep.subr.mxu0 0.0
        %6129 = vmatpush2.msra.mxu0 0.0
        %6130 = vmatprep.subr.mxu0 0.0
        %6131 = vmatpush2.msra.mxu0 0.0
        %6132 = vmatprep.subr.mxu0 0.0
        %6133 = vmatpush2.msra.mxu0 0.0
        %6134 = vmatprep.subr.mxu0 0.0
        %6135 = vmatpush2.msra.mxu0 0.0
        %6136 = vmatprep.subr.mxu0 0.0
        %6137 = vmatpush2.msra.mxu0 0.0
        %6138 = vmatprep.subr.mxu0 0.0
        %6139 = vmatpush2.msra.mxu0 0.0
        %6140 = vmatprep.subr.mxu0 0.0
        %6141 = vmatpush2.msra.mxu0 0.0
        %6142 = vmatprep.subr.mxu0 0.0
        %6143 = vmatpush2.msra.mxu0 0.0
        %6144 = vmatprep.subr.mxu0 0.0
        %6145 = vmatpush2.msra.mxu0 0.0
        %6146 = vmatprep.subr.mxu0 0.0
        %6147 = vmatpush2.msra.mxu0 0.0
        %6148 = vmatprep.subr.mxu0 0.0
        %6149 = vmatpush2.msra.mxu0 0.0
        %6150 = vmatprep.subr.mxu0 0.0
        %6151 = vmatpush2.msra.mxu0 0.0
        %6152 = vmatprep.mubr.f32.mxu0 0.0
        %6153 = vmatmul.mubr.f32.gmra.mxu0 %v6086
        %v6154 = vpop.f32.mrf.mxu0
        %v6155 = vadd.f32 0.0, %v6154
        %v6156 = vpop.f32.mrf.mxu0
        %6157 = vdwg.mxu0
        %v6158 = vld [vmem:[%s19] sm:$0xff]
        %v6159 = vld [vmem:[%s19 + $0x8] sm:$0xff]
        %v6160 = vld [vmem:[%s19 + $0x10] sm:$0xff]
        %v6161 = vld [vmem:[%s19 + $0x18] sm:$0xff]
        %v6162 = vld [vmem:[%s20] sm:$0x1]
        %v6164 = vlaneseq
        %v6165 = vshrl.u32 %v6164, 7
        %v6166 = vsub.s32 0, %v6165
        %v6167 = vrot.slane %v6162, %v6166
        %v6170 = vsel %vm1270, %v6155, 0
        %6172 = vmatprep.subr.mxu0 0.0
        %6173 = vmatpush1.msra.mxu0 0.0
        %6174 = vmatprep.subr.mxu0 0.0
        %6175 = vmatpush1.msra.mxu0 0.0
        %6176 = vmatprep.subr.mxu0 0.0
        %6177 = vmatpush1.msra.mxu0 0.0
        %6178 = vmatprep.subr.mxu0 0.0
        %6179 = vmatpush1.msra.mxu0 0.0
        %6180 = vmatprep.subr.mxu0 0.0
        %6181 = vmatpush1.msra.mxu0 0.0
        %6182 = vmatprep.subr.mxu0 0.0
        %6183 = vmatpush1.msra.mxu0 0.0
        %6184 = vmatprep.subr.mxu0 0.0
        %6185 = vmatpush1.msra.mxu0 0.0
        %6186 = vmatprep.subr.mxu0 0.0
        %6187 = vmatpush1.msra.mxu0 0.0
        %6188 = vmatprep.subr.mxu0 0.0
        %6189 = vmatpush1.msra.mxu0 0.0
        %6190 = vmatprep.subr.mxu0 0.0
        %6191 = vmatpush1.msra.mxu0 0.0
        %6192 = vmatprep.subr.mxu0 0.0
        %6193 = vmatpush1.msra.mxu0 0.0
        %6194 = vmatprep.subr.mxu0 0.0
        %6195 = vmatpush1.msra.mxu0 0.0
        %6196 = vmatprep.subr.mxu0 0.0
        %6197 = vmatpush1.msra.mxu0 %v6161
        %6198 = vmatprep.subr.mxu0 0.0
        %6199 = vmatpush1.msra.mxu0 %v6160
        %6200 = vmatprep.subr.mxu0 0.0
        %6201 = vmatpush1.msra.mxu0 %v6159
        %6202 = vmatprep.subr.mxu0 0.0
        %6203 = vmatpush1.msra.mxu0 %v6158
        %6204 = vmatprep.subr.mxu0 0.0
        %6205 = vmatpush2.msra.mxu0 0.0
        %6206 = vmatprep.subr.mxu0 0.0
        %6207 = vmatpush2.msra.mxu0 0.0
        %6208 = vmatprep.subr.mxu0 0.0
        %6209 = vmatpush2.msra.mxu0 0.0
        %6210 = vmatprep.subr.mxu0 0.0
        %6211 = vmatpush2.msra.mxu0 0.0
        %6212 = vmatprep.subr.mxu0 0.0
        %6213 = vmatpush2.msra.mxu0 0.0
        %6214 = vmatprep.subr.mxu0 0.0
        %6215 = vmatpush2.msra.mxu0 0.0
        %6216 = vmatprep.subr.mxu0 0.0
        %6217 = vmatpush2.msra.mxu0 0.0
        %6218 = vmatprep.subr.mxu0 0.0
        %6219 = vmatpush2.msra.mxu0 0.0
        %6220 = vmatprep.subr.mxu0 0.0
        %6221 = vmatpush2.msra.mxu0 0.0
        %6222 = vmatprep.subr.mxu0 0.0
        %6223 = vmatpush2.msra.mxu0 0.0
        %6224 = vmatprep.subr.mxu0 0.0
        %6225 = vmatpush2.msra.mxu0 0.0
        %6226 = vmatprep.subr.mxu0 0.0
        %6227 = vmatpush2.msra.mxu0 0.0
        %6228 = vmatprep.subr.mxu0 0.0
        %6229 = vmatpush2.msra.mxu0 0.0
        %6230 = vmatprep.subr.mxu0 0.0
        %6231 = vmatpush2.msra.mxu0 0.0
        %6232 = vmatprep.subr.mxu0 0.0
        %6233 = vmatpush2.msra.mxu0 0.0
        %6234 = vmatprep.subr.mxu0 0.0
        %6235 = vmatpush2.msra.mxu0 0.0
        %6236 = vmatprep.mubr.f32.mxu0 0.0
        %6237 = vmatmul.mubr.f32.gmra.mxu0 %v6170
        %v6238 = vpop.f32.mrf.mxu0
        %v6239 = vadd.f32 %v6167, %v6238
        %v6240 = vpop.f32.mrf.mxu0
        %6241 = vdwg.mxu0
        %v6242 = vld [vmem:[%s21] sm:$0xff]
        %v6243 = vld [vmem:[%s21 + $0x8] sm:$0xff]
        %v6244 = vld [vmem:[%s21 + $0x10] sm:$0xff]
        %v6245 = vld [vmem:[%s21 + $0x18] sm:$0xff]
        %v6246 = vld [vmem:[%s22] sm:$0x1]
        %v6248 = vlaneseq
        %v6249 = vshrl.u32 %v6248, 7
        %v6250 = vsub.s32 0, %v6249
        %v6251 = vrot.slane %v6246, %v6250
        %v6254 = vsel %vm1270, %v5471, 0
        %6256 = vmatprep.subr.mxu0 0.0
        %6257 = vmatpush1.msra.mxu0 0.0
        %6258 = vmatprep.subr.mxu0 0.0
        %6259 = vmatpush1.msra.mxu0 0.0
        %6260 = vmatprep.subr.mxu0 0.0
        %6261 = vmatpush1.msra.mxu0 0.0
        %6262 = vmatprep.subr.mxu0 0.0
        %6263 = vmatpush1.msra.mxu0 0.0
        %6264 = vmatprep.subr.mxu0 0.0
        %6265 = vmatpush1.msra.mxu0 0.0
        %6266 = vmatprep.subr.mxu0 0.0
        %6267 = vmatpush1.msra.mxu0 0.0
        %6268 = vmatprep.subr.mxu0 0.0
        %6269 = vmatpush1.msra.mxu0 0.0
        %6270 = vmatprep.subr.mxu0 0.0
        %6271 = vmatpush1.msra.mxu0 0.0
        %6272 = vmatprep.subr.mxu0 0.0
        %6273 = vmatpush1.msra.mxu0 0.0
        %6274 = vmatprep.subr.mxu0 0.0
        %6275 = vmatpush1.msra.mxu0 0.0
        %6276 = vmatprep.subr.mxu0 0.0
        %6277 = vmatpush1.msra.mxu0 0.0
        %6278 = vmatprep.subr.mxu0 0.0
        %6279 = vmatpush1.msra.mxu0 0.0
        %6280 = vmatprep.subr.mxu0 0.0
        %6281 = vmatpush1.msra.mxu0 %v6245
        %6282 = vmatprep.subr.mxu0 0.0
        %6283 = vmatpush1.msra.mxu0 %v6244
        %6284 = vmatprep.subr.mxu0 0.0
        %6285 = vmatpush1.msra.mxu0 %v6243
        %6286 = vmatprep.subr.mxu0 0.0
        %6287 = vmatpush1.msra.mxu0 %v6242
        %6288 = vmatprep.subr.mxu0 0.0
        %6289 = vmatpush2.msra.mxu0 0.0
        %6290 = vmatprep.subr.mxu0 0.0
        %6291 = vmatpush2.msra.mxu0 0.0
        %6292 = vmatprep.subr.mxu0 0.0
        %6293 = vmatpush2.msra.mxu0 0.0
        %6294 = vmatprep.subr.mxu0 0.0
        %6295 = vmatpush2.msra.mxu0 0.0
        %6296 = vmatprep.subr.mxu0 0.0
        %6297 = vmatpush2.msra.mxu0 0.0
        %6298 = vmatprep.subr.mxu0 0.0
        %6299 = vmatpush2.msra.mxu0 0.0
        %6300 = vmatprep.subr.mxu0 0.0
        %6301 = vmatpush2.msra.mxu0 0.0
        %6302 = vmatprep.subr.mxu0 0.0
        %6303 = vmatpush2.msra.mxu0 0.0
        %6304 = vmatprep.subr.mxu0 0.0
        %6305 = vmatpush2.msra.mxu0 0.0
        %6306 = vmatprep.subr.mxu0 0.0
        %6307 = vmatpush2.msra.mxu0 0.0
        %6308 = vmatprep.subr.mxu0 0.0
        %6309 = vmatpush2.msra.mxu0 0.0
        %6310 = vmatprep.subr.mxu0 0.0
        %6311 = vmatpush2.msra.mxu0 0.0
        %6312 = vmatprep.subr.mxu0 0.0
        %6313 = vmatpush2.msra.mxu0 0.0
        %6314 = vmatprep.subr.mxu0 0.0
        %6315 = vmatpush2.msra.mxu0 0.0
        %6316 = vmatprep.subr.mxu0 0.0
        %6317 = vmatpush2.msra.mxu0 0.0
        %6318 = vmatprep.subr.mxu0 0.0
        %6319 = vmatpush2.msra.mxu0 0.0
        %6320 = vmatprep.mubr.f32.mxu0 0.0
        %6321 = vmatmul.mubr.f32.gmra.mxu0 %v6254
        %v6322 = vpop.f32.mrf.mxu0
        %v6323 = vadd.f32 %v6251, %v6322
        %v6324 = vpop.f32.mrf.mxu0
        %6325 = vdwg.mxu0
        %v6326 = vadd.f32 %v6239, %v6323
        %v6327 = vxor.u32 %v6326, 2147483648
        %v6328 = vmul.f32 %v6327, 1.442695
        %v6329 = vpow.pop %v6328
        %v6330 = vadd.f32 %v6329, 1.0
        %v6331 = vrcp.pop %v6330
        %v6332 = vmul.f32 1.0, %v6331
        %6334 = vrot.lane.b32.xlu0 %v6323, 64
        %v6335 = vpop.permute.xlu0 %6334
        %v6337 = vmul.f32 %v6332, %v6335
        %6339 = vrot.lane.b32.xlu0 %v6337, 64
        %v6340 = vpop.permute.xlu0 %6339
        %v6342 = vadd.f32 %v6239, %v6340
        %v6343 = vtanh.pop %v6342
        %v6344 = vsub.f32 1.0, %v6332
        %6346 = vrot.lane.b32.xlu0 %v6343, 96
        %v6347 = vpop.permute.xlu0 %6346
        %v6349 = vmul.f32 %v6344, %v6347
        %6350 = vrot.lane.b32.xlu0 %v5471, 32
        %v6351 = vpop.permute.xlu0 %6350
        %v6353 = vmul.f32 %v6332, %v6351
        %v6354 = vadd.f32 %v6349, %v6353
        %v6355 = vld [vmem:[%s13] sm:$0x1]
        %v6356 = vld [vmem:[%s14] sm:$0x1]
        %6358 = vrot.lane.b32.xlu0 %v6354, 96
        %v6359 = vpop.permute.xlu0 %6358
        %v6361 = vsel %vm1270, %v6359, 0.0
        %6362 = vadd.xlane.f32.xlu0 %v6361
        %v6363 = vpop.xlane.xlu0 %6362
        %v6364 = vmul.f32 %v6363, %v5139
        %v6365 = vsub.f32 %v6354, %v6364
        %v6366 = vmul.f32 %v6365, %v6365
        %6368 = vrot.lane.b32.xlu0 %v6366, 96
        %v6369 = vpop.permute.xlu0 %6368
        %v6371 = vsel %vm1270, %v6369, 0.0
        %6372 = vadd.xlane.f32.xlu0 %v6371
        %v6373 = vpop.xlane.xlu0 %6372
        %v6374 = vmul.f32 %v6373, %v5139
        %v6375 = vadd.f32 %v6374, 1e-05
        %v6376 = vrsqrt.pop %v6375
        %v6377 = vmul.f32 %v6365, %v6376
        %v6379 = vlaneseq
        %v6380 = vshrl.u32 %v6379, 7
        %v6381 = vsub.s32 0, %v6380
        %v6382 = vrot.slane %v6355, %v6381
        %6383 = vrot.lane.b32.xlu0 %v6382, 32
        %v6384 = vpop.permute.xlu0 %6383
        %v6386 = vmul.f32 %v6377, %v6384
        %v6388 = vlaneseq
        %v6389 = vshrl.u32 %v6388, 7
        %v6390 = vsub.s32 0, %v6389
        %v6391 = vrot.slane %v6356, %v6390
        %6392 = vrot.lane.b32.xlu0 %v6391, 32
        %v6393 = vpop.permute.xlu0 %6392
        %v6395 = vadd.f32 %v6386, %v6393
        %v6396 = vld [vmem:[%s23] sm:$0xff]
        %v6397 = vld [vmem:[%s23 + $0x8] sm:$0xff]
        %v6398 = vld [vmem:[%s23 + $0x10] sm:$0xff]
        %v6399 = vld [vmem:[%s23 + $0x18] sm:$0xff]
        %v6400 = vld [vmem:[%s24] sm:$0x1]
        %v6402 = vlaneseq
        %v6403 = vshrl.u32 %v6402, 7
        %v6404 = vsub.s32 0, %v6403
        %v6405 = vrot.slane %v6400, %v6404
        %6408 = vrot.lane.b32.xlu0 %v6395, 96
        %v6409 = vpop.permute.xlu0 %6408
        %v6410 = vsel %vm1270, %v6409, 0
        %6412 = vmatprep.subr.mxu0 0.0
        %6413 = vmatpush1.msra.mxu0 0.0
        %6414 = vmatprep.subr.mxu0 0.0
        %6415 = vmatpush1.msra.mxu0 0.0
        %6416 = vmatprep.subr.mxu0 0.0
        %6417 = vmatpush1.msra.mxu0 0.0
        %6418 = vmatprep.subr.mxu0 0.0
        %6419 = vmatpush1.msra.mxu0 0.0
        %6420 = vmatprep.subr.mxu0 0.0
        %6421 = vmatpush1.msra.mxu0 0.0
        %6422 = vmatprep.subr.mxu0 0.0
        %6423 = vmatpush1.msra.mxu0 0.0
        %6424 = vmatprep.subr.mxu0 0.0
        %6425 = vmatpush1.msra.mxu0 0.0
        %6426 = vmatprep.subr.mxu0 0.0
        %6427 = vmatpush1.msra.mxu0 0.0
        %6428 = vmatprep.subr.mxu0 0.0
        %6429 = vmatpush1.msra.mxu0 0.0
        %6430 = vmatprep.subr.mxu0 0.0
        %6431 = vmatpush1.msra.mxu0 0.0
        %6432 = vmatprep.subr.mxu0 0.0
        %6433 = vmatpush1.msra.mxu0 0.0
        %6434 = vmatprep.subr.mxu0 0.0
        %6435 = vmatpush1.msra.mxu0 0.0
        %6436 = vmatprep.subr.mxu0 0.0
        %6437 = vmatpush1.msra.mxu0 %v6399
        %6438 = vmatprep.subr.mxu0 0.0
        %6439 = vmatpush1.msra.mxu0 %v6398
        %6440 = vmatprep.subr.mxu0 0.0
        %6441 = vmatpush1.msra.mxu0 %v6397
        %6442 = vmatprep.subr.mxu0 0.0
        %6443 = vmatpush1.msra.mxu0 %v6396
        %6444 = vmatprep.subr.mxu0 0.0
        %6445 = vmatpush2.msra.mxu0 0.0
        %6446 = vmatprep.subr.mxu0 0.0
        %6447 = vmatpush2.msra.mxu0 0.0
        %6448 = vmatprep.subr.mxu0 0.0
        %6449 = vmatpush2.msra.mxu0 0.0
        %6450 = vmatprep.subr.mxu0 0.0
        %6451 = vmatpush2.msra.mxu0 0.0
        %6452 = vmatprep.subr.mxu0 0.0
        %6453 = vmatpush2.msra.mxu0 0.0
        %6454 = vmatprep.subr.mxu0 0.0
        %6455 = vmatpush2.msra.mxu0 0.0
        %6456 = vmatprep.subr.mxu0 0.0
        %6457 = vmatpush2.msra.mxu0 0.0
        %6458 = vmatprep.subr.mxu0 0.0
        %6459 = vmatpush2.msra.mxu0 0.0
        %6460 = vmatprep.subr.mxu0 0.0
        %6461 = vmatpush2.msra.mxu0 0.0
        %6462 = vmatprep.subr.mxu0 0.0
        %6463 = vmatpush2.msra.mxu0 0.0
        %6464 = vmatprep.subr.mxu0 0.0
        %6465 = vmatpush2.msra.mxu0 0.0
        %6466 = vmatprep.subr.mxu0 0.0
        %6467 = vmatpush2.msra.mxu0 0.0
        %6468 = vmatprep.subr.mxu0 0.0
        %6469 = vmatpush2.msra.mxu0 0.0
        %6470 = vmatprep.subr.mxu0 0.0
        %6471 = vmatpush2.msra.mxu0 0.0
        %6472 = vmatprep.subr.mxu0 0.0
        %6473 = vmatpush2.msra.mxu0 0.0
        %6474 = vmatprep.subr.mxu0 0.0
        %6475 = vmatpush2.msra.mxu0 0.0
        %6476 = vmatprep.mubr.f32.mxu0 0.0
        %6477 = vmatmul.mubr.f32.gmra.mxu0 %v6410
        %v6478 = vpop.f32.mrf.mxu0
        %v6479 = vadd.f32 %v6405, %v6478
        %v6480 = vpop.f32.mrf.mxu0
        %6481 = vdwg.mxu0
        %v6482 = vmax.f32 %v6479, 0.0
        %v6483 = vld [vmem:[%s25] sm:$0xff]
        %v6484 = vld [vmem:[%s25 + $0x8] sm:$0xff]
        %v6485 = vld [vmem:[%s25 + $0x10] sm:$0xff]
        %v6486 = vld [vmem:[%s25 + $0x18] sm:$0xff]
        %v6487 = vld [vmem:[%s25 + $0x20] sm:$0xff]
        %v6488 = vld [vmem:[%s25 + $0x28] sm:$0xff]
        %v6489 = vld [vmem:[%s25 + $0x30] sm:$0xff]
        %v6490 = vld [vmem:[%s25 + $0x38] sm:$0xff]
        %vm6491 = vcmask 523264
        %v6493 = vsel %vm6491, %v6482, 0
        %6495 = vmatprep.subr.mxu0 0.0
        %6496 = vmatpush1.msra.mxu0 0.0
        %6497 = vmatprep.subr.mxu0 0.0
        %6498 = vmatpush1.msra.mxu0 0.0
        %6499 = vmatprep.subr.mxu0 0.0
        %6500 = vmatpush1.msra.mxu0 0.0
        %6501 = vmatprep.subr.mxu0 0.0
        %6502 = vmatpush1.msra.mxu0 0.0
        %6503 = vmatprep.subr.mxu0 0.0
        %6504 = vmatpush1.msra.mxu0 0.0
        %6505 = vmatprep.subr.mxu0 0.0
        %6506 = vmatpush1.msra.mxu0 0.0
        %6507 = vmatprep.subr.mxu0 0.0
        %6508 = vmatpush1.msra.mxu0 0.0
        %6509 = vmatprep.subr.mxu0 0.0
        %6510 = vmatpush1.msra.mxu0 0.0
        %6511 = vmatprep.subr.mxu0 0.0
        %6512 = vmatpush1.msra.mxu0 %v6490
        %6513 = vmatprep.subr.mxu0 0.0
        %6514 = vmatpush1.msra.mxu0 %v6489
        %6515 = vmatprep.subr.mxu0 0.0
        %6516 = vmatpush1.msra.mxu0 %v6488
        %6517 = vmatprep.subr.mxu0 0.0
        %6518 = vmatpush1.msra.mxu0 %v6487
        %6519 = vmatprep.subr.mxu0 0.0
        %6520 = vmatpush1.msra.mxu0 %v6486
        %6521 = vmatprep.subr.mxu0 0.0
        %6522 = vmatpush1.msra.mxu0 %v6485
        %6523 = vmatprep.subr.mxu0 0.0
        %6524 = vmatpush1.msra.mxu0 %v6484
        %6525 = vmatprep.subr.mxu0 0.0
        %6526 = vmatpush1.msra.mxu0 %v6483
        %6527 = vmatprep.subr.mxu0 0.0
        %6528 = vmatpush2.msra.mxu0 0.0
        %6529 = vmatprep.subr.mxu0 0.0
        %6530 = vmatpush2.msra.mxu0 0.0
        %6531 = vmatprep.subr.mxu0 0.0
        %6532 = vmatpush2.msra.mxu0 0.0
        %6533 = vmatprep.subr.mxu0 0.0
        %6534 = vmatpush2.msra.mxu0 0.0
        %6535 = vmatprep.subr.mxu0 0.0
        %6536 = vmatpush2.msra.mxu0 0.0
        %6537 = vmatprep.subr.mxu0 0.0
        %6538 = vmatpush2.msra.mxu0 0.0
        %6539 = vmatprep.subr.mxu0 0.0
        %6540 = vmatpush2.msra.mxu0 0.0
        %6541 = vmatprep.subr.mxu0 0.0
        %6542 = vmatpush2.msra.mxu0 0.0
        %6543 = vmatprep.subr.mxu0 0.0
        %6544 = vmatpush2.msra.mxu0 0.0
        %6545 = vmatprep.subr.mxu0 0.0
        %6546 = vmatpush2.msra.mxu0 0.0
        %6547 = vmatprep.subr.mxu0 0.0
        %6548 = vmatpush2.msra.mxu0 0.0
        %6549 = vmatprep.subr.mxu0 0.0
        %6550 = vmatpush2.msra.mxu0 0.0
        %6551 = vmatprep.subr.mxu0 0.0
        %6552 = vmatpush2.msra.mxu0 0.0
        %6553 = vmatprep.subr.mxu0 0.0
        %6554 = vmatpush2.msra.mxu0 0.0
        %6555 = vmatprep.subr.mxu0 0.0
        %6556 = vmatpush2.msra.mxu0 0.0
        %6557 = vmatprep.subr.mxu0 0.0
        %6558 = vmatpush2.msra.mxu0 0.0
        %6559 = vmatprep.mubr.f32.mxu0 0.0
        %6560 = vmatmul.mubr.f32.gmra.mxu0 %v6493
        %v6561 = vpop.f32.mrf.mxu0
        %v6562 = vadd.f32 0.0, %v6561
        %v6563 = vpop.f32.mrf.mxu0
        %6564 = vdwg.mxu0
        %6566 = vrot.lane.b32.xlu0 %v6562, 32
        %v6567 = vpop.permute.xlu0 %6566
        %v6569 = vadd.f32 %v6354, %v6567
        %v6570 = vld [vmem:[%s26] sm:$0x1]
        %v6572 = vlaneseq
        %v6573 = vshrl.u32 %v6572, 7
        %v6574 = vsub.s32 0, %v6573
        %v6575 = vrot.slane %v6570, %v6574
        %6576 = vrot.lane.b32.xlu0 %v6575, 32
        %v6577 = vpop.permute.xlu0 %6576
        %v6579 = vadd.f32 %v6569, %v6577
        %6581 = vrot.lane.b32.xlu0 %v6579, 96
        %v6582 = vpop.permute.xlu0 %6581
        %v6584 = vsel %vm1270, %v6582, 0.0
        %6585 = vadd.xlane.f32.xlu0 %v6584
        %v6586 = vpop.xlane.xlu0 %6585
        %v6587 = vmul.f32 %v6586, %v5139
        %v6588 = vsub.f32 %v6579, %v6587
        %v6589 = vmul.f32 %v6588, %v6588
        %6591 = vrot.lane.b32.xlu0 %v6589, 96
        %v6592 = vpop.permute.xlu0 %6591
        %v6594 = vsel %vm1270, %v6592, 0.0
        %6595 = vadd.xlane.f32.xlu0 %v6594
        %v6596 = vpop.xlane.xlu0 %6595
        %v6597 = vmul.f32 %v6596, %v5139
        %v6598 = vadd.f32 %v6597, 1e-05
        %v6599 = vrsqrt.pop %v6598
        %v6600 = vmul.f32 %v6588, %v6599
        %6601 = vrot.lane.b32.xlu0 %v5491, 32
        %v6602 = vpop.permute.xlu0 %6601
        %v6604 = vmul.f32 %v6600, %v6602
        %6605 = vrot.lane.b32.xlu0 %v5498, 32
        %v6606 = vpop.permute.xlu0 %6605
        %v6608 = vadd.f32 %v6604, %v6606
        %6610 = vrot.lane.b32.xlu0 %v6608, 96
        %v6611 = vpop.permute.xlu0 %6610
        %v6612 = vsel %vm1270, %v6611, 0
        %6614 = vmatprep.subr.mxu0 0.0
        %6615 = vmatpush1.msra.mxu0 0.0
        %6616 = vmatprep.subr.mxu0 0.0
        %6617 = vmatpush1.msra.mxu0 0.0
        %6618 = vmatprep.subr.mxu0 0.0
        %6619 = vmatpush1.msra.mxu0 0.0
        %6620 = vmatprep.subr.mxu0 0.0
        %6621 = vmatpush1.msra.mxu0 0.0
        %6622 = vmatprep.subr.mxu0 0.0
        %6623 = vmatpush1.msra.mxu0 0.0
        %6624 = vmatprep.subr.mxu0 0.0
        %6625 = vmatpush1.msra.mxu0 0.0
        %6626 = vmatprep.subr.mxu0 0.0
        %6627 = vmatpush1.msra.mxu0 0.0
        %6628 = vmatprep.subr.mxu0 0.0
        %6629 = vmatpush1.msra.mxu0 0.0
        %6630 = vmatprep.subr.mxu0 0.0
        %6631 = vmatpush1.msra.mxu0 0.0
        %6632 = vmatprep.subr.mxu0 0.0
        %6633 = vmatpush1.msra.mxu0 0.0
        %6634 = vmatprep.subr.mxu0 0.0
        %6635 = vmatpush1.msra.mxu0 0.0
        %6636 = vmatprep.subr.mxu0 0.0
        %6637 = vmatpush1.msra.mxu0 0.0
        %6638 = vmatprep.subr.mxu0 0.0
        %6639 = vmatpush1.msra.mxu0 %v5504
        %6640 = vmatprep.subr.mxu0 0.0
        %6641 = vmatpush1.msra.mxu0 %v5503
        %6642 = vmatprep.subr.mxu0 0.0
        %6643 = vmatpush1.msra.mxu0 %v5502
        %6644 = vmatprep.subr.mxu0 0.0
        %6645 = vmatpush1.msra.mxu0 %v5501
        %6646 = vmatprep.subr.mxu0 0.0
        %6647 = vmatpush2.msra.mxu0 0.0
        %6648 = vmatprep.subr.mxu0 0.0
        %6649 = vmatpush2.msra.mxu0 0.0
        %6650 = vmatprep.subr.mxu0 0.0
        %6651 = vmatpush2.msra.mxu0 0.0
        %6652 = vmatprep.subr.mxu0 0.0
        %6653 = vmatpush2.msra.mxu0 0.0
        %6654 = vmatprep.subr.mxu0 0.0
        %6655 = vmatpush2.msra.mxu0 0.0
        %6656 = vmatprep.subr.mxu0 0.0
        %6657 = vmatpush2.msra.mxu0 0.0
        %6658 = vmatprep.subr.mxu0 0.0
        %6659 = vmatpush2.msra.mxu0 0.0
        %6660 = vmatprep.subr.mxu0 0.0
        %6661 = vmatpush2.msra.mxu0 0.0
        %6662 = vmatprep.subr.mxu0 0.0
        %6663 = vmatpush2.msra.mxu0 0.0
        %6664 = vmatprep.subr.mxu0 0.0
        %6665 = vmatpush2.msra.mxu0 0.0
        %6666 = vmatprep.subr.mxu0 0.0
        %6667 = vmatpush2.msra.mxu0 0.0
        %6668 = vmatprep.subr.mxu0 0.0
        %6669 = vmatpush2.msra.mxu0 0.0
        %6670 = vmatprep.subr.mxu0 0.0
        %6671 = vmatpush2.msra.mxu0 0.0
        %6672 = vmatprep.subr.mxu0 0.0
        %6673 = vmatpush2.msra.mxu0 0.0
        %6674 = vmatprep.subr.mxu0 0.0
        %6675 = vmatpush2.msra.mxu0 0.0
        %6676 = vmatprep.subr.mxu0 0.0
        %6677 = vmatpush2.msra.mxu0 0.0
        %6678 = vmatprep.mubr.f32.mxu0 0.0
        %6679 = vmatmul.mubr.f32.gmra.mxu0 %v6612
        %v6680 = vpop.f32.mrf.mxu0
        %v6681 = vadd.f32 %v5510, %v6680
        %v6682 = vpop.f32.mrf.mxu0
        %6683 = vdwg.mxu0
        %6684 = vmatprep.subr.mxu0 0.0
        %6685 = vmatpush1.msra.mxu0 0.0
        %6686 = vmatprep.subr.mxu0 0.0
        %6687 = vmatpush1.msra.mxu0 0.0
        %6688 = vmatprep.subr.mxu0 0.0
        %6689 = vmatpush1.msra.mxu0 0.0
        %6690 = vmatprep.subr.mxu0 0.0
        %6691 = vmatpush1.msra.mxu0 0.0
        %6692 = vmatprep.subr.mxu0 0.0
        %6693 = vmatpush1.msra.mxu0 0.0
        %6694 = vmatprep.subr.mxu0 0.0
        %6695 = vmatpush1.msra.mxu0 0.0
        %6696 = vmatprep.subr.mxu0 0.0
        %6697 = vmatpush1.msra.mxu0 0.0
        %6698 = vmatprep.subr.mxu0 0.0
        %6699 = vmatpush1.msra.mxu0 0.0
        %6700 = vmatprep.subr.mxu0 0.0
        %6701 = vmatpush1.msra.mxu0 0.0
        %6702 = vmatprep.subr.mxu0 0.0
        %6703 = vmatpush1.msra.mxu0 0.0
        %6704 = vmatprep.subr.mxu0 0.0
        %6705 = vmatpush1.msra.mxu0 0.0
        %6706 = vmatprep.subr.mxu0 0.0
        %6707 = vmatpush1.msra.mxu0 0.0
        %6708 = vmatprep.subr.mxu0 0.0
        %6709 = vmatpush1.msra.mxu0 0.0
        %6710 = vmatprep.subr.mxu0 0.0
        %6711 = vmatpush1.msra.mxu0 0.0
        %6712 = vmatprep.subr.mxu0 0.0
        %6713 = vmatpush1.msra.mxu0 0.0
        %6714 = vmatprep.subr.mxu0 0.0
        %6715 = vmatpush1.msra.mxu0 %v6681
        %6716 = vmatprep.subr.mxu0 0.0
        %6717 = vmatpush2.msra.mxu0 0.0
        %6718 = vmatprep.subr.mxu0 0.0
        %6719 = vmatpush2.msra.mxu0 0.0
        %6720 = vmatprep.subr.mxu0 0.0
        %6721 = vmatpush2.msra.mxu0 0.0
        %6722 = vmatprep.subr.mxu0 0.0
        %6723 = vmatpush2.msra.mxu0 0.0
        %6724 = vmatprep.subr.mxu0 0.0
        %6725 = vmatpush2.msra.mxu0 0.0
        %6726 = vmatprep.subr.mxu0 0.0
        %6727 = vmatpush2.msra.mxu0 0.0
        %6728 = vmatprep.subr.mxu0 0.0
        %6729 = vmatpush2.msra.mxu0 0.0
        %6730 = vmatprep.subr.mxu0 0.0
        %6731 = vmatpush2.msra.mxu0 0.0
        %6732 = vmatprep.subr.mxu0 0.0
        %6733 = vmatpush2.msra.mxu0 0.0
        %6734 = vmatprep.subr.mxu0 0.0
        %6735 = vmatpush2.msra.mxu0 0.0
        %6736 = vmatprep.subr.mxu0 0.0
        %6737 = vmatpush2.msra.mxu0 0.0
        %6738 = vmatprep.subr.mxu0 0.0
        %6739 = vmatpush2.msra.mxu0 0.0
        %6740 = vmatprep.subr.mxu0 0.0
        %6741 = vmatpush2.msra.mxu0 0.0
        %6742 = vmatprep.subr.mxu0 0.0
        %6743 = vmatpush2.msra.mxu0 0.0
        %6744 = vmatprep.subr.mxu0 0.0
        %6745 = vmatpush2.msra.mxu0 0.0
        %6746 = vmatprep.subr.mxu0 0.0
        %6747 = vmatpush2.msra.mxu0 0.0
        %6748 = vmatprep.mubr.f32.mxu0 0.0
        %6749 = vmatmul.mubr.f32.gmra.mxu0 %v5587
        %v6750 = vpop.f32.mrf.mxu0
        %v6751 = vadd.f32 0.0, %v6750
        %v6752 = vpop.f32.mrf.mxu0
        %6753 = vmatprep.mubr.f32.mxu0 0.0
        %6754 = vmatmul.mubr.f32.gmra.mxu0 %v5590
        %v6755 = vpop.f32.mrf.mxu0
        %v6756 = vadd.f32 0.0, %v6755
        %v6757 = vpop.f32.mrf.mxu0
        %6758 = vmatprep.mubr.f32.mxu0 0.0
        %6759 = vmatmul.mubr.f32.gmra.mxu0 %v5593
        %v6760 = vpop.f32.mrf.mxu0
        %v6761 = vadd.f32 0.0, %v6760
        %v6762 = vpop.f32.mrf.mxu0
        %6763 = vmatprep.mubr.f32.mxu0 0.0
        %6764 = vmatmul.mubr.f32.gmra.mxu0 %v5596
        %v6765 = vpop.f32.mrf.mxu0
        %v6766 = vadd.f32 0.0, %v6765
        %v6767 = vpop.f32.mrf.mxu0
        %6768 = vdwg.mxu0
        %v6769 = vmul.f32 %v6751, %v5447
        %v6770 = vmul.f32 %v6756, %v5448
        %v6771 = vmul.f32 %v6761, %v5449
        %v6772 = vmul.f32 %v6766, %v5450
        %v6774 = vsel %vm1270, %v6769, 0
        %v6777 = vsel %vm1270, %v6770, 0
        %v6780 = vsel %vm1270, %v6771, 0
        %v6783 = vsel %vm1270, %v6772, 0
        %6785 = vmatprep.subr.mxu0 0.0
        %6786 = vmatpush1.msra.mxu0 0.0
        %6787 = vmatprep.subr.mxu0 0.0
        %6788 = vmatpush1.msra.mxu0 0.0
        %6789 = vmatprep.subr.mxu0 0.0
        %6790 = vmatpush1.msra.mxu0 0.0
        %6791 = vmatprep.subr.mxu0 0.0
        %6792 = vmatpush1.msra.mxu0 0.0
        %6793 = vmatprep.subr.mxu0 0.0
        %6794 = vmatpush1.msra.mxu0 0.0
        %6795 = vmatprep.subr.mxu0 0.0
        %6796 = vmatpush1.msra.mxu0 0.0
        %6797 = vmatprep.subr.mxu0 0.0
        %6798 = vmatpush1.msra.mxu0 0.0
        %6799 = vmatprep.subr.mxu0 0.0
        %6800 = vmatpush1.msra.mxu0 0.0
        %6801 = vmatprep.subr.mxu0 0.0
        %6802 = vmatpush1.msra.mxu0 0.0
        %6803 = vmatprep.subr.mxu0 0.0
        %6804 = vmatpush1.msra.mxu0 0.0
        %6805 = vmatprep.subr.mxu0 0.0
        %6806 = vmatpush1.msra.mxu0 0.0
        %6807 = vmatprep.subr.mxu0 0.0
        %6808 = vmatpush1.msra.mxu0 0.0
        %6809 = vmatprep.subr.mxu0 %v5421
        %6810 = vmatpush1.msra.mxu0 %v5419
        %6811 = vmatprep.subr.mxu0 %v5415
        %6812 = vmatpush1.msra.mxu0 %v5413
        %6813 = vmatprep.subr.mxu0 %v5409
        %6814 = vmatpush1.msra.mxu0 %v5407
        %6815 = vmatprep.subr.mxu0 %v5403
        %6816 = vmatpush1.msra.mxu0 %v5401
        %6817 = vmatprep.subr.mxu0 0.0
        %6818 = vmatpush2.msra.mxu0 0.0
        %6819 = vmatprep.subr.mxu0 0.0
        %6820 = vmatpush2.msra.mxu0 0.0
        %6821 = vmatprep.subr.mxu0 0.0
        %6822 = vmatpush2.msra.mxu0 0.0
        %6823 = vmatprep.subr.mxu0 0.0
        %6824 = vmatpush2.msra.mxu0 0.0
        %6825 = vmatprep.subr.mxu0 0.0
        %6826 = vmatpush2.msra.mxu0 0.0
        %6827 = vmatprep.subr.mxu0 0.0
        %6828 = vmatpush2.msra.mxu0 0.0
        %6829 = vmatprep.subr.mxu0 0.0
        %6830 = vmatpush2.msra.mxu0 0.0
        %6831 = vmatprep.subr.mxu0 0.0
        %6832 = vmatpush2.msra.mxu0 0.0
        %6833 = vmatprep.subr.mxu0 0.0
        %6834 = vmatpush2.msra.mxu0 0.0
        %6835 = vmatprep.subr.mxu0 0.0
        %6836 = vmatpush2.msra.mxu0 0.0
        %6837 = vmatprep.subr.mxu0 0.0
        %6838 = vmatpush2.msra.mxu0 0.0
        %6839 = vmatprep.subr.mxu0 0.0
        %6840 = vmatpush2.msra.mxu0 0.0
        %6841 = vmatprep.subr.mxu0 0.0
        %6842 = vmatpush2.msra.mxu0 0.0
        %6843 = vmatprep.subr.mxu0 0.0
        %6844 = vmatpush2.msra.mxu0 0.0
        %6845 = vmatprep.subr.mxu0 0.0
        %6846 = vmatpush2.msra.mxu0 0.0
        %6847 = vmatprep.subr.mxu0 0.0
        %6848 = vmatpush2.msra.mxu0 0.0
        %6849 = vmatprep.mubr.f32.mxu0 0.0
        %6850 = vmatmul.mubr.f32.gmra.mxu0 %v6774
        %v6851 = vpop.f32.mrf.mxu0
        %v6852 = vadd.f32 0.0, %v6851
        %v6853 = vpop.f32.mrf.mxu0
        %v6854 = vadd.f32 0.0, %v6853
        %6855 = vmatprep.mubr.f32.mxu0 0.0
        %6856 = vmatmul.mubr.f32.gmra.mxu0 %v6777
        %v6857 = vpop.f32.mrf.mxu0
        %v6858 = vadd.f32 0.0, %v6857
        %v6859 = vpop.f32.mrf.mxu0
        %v6860 = vadd.f32 0.0, %v6859
        %6861 = vmatprep.mubr.f32.mxu0 0.0
        %6862 = vmatmul.mubr.f32.gmra.mxu0 %v6780
        %v6863 = vpop.f32.mrf.mxu0
        %v6864 = vadd.f32 0.0, %v6863
        %v6865 = vpop.f32.mrf.mxu0
        %v6866 = vadd.f32 0.0, %v6865
        %6867 = vmatprep.mubr.f32.mxu0 0.0
        %6868 = vmatmul.mubr.f32.gmra.mxu0 %v6783
        %v6869 = vpop.f32.mrf.mxu0
        %v6870 = vadd.f32 0.0, %v6869
        %v6871 = vpop.f32.mrf.mxu0
        %v6872 = vadd.f32 0.0, %v6871
        %6873 = vdwg.mxu0
        %v6874 = vmul.f32 %v6852, 0.35355338
        %v6875 = vmul.f32 %v6854, 0.35355338
        %v6876 = vmul.f32 %v6858, 0.35355338
        %v6877 = vmul.f32 %v6860, 0.35355338
        %v6878 = vmul.f32 %v6864, 0.35355338
        %v6879 = vmul.f32 %v6866, 0.35355338
        %v6880 = vmul.f32 %v6870, 0.35355338
        %v6881 = vmul.f32 %v6872, 0.35355338
        %v6882 = vrot.slane %v6874, 4
        %v6883 = vmax.f32 %v6874, %v6882
        %v6884 = vrot.slane %v6883, 2
        %v6885 = vmax.f32 %v6883, %v6884
        %v6886 = vrot.slane %v6885, 1
        %v6887 = vmax.f32 %v6885, %v6886
        %v6888 = vrot.slane %v6875, 4
        %v6889 = vmax.f32 %v6875, %v6888
        %v6890 = vrot.slane %v6889, 2
        %v6891 = vmax.f32 %v6889, %v6890
        %v6892 = vrot.slane %v6891, 1
        %v6893 = vmax.f32 %v6891, %v6892
        %v6894 = vrot.slane %v6876, 4
        %v6895 = vmax.f32 %v6876, %v6894
        %v6896 = vrot.slane %v6895, 2
        %v6897 = vmax.f32 %v6895, %v6896
        %v6898 = vrot.slane %v6897, 1
        %v6899 = vmax.f32 %v6897, %v6898
        %v6900 = vrot.slane %v6877, 4
        %v6901 = vmax.f32 %v6877, %v6900
        %v6902 = vrot.slane %v6901, 2
        %v6903 = vmax.f32 %v6901, %v6902
        %v6904 = vrot.slane %v6903, 1
        %v6905 = vmax.f32 %v6903, %v6904
        %v6906 = vrot.slane %v6878, 4
        %v6907 = vmax.f32 %v6878, %v6906
        %v6908 = vrot.slane %v6907, 2
        %v6909 = vmax.f32 %v6907, %v6908
        %v6910 = vrot.slane %v6909, 1
        %v6911 = vmax.f32 %v6909, %v6910
        %v6912 = vrot.slane %v6879, 4
        %v6913 = vmax.f32 %v6879, %v6912
        %v6914 = vrot.slane %v6913, 2
        %v6915 = vmax.f32 %v6913, %v6914
        %v6916 = vrot.slane %v6915, 1
        %v6917 = vmax.f32 %v6915, %v6916
        %v6918 = vrot.slane %v6880, 4
        %v6919 = vmax.f32 %v6880, %v6918
        %v6920 = vrot.slane %v6919, 2
        %v6921 = vmax.f32 %v6919, %v6920
        %v6922 = vrot.slane %v6921, 1
        %v6923 = vmax.f32 %v6921, %v6922
        %v6924 = vrot.slane %v6881, 4
        %v6925 = vmax.f32 %v6881, %v6924
        %v6926 = vrot.slane %v6925, 2
        %v6927 = vmax.f32 %v6925, %v6926
        %v6928 = vrot.slane %v6927, 1
        %v6929 = vmax.f32 %v6927, %v6928
        %v6930 = vsub.f32 %v6874, %v6887
        %v6931 = vsub.f32 %v6875, %v6893
        %v6932 = vsub.f32 %v6876, %v6899
        %v6933 = vsub.f32 %v6877, %v6905
        %v6934 = vsub.f32 %v6878, %v6911
        %v6935 = vsub.f32 %v6879, %v6917
        %v6936 = vsub.f32 %v6880, %v6923
        %v6937 = vsub.f32 %v6881, %v6929
        %v6938 = vmul.f32 %v6930, 1.442695
        %v6939 = vpow.pop %v6938
        %v6940 = vmul.f32 %v6931, 1.442695
        %v6941 = vpow.pop %v6940
        %v6942 = vmul.f32 %v6932, 1.442695
        %v6943 = vpow.pop %v6942
        %v6944 = vmul.f32 %v6933, 1.442695
        %v6945 = vpow.pop %v6944
        %v6946 = vmul.f32 %v6934, 1.442695
        %v6947 = vpow.pop %v6946
        %v6948 = vmul.f32 %v6935, 1.442695
        %v6949 = vpow.pop %v6948
        %v6950 = vmul.f32 %v6936, 1.442695
        %v6951 = vpow.pop %v6950
        %v6952 = vmul.f32 %v6937, 1.442695
        %v6953 = vpow.pop %v6952
        %v6954 = vrot.slane %v6939, 4
        %v6955 = vadd.f32 %v6939, %v6954
        %v6956 = vrot.slane %v6955, 2
        %v6957 = vadd.f32 %v6955, %v6956
        %v6958 = vrot.slane %v6957, 1
        %v6959 = vadd.f32 %v6957, %v6958
        %v6960 = vrot.slane %v6941, 4
        %v6961 = vadd.f32 %v6941, %v6960
        %v6962 = vrot.slane %v6961, 2
        %v6963 = vadd.f32 %v6961, %v6962
        %v6964 = vrot.slane %v6963, 1
        %v6965 = vadd.f32 %v6963, %v6964
        %v6966 = vrot.slane %v6943, 4
        %v6967 = vadd.f32 %v6943, %v6966
        %v6968 = vrot.slane %v6967, 2
        %v6969 = vadd.f32 %v6967, %v6968
        %v6970 = vrot.slane %v6969, 1
        %v6971 = vadd.f32 %v6969, %v6970
        %v6972 = vrot.slane %v6945, 4
        %v6973 = vadd.f32 %v6945, %v6972
        %v6974 = vrot.slane %v6973, 2
        %v6975 = vadd.f32 %v6973, %v6974
        %v6976 = vrot.slane %v6975, 1
        %v6977 = vadd.f32 %v6975, %v6976
        %v6978 = vrot.slane %v6947, 4
        %v6979 = vadd.f32 %v6947, %v6978
        %v6980 = vrot.slane %v6979, 2
        %v6981 = vadd.f32 %v6979, %v6980
        %v6982 = vrot.slane %v6981, 1
        %v6983 = vadd.f32 %v6981, %v6982
        %v6984 = vrot.slane %v6949, 4
        %v6985 = vadd.f32 %v6949, %v6984
        %v6986 = vrot.slane %v6985, 2
        %v6987 = vadd.f32 %v6985, %v6986
        %v6988 = vrot.slane %v6987, 1
        %v6989 = vadd.f32 %v6987, %v6988
        %v6990 = vrot.slane %v6951, 4
        %v6991 = vadd.f32 %v6951, %v6990
        %v6992 = vrot.slane %v6991, 2
        %v6993 = vadd.f32 %v6991, %v6992
        %v6994 = vrot.slane %v6993, 1
        %v6995 = vadd.f32 %v6993, %v6994
        %v6996 = vrot.slane %v6953, 4
        %v6997 = vadd.f32 %v6953, %v6996
        %v6998 = vrot.slane %v6997, 2
        %v6999 = vadd.f32 %v6997, %v6998
        %v7000 = vrot.slane %v6999, 1
        %v7001 = vadd.f32 %v6999, %v7000
        %v7002 = vrcp.pop %v6959
        %v7003 = vrcp.pop %v6965
        %v7004 = vrcp.pop %v6971
        %v7005 = vrcp.pop %v6977
        %v7006 = vrcp.pop %v6983
        %v7007 = vrcp.pop %v6989
        %v7008 = vrcp.pop %v6995
        %v7009 = vrcp.pop %v7001
        %v7010 = vmul.f32 %v6939, %v7002
        %v7011 = vmul.f32 %v6941, %v7003
        %v7012 = vmul.f32 %v6943, %v7004
        %v7013 = vmul.f32 %v6945, %v7005
        %v7014 = vmul.f32 %v6947, %v7006
        %v7015 = vmul.f32 %v6949, %v7007
        %v7016 = vmul.f32 %v6951, %v7008
        %v7017 = vmul.f32 %v6953, %v7009
        %v7018 = vadd.f32 %v7010, 1e-08
        %v7019 = vadd.f32 %v7011, 1e-08
        %v7020 = vadd.f32 %v7012, 1e-08
        %v7021 = vadd.f32 %v7013, 1e-08
        %v7022 = vadd.f32 %v7014, 1e-08
        %v7023 = vadd.f32 %v7015, 1e-08
        %v7024 = vadd.f32 %v7016, 1e-08
        %v7025 = vadd.f32 %v7017, 1e-08
        %v7026 = vadd.f32 %v7018, %v7019
        %7027 = vadd.xlane.f32.xlu0 %v7026
        %v7028 = vpop.xlane.xlu0 %7027
        %v7029 = vadd.f32 %v7020, %v7021
        %7030 = vadd.xlane.f32.xlu0 %v7029
        %v7031 = vpop.xlane.xlu0 %7030
        %v7032 = vadd.f32 %v7022, %v7023
        %7033 = vadd.xlane.f32.xlu0 %v7032
        %v7034 = vpop.xlane.xlu0 %7033
        %v7035 = vadd.f32 %v7024, %v7025
        %7036 = vadd.xlane.f32.xlu0 %v7035
        %v7037 = vpop.xlane.xlu0 %7036
        %v7038 = vrcp.pop %v7028
        %v7039 = vrcp.pop %v7031
        %v7040 = vrcp.pop %v7034
        %v7041 = vrcp.pop %v7037
        %v7042 = vmul.f32 %v7018, %v7038
        %v7043 = vmul.f32 %v7019, %v7038
        %v7044 = vmul.f32 %v7020, %v7039
        %v7045 = vmul.f32 %v7021, %v7039
        %v7046 = vmul.f32 %v7022, %v7040
        %v7047 = vmul.f32 %v7023, %v7040
        %v7048 = vmul.f32 %v7024, %v7041
        %v7049 = vmul.f32 %v7025, %v7041
        %7050 = vmatprep.subr.mxu0 0.0
        %7051 = vmatpush1.xpose.msra.mxu0 0.0
        %7052 = vmatprep.subr.mxu0 0.0
        %7053 = vmatpush1.xpose.msra.mxu0 0.0
        %7054 = vmatprep.subr.mxu0 0.0
        %7055 = vmatpush1.xpose.msra.mxu0 0.0
        %7056 = vmatprep.subr.mxu0 0.0
        %7057 = vmatpush1.xpose.msra.mxu0 0.0
        %7058 = vmatprep.subr.mxu0 0.0
        %7059 = vmatpush1.xpose.msra.mxu0 0.0
        %7060 = vmatprep.subr.mxu0 0.0
        %7061 = vmatpush1.xpose.msra.mxu0 0.0
        %7062 = vmatprep.subr.mxu0 0.0
        %7063 = vmatpush1.xpose.msra.mxu0 0.0
        %7064 = vmatprep.subr.mxu0 0.0
        %7065 = vmatpush1.xpose.msra.mxu0 0.0
        %7066 = vmatprep.subr.mxu0 0.0
        %7067 = vmatpush1.xpose.msra.mxu0 0.0
        %7068 = vmatprep.subr.mxu0 0.0
        %7069 = vmatpush1.xpose.msra.mxu0 0.0
        %7070 = vmatprep.subr.mxu0 0.0
        %7071 = vmatpush1.xpose.msra.mxu0 0.0
        %7072 = vmatprep.subr.mxu0 0.0
        %7073 = vmatpush1.xpose.msra.mxu0 0.0
        %7074 = vmatprep.subr.mxu0 %v5445
        %7075 = vmatpush1.xpose.msra.mxu0 %v5443
        %7076 = vmatprep.subr.mxu0 %v5439
        %7077 = vmatpush1.xpose.msra.mxu0 %v5437
        %7078 = vmatprep.subr.mxu0 %v5433
        %7079 = vmatpush1.xpose.msra.mxu0 %v5431
        %7080 = vmatprep.subr.mxu0 %v5427
        %7081 = vmatpush1.xpose.msra.mxu0 %v5425
        %7082 = vmatprep.subr.mxu0 0.0
        %7083 = vmatpush2.xpose.msra.mxu0 0.0
        %7084 = vmatprep.subr.mxu0 0.0
        %7085 = vmatpush2.xpose.msra.mxu0 0.0
        %7086 = vmatprep.subr.mxu0 0.0
        %7087 = vmatpush2.xpose.msra.mxu0 0.0
        %7088 = vmatprep.subr.mxu0 0.0
        %7089 = vmatpush2.xpose.msra.mxu0 0.0
        %7090 = vmatprep.subr.mxu0 0.0
        %7091 = vmatpush2.xpose.msra.mxu0 0.0
        %7092 = vmatprep.subr.mxu0 0.0
        %7093 = vmatpush2.xpose.msra.mxu0 0.0
        %7094 = vmatprep.subr.mxu0 0.0
        %7095 = vmatpush2.xpose.msra.mxu0 0.0
        %7096 = vmatprep.subr.mxu0 0.0
        %7097 = vmatpush2.xpose.msra.mxu0 0.0
        %7098 = vmatprep.subr.mxu0 0.0
        %7099 = vmatpush2.xpose.msra.mxu0 0.0
        %7100 = vmatprep.subr.mxu0 0.0
        %7101 = vmatpush2.xpose.msra.mxu0 0.0
        %7102 = vmatprep.subr.mxu0 0.0
        %7103 = vmatpush2.xpose.msra.mxu0 0.0
        %7104 = vmatprep.subr.mxu0 0.0
        %7105 = vmatpush2.xpose.msra.mxu0 0.0
        %7106 = vmatprep.subr.mxu0 0.0
        %7107 = vmatpush2.xpose.msra.mxu0 0.0
        %7108 = vmatprep.subr.mxu0 0.0
        %7109 = vmatpush2.xpose.msra.mxu0 0.0
        %7110 = vmatprep.subr.mxu0 0.0
        %7111 = vmatpush2.xpose.msra.mxu0 0.0
        %7112 = vmatprep.subr.mxu0 0.0
        %7113 = vmatpush2.xpose.msra.mxu0 0.0
        %7114 = vmatprep.mubr.f32.mxu0 %v7043
        %7115 = vmatmul.mubr.f32.gmra.mxu0 %v7042
        %v7116 = vpop.f32.mrf.mxu0
        %v7117 = vadd.f32 0.0, %v7116
        %v7118 = vpop.f32.mrf.mxu0
        %7119 = vmatprep.mubr.f32.mxu0 %v7045
        %7120 = vmatmul.mubr.f32.gmra.mxu0 %v7044
        %v7121 = vpop.f32.mrf.mxu0
        %v7122 = vadd.f32 0.0, %v7121
        %v7123 = vpop.f32.mrf.mxu0
        %7124 = vmatprep.mubr.f32.mxu0 %v7047
        %7125 = vmatmul.mubr.f32.gmra.mxu0 %v7046
        %v7126 = vpop.f32.mrf.mxu0
        %v7127 = vadd.f32 0.0, %v7126
        %v7128 = vpop.f32.mrf.mxu0
        %7129 = vmatprep.mubr.f32.mxu0 %v7049
        %7130 = vmatmul.mubr.f32.gmra.mxu0 %v7048
        %v7131 = vpop.f32.mrf.mxu0
        %v7132 = vadd.f32 0.0, %v7131
        %v7133 = vpop.f32.mrf.mxu0
        %7134 = vdwg.mxu0
        %v7135 = vmul.f32 %v7117, %v5447
        %v7136 = vmul.f32 %v7122, %v5448
        %v7137 = vmul.f32 %v7127, %v5449
        %v7138 = vmul.f32 %v7132, %v5450
        %7139 = vmatprep.subr.mxu0 0.0
        %7140 = vmatpush1.msra.mxu0 0.0
        %7141 = vmatprep.subr.mxu0 0.0
        %7142 = vmatpush1.msra.mxu0 0.0
        %7143 = vmatprep.subr.mxu0 0.0
        %7144 = vmatpush1.msra.mxu0 0.0
        %7145 = vmatprep.subr.mxu0 0.0
        %7146 = vmatpush1.msra.mxu0 0.0
        %7147 = vmatprep.subr.mxu0 0.0
        %7148 = vmatpush1.msra.mxu0 0.0
        %7149 = vmatprep.subr.mxu0 0.0
        %7150 = vmatpush1.msra.mxu0 0.0
        %7151 = vmatprep.subr.mxu0 0.0
        %7152 = vmatpush1.msra.mxu0 0.0
        %7153 = vmatprep.subr.mxu0 0.0
        %7154 = vmatpush1.msra.mxu0 0.0
        %7155 = vmatprep.subr.mxu0 0.0
        %7156 = vmatpush1.msra.mxu0 0.0
        %7157 = vmatprep.subr.mxu0 0.0
        %7158 = vmatpush1.msra.mxu0 0.0
        %7159 = vmatprep.subr.mxu0 0.0
        %7160 = vmatpush1.msra.mxu0 0.0
        %7161 = vmatprep.subr.mxu0 0.0
        %7162 = vmatpush1.msra.mxu0 0.0
        %7163 = vmatprep.subr.mxu0 0.0
        %7164 = vmatpush1.msra.mxu0 %v7138
        %7165 = vmatprep.subr.mxu0 0.0
        %7166 = vmatpush1.msra.mxu0 %v7137
        %7167 = vmatprep.subr.mxu0 0.0
        %7168 = vmatpush1.msra.mxu0 %v7136
        %7169 = vmatprep.subr.mxu0 0.0
        %7170 = vmatpush1.msra.mxu0 %v7135
        %7171 = vmatprep.subr.mxu0 0.0
        %7172 = vmatpush2.msra.mxu0 0.0
        %7173 = vmatprep.subr.mxu0 0.0
        %7174 = vmatpush2.msra.mxu0 0.0
        %7175 = vmatprep.subr.mxu0 0.0
        %7176 = vmatpush2.msra.mxu0 0.0
        %7177 = vmatprep.subr.mxu0 0.0
        %7178 = vmatpush2.msra.mxu0 0.0
        %7179 = vmatprep.subr.mxu0 0.0
        %7180 = vmatpush2.msra.mxu0 0.0
        %7181 = vmatprep.subr.mxu0 0.0
        %7182 = vmatpush2.msra.mxu0 0.0
        %7183 = vmatprep.subr.mxu0 0.0
        %7184 = vmatpush2.msra.mxu0 0.0
        %7185 = vmatprep.subr.mxu0 0.0
        %7186 = vmatpush2.msra.mxu0 0.0
        %7187 = vmatprep.subr.mxu0 0.0
        %7188 = vmatpush2.msra.mxu0 0.0
        %7189 = vmatprep.subr.mxu0 0.0
        %7190 = vmatpush2.msra.mxu0 0.0
        %7191 = vmatprep.subr.mxu0 0.0
        %7192 = vmatpush2.msra.mxu0 0.0
        %7193 = vmatprep.subr.mxu0 0.0
        %7194 = vmatpush2.msra.mxu0 0.0
        %7195 = vmatprep.subr.mxu0 0.0
        %7196 = vmatpush2.msra.mxu0 0.0
        %7197 = vmatprep.subr.mxu0 0.0
        %7198 = vmatpush2.msra.mxu0 0.0
        %7199 = vmatprep.subr.mxu0 0.0
        %7200 = vmatpush2.msra.mxu0 0.0
        %7201 = vmatprep.subr.mxu0 0.0
        %7202 = vmatpush2.msra.mxu0 0.0
        %7203 = vmatprep.mubr.f32.mxu0 0.0
        %7204 = vmatmul.mubr.f32.gmra.mxu0 %v6086
        %v7205 = vpop.f32.mrf.mxu0
        %v7206 = vadd.f32 0.0, %v7205
        %v7207 = vpop.f32.mrf.mxu0
        %7208 = vdwg.mxu0
        %v7210 = vsel %vm1270, %v7206, 0
        %7212 = vmatprep.subr.mxu0 0.0
        %7213 = vmatpush1.msra.mxu0 0.0
        %7214 = vmatprep.subr.mxu0 0.0
        %7215 = vmatpush1.msra.mxu0 0.0
        %7216 = vmatprep.subr.mxu0 0.0
        %7217 = vmatpush1.msra.mxu0 0.0
        %7218 = vmatprep.subr.mxu0 0.0
        %7219 = vmatpush1.msra.mxu0 0.0
        %7220 = vmatprep.subr.mxu0 0.0
        %7221 = vmatpush1.msra.mxu0 0.0
        %7222 = vmatprep.subr.mxu0 0.0
        %7223 = vmatpush1.msra.mxu0 0.0
        %7224 = vmatprep.subr.mxu0 0.0
        %7225 = vmatpush1.msra.mxu0 0.0
        %7226 = vmatprep.subr.mxu0 0.0
        %7227 = vmatpush1.msra.mxu0 0.0
        %7228 = vmatprep.subr.mxu0 0.0
        %7229 = vmatpush1.msra.mxu0 0.0
        %7230 = vmatprep.subr.mxu0 0.0
        %7231 = vmatpush1.msra.mxu0 0.0
        %7232 = vmatprep.subr.mxu0 0.0
        %7233 = vmatpush1.msra.mxu0 0.0
        %7234 = vmatprep.subr.mxu0 0.0
        %7235 = vmatpush1.msra.mxu0 0.0
        %7236 = vmatprep.subr.mxu0 0.0
        %7237 = vmatpush1.msra.mxu0 %v6161
        %7238 = vmatprep.subr.mxu0 0.0
        %7239 = vmatpush1.msra.mxu0 %v6160
        %7240 = vmatprep.subr.mxu0 0.0
        %7241 = vmatpush1.msra.mxu0 %v6159
        %7242 = vmatprep.subr.mxu0 0.0
        %7243 = vmatpush1.msra.mxu0 %v6158
        %7244 = vmatprep.subr.mxu0 0.0
        %7245 = vmatpush2.msra.mxu0 0.0
        %7246 = vmatprep.subr.mxu0 0.0
        %7247 = vmatpush2.msra.mxu0 0.0
        %7248 = vmatprep.subr.mxu0 0.0
        %7249 = vmatpush2.msra.mxu0 0.0
        %7250 = vmatprep.subr.mxu0 0.0
        %7251 = vmatpush2.msra.mxu0 0.0
        %7252 = vmatprep.subr.mxu0 0.0
        %7253 = vmatpush2.msra.mxu0 0.0
        %7254 = vmatprep.subr.mxu0 0.0
        %7255 = vmatpush2.msra.mxu0 0.0
        %7256 = vmatprep.subr.mxu0 0.0
        %7257 = vmatpush2.msra.mxu0 0.0
        %7258 = vmatprep.subr.mxu0 0.0
        %7259 = vmatpush2.msra.mxu0 0.0
        %7260 = vmatprep.subr.mxu0 0.0
        %7261 = vmatpush2.msra.mxu0 0.0
        %7262 = vmatprep.subr.mxu0 0.0
        %7263 = vmatpush2.msra.mxu0 0.0
        %7264 = vmatprep.subr.mxu0 0.0
        %7265 = vmatpush2.msra.mxu0 0.0
        %7266 = vmatprep.subr.mxu0 0.0
        %7267 = vmatpush2.msra.mxu0 0.0
        %7268 = vmatprep.subr.mxu0 0.0
        %7269 = vmatpush2.msra.mxu0 0.0
        %7270 = vmatprep.subr.mxu0 0.0
        %7271 = vmatpush2.msra.mxu0 0.0
        %7272 = vmatprep.subr.mxu0 0.0
        %7273 = vmatpush2.msra.mxu0 0.0
        %7274 = vmatprep.subr.mxu0 0.0
        %7275 = vmatpush2.msra.mxu0 0.0
        %7276 = vmatprep.mubr.f32.mxu0 0.0
        %7277 = vmatmul.mubr.f32.gmra.mxu0 %v7210
        %v7278 = vpop.f32.mrf.mxu0
        %v7279 = vadd.f32 %v6167, %v7278
        %v7280 = vpop.f32.mrf.mxu0
        %7281 = vdwg.mxu0
        %v7282 = vsel %vm1270, %v6582, 0
        %7284 = vmatprep.subr.mxu0 0.0
        %7285 = vmatpush1.msra.mxu0 0.0
        %7286 = vmatprep.subr.mxu0 0.0
        %7287 = vmatpush1.msra.mxu0 0.0
        %7288 = vmatprep.subr.mxu0 0.0
        %7289 = vmatpush1.msra.mxu0 0.0
        %7290 = vmatprep.subr.mxu0 0.0
        %7291 = vmatpush1.msra.mxu0 0.0
        %7292 = vmatprep.subr.mxu0 0.0
        %7293 = vmatpush1.msra.mxu0 0.0
        %7294 = vmatprep.subr.mxu0 0.0
        %7295 = vmatpush1.msra.mxu0 0.0
        %7296 = vmatprep.subr.mxu0 0.0
        %7297 = vmatpush1.msra.mxu0 0.0
        %7298 = vmatprep.subr.mxu0 0.0
        %7299 = vmatpush1.msra.mxu0 0.0
        %7300 = vmatprep.subr.mxu0 0.0
        %7301 = vmatpush1.msra.mxu0 0.0
        %7302 = vmatprep.subr.mxu0 0.0
        %7303 = vmatpush1.msra.mxu0 0.0
        %7304 = vmatprep.subr.mxu0 0.0
        %7305 = vmatpush1.msra.mxu0 0.0
        %7306 = vmatprep.subr.mxu0 0.0
        %7307 = vmatpush1.msra.mxu0 0.0
        %7308 = vmatprep.subr.mxu0 0.0
        %7309 = vmatpush1.msra.mxu0 %v6245
        %7310 = vmatprep.subr.mxu0 0.0
        %7311 = vmatpush1.msra.mxu0 %v6244
        %7312 = vmatprep.subr.mxu0 0.0
        %7313 = vmatpush1.msra.mxu0 %v6243
        %7314 = vmatprep.subr.mxu0 0.0
        %7315 = vmatpush1.msra.mxu0 %v6242
        %7316 = vmatprep.subr.mxu0 0.0
        %7317 = vmatpush2.msra.mxu0 0.0
        %7318 = vmatprep.subr.mxu0 0.0
        %7319 = vmatpush2.msra.mxu0 0.0
        %7320 = vmatprep.subr.mxu0 0.0
        %7321 = vmatpush2.msra.mxu0 0.0
        %7322 = vmatprep.subr.mxu0 0.0
        %7323 = vmatpush2.msra.mxu0 0.0
        %7324 = vmatprep.subr.mxu0 0.0
        %7325 = vmatpush2.msra.mxu0 0.0
        %7326 = vmatprep.subr.mxu0 0.0
        %7327 = vmatpush2.msra.mxu0 0.0
        %7328 = vmatprep.subr.mxu0 0.0
        %7329 = vmatpush2.msra.mxu0 0.0
        %7330 = vmatprep.subr.mxu0 0.0
        %7331 = vmatpush2.msra.mxu0 0.0
        %7332 = vmatprep.subr.mxu0 0.0
        %7333 = vmatpush2.msra.mxu0 0.0
        %7334 = vmatprep.subr.mxu0 0.0
        %7335 = vmatpush2.msra.mxu0 0.0
        %7336 = vmatprep.subr.mxu0 0.0
        %7337 = vmatpush2.msra.mxu0 0.0
        %7338 = vmatprep.subr.mxu0 0.0
        %7339 = vmatpush2.msra.mxu0 0.0
        %7340 = vmatprep.subr.mxu0 0.0
        %7341 = vmatpush2.msra.mxu0 0.0
        %7342 = vmatprep.subr.mxu0 0.0
        %7343 = vmatpush2.msra.mxu0 0.0
        %7344 = vmatprep.subr.mxu0 0.0
        %7345 = vmatpush2.msra.mxu0 0.0
        %7346 = vmatprep.subr.mxu0 0.0
        %7347 = vmatpush2.msra.mxu0 0.0
        %7348 = vmatprep.mubr.f32.mxu0 0.0
        %7349 = vmatmul.mubr.f32.gmra.mxu0 %v7282
        %v7350 = vpop.f32.mrf.mxu0
        %v7351 = vadd.f32 %v6251, %v7350
        %v7352 = vpop.f32.mrf.mxu0
        %7353 = vdwg.mxu0
        %v7354 = vadd.f32 %v7279, %v7351
        %v7355 = vxor.u32 %v7354, 2147483648
        %v7356 = vmul.f32 %v7355, 1.442695
        %v7357 = vpow.pop %v7356
        %v7358 = vadd.f32 %v7357, 1.0
        %v7359 = vrcp.pop %v7358
        %v7360 = vmul.f32 1.0, %v7359
        %7362 = vrot.lane.b32.xlu0 %v7351, 64
        %v7363 = vpop.permute.xlu0 %7362
        %v7365 = vmul.f32 %v7360, %v7363
        %7367 = vrot.lane.b32.xlu0 %v7365, 64
        %v7368 = vpop.permute.xlu0 %7367
        %v7370 = vadd.f32 %v7279, %v7368
        %v7371 = vtanh.pop %v7370
        %v7372 = vsub.f32 1.0, %v7360
        %7374 = vrot.lane.b32.xlu0 %v7371, 96
        %v7375 = vpop.permute.xlu0 %7374
        %v7377 = vmul.f32 %v7372, %v7375
        %v7378 = vmul.f32 %v7360, %v6579
        %v7379 = vadd.f32 %v7377, %v7378
        %7381 = vrot.lane.b32.xlu0 %v7379, 96
        %v7382 = vpop.permute.xlu0 %7381
        %v7384 = vsel %vm1270, %v7382, 0.0
        %7385 = vadd.xlane.f32.xlu0 %v7384
        %v7386 = vpop.xlane.xlu0 %7385
        %v7387 = vmul.f32 %v7386, %v5139
        %v7388 = vsub.f32 %v7379, %v7387
        %v7389 = vmul.f32 %v7388, %v7388
        %7391 = vrot.lane.b32.xlu0 %v7389, 96
        %v7392 = vpop.permute.xlu0 %7391
        %v7394 = vsel %vm1270, %v7392, 0.0
        %7395 = vadd.xlane.f32.xlu0 %v7394
        %v7396 = vpop.xlane.xlu0 %7395
        %v7397 = vmul.f32 %v7396, %v5139
        %v7398 = vadd.f32 %v7397, 1e-05
        %v7399 = vrsqrt.pop %v7398
        %v7400 = vmul.f32 %v7388, %v7399
        %v7401 = vmul.f32 %v7400, %v6384
        %v7402 = vadd.f32 %v7401, %v6393
        %7404 = vrot.lane.b32.xlu0 %v7402, 96
        %v7405 = vpop.permute.xlu0 %7404
        %v7406 = vsel %vm1270, %v7405, 0
        %7408 = vmatprep.subr.mxu0 0.0
        %7409 = vmatpush1.msra.mxu0 0.0
        %7410 = vmatprep.subr.mxu0 0.0
        %7411 = vmatpush1.msra.mxu0 0.0
        %7412 = vmatprep.subr.mxu0 0.0
        %7413 = vmatpush1.msra.mxu0 0.0
        %7414 = vmatprep.subr.mxu0 0.0
        %7415 = vmatpush1.msra.mxu0 0.0
        %7416 = vmatprep.subr.mxu0 0.0
        %7417 = vmatpush1.msra.mxu0 0.0
        %7418 = vmatprep.subr.mxu0 0.0
        %7419 = vmatpush1.msra.mxu0 0.0
        %7420 = vmatprep.subr.mxu0 0.0
        %7421 = vmatpush1.msra.mxu0 0.0
        %7422 = vmatprep.subr.mxu0 0.0
        %7423 = vmatpush1.msra.mxu0 0.0
        %7424 = vmatprep.subr.mxu0 0.0
        %7425 = vmatpush1.msra.mxu0 0.0
        %7426 = vmatprep.subr.mxu0 0.0
        %7427 = vmatpush1.msra.mxu0 0.0
        %7428 = vmatprep.subr.mxu0 0.0
        %7429 = vmatpush1.msra.mxu0 0.0
        %7430 = vmatprep.subr.mxu0 0.0
        %7431 = vmatpush1.msra.mxu0 0.0
        %7432 = vmatprep.subr.mxu0 0.0
        %7433 = vmatpush1.msra.mxu0 %v6399
        %7434 = vmatprep.subr.mxu0 0.0
        %7435 = vmatpush1.msra.mxu0 %v6398
        %7436 = vmatprep.subr.mxu0 0.0
        %7437 = vmatpush1.msra.mxu0 %v6397
        %7438 = vmatprep.subr.mxu0 0.0
        %7439 = vmatpush1.msra.mxu0 %v6396
        %7440 = vmatprep.subr.mxu0 0.0
        %7441 = vmatpush2.msra.mxu0 0.0
        %7442 = vmatprep.subr.mxu0 0.0
        %7443 = vmatpush2.msra.mxu0 0.0
        %7444 = vmatprep.subr.mxu0 0.0
        %7445 = vmatpush2.msra.mxu0 0.0
        %7446 = vmatprep.subr.mxu0 0.0
        %7447 = vmatpush2.msra.mxu0 0.0
        %7448 = vmatprep.subr.mxu0 0.0
        %7449 = vmatpush2.msra.mxu0 0.0
        %7450 = vmatprep.subr.mxu0 0.0
        %7451 = vmatpush2.msra.mxu0 0.0
        %7452 = vmatprep.subr.mxu0 0.0
        %7453 = vmatpush2.msra.mxu0 0.0
        %7454 = vmatprep.subr.mxu0 0.0
        %7455 = vmatpush2.msra.mxu0 0.0
        %7456 = vmatprep.subr.mxu0 0.0
        %7457 = vmatpush2.msra.mxu0 0.0
        %7458 = vmatprep.subr.mxu0 0.0
        %7459 = vmatpush2.msra.mxu0 0.0
        %7460 = vmatprep.subr.mxu0 0.0
        %7461 = vmatpush2.msra.mxu0 0.0
        %7462 = vmatprep.subr.mxu0 0.0
        %7463 = vmatpush2.msra.mxu0 0.0
        %7464 = vmatprep.subr.mxu0 0.0
        %7465 = vmatpush2.msra.mxu0 0.0
        %7466 = vmatprep.subr.mxu0 0.0
        %7467 = vmatpush2.msra.mxu0 0.0
        %7468 = vmatprep.subr.mxu0 0.0
        %7469 = vmatpush2.msra.mxu0 0.0
        %7470 = vmatprep.subr.mxu0 0.0
        %7471 = vmatpush2.msra.mxu0 0.0
        %7472 = vmatprep.mubr.f32.mxu0 0.0
        %7473 = vmatmul.mubr.f32.gmra.mxu0 %v7406
        %v7474 = vpop.f32.mrf.mxu0
        %v7475 = vadd.f32 %v6405, %v7474
        %v7476 = vpop.f32.mrf.mxu0
        %7477 = vdwg.mxu0
        %v7478 = vmax.f32 %v7475, 0.0
        %v7480 = vsel %vm6491, %v7478, 0
        %7482 = vmatprep.subr.mxu0 0.0
        %7483 = vmatpush1.msra.mxu0 0.0
        %7484 = vmatprep.subr.mxu0 0.0
        %7485 = vmatpush1.msra.mxu0 0.0
        %7486 = vmatprep.subr.mxu0 0.0
        %7487 = vmatpush1.msra.mxu0 0.0
        %7488 = vmatprep.subr.mxu0 0.0
        %7489 = vmatpush1.msra.mxu0 0.0
        %7490 = vmatprep.subr.mxu0 0.0
        %7491 = vmatpush1.msra.mxu0 0.0
        %7492 = vmatprep.subr.mxu0 0.0
        %7493 = vmatpush1.msra.mxu0 0.0
        %7494 = vmatprep.subr.mxu0 0.0
        %7495 = vmatpush1.msra.mxu0 0.0
        %7496 = vmatprep.subr.mxu0 0.0
        %7497 = vmatpush1.msra.mxu0 0.0
        %7498 = vmatprep.subr.mxu0 0.0
        %7499 = vmatpush1.msra.mxu0 %v6490
        %7500 = vmatprep.subr.mxu0 0.0
        %7501 = vmatpush1.msra.mxu0 %v6489
        %7502 = vmatprep.subr.mxu0 0.0
        %7503 = vmatpush1.msra.mxu0 %v6488
        %7504 = vmatprep.subr.mxu0 0.0
        %7505 = vmatpush1.msra.mxu0 %v6487
        %7506 = vmatprep.subr.mxu0 0.0
        %7507 = vmatpush1.msra.mxu0 %v6486
        %7508 = vmatprep.subr.mxu0 0.0
        %7509 = vmatpush1.msra.mxu0 %v6485
        %7510 = vmatprep.subr.mxu0 0.0
        %7511 = vmatpush1.msra.mxu0 %v6484
        %7512 = vmatprep.subr.mxu0 0.0
        %7513 = vmatpush1.msra.mxu0 %v6483
        %7514 = vmatprep.subr.mxu0 0.0
        %7515 = vmatpush2.msra.mxu0 0.0
        %7516 = vmatprep.subr.mxu0 0.0
        %7517 = vmatpush2.msra.mxu0 0.0
        %7518 = vmatprep.subr.mxu0 0.0
        %7519 = vmatpush2.msra.mxu0 0.0
        %7520 = vmatprep.subr.mxu0 0.0
        %7521 = vmatpush2.msra.mxu0 0.0
        %7522 = vmatprep.subr.mxu0 0.0
        %7523 = vmatpush2.msra.mxu0 0.0
        %7524 = vmatprep.subr.mxu0 0.0
        %7525 = vmatpush2.msra.mxu0 0.0
        %7526 = vmatprep.subr.mxu0 0.0
        %7527 = vmatpush2.msra.mxu0 0.0
        %7528 = vmatprep.subr.mxu0 0.0
        %7529 = vmatpush2.msra.mxu0 0.0
        %7530 = vmatprep.subr.mxu0 0.0
        %7531 = vmatpush2.msra.mxu0 0.0
        %7532 = vmatprep.subr.mxu0 0.0
        %7533 = vmatpush2.msra.mxu0 0.0
        %7534 = vmatprep.subr.mxu0 0.0
        %7535 = vmatpush2.msra.mxu0 0.0
        %7536 = vmatprep.subr.mxu0 0.0
        %7537 = vmatpush2.msra.mxu0 0.0
        %7538 = vmatprep.subr.mxu0 0.0
        %7539 = vmatpush2.msra.mxu0 0.0
        %7540 = vmatprep.subr.mxu0 0.0
        %7541 = vmatpush2.msra.mxu0 0.0
        %7542 = vmatprep.subr.mxu0 0.0
        %7543 = vmatpush2.msra.mxu0 0.0
        %7544 = vmatprep.subr.mxu0 0.0
        %7545 = vmatpush2.msra.mxu0 0.0
        %7546 = vmatprep.mubr.f32.mxu0 0.0
        %7547 = vmatmul.mubr.f32.gmra.mxu0 %v7480
        %v7548 = vpop.f32.mrf.mxu0
        %v7549 = vadd.f32 0.0, %v7548
        %v7550 = vpop.f32.mrf.mxu0
        %7551 = vdwg.mxu0
        %7553 = vrot.lane.b32.xlu0 %v7549, 32
        %v7554 = vpop.permute.xlu0 %7553
        %v7556 = vadd.f32 %v7379, %v7554
        %v7557 = vadd.f32 %v7556, %v6577
        %7559 = vrot.lane.b32.xlu0 %v7557, 96
        %v7560 = vpop.permute.xlu0 %7559
        %v7562 = vsel %vm1270, %v7560, 0.0
        %7563 = vadd.xlane.f32.xlu0 %v7562
        %v7564 = vpop.xlane.xlu0 %7563
        %v7565 = vmul.f32 %v7564, %v5139
        %v7566 = vsub.f32 %v7557, %v7565
        %v7567 = vmul.f32 %v7566, %v7566
        %7569 = vrot.lane.b32.xlu0 %v7567, 96
        %v7570 = vpop.permute.xlu0 %7569
        %v7572 = vsel %vm1270, %v7570, 0.0
        %7573 = vadd.xlane.f32.xlu0 %v7572
        %v7574 = vpop.xlane.xlu0 %7573
        %v7575 = vmul.f32 %v7574, %v5139
        %v7576 = vadd.f32 %v7575, 1e-05
        %v7577 = vrsqrt.pop %v7576
        %v7578 = vmul.f32 %v7566, %v7577
        %v7579 = vmul.f32 %v7578, %v6602
        %v7580 = vadd.f32 %v7579, %v6606
        %7582 = vrot.lane.b32.xlu0 %v7580, 96
        %v7583 = vpop.permute.xlu0 %7582
        %v7584 = vsel %vm1270, %v7583, 0
        %7586 = vmatprep.subr.mxu0 0.0
        %7587 = vmatpush1.msra.mxu0 0.0
        %7588 = vmatprep.subr.mxu0 0.0
        %7589 = vmatpush1.msra.mxu0 0.0
        %7590 = vmatprep.subr.mxu0 0.0
        %7591 = vmatpush1.msra.mxu0 0.0
        %7592 = vmatprep.subr.mxu0 0.0
        %7593 = vmatpush1.msra.mxu0 0.0
        %7594 = vmatprep.subr.mxu0 0.0
        %7595 = vmatpush1.msra.mxu0 0.0
        %7596 = vmatprep.subr.mxu0 0.0
        %7597 = vmatpush1.msra.mxu0 0.0
        %7598 = vmatprep.subr.mxu0 0.0
        %7599 = vmatpush1.msra.mxu0 0.0
        %7600 = vmatprep.subr.mxu0 0.0
        %7601 = vmatpush1.msra.mxu0 0.0
        %7602 = vmatprep.subr.mxu0 0.0
        %7603 = vmatpush1.msra.mxu0 0.0
        %7604 = vmatprep.subr.mxu0 0.0
        %7605 = vmatpush1.msra.mxu0 0.0
        %7606 = vmatprep.subr.mxu0 0.0
        %7607 = vmatpush1.msra.mxu0 0.0
        %7608 = vmatprep.subr.mxu0 0.0
        %7609 = vmatpush1.msra.mxu0 0.0
        %7610 = vmatprep.subr.mxu0 0.0
        %7611 = vmatpush1.msra.mxu0 %v5504
        %7612 = vmatprep.subr.mxu0 0.0
        %7613 = vmatpush1.msra.mxu0 %v5503
        %7614 = vmatprep.subr.mxu0 0.0
        %7615 = vmatpush1.msra.mxu0 %v5502
        %7616 = vmatprep.subr.mxu0 0.0
        %7617 = vmatpush1.msra.mxu0 %v5501
        %7618 = vmatprep.subr.mxu0 0.0
        %7619 = vmatpush2.msra.mxu0 0.0
        %7620 = vmatprep.subr.mxu0 0.0
        %7621 = vmatpush2.msra.mxu0 0.0
        %7622 = vmatprep.subr.mxu0 0.0
        %7623 = vmatpush2.msra.mxu0 0.0
        %7624 = vmatprep.subr.mxu0 0.0
        %7625 = vmatpush2.msra.mxu0 0.0
        %7626 = vmatprep.subr.mxu0 0.0
        %7627 = vmatpush2.msra.mxu0 0.0
        %7628 = vmatprep.subr.mxu0 0.0
        %7629 = vmatpush2.msra.mxu0 0.0
        %7630 = vmatprep.subr.mxu0 0.0
        %7631 = vmatpush2.msra.mxu0 0.0
        %7632 = vmatprep.subr.mxu0 0.0
        %7633 = vmatpush2.msra.mxu0 0.0
        %7634 = vmatprep.subr.mxu0 0.0
        %7635 = vmatpush2.msra.mxu0 0.0
        %7636 = vmatprep.subr.mxu0 0.0
        %7637 = vmatpush2.msra.mxu0 0.0
        %7638 = vmatprep.subr.mxu0 0.0
        %7639 = vmatpush2.msra.mxu0 0.0
        %7640 = vmatprep.subr.mxu0 0.0
        %7641 = vmatpush2.msra.mxu0 0.0
        %7642 = vmatprep.subr.mxu0 0.0
        %7643 = vmatpush2.msra.mxu0 0.0
        %7644 = vmatprep.subr.mxu0 0.0
        %7645 = vmatpush2.msra.mxu0 0.0
        %7646 = vmatprep.subr.mxu0 0.0
        %7647 = vmatpush2.msra.mxu0 0.0
        %7648 = vmatprep.subr.mxu0 0.0
        %7649 = vmatpush2.msra.mxu0 0.0
        %7650 = vmatprep.mubr.f32.mxu0 0.0
        %7651 = vmatmul.mubr.f32.gmra.mxu0 %v7584
        %v7652 = vpop.f32.mrf.mxu0
        %v7653 = vadd.f32 %v5510, %v7652
        %v7654 = vpop.f32.mrf.mxu0
        %7655 = vdwg.mxu0
        %7656 = vmatprep.subr.mxu0 0.0
        %7657 = vmatpush1.msra.mxu0 0.0
        %7658 = vmatprep.subr.mxu0 0.0
        %7659 = vmatpush1.msra.mxu0 0.0
        %7660 = vmatprep.subr.mxu0 0.0
        %7661 = vmatpush1.msra.mxu0 0.0
        %7662 = vmatprep.subr.mxu0 0.0
        %7663 = vmatpush1.msra.mxu0 0.0
        %7664 = vmatprep.subr.mxu0 0.0
        %7665 = vmatpush1.msra.mxu0 0.0
        %7666 = vmatprep.subr.mxu0 0.0
        %7667 = vmatpush1.msra.mxu0 0.0
        %7668 = vmatprep.subr.mxu0 0.0
        %7669 = vmatpush1.msra.mxu0 0.0
        %7670 = vmatprep.subr.mxu0 0.0
        %7671 = vmatpush1.msra.mxu0 0.0
        %7672 = vmatprep.subr.mxu0 0.0
        %7673 = vmatpush1.msra.mxu0 0.0
        %7674 = vmatprep.subr.mxu0 0.0
        %7675 = vmatpush1.msra.mxu0 0.0
        %7676 = vmatprep.subr.mxu0 0.0
        %7677 = vmatpush1.msra.mxu0 0.0
        %7678 = vmatprep.subr.mxu0 0.0
        %7679 = vmatpush1.msra.mxu0 0.0
        %7680 = vmatprep.subr.mxu0 0.0
        %7681 = vmatpush1.msra.mxu0 0.0
        %7682 = vmatprep.subr.mxu0 0.0
        %7683 = vmatpush1.msra.mxu0 0.0
        %7684 = vmatprep.subr.mxu0 0.0
        %7685 = vmatpush1.msra.mxu0 0.0
        %7686 = vmatprep.subr.mxu0 0.0
        %7687 = vmatpush1.msra.mxu0 %v7653
        %7688 = vmatprep.subr.mxu0 0.0
        %7689 = vmatpush2.msra.mxu0 0.0
        %7690 = vmatprep.subr.mxu0 0.0
        %7691 = vmatpush2.msra.mxu0 0.0
        %7692 = vmatprep.subr.mxu0 0.0
        %7693 = vmatpush2.msra.mxu0 0.0
        %7694 = vmatprep.subr.mxu0 0.0
        %7695 = vmatpush2.msra.mxu0 0.0
        %7696 = vmatprep.subr.mxu0 0.0
        %7697 = vmatpush2.msra.mxu0 0.0
        %7698 = vmatprep.subr.mxu0 0.0
        %7699 = vmatpush2.msra.mxu0 0.0
        %7700 = vmatprep.subr.mxu0 0.0
        %7701 = vmatpush2.msra.mxu0 0.0
        %7702 = vmatprep.subr.mxu0 0.0
        %7703 = vmatpush2.msra.mxu0 0.0
        %7704 = vmatprep.subr.mxu0 0.0
        %7705 = vmatpush2.msra.mxu0 0.0
        %7706 = vmatprep.subr.mxu0 0.0
        %7707 = vmatpush2.msra.mxu0 0.0
        %7708 = vmatprep.subr.mxu0 0.0
        %7709 = vmatpush2.msra.mxu0 0.0
        %7710 = vmatprep.subr.mxu0 0.0
        %7711 = vmatpush2.msra.mxu0 0.0
        %7712 = vmatprep.subr.mxu0 0.0
        %7713 = vmatpush2.msra.mxu0 0.0
        %7714 = vmatprep.subr.mxu0 0.0
        %7715 = vmatpush2.msra.mxu0 0.0
        %7716 = vmatprep.subr.mxu0 0.0
        %7717 = vmatpush2.msra.mxu0 0.0
        %7718 = vmatprep.subr.mxu0 0.0
        %7719 = vmatpush2.msra.mxu0 0.0
        %7720 = vmatprep.mubr.f32.mxu0 0.0
        %7721 = vmatmul.mubr.f32.gmra.mxu0 %v5587
        %v7722 = vpop.f32.mrf.mxu0
        %v7723 = vadd.f32 0.0, %v7722
        %v7724 = vpop.f32.mrf.mxu0
        %7725 = vmatprep.mubr.f32.mxu0 0.0
        %7726 = vmatmul.mubr.f32.gmra.mxu0 %v5590
        %v7727 = vpop.f32.mrf.mxu0
        %v7728 = vadd.f32 0.0, %v7727
        %v7729 = vpop.f32.mrf.mxu0
        %7730 = vmatprep.mubr.f32.mxu0 0.0
        %7731 = vmatmul.mubr.f32.gmra.mxu0 %v5593
        %v7732 = vpop.f32.mrf.mxu0
        %v7733 = vadd.f32 0.0, %v7732
        %v7734 = vpop.f32.mrf.mxu0
        %7735 = vmatprep.mubr.f32.mxu0 0.0
        %7736 = vmatmul.mubr.f32.gmra.mxu0 %v5596
        %v7737 = vpop.f32.mrf.mxu0
        %v7738 = vadd.f32 0.0, %v7737
        %v7739 = vpop.f32.mrf.mxu0
        %7740 = vdwg.mxu0
        %v7741 = vmul.f32 %v7723, %v5447
        %v7742 = vmul.f32 %v7728, %v5448
        %v7743 = vmul.f32 %v7733, %v5449
        %v7744 = vmul.f32 %v7738, %v5450
        %v7746 = vsel %vm1270, %v7741, 0
        %v7749 = vsel %vm1270, %v7742, 0
        %v7752 = vsel %vm1270, %v7743, 0
        %v7755 = vsel %vm1270, %v7744, 0
        %7757 = vmatprep.subr.mxu0 0.0
        %7758 = vmatpush1.msra.mxu0 0.0
        %7759 = vmatprep.subr.mxu0 0.0
        %7760 = vmatpush1.msra.mxu0 0.0
        %7761 = vmatprep.subr.mxu0 0.0
        %7762 = vmatpush1.msra.mxu0 0.0
        %7763 = vmatprep.subr.mxu0 0.0
        %7764 = vmatpush1.msra.mxu0 0.0
        %7765 = vmatprep.subr.mxu0 0.0
        %7766 = vmatpush1.msra.mxu0 0.0
        %7767 = vmatprep.subr.mxu0 0.0
        %7768 = vmatpush1.msra.mxu0 0.0
        %7769 = vmatprep.subr.mxu0 0.0
        %7770 = vmatpush1.msra.mxu0 0.0
        %7771 = vmatprep.subr.mxu0 0.0
        %7772 = vmatpush1.msra.mxu0 0.0
        %7773 = vmatprep.subr.mxu0 0.0
        %7774 = vmatpush1.msra.mxu0 0.0
        %7775 = vmatprep.subr.mxu0 0.0
        %7776 = vmatpush1.msra.mxu0 0.0
        %7777 = vmatprep.subr.mxu0 0.0
        %7778 = vmatpush1.msra.mxu0 0.0
        %7779 = vmatprep.subr.mxu0 0.0
        %7780 = vmatpush1.msra.mxu0 0.0
        %7781 = vmatprep.subr.mxu0 %v5421
        %7782 = vmatpush1.msra.mxu0 %v5419
        %7783 = vmatprep.subr.mxu0 %v5415
        %7784 = vmatpush1.msra.mxu0 %v5413
        %7785 = vmatprep.subr.mxu0 %v5409
        %7786 = vmatpush1.msra.mxu0 %v5407
        %7787 = vmatprep.subr.mxu0 %v5403
        %7788 = vmatpush1.msra.mxu0 %v5401
        %7789 = vmatprep.subr.mxu0 0.0
        %7790 = vmatpush2.msra.mxu0 0.0
        %7791 = vmatprep.subr.mxu0 0.0
        %7792 = vmatpush2.msra.mxu0 0.0
        %7793 = vmatprep.subr.mxu0 0.0
        %7794 = vmatpush2.msra.mxu0 0.0
        %7795 = vmatprep.subr.mxu0 0.0
        %7796 = vmatpush2.msra.mxu0 0.0
        %7797 = vmatprep.subr.mxu0 0.0
        %7798 = vmatpush2.msra.mxu0 0.0
        %7799 = vmatprep.subr.mxu0 0.0
        %7800 = vmatpush2.msra.mxu0 0.0
        %7801 = vmatprep.subr.mxu0 0.0
        %7802 = vmatpush2.msra.mxu0 0.0
        %7803 = vmatprep.subr.mxu0 0.0
        %7804 = vmatpush2.msra.mxu0 0.0
        %7805 = vmatprep.subr.mxu0 0.0
        %7806 = vmatpush2.msra.mxu0 0.0
        %7807 = vmatprep.subr.mxu0 0.0
        %7808 = vmatpush2.msra.mxu0 0.0
        %7809 = vmatprep.subr.mxu0 0.0
        %7810 = vmatpush2.msra.mxu0 0.0
        %7811 = vmatprep.subr.mxu0 0.0
        %7812 = vmatpush2.msra.mxu0 0.0
        %7813 = vmatprep.subr.mxu0 0.0
        %7814 = vmatpush2.msra.mxu0 0.0
        %7815 = vmatprep.subr.mxu0 0.0
        %7816 = vmatpush2.msra.mxu0 0.0
        %7817 = vmatprep.subr.mxu0 0.0
        %7818 = vmatpush2.msra.mxu0 0.0
        %7819 = vmatprep.subr.mxu0 0.0
        %7820 = vmatpush2.msra.mxu0 0.0
        %7821 = vmatprep.mubr.f32.mxu0 0.0
        %7822 = vmatmul.mubr.f32.gmra.mxu0 %v7746
        %v7823 = vpop.f32.mrf.mxu0
        %v7824 = vadd.f32 0.0, %v7823
        %v7825 = vpop.f32.mrf.mxu0
        %v7826 = vadd.f32 0.0, %v7825
        %7827 = vmatprep.mubr.f32.mxu0 0.0
        %7828 = vmatmul.mubr.f32.gmra.mxu0 %v7749
        %v7829 = vpop.f32.mrf.mxu0
        %v7830 = vadd.f32 0.0, %v7829
        %v7831 = vpop.f32.mrf.mxu0
        %v7832 = vadd.f32 0.0, %v7831
        %7833 = vmatprep.mubr.f32.mxu0 0.0
        %7834 = vmatmul.mubr.f32.gmra.mxu0 %v7752
        %v7835 = vpop.f32.mrf.mxu0
        %v7836 = vadd.f32 0.0, %v7835
        %v7837 = vpop.f32.mrf.mxu0
        %v7838 = vadd.f32 0.0, %v7837
        %7839 = vmatprep.mubr.f32.mxu0 0.0
        %7840 = vmatmul.mubr.f32.gmra.mxu0 %v7755
        %v7841 = vpop.f32.mrf.mxu0
        %v7842 = vadd.f32 0.0, %v7841
        %v7843 = vpop.f32.mrf.mxu0
        %v7844 = vadd.f32 0.0, %v7843
        %7845 = vdwg.mxu0
        %v7846 = vmul.f32 %v7824, 0.35355338
        %v7847 = vmul.f32 %v7826, 0.35355338
        %v7848 = vmul.f32 %v7830, 0.35355338
        %v7849 = vmul.f32 %v7832, 0.35355338
        %v7850 = vmul.f32 %v7836, 0.35355338
        %v7851 = vmul.f32 %v7838, 0.35355338
        %v7852 = vmul.f32 %v7842, 0.35355338
        %v7853 = vmul.f32 %v7844, 0.35355338
        %v7854 = vrot.slane %v7846, 4
        %v7855 = vmax.f32 %v7846, %v7854
        %v7856 = vrot.slane %v7855, 2
        %v7857 = vmax.f32 %v7855, %v7856
        %v7858 = vrot.slane %v7857, 1
        %v7859 = vmax.f32 %v7857, %v7858
        %v7860 = vrot.slane %v7847, 4
        %v7861 = vmax.f32 %v7847, %v7860
        %v7862 = vrot.slane %v7861, 2
        %v7863 = vmax.f32 %v7861, %v7862
        %v7864 = vrot.slane %v7863, 1
        %v7865 = vmax.f32 %v7863, %v7864
        %v7866 = vrot.slane %v7848, 4
        %v7867 = vmax.f32 %v7848, %v7866
        %v7868 = vrot.slane %v7867, 2
        %v7869 = vmax.f32 %v7867, %v7868
        %v7870 = vrot.slane %v7869, 1
        %v7871 = vmax.f32 %v7869, %v7870
        %v7872 = vrot.slane %v7849, 4
        %v7873 = vmax.f32 %v7849, %v7872
        %v7874 = vrot.slane %v7873, 2
        %v7875 = vmax.f32 %v7873, %v7874
        %v7876 = vrot.slane %v7875, 1
        %v7877 = vmax.f32 %v7875, %v7876
        %v7878 = vrot.slane %v7850, 4
        %v7879 = vmax.f32 %v7850, %v7878
        %v7880 = vrot.slane %v7879, 2
        %v7881 = vmax.f32 %v7879, %v7880
        %v7882 = vrot.slane %v7881, 1
        %v7883 = vmax.f32 %v7881, %v7882
        %v7884 = vrot.slane %v7851, 4
        %v7885 = vmax.f32 %v7851, %v7884
        %v7886 = vrot.slane %v7885, 2
        %v7887 = vmax.f32 %v7885, %v7886
        %v7888 = vrot.slane %v7887, 1
        %v7889 = vmax.f32 %v7887, %v7888
        %v7890 = vrot.slane %v7852, 4
        %v7891 = vmax.f32 %v7852, %v7890
        %v7892 = vrot.slane %v7891, 2
        %v7893 = vmax.f32 %v7891, %v7892
        %v7894 = vrot.slane %v7893, 1
        %v7895 = vmax.f32 %v7893, %v7894
        %v7896 = vrot.slane %v7853, 4
        %v7897 = vmax.f32 %v7853, %v7896
        %v7898 = vrot.slane %v7897, 2
        %v7899 = vmax.f32 %v7897, %v7898
        %v7900 = vrot.slane %v7899, 1
        %v7901 = vmax.f32 %v7899, %v7900
        %v7902 = vsub.f32 %v7846, %v7859
        %v7903 = vsub.f32 %v7847, %v7865
        %v7904 = vsub.f32 %v7848, %v7871
        %v7905 = vsub.f32 %v7849, %v7877
        %v7906 = vsub.f32 %v7850, %v7883
        %v7907 = vsub.f32 %v7851, %v7889
        %v7908 = vsub.f32 %v7852, %v7895
        %v7909 = vsub.f32 %v7853, %v7901
        %v7910 = vmul.f32 %v7902, 1.442695
        %v7911 = vpow.pop %v7910
        %v7912 = vmul.f32 %v7903, 1.442695
        %v7913 = vpow.pop %v7912
        %v7914 = vmul.f32 %v7904, 1.442695
        %v7915 = vpow.pop %v7914
        %v7916 = vmul.f32 %v7905, 1.442695
        %v7917 = vpow.pop %v7916
        %v7918 = vmul.f32 %v7906, 1.442695
        %v7919 = vpow.pop %v7918
        %v7920 = vmul.f32 %v7907, 1.442695
        %v7921 = vpow.pop %v7920
        %v7922 = vmul.f32 %v7908, 1.442695
        %v7923 = vpow.pop %v7922
        %v7924 = vmul.f32 %v7909, 1.442695
        %v7925 = vpow.pop %v7924
        %v7926 = vrot.slane %v7911, 4
        %v7927 = vadd.f32 %v7911, %v7926
        %v7928 = vrot.slane %v7927, 2
        %v7929 = vadd.f32 %v7927, %v7928
        %v7930 = vrot.slane %v7929, 1
        %v7931 = vadd.f32 %v7929, %v7930
        %v7932 = vrot.slane %v7913, 4
        %v7933 = vadd.f32 %v7913, %v7932
        %v7934 = vrot.slane %v7933, 2
        %v7935 = vadd.f32 %v7933, %v7934
        %v7936 = vrot.slane %v7935, 1
        %v7937 = vadd.f32 %v7935, %v7936
        %v7938 = vrot.slane %v7915, 4
        %v7939 = vadd.f32 %v7915, %v7938
        %v7940 = vrot.slane %v7939, 2
        %v7941 = vadd.f32 %v7939, %v7940
        %v7942 = vrot.slane %v7941, 1
        %v7943 = vadd.f32 %v7941, %v7942
        %v7944 = vrot.slane %v7917, 4
        %v7945 = vadd.f32 %v7917, %v7944
        %v7946 = vrot.slane %v7945, 2
        %v7947 = vadd.f32 %v7945, %v7946
        %v7948 = vrot.slane %v7947, 1
        %v7949 = vadd.f32 %v7947, %v7948
        %v7950 = vrot.slane %v7919, 4
        %v7951 = vadd.f32 %v7919, %v7950
        %v7952 = vrot.slane %v7951, 2
        %v7953 = vadd.f32 %v7951, %v7952
        %v7954 = vrot.slane %v7953, 1
        %v7955 = vadd.f32 %v7953, %v7954
        %v7956 = vrot.slane %v7921, 4
        %v7957 = vadd.f32 %v7921, %v7956
        %v7958 = vrot.slane %v7957, 2
        %v7959 = vadd.f32 %v7957, %v7958
        %v7960 = vrot.slane %v7959, 1
        %v7961 = vadd.f32 %v7959, %v7960
        %v7962 = vrot.slane %v7923, 4
        %v7963 = vadd.f32 %v7923, %v7962
        %v7964 = vrot.slane %v7963, 2
        %v7965 = vadd.f32 %v7963, %v7964
        %v7966 = vrot.slane %v7965, 1
        %v7967 = vadd.f32 %v7965, %v7966
        %v7968 = vrot.slane %v7925, 4
        %v7969 = vadd.f32 %v7925, %v7968
        %v7970 = vrot.slane %v7969, 2
        %v7971 = vadd.f32 %v7969, %v7970
        %v7972 = vrot.slane %v7971, 1
        %v7973 = vadd.f32 %v7971, %v7972
        %v7974 = vrcp.pop %v7931
        %v7975 = vrcp.pop %v7937
        %v7976 = vrcp.pop %v7943
        %v7977 = vrcp.pop %v7949
        %v7978 = vrcp.pop %v7955
        %v7979 = vrcp.pop %v7961
        %v7980 = vrcp.pop %v7967
        %v7981 = vrcp.pop %v7973
        %v7982 = vmul.f32 %v7911, %v7974
        %v7983 = vmul.f32 %v7913, %v7975
        %v7984 = vmul.f32 %v7915, %v7976
        %v7985 = vmul.f32 %v7917, %v7977
        %v7986 = vmul.f32 %v7919, %v7978
        %v7987 = vmul.f32 %v7921, %v7979
        %v7988 = vmul.f32 %v7923, %v7980
        %v7989 = vmul.f32 %v7925, %v7981
        %v7990 = vadd.f32 %v7982, 1e-08
        %v7991 = vadd.f32 %v7983, 1e-08
        %v7992 = vadd.f32 %v7984, 1e-08
        %v7993 = vadd.f32 %v7985, 1e-08
        %v7994 = vadd.f32 %v7986, 1e-08
        %v7995 = vadd.f32 %v7987, 1e-08
        %v7996 = vadd.f32 %v7988, 1e-08
        %v7997 = vadd.f32 %v7989, 1e-08
        %v7998 = vadd.f32 %v7990, %v7991
        %7999 = vadd.xlane.f32.xlu0 %v7998
        %v8000 = vpop.xlane.xlu0 %7999
        %v8001 = vadd.f32 %v7992, %v7993
        %8002 = vadd.xlane.f32.xlu0 %v8001
        %v8003 = vpop.xlane.xlu0 %8002
        %v8004 = vadd.f32 %v7994, %v7995
        %8005 = vadd.xlane.f32.xlu0 %v8004
        %v8006 = vpop.xlane.xlu0 %8005
        %v8007 = vadd.f32 %v7996, %v7997
        %8008 = vadd.xlane.f32.xlu0 %v8007
        %v8009 = vpop.xlane.xlu0 %8008
        %v8010 = vrcp.pop %v8000
        %v8011 = vrcp.pop %v8003
        %v8012 = vrcp.pop %v8006
        %v8013 = vrcp.pop %v8009
        %v8014 = vmul.f32 %v7990, %v8010
        %v8015 = vmul.f32 %v7991, %v8010
        %v8016 = vmul.f32 %v7992, %v8011
        %v8017 = vmul.f32 %v7993, %v8011
        %v8018 = vmul.f32 %v7994, %v8012
        %v8019 = vmul.f32 %v7995, %v8012
        %v8020 = vmul.f32 %v7996, %v8013
        %v8021 = vmul.f32 %v7997, %v8013
        %8022 = vmatprep.subr.mxu0 0.0
        %8023 = vmatpush1.xpose.msra.mxu0 0.0
        %8024 = vmatprep.subr.mxu0 0.0
        %8025 = vmatpush1.xpose.msra.mxu0 0.0
        %8026 = vmatprep.subr.mxu0 0.0
        %8027 = vmatpush1.xpose.msra.mxu0 0.0
        %8028 = vmatprep.subr.mxu0 0.0
        %8029 = vmatpush1.xpose.msra.mxu0 0.0
        %8030 = vmatprep.subr.mxu0 0.0
        %8031 = vmatpush1.xpose.msra.mxu0 0.0
        %8032 = vmatprep.subr.mxu0 0.0
        %8033 = vmatpush1.xpose.msra.mxu0 0.0
        %8034 = vmatprep.subr.mxu0 0.0
        %8035 = vmatpush1.xpose.msra.mxu0 0.0
        %8036 = vmatprep.subr.mxu0 0.0
        %8037 = vmatpush1.xpose.msra.mxu0 0.0
        %8038 = vmatprep.subr.mxu0 0.0
        %8039 = vmatpush1.xpose.msra.mxu0 0.0
        %8040 = vmatprep.subr.mxu0 0.0
        %8041 = vmatpush1.xpose.msra.mxu0 0.0
        %8042 = vmatprep.subr.mxu0 0.0
        %8043 = vmatpush1.xpose.msra.mxu0 0.0
        %8044 = vmatprep.subr.mxu0 0.0
        %8045 = vmatpush1.xpose.msra.mxu0 0.0
        %8046 = vmatprep.subr.mxu0 %v5445
        %8047 = vmatpush1.xpose.msra.mxu0 %v5443
        %8048 = vmatprep.subr.mxu0 %v5439
        %8049 = vmatpush1.xpose.msra.mxu0 %v5437
        %8050 = vmatprep.subr.mxu0 %v5433
        %8051 = vmatpush1.xpose.msra.mxu0 %v5431
        %8052 = vmatprep.subr.mxu0 %v5427
        %8053 = vmatpush1.xpose.msra.mxu0 %v5425
        %8054 = vmatprep.subr.mxu0 0.0
        %8055 = vmatpush2.xpose.msra.mxu0 0.0
        %8056 = vmatprep.subr.mxu0 0.0
        %8057 = vmatpush2.xpose.msra.mxu0 0.0
        %8058 = vmatprep.subr.mxu0 0.0
        %8059 = vmatpush2.xpose.msra.mxu0 0.0
        %8060 = vmatprep.subr.mxu0 0.0
        %8061 = vmatpush2.xpose.msra.mxu0 0.0
        %8062 = vmatprep.subr.mxu0 0.0
        %8063 = vmatpush2.xpose.msra.mxu0 0.0
        %8064 = vmatprep.subr.mxu0 0.0
        %8065 = vmatpush2.xpose.msra.mxu0 0.0
        %8066 = vmatprep.subr.mxu0 0.0
        %8067 = vmatpush2.xpose.msra.mxu0 0.0
        %8068 = vmatprep.subr.mxu0 0.0
        %8069 = vmatpush2.xpose.msra.mxu0 0.0
        %8070 = vmatprep.subr.mxu0 0.0
        %8071 = vmatpush2.xpose.msra.mxu0 0.0
        %8072 = vmatprep.subr.mxu0 0.0
        %8073 = vmatpush2.xpose.msra.mxu0 0.0
        %8074 = vmatprep.subr.mxu0 0.0
        %8075 = vmatpush2.xpose.msra.mxu0 0.0
        %8076 = vmatprep.subr.mxu0 0.0
        %8077 = vmatpush2.xpose.msra.mxu0 0.0
        %8078 = vmatprep.subr.mxu0 0.0
        %8079 = vmatpush2.xpose.msra.mxu0 0.0
        %8080 = vmatprep.subr.mxu0 0.0
        %8081 = vmatpush2.xpose.msra.mxu0 0.0
        %8082 = vmatprep.subr.mxu0 0.0
        %8083 = vmatpush2.xpose.msra.mxu0 0.0
        %8084 = vmatprep.subr.mxu0 0.0
        %8085 = vmatpush2.xpose.msra.mxu0 0.0
        %8086 = vmatprep.mubr.f32.mxu0 %v8015
        %8087 = vmatmul.mubr.f32.gmra.mxu0 %v8014
        %v8088 = vpop.f32.mrf.mxu0
        %v8089 = vadd.f32 0.0, %v8088
        %v8090 = vpop.f32.mrf.mxu0
        %8091 = vmatprep.mubr.f32.mxu0 %v8017
        %8092 = vmatmul.mubr.f32.gmra.mxu0 %v8016
        %v8093 = vpop.f32.mrf.mxu0
        %v8094 = vadd.f32 0.0, %v8093
        %v8095 = vpop.f32.mrf.mxu0
        %8096 = vmatprep.mubr.f32.mxu0 %v8019
        %8097 = vmatmul.mubr.f32.gmra.mxu0 %v8018
        %v8098 = vpop.f32.mrf.mxu0
        %v8099 = vadd.f32 0.0, %v8098
        %v8100 = vpop.f32.mrf.mxu0
        %8101 = vmatprep.mubr.f32.mxu0 %v8021
        %8102 = vmatmul.mubr.f32.gmra.mxu0 %v8020
        %v8103 = vpop.f32.mrf.mxu0
        %v8104 = vadd.f32 0.0, %v8103
        %v8105 = vpop.f32.mrf.mxu0
        %8106 = vdwg.mxu0
        %v8107 = vmul.f32 %v8089, %v5447
        %v8108 = vmul.f32 %v8094, %v5448
        %v8109 = vmul.f32 %v8099, %v5449
        %v8110 = vmul.f32 %v8104, %v5450
        %8111 = vmatprep.subr.mxu0 0.0
        %8112 = vmatpush1.msra.mxu0 0.0
        %8113 = vmatprep.subr.mxu0 0.0
        %8114 = vmatpush1.msra.mxu0 0.0
        %8115 = vmatprep.subr.mxu0 0.0
        %8116 = vmatpush1.msra.mxu0 0.0
        %8117 = vmatprep.subr.mxu0 0.0
        %8118 = vmatpush1.msra.mxu0 0.0
        %8119 = vmatprep.subr.mxu0 0.0
        %8120 = vmatpush1.msra.mxu0 0.0
        %8121 = vmatprep.subr.mxu0 0.0
        %8122 = vmatpush1.msra.mxu0 0.0
        %8123 = vmatprep.subr.mxu0 0.0
        %8124 = vmatpush1.msra.mxu0 0.0
        %8125 = vmatprep.subr.mxu0 0.0
        %8126 = vmatpush1.msra.mxu0 0.0
        %8127 = vmatprep.subr.mxu0 0.0
        %8128 = vmatpush1.msra.mxu0 0.0
        %8129 = vmatprep.subr.mxu0 0.0
        %8130 = vmatpush1.msra.mxu0 0.0
        %8131 = vmatprep.subr.mxu0 0.0
        %8132 = vmatpush1.msra.mxu0 0.0
        %8133 = vmatprep.subr.mxu0 0.0
        %8134 = vmatpush1.msra.mxu0 0.0
        %8135 = vmatprep.subr.mxu0 0.0
        %8136 = vmatpush1.msra.mxu0 %v8110
        %8137 = vmatprep.subr.mxu0 0.0
        %8138 = vmatpush1.msra.mxu0 %v8109
        %8139 = vmatprep.subr.mxu0 0.0
        %8140 = vmatpush1.msra.mxu0 %v8108
        %8141 = vmatprep.subr.mxu0 0.0
        %8142 = vmatpush1.msra.mxu0 %v8107
        %8143 = vmatprep.subr.mxu0 0.0
        %8144 = vmatpush2.msra.mxu0 0.0
        %8145 = vmatprep.subr.mxu0 0.0
        %8146 = vmatpush2.msra.mxu0 0.0
        %8147 = vmatprep.subr.mxu0 0.0
        %8148 = vmatpush2.msra.mxu0 0.0
        %8149 = vmatprep.subr.mxu0 0.0
        %8150 = vmatpush2.msra.mxu0 0.0
        %8151 = vmatprep.subr.mxu0 0.0
        %8152 = vmatpush2.msra.mxu0 0.0
        %8153 = vmatprep.subr.mxu0 0.0
        %8154 = vmatpush2.msra.mxu0 0.0
        %8155 = vmatprep.subr.mxu0 0.0
        %8156 = vmatpush2.msra.mxu0 0.0
        %8157 = vmatprep.subr.mxu0 0.0
        %8158 = vmatpush2.msra.mxu0 0.0
        %8159 = vmatprep.subr.mxu0 0.0
        %8160 = vmatpush2.msra.mxu0 0.0
        %8161 = vmatprep.subr.mxu0 0.0
        %8162 = vmatpush2.msra.mxu0 0.0
        %8163 = vmatprep.subr.mxu0 0.0
        %8164 = vmatpush2.msra.mxu0 0.0
        %8165 = vmatprep.subr.mxu0 0.0
        %8166 = vmatpush2.msra.mxu0 0.0
        %8167 = vmatprep.subr.mxu0 0.0
        %8168 = vmatpush2.msra.mxu0 0.0
        %8169 = vmatprep.subr.mxu0 0.0
        %8170 = vmatpush2.msra.mxu0 0.0
        %8171 = vmatprep.subr.mxu0 0.0
        %8172 = vmatpush2.msra.mxu0 0.0
        %8173 = vmatprep.subr.mxu0 0.0
        %8174 = vmatpush2.msra.mxu0 0.0
        %8175 = vmatprep.mubr.f32.mxu0 0.0
        %8176 = vmatmul.mubr.f32.gmra.mxu0 %v6086
        %v8177 = vpop.f32.mrf.mxu0
        %v8178 = vadd.f32 0.0, %v8177
        %v8179 = vpop.f32.mrf.mxu0
        %8180 = vdwg.mxu0
        %v8182 = vsel %vm1270, %v8178, 0
        %8184 = vmatprep.subr.mxu0 0.0
        %8185 = vmatpush1.msra.mxu0 0.0
        %8186 = vmatprep.subr.mxu0 0.0
        %8187 = vmatpush1.msra.mxu0 0.0
        %8188 = vmatprep.subr.mxu0 0.0
        %8189 = vmatpush1.msra.mxu0 0.0
        %8190 = vmatprep.subr.mxu0 0.0
        %8191 = vmatpush1.msra.mxu0 0.0
        %8192 = vmatprep.subr.mxu0 0.0
        %8193 = vmatpush1.msra.mxu0 0.0
        %8194 = vmatprep.subr.mxu0 0.0
        %8195 = vmatpush1.msra.mxu0 0.0
        %8196 = vmatprep.subr.mxu0 0.0
        %8197 = vmatpush1.msra.mxu0 0.0
        %8198 = vmatprep.subr.mxu0 0.0
        %8199 = vmatpush1.msra.mxu0 0.0
        %8200 = vmatprep.subr.mxu0 0.0
        %8201 = vmatpush1.msra.mxu0 0.0
        %8202 = vmatprep.subr.mxu0 0.0
        %8203 = vmatpush1.msra.mxu0 0.0
        %8204 = vmatprep.subr.mxu0 0.0
        %8205 = vmatpush1.msra.mxu0 0.0
        %8206 = vmatprep.subr.mxu0 0.0
        %8207 = vmatpush1.msra.mxu0 0.0
        %8208 = vmatprep.subr.mxu0 0.0
        %8209 = vmatpush1.msra.mxu0 %v6161
        %8210 = vmatprep.subr.mxu0 0.0
        %8211 = vmatpush1.msra.mxu0 %v6160
        %8212 = vmatprep.subr.mxu0 0.0
        %8213 = vmatpush1.msra.mxu0 %v6159
        %8214 = vmatprep.subr.mxu0 0.0
        %8215 = vmatpush1.msra.mxu0 %v6158
        %8216 = vmatprep.subr.mxu0 0.0
        %8217 = vmatpush2.msra.mxu0 0.0
        %8218 = vmatprep.subr.mxu0 0.0
        %8219 = vmatpush2.msra.mxu0 0.0
        %8220 = vmatprep.subr.mxu0 0.0
        %8221 = vmatpush2.msra.mxu0 0.0
        %8222 = vmatprep.subr.mxu0 0.0
        %8223 = vmatpush2.msra.mxu0 0.0
        %8224 = vmatprep.subr.mxu0 0.0
        %8225 = vmatpush2.msra.mxu0 0.0
        %8226 = vmatprep.subr.mxu0 0.0
        %8227 = vmatpush2.msra.mxu0 0.0
        %8228 = vmatprep.subr.mxu0 0.0
        %8229 = vmatpush2.msra.mxu0 0.0
        %8230 = vmatprep.subr.mxu0 0.0
        %8231 = vmatpush2.msra.mxu0 0.0
        %8232 = vmatprep.subr.mxu0 0.0
        %8233 = vmatpush2.msra.mxu0 0.0
        %8234 = vmatprep.subr.mxu0 0.0
        %8235 = vmatpush2.msra.mxu0 0.0
        %8236 = vmatprep.subr.mxu0 0.0
        %8237 = vmatpush2.msra.mxu0 0.0
        %8238 = vmatprep.subr.mxu0 0.0
        %8239 = vmatpush2.msra.mxu0 0.0
        %8240 = vmatprep.subr.mxu0 0.0
        %8241 = vmatpush2.msra.mxu0 0.0
        %8242 = vmatprep.subr.mxu0 0.0
        %8243 = vmatpush2.msra.mxu0 0.0
        %8244 = vmatprep.subr.mxu0 0.0
        %8245 = vmatpush2.msra.mxu0 0.0
        %8246 = vmatprep.subr.mxu0 0.0
        %8247 = vmatpush2.msra.mxu0 0.0
        %8248 = vmatprep.mubr.f32.mxu0 0.0
        %8249 = vmatmul.mubr.f32.gmra.mxu0 %v8182
        %v8250 = vpop.f32.mrf.mxu0
        %v8251 = vadd.f32 %v6167, %v8250
        %v8252 = vpop.f32.mrf.mxu0
        %8253 = vdwg.mxu0
        %v8254 = vsel %vm1270, %v7560, 0
        %8256 = vmatprep.subr.mxu0 0.0
        %8257 = vmatpush1.msra.mxu0 0.0
        %8258 = vmatprep.subr.mxu0 0.0
        %8259 = vmatpush1.msra.mxu0 0.0
        %8260 = vmatprep.subr.mxu0 0.0
        %8261 = vmatpush1.msra.mxu0 0.0
        %8262 = vmatprep.subr.mxu0 0.0
        %8263 = vmatpush1.msra.mxu0 0.0
        %8264 = vmatprep.subr.mxu0 0.0
        %8265 = vmatpush1.msra.mxu0 0.0
        %8266 = vmatprep.subr.mxu0 0.0
        %8267 = vmatpush1.msra.mxu0 0.0
        %8268 = vmatprep.subr.mxu0 0.0
        %8269 = vmatpush1.msra.mxu0 0.0
        %8270 = vmatprep.subr.mxu0 0.0
        %8271 = vmatpush1.msra.mxu0 0.0
        %8272 = vmatprep.subr.mxu0 0.0
        %8273 = vmatpush1.msra.mxu0 0.0
        %8274 = vmatprep.subr.mxu0 0.0
        %8275 = vmatpush1.msra.mxu0 0.0
        %8276 = vmatprep.subr.mxu0 0.0
        %8277 = vmatpush1.msra.mxu0 0.0
        %8278 = vmatprep.subr.mxu0 0.0
        %8279 = vmatpush1.msra.mxu0 0.0
        %8280 = vmatprep.subr.mxu0 0.0
        %8281 = vmatpush1.msra.mxu0 %v6245
        %8282 = vmatprep.subr.mxu0 0.0
        %8283 = vmatpush1.msra.mxu0 %v6244
        %8284 = vmatprep.subr.mxu0 0.0
        %8285 = vmatpush1.msra.mxu0 %v6243
        %8286 = vmatprep.subr.mxu0 0.0
        %8287 = vmatpush1.msra.mxu0 %v6242
        %8288 = vmatprep.subr.mxu0 0.0
        %8289 = vmatpush2.msra.mxu0 0.0
        %8290 = vmatprep.subr.mxu0 0.0
        %8291 = vmatpush2.msra.mxu0 0.0
        %8292 = vmatprep.subr.mxu0 0.0
        %8293 = vmatpush2.msra.mxu0 0.0
        %8294 = vmatprep.subr.mxu0 0.0
        %8295 = vmatpush2.msra.mxu0 0.0
        %8296 = vmatprep.subr.mxu0 0.0
        %8297 = vmatpush2.msra.mxu0 0.0
        %8298 = vmatprep.subr.mxu0 0.0
        %8299 = vmatpush2.msra.mxu0 0.0
        %8300 = vmatprep.subr.mxu0 0.0
        %8301 = vmatpush2.msra.mxu0 0.0
        %8302 = vmatprep.subr.mxu0 0.0
        %8303 = vmatpush2.msra.mxu0 0.0
        %8304 = vmatprep.subr.mxu0 0.0
        %8305 = vmatpush2.msra.mxu0 0.0
        %8306 = vmatprep.subr.mxu0 0.0
        %8307 = vmatpush2.msra.mxu0 0.0
        %8308 = vmatprep.subr.mxu0 0.0
        %8309 = vmatpush2.msra.mxu0 0.0
        %8310 = vmatprep.subr.mxu0 0.0
        %8311 = vmatpush2.msra.mxu0 0.0
        %8312 = vmatprep.subr.mxu0 0.0
        %8313 = vmatpush2.msra.mxu0 0.0
        %8314 = vmatprep.subr.mxu0 0.0
        %8315 = vmatpush2.msra.mxu0 0.0
        %8316 = vmatprep.subr.mxu0 0.0
        %8317 = vmatpush2.msra.mxu0 0.0
        %8318 = vmatprep.subr.mxu0 0.0
        %8319 = vmatpush2.msra.mxu0 0.0
        %8320 = vmatprep.mubr.f32.mxu0 0.0
        %8321 = vmatmul.mubr.f32.gmra.mxu0 %v8254
        %v8322 = vpop.f32.mrf.mxu0
        %v8323 = vadd.f32 %v6251, %v8322
        %v8324 = vpop.f32.mrf.mxu0
        %8325 = vdwg.mxu0
        %v8326 = vadd.f32 %v8251, %v8323
        %v8327 = vxor.u32 %v8326, 2147483648
        %v8328 = vmul.f32 %v8327, 1.442695
        %v8329 = vpow.pop %v8328
        %v8330 = vadd.f32 %v8329, 1.0
        %v8331 = vrcp.pop %v8330
        %v8332 = vmul.f32 1.0, %v8331
        %8334 = vrot.lane.b32.xlu0 %v8323, 64
        %v8335 = vpop.permute.xlu0 %8334
        %v8337 = vmul.f32 %v8332, %v8335
        %8339 = vrot.lane.b32.xlu0 %v8337, 64
        %v8340 = vpop.permute.xlu0 %8339
        %v8342 = vadd.f32 %v8251, %v8340
        %v8343 = vtanh.pop %v8342
        %v8344 = vsub.f32 1.0, %v8332
        %8346 = vrot.lane.b32.xlu0 %v8343, 96
        %v8347 = vpop.permute.xlu0 %8346
        %v8349 = vmul.f32 %v8344, %v8347
        %v8350 = vmul.f32 %v8332, %v7557
        %v8351 = vadd.f32 %v8349, %v8350
        %8353 = vrot.lane.b32.xlu0 %v8351, 96
        %v8354 = vpop.permute.xlu0 %8353
        %v8356 = vsel %vm1270, %v8354, 0.0
        %8357 = vadd.xlane.f32.xlu0 %v8356
        %v8358 = vpop.xlane.xlu0 %8357
        %v8359 = vmul.f32 %v8358, %v5139
        %v8360 = vsub.f32 %v8351, %v8359
        %v8361 = vmul.f32 %v8360, %v8360
        %8363 = vrot.lane.b32.xlu0 %v8361, 96
        %v8364 = vpop.permute.xlu0 %8363
        %v8366 = vsel %vm1270, %v8364, 0.0
        %8367 = vadd.xlane.f32.xlu0 %v8366
        %v8368 = vpop.xlane.xlu0 %8367
        %v8369 = vmul.f32 %v8368, %v5139
        %v8370 = vadd.f32 %v8369, 1e-05
        %v8371 = vrsqrt.pop %v8370
        %v8372 = vmul.f32 %v8360, %v8371
        %v8373 = vmul.f32 %v8372, %v6384
        %v8374 = vadd.f32 %v8373, %v6393
        %8376 = vrot.lane.b32.xlu0 %v8374, 96
        %v8377 = vpop.permute.xlu0 %8376
        %v8378 = vsel %vm1270, %v8377, 0
        %8380 = vmatprep.subr.mxu0 0.0
        %8381 = vmatpush1.msra.mxu0 0.0
        %8382 = vmatprep.subr.mxu0 0.0
        %8383 = vmatpush1.msra.mxu0 0.0
        %8384 = vmatprep.subr.mxu0 0.0
        %8385 = vmatpush1.msra.mxu0 0.0
        %8386 = vmatprep.subr.mxu0 0.0
        %8387 = vmatpush1.msra.mxu0 0.0
        %8388 = vmatprep.subr.mxu0 0.0
        %8389 = vmatpush1.msra.mxu0 0.0
        %8390 = vmatprep.subr.mxu0 0.0
        %8391 = vmatpush1.msra.mxu0 0.0
        %8392 = vmatprep.subr.mxu0 0.0
        %8393 = vmatpush1.msra.mxu0 0.0
        %8394 = vmatprep.subr.mxu0 0.0
        %8395 = vmatpush1.msra.mxu0 0.0
        %8396 = vmatprep.subr.mxu0 0.0
        %8397 = vmatpush1.msra.mxu0 0.0
        %8398 = vmatprep.subr.mxu0 0.0
        %8399 = vmatpush1.msra.mxu0 0.0
        %8400 = vmatprep.subr.mxu0 0.0
        %8401 = vmatpush1.msra.mxu0 0.0
        %8402 = vmatprep.subr.mxu0 0.0
        %8403 = vmatpush1.msra.mxu0 0.0
        %8404 = vmatprep.subr.mxu0 0.0
        %8405 = vmatpush1.msra.mxu0 %v6399
        %8406 = vmatprep.subr.mxu0 0.0
        %8407 = vmatpush1.msra.mxu0 %v6398
        %8408 = vmatprep.subr.mxu0 0.0
        %8409 = vmatpush1.msra.mxu0 %v6397
        %8410 = vmatprep.subr.mxu0 0.0
        %8411 = vmatpush1.msra.mxu0 %v6396
        %8412 = vmatprep.subr.mxu0 0.0
        %8413 = vmatpush2.msra.mxu0 0.0
        %8414 = vmatprep.subr.mxu0 0.0
        %8415 = vmatpush2.msra.mxu0 0.0
        %8416 = vmatprep.subr.mxu0 0.0
        %8417 = vmatpush2.msra.mxu0 0.0
        %8418 = vmatprep.subr.mxu0 0.0
        %8419 = vmatpush2.msra.mxu0 0.0
        %8420 = vmatprep.subr.mxu0 0.0
        %8421 = vmatpush2.msra.mxu0 0.0
        %8422 = vmatprep.subr.mxu0 0.0
        %8423 = vmatpush2.msra.mxu0 0.0
        %8424 = vmatprep.subr.mxu0 0.0
        %8425 = vmatpush2.msra.mxu0 0.0
        %8426 = vmatprep.subr.mxu0 0.0
        %8427 = vmatpush2.msra.mxu0 0.0
        %8428 = vmatprep.subr.mxu0 0.0
        %8429 = vmatpush2.msra.mxu0 0.0
        %8430 = vmatprep.subr.mxu0 0.0
        %8431 = vmatpush2.msra.mxu0 0.0
        %8432 = vmatprep.subr.mxu0 0.0
        %8433 = vmatpush2.msra.mxu0 0.0
        %8434 = vmatprep.subr.mxu0 0.0
        %8435 = vmatpush2.msra.mxu0 0.0
        %8436 = vmatprep.subr.mxu0 0.0
        %8437 = vmatpush2.msra.mxu0 0.0
        %8438 = vmatprep.subr.mxu0 0.0
        %8439 = vmatpush2.msra.mxu0 0.0
        %8440 = vmatprep.subr.mxu0 0.0
        %8441 = vmatpush2.msra.mxu0 0.0
        %8442 = vmatprep.subr.mxu0 0.0
        %8443 = vmatpush2.msra.mxu0 0.0
        %8444 = vmatprep.mubr.f32.mxu0 0.0
        %8445 = vmatmul.mubr.f32.gmra.mxu0 %v8378
        %v8446 = vpop.f32.mrf.mxu0
        %v8447 = vadd.f32 %v6405, %v8446
        %v8448 = vpop.f32.mrf.mxu0
        %8449 = vdwg.mxu0
        %v8450 = vmax.f32 %v8447, 0.0
        %v8452 = vsel %vm6491, %v8450, 0
        %8454 = vmatprep.subr.mxu0 0.0
        %8455 = vmatpush1.msra.mxu0 0.0
        %8456 = vmatprep.subr.mxu0 0.0
        %8457 = vmatpush1.msra.mxu0 0.0
        %8458 = vmatprep.subr.mxu0 0.0
        %8459 = vmatpush1.msra.mxu0 0.0
        %8460 = vmatprep.subr.mxu0 0.0
        %8461 = vmatpush1.msra.mxu0 0.0
        %8462 = vmatprep.subr.mxu0 0.0
        %8463 = vmatpush1.msra.mxu0 0.0
        %8464 = vmatprep.subr.mxu0 0.0
        %8465 = vmatpush1.msra.mxu0 0.0
        %8466 = vmatprep.subr.mxu0 0.0
        %8467 = vmatpush1.msra.mxu0 0.0
        %8468 = vmatprep.subr.mxu0 0.0
        %8469 = vmatpush1.msra.mxu0 0.0
        %8470 = vmatprep.subr.mxu0 0.0
        %8471 = vmatpush1.msra.mxu0 %v6490
        %8472 = vmatprep.subr.mxu0 0.0
        %8473 = vmatpush1.msra.mxu0 %v6489
        %8474 = vmatprep.subr.mxu0 0.0
        %8475 = vmatpush1.msra.mxu0 %v6488
        %8476 = vmatprep.subr.mxu0 0.0
        %8477 = vmatpush1.msra.mxu0 %v6487
        %8478 = vmatprep.subr.mxu0 0.0
        %8479 = vmatpush1.msra.mxu0 %v6486
        %8480 = vmatprep.subr.mxu0 0.0
        %8481 = vmatpush1.msra.mxu0 %v6485
        %8482 = vmatprep.subr.mxu0 0.0
        %8483 = vmatpush1.msra.mxu0 %v6484
        %8484 = vmatprep.subr.mxu0 0.0
        %8485 = vmatpush1.msra.mxu0 %v6483
        %8486 = vmatprep.subr.mxu0 0.0
        %8487 = vmatpush2.msra.mxu0 0.0
        %8488 = vmatprep.subr.mxu0 0.0
        %8489 = vmatpush2.msra.mxu0 0.0
        %8490 = vmatprep.subr.mxu0 0.0
        %8491 = vmatpush2.msra.mxu0 0.0
        %8492 = vmatprep.subr.mxu0 0.0
        %8493 = vmatpush2.msra.mxu0 0.0
        %8494 = vmatprep.subr.mxu0 0.0
        %8495 = vmatpush2.msra.mxu0 0.0
        %8496 = vmatprep.subr.mxu0 0.0
        %8497 = vmatpush2.msra.mxu0 0.0
        %8498 = vmatprep.subr.mxu0 0.0
        %8499 = vmatpush2.msra.mxu0 0.0
        %8500 = vmatprep.subr.mxu0 0.0
        %8501 = vmatpush2.msra.mxu0 0.0
        %8502 = vmatprep.subr.mxu0 0.0
        %8503 = vmatpush2.msra.mxu0 0.0
        %8504 = vmatprep.subr.mxu0 0.0
        %8505 = vmatpush2.msra.mxu0 0.0
        %8506 = vmatprep.subr.mxu0 0.0
        %8507 = vmatpush2.msra.mxu0 0.0
        %8508 = vmatprep.subr.mxu0 0.0
        %8509 = vmatpush2.msra.mxu0 0.0
        %8510 = vmatprep.subr.mxu0 0.0
        %8511 = vmatpush2.msra.mxu0 0.0
        %8512 = vmatprep.subr.mxu0 0.0
        %8513 = vmatpush2.msra.mxu0 0.0
        %8514 = vmatprep.subr.mxu0 0.0
        %8515 = vmatpush2.msra.mxu0 0.0
        %8516 = vmatprep.subr.mxu0 0.0
        %8517 = vmatpush2.msra.mxu0 0.0
        %8518 = vmatprep.mubr.f32.mxu0 0.0
        %8519 = vmatmul.mubr.f32.gmra.mxu0 %v8452
        %v8520 = vpop.f32.mrf.mxu0
        %v8521 = vadd.f32 0.0, %v8520
        %v8522 = vpop.f32.mrf.mxu0
        %8523 = vdwg.mxu0
        %8525 = vrot.lane.b32.xlu0 %v8521, 32
        %v8526 = vpop.permute.xlu0 %8525
        %v8528 = vadd.f32 %v8351, %v8526
        %v8529 = vadd.f32 %v8528, %v6577
        %v8530 = vadd.f32 %v7990, %v7992
        %v8531 = vadd.f32 %v8530, %v7994
        %v8532 = vadd.f32 %v8531, %v7996
        %v8533 = vadd.f32 %v7991, %v7993
        %v8534 = vadd.f32 %v8533, %v7995
        %v8535 = vadd.f32 %v8534, %v7997
        %v8536 = vrcp.pop 4.0
        %v8537 = vmul.f32 %v8532, %v8536
        %v8538 = vmul.f32 %v8535, %v8536
        %8539 = vst [vmem:[%s859] sm:$0xff] %v8537
        %8540 = vst [vmem:[%s859 + $0x8] sm:$0xff] %v8538
        %8542 = vrot.lane.b32.xlu0 %v8529, 96
        %v8543 = vpop.permute.xlu0 %8542
        %8545 = vxpose.xlu0.b32.start [1/16] %v8543, 128
        %8546 = vxpose.xlu0.b32.cont [2/16] 0.0, 128
        %8547 = vxpose.xlu0.b32.cont [3/16] 0.0, 128
        %8548 = vxpose.xlu0.b32.cont [4/16] 0.0, 128
        %8549 = vxpose.xlu0.b32.cont [5/16] 0.0, 128
        %8550 = vxpose.xlu0.b32.cont [6/16] 0.0, 128
        %8551 = vxpose.xlu0.b32.cont [7/16] 0.0, 128
        %8552 = vxpose.xlu0.b32.cont [8/16] 0.0, 128
        %8553 = vxpose.xlu0.b32.cont [9/16] 0.0, 128
        %8554 = vxpose.xlu0.b32.cont [10/16] 0.0, 128
        %8555 = vxpose.xlu0.b32.cont [11/16] 0.0, 128
        %8556 = vxpose.xlu0.b32.cont [12/16] 0.0, 128
        %8557 = vxpose.xlu0.b32.cont [13/16] 0.0, 128
        %8558 = vxpose.xlu0.b32.cont [14/16] 0.0, 128
        %8559 = vxpose.xlu0.b32.cont [15/16] 0.0, 128
        %8560 = vxpose.xlu0.b32.end [16/16] 0.0, 128
        %v8561 = vpop.trf.xlu0
        %v8562 = vpop.trf.xlu0
        %v8563 = vpop.trf.xlu0
        %v8564 = vpop.trf.xlu0
        %v8565 = vpop.trf.xlu0
        %v8566 = vpop.trf.xlu0
        %v8567 = vpop.trf.xlu0
        %v8568 = vpop.trf.xlu0
        %v8569 = vpop.trf.xlu0
        %v8570 = vpop.trf.xlu0
        %v8571 = vpop.trf.xlu0
        %v8572 = vpop.trf.xlu0
        %v8573 = vpop.trf.xlu0
        %v8574 = vpop.trf.xlu0
        %v8575 = vpop.trf.xlu0
        %v8576 = vpop.trf.xlu0
        %v8578 = vsel %vm5585, %v8561, 0
        %v8581 = vsel %vm5585, %v8562, 0
        %v8584 = vsel %vm5585, %v8563, 0
        %v8587 = vsel %vm5585, %v8564, 0
        %8589 = vmatprep.subr.mxu0 0.0
        %8590 = vmatpush1.msra.mxu0 0.0
        %8591 = vmatprep.subr.mxu0 0.0
        %8592 = vmatpush1.msra.mxu0 0.0
        %8593 = vmatprep.subr.mxu0 0.0
        %8594 = vmatpush1.msra.mxu0 0.0
        %8595 = vmatprep.subr.mxu0 0.0
        %8596 = vmatpush1.msra.mxu0 0.0
        %8597 = vmatprep.subr.mxu0 0.0
        %8598 = vmatpush1.msra.mxu0 0.0
        %8599 = vmatprep.subr.mxu0 0.0
        %8600 = vmatpush1.msra.mxu0 0.0
        %8601 = vmatprep.subr.mxu0 0.0
        %8602 = vmatpush1.msra.mxu0 0.0
        %8603 = vmatprep.subr.mxu0 0.0
        %8604 = vmatpush1.msra.mxu0 0.0
        %8605 = vmatprep.subr.mxu0 0.0
        %8606 = vmatpush1.msra.mxu0 0.0
        %8607 = vmatprep.subr.mxu0 0.0
        %8608 = vmatpush1.msra.mxu0 0.0
        %8609 = vmatprep.subr.mxu0 0.0
        %8610 = vmatpush1.msra.mxu0 0.0
        %8611 = vmatprep.subr.mxu0 0.0
        %8612 = vmatpush1.msra.mxu0 0.0
        %8613 = vmatprep.subr.mxu0 0.0
        %8614 = vmatpush1.msra.mxu0 0.0
        %8615 = vmatprep.subr.mxu0 0.0
        %8616 = vmatpush1.msra.mxu0 0.0
        %8617 = vmatprep.subr.mxu0 0.0
        %8618 = vmatpush1.msra.mxu0 0.0
        %8619 = vmatprep.subr.mxu0 %v8538
        %8620 = vmatpush1.msra.mxu0 %v8537
        %8621 = vmatprep.subr.mxu0 0.0
        %8622 = vmatpush2.msra.mxu0 0.0
        %8623 = vmatprep.subr.mxu0 0.0
        %8624 = vmatpush2.msra.mxu0 0.0
        %8625 = vmatprep.subr.mxu0 0.0
        %8626 = vmatpush2.msra.mxu0 0.0
        %8627 = vmatprep.subr.mxu0 0.0
        %8628 = vmatpush2.msra.mxu0 0.0
        %8629 = vmatprep.subr.mxu0 0.0
        %8630 = vmatpush2.msra.mxu0 0.0
        %8631 = vmatprep.subr.mxu0 0.0
        %8632 = vmatpush2.msra.mxu0 0.0
        %8633 = vmatprep.subr.mxu0 0.0
        %8634 = vmatpush2.msra.mxu0 0.0
        %8635 = vmatprep.subr.mxu0 0.0
        %8636 = vmatpush2.msra.mxu0 0.0
        %8637 = vmatprep.subr.mxu0 0.0
        %8638 = vmatpush2.msra.mxu0 0.0
        %8639 = vmatprep.subr.mxu0 0.0
        %8640 = vmatpush2.msra.mxu0 0.0
        %8641 = vmatprep.subr.mxu0 0.0
        %8642 = vmatpush2.msra.mxu0 0.0
        %8643 = vmatprep.subr.mxu0 0.0
        %8644 = vmatpush2.msra.mxu0 0.0
        %8645 = vmatprep.subr.mxu0 0.0
        %8646 = vmatpush2.msra.mxu0 0.0
        %8647 = vmatprep.subr.mxu0 0.0
        %8648 = vmatpush2.msra.mxu0 0.0
        %8649 = vmatprep.subr.mxu0 0.0
        %8650 = vmatpush2.msra.mxu0 0.0
        %8651 = vmatprep.subr.mxu0 0.0
        %8652 = vmatpush2.msra.mxu0 0.0
        %8653 = vmatprep.mubr.f32.mxu0 0.0
        %8654 = vmatmul.mubr.f32.gmra.mxu0 %v8578
        %v8655 = vpop.f32.mrf.mxu0
        %v8656 = vadd.f32 0.0, %v8655
        %v8657 = vpop.f32.mrf.mxu0
        %v8658 = vadd.f32 0.0, %v8657
        %8659 = vmatprep.mubr.f32.mxu0 0.0
        %8660 = vmatmul.mubr.f32.gmra.mxu0 %v8581
        %v8661 = vpop.f32.mrf.mxu0
        %v8662 = vadd.f32 0.0, %v8661
        %v8663 = vpop.f32.mrf.mxu0
        %v8664 = vadd.f32 0.0, %v8663
        %8665 = vmatprep.mubr.f32.mxu0 0.0
        %8666 = vmatmul.mubr.f32.gmra.mxu0 %v8584
        %v8667 = vpop.f32.mrf.mxu0
        %v8668 = vadd.f32 0.0, %v8667
        %v8669 = vpop.f32.mrf.mxu0
        %v8670 = vadd.f32 0.0, %v8669
        %8671 = vmatprep.mubr.f32.mxu0 0.0
        %8672 = vmatmul.mubr.f32.gmra.mxu0 %v8587
        %v8673 = vpop.f32.mrf.mxu0
        %v8674 = vadd.f32 0.0, %v8673
        %v8675 = vpop.f32.mrf.mxu0
        %v8676 = vadd.f32 0.0, %v8675
        %8677 = vdwg.mxu0
        %8678 = vst [vmem:[%s873] sm:$0xff] %v5113
        %8679 = vst [vmem:[%s873 + $0x8] sm:$0xff] %v5114
        %8680 = vst [vmem:[%s873 + $0x10] sm:$0xff] %v5115
        %8681 = vst [vmem:[%s873 + $0x18] sm:$0xff] %v5116
        %8682 = vst [vmem:[%s873 + $0x20] sm:$0xff] %v5117
        %8683 = vst [vmem:[%s873 + $0x28] sm:$0xff] %v5118
        %8684 = vst [vmem:[%s873 + $0x30] sm:$0xff] %v5119
        %8685 = vst [vmem:[%s873 + $0x38] sm:$0xff] %v5120
        %8686 = vst [vmem:[%s873 + $0x40] sm:$0xff] %v8656
        %8687 = vst [vmem:[%s873 + $0x48] sm:$0xff] %v8658
        %8688 = vst [vmem:[%s873 + $0x50] sm:$0xff] %v8662
        %8689 = vst [vmem:[%s873 + $0x58] sm:$0xff] %v8664
        %8690 = vst [vmem:[%s873 + $0x60] sm:$0xff] %v8668
        %8691 = vst [vmem:[%s873 + $0x68] sm:$0xff] %v8670
        %8692 = vst [vmem:[%s873 + $0x70] sm:$0xff] %v8674
        %8693 = vst [vmem:[%s873 + $0x78] sm:$0xff] %v8676
        %p8694 = scmp.lt.s32.totalorder %s43, 1
        %s8695 = scalar_select %p8694, %s43, 1
        %s8696 = smul.addr %s8695, 16
        %s8697 = smul.addr %s8696, 8
        %s8698 = scalar_lea.vmem %s27, %s8697
        %s8699 = sand.u32 %s654, 1
        %s8700 = scalar_lea.sflag [#allocation4], %s8699
        %s8701 = sand.u32 %s654, 1
        %s8702 = smul.addr %s8701, 16
        %s8703 = scalar_lea.vmem [#allocation3], %s8702
        // Predicated region
        $region129: #{_lambda_.1} parent=127 // pred_check
          %p8704 = pneg %p638
        $region130: #{_lambda_.1} parent=127 // pred_check_branch
          %8706 = sbr.rel (%p8704) target = $region132
        $region131: #{_lambda_.1} parent=127 // pred_region
          _
        $region132: #{_lambda_.1} parent=127 // pred_fallthru
          _
        // Predicated region
        $region133: #{_lambda_.1} parent=127 // pred_check
          %p8707 = pneg %p664
        $region134: #{_lambda_.1} parent=127 // pred_check_branch
          %8709 = sbr.rel (%p8707) target = $region136
        $region135: #{_lambda_.1} parent=127 // pred_region
          %s8711 = ssub.s32 256, 256
          %8712 = vsyncadd %s8700, %s8711
          %s8713 = smul.addr %s43, 2
          %s8714 = smul.addr %s8713, 128
          %s8715 = scalar_lea.hbm %s28, %s8714
          %s8717 = sshll.u32 %s8703, 4
          %s8718 = int_to_ptr.vmem [resolvable:$true] %s8717
          %8720 = dma.vmem_to_hbm [thread:$0]  %s8718, 256, %s8715, %s8700
        $region136: #{_lambda_.1} parent=127 // pred_fallthru
          _
      $region128: #{_lambda_.1} parent=5 // pred_fallthru
        _
      %p8721 = scmp.le.s32.totalorder 2, %s38
      // Predicated region
      $region137: #{_lambda_.1} parent=5 // pred_check
        %p8722 = pneg %p8721
      $region138: #{_lambda_.1} parent=5 // pred_check_branch
        %8724 = sbr.rel (%p8722) target = $region140
      $region139: #{_lambda_.1} parent=5 // pred_region
        %s8725 = ssub.s32 %s38, 2
        // Predicated region
        $region141: #{_lambda_.1} parent=139 // pred_check
          %p8726 = pneg %p644
        $region142: #{_lambda_.1} parent=139 // pred_check_branch
          %8728 = sbr.rel (%p8726) target = $region144
        $region143: #{_lambda_.1} parent=139 // pred_region
          %p8729 = scmp.lt.s32.totalorder %s44, 1
          %s8730 = scalar_select %p8729, %s44, 1
          %s8731 = smul.addr %s8730, 16
          %s8732 = smul.addr %s8731, 8
          %s8733 = scalar_lea.vmem %s27, %s8732
        $region144: #{_lambda_.1} parent=139 // pred_fallthru
          _
        // Predicated region
        $region145: #{_lambda_.1} parent=139 // pred_check
          %p8734 = pneg %p670
        $region146: #{_lambda_.1} parent=139 // pred_check_branch
          %8736 = sbr.rel (%p8734) target = $region148
        $region147: #{_lambda_.1} parent=139 // pred_region
          %s8737 = sand.u32 %s655, 1
          %s8738 = scalar_lea.sflag [#allocation4], %s8737
          %s8739 = sand.u32 %s655, 1
          %s8740 = smul.addr %s8739, 16
          %s8741 = scalar_lea.vmem [#allocation3], %s8740
          %8742 = dma.done %s8738, 256
        $region148: #{_lambda_.1} parent=139 // pred_fallthru
          _
      $region140: #{_lambda_.1} parent=5 // pred_fallthru
        _
    $region6: #{_lambda_.1} parent=1 // loop_footer
      %s42 = sadd.s32 1, %s38
    $region7: #{_lambda_.1} parent=1 // loop_footer_branch
      %37 = sbr.rel target = $region3
    $region8: #{_lambda_.1} parent=1 // loop_exit
      _
    %8743 = vsyncpa [#allocation4], 1
    %s8744 = scalar_lea.sflag [#allocation4], 1
    %8745 = vsyncpa %s8744, 1

</llo_original>
